<compile_context>
chip_gen: v5e
topology: v5e:2x2
jax: 0.10.0
libtpu: 0.0.40
codegen_flags: <defaults>
</compile_context>

<pallas_src>
import jax
import jax.numpy as jnp
from jax import lax
from jax.experimental import pallas as pl
from jax.experimental.pallas import tpu as pltpu

BN_EPS = 1e-5
LANE = 128


def _round_up(x, m):
    return (x + m - 1) // m * m


def _vmem_cap_bytes():
    """Physical VMEM per core (generation-aware); conservative fallback."""
    try:
        cap = getattr(pltpu.get_tpu_info(), "vmem_capacity_bytes", None)
        if cap:
            return int(cap)
    except Exception:
        pass
    return 64 * 2 ** 20            # conservative default (v7x per-TensorCore)


def _vmem_limit(requested_bytes):
    # Leave ~25% headroom for compiler-internal scratch: ~48 MiB ceiling on
    # v7x (64 MiB physical), ~96 MiB available on v5e/v6e (128 MiB physical).
    ceiling = (_vmem_cap_bytes() * 3) // 4
    return int(max(32 * 2 ** 20, min(ceiling, int(requested_bytes))))


def _pick_row_tile(hw, max_rows=2048):
    """Largest row tile that divides HW (keeps pass-2 blocks VMEM-friendly)."""
    if hw <= max_rows:
        return hw
    for t in range(max_rows, 7, -1):
        if hw % t == 0 and t % 8 == 0:
            return t
    return hw


# ---------------------------------------------------------------------------
# pass 1: conv (deep-K matmul) + per-image BN partial statistics
# ---------------------------------------------------------------------------
def _conv_stats(x_nhwc, w_hwio, cpad):
    """KxK stride-1 'same' conv -> (pre-BN conv, per-image channel sums, ssq).

    x_nhwc: (N, H, W, Cin) bf16.  w_hwio: (K, K, Cin, Cout) f32.
    Returns conv (N, HW, Cpad) f32, sums (N, 1, Cpad) f32, ssqs (N, 1, Cpad).
    """
    N, H, W, Cin = x_nhwc.shape
    K, K2, wcin, Cout = w_hwio.shape
    assert K == K2 and wcin == Cin and K % 2 == 1
    pad = K // 2
    Hp, Wp = H + 2 * pad, W + 2 * pad
    HW = H * W
    taps = [(kh, kw) for kh in range(K) for kw in range(K)]
    KKC = K * K * Cin
    # Deep-K im2col concatenates lane-tile aligned channel chunks; narrow-Cin
    # layers (fed by the 8-channel stem) fall back to per-tap matmuls but still
    # accumulate locally and store the output tile exactly once.
    use_im2col = (pad == 0) or (Cin % LANE == 0)

    w = jnp.pad(w_hwio.astype(jnp.float32),
                ((0, 0), (0, 0), (0, 0), (0, cpad - Cout)))
    if use_im2col:
        w_packed = w.reshape(KKC, cpad).astype(jnp.bfloat16)    # (kh,kw,cin) rows
        w_spec = pl.BlockSpec((KKC, cpad), lambda n: (0, 0))
    else:
        w_packed = w.reshape(K * K, Cin, cpad).astype(jnp.bfloat16)
        w_spec = pl.BlockSpec((K * K, Cin, cpad), lambda n: (0, 0, 0))

    def kernel(x_ref, w_ref, conv_ref, sum_ref, ssq_ref, *scratch):
        if pad:
            xp_ref, = scratch
            # Build the haloed tile entirely in VMEM (no wrapper jnp.pad HBM
            # round trip).  Re-written every step so grid iterations stay
            # independent ("parallel" / megacore safe).
            xp_ref[...] = jnp.zeros_like(xp_ref)
            xp_ref[pad:pad + H, pad:pad + W, :] = x_ref[0]
            if use_im2col:
                # In-VMEM im2col: (HW, K*K*Cin) bf16 slab -> one deep-K matmul.
                patches = [xp_ref[kh:kh + H, kw:kw + W, :].reshape(HW, Cin)
                           for kh, kw in taps]
                slab = jnp.concatenate(patches, axis=-1)
                conv = jnp.dot(slab, w_ref[...],
                               preferred_element_type=jnp.float32)
            else:
                # Narrow-Cin fallback: shallow per-tap matmuls, local f32 accum.
                conv = None
                for t, (kh, kw) in enumerate(taps):
                    patch = xp_ref[kh:kh + H, kw:kw + W, :].reshape(HW, Cin)
                    part = jnp.dot(patch, w_ref[t],
                                   preferred_element_type=jnp.float32)
                    conv = part if conv is None else conv + part
        else:                                           # 1x1 conv (shortcut)
            slab = x_ref[0].reshape(HW, Cin)
            conv = jnp.dot(slab, w_ref[...], preferred_element_type=jnp.float32)

        conv_ref[0] = conv                  # single full-width store per step
        sum_ref[0] = jnp.sum(conv, axis=0, keepdims=True)
        ssq_ref[0] = jnp.sum(conv * conv, axis=0, keepdims=True)

    scratch_shapes = []
    if pad:
        scratch_shapes.append(pltpu.VMEM((Hp, Wp, Cin), jnp.bfloat16))

    bs = 2                                   # bf16 itemsize
    conv_bytes = HW * cpad * 4
    req = (2 * H * W * Cin * bs              # double-buffered input tile
           + 2 * int(w_packed.size) * bs     # resident weights
           + 2 * conv_bytes                  # double-buffered output tile
           + Hp * Wp * Cin * bs              # halo scratch
           + HW * KKC * bs                   # im2col slab temporary
           + conv_bytes                      # f32 conv temporary
           + 8 * cpad * 4 + (2 << 20))

    cost = pl.CostEstimate(
        flops=int(2 * N * HW * KKC * cpad),
        transcendentals=0,
        bytes_accessed=int(x_nhwc.size) * bs + int(w_packed.size) * bs
        + N * conv_bytes + 2 * N * cpad * 4)

    return pl.pallas_call(
        kernel,
        out_shape=(jax.ShapeDtypeStruct((N, HW, cpad), jnp.float32),
                   jax.ShapeDtypeStruct((N, 1, cpad), jnp.float32),
                   jax.ShapeDtypeStruct((N, 1, cpad), jnp.float32)),
        grid=(N,),
        in_specs=[pl.BlockSpec((1, H, W, Cin), lambda n: (n, 0, 0, 0)), w_spec],
        out_specs=(pl.BlockSpec((1, HW, cpad), lambda n: (n, 0, 0)),
                   pl.BlockSpec((1, 1, cpad), lambda n: (n, 0, 0)),
                   pl.BlockSpec((1, 1, cpad), lambda n: (n, 0, 0))),
        scratch_shapes=scratch_shapes,
        compiler_params=pltpu.CompilerParams(
            dimension_semantics=("parallel",),
            vmem_limit_bytes=_vmem_limit(req)),
        cost_estimate=cost,
    )(x_nhwc.astype(jnp.bfloat16), w_packed)


# ---------------------------------------------------------------------------
# pass 2: streaming BN-apply (+ residual) (+ ReLU)
# ---------------------------------------------------------------------------
def _bn_apply(conv, scale, shift, *, residual, relu, out_dtype):
    N, HW, cpad = conv.shape
    tile = _pick_row_tile(HW)
    grid = (N, HW // tile)
    has_res = residual is not None

    def kernel(*refs):
        if has_res:
            conv_ref, sc_ref, sh_ref, res_ref, out_ref = refs
        else:
            conv_ref, sc_ref, sh_ref, out_ref = refs
        y = conv_ref[0] * sc_ref[...] + sh_ref[...]
        if has_res:
            y = y + res_ref[0].astype(jnp.float32)
        if relu:
            y = jnp.maximum(y, 0.0)
        out_ref[0] = y.astype(out_ref.dtype)

    in_specs = [pl.BlockSpec((1, tile, cpad), lambda n, t: (n, t, 0)),
                pl.BlockSpec((1, cpad), lambda n, t: (0, 0)),
                pl.BlockSpec((1, cpad), lambda n, t: (0, 0))]
    args = [conv, scale, shift]
    if has_res:
        in_specs.append(pl.BlockSpec((1, tile, cpad), lambda n, t: (n, t, 0)))
        args.append(residual)

    res_isz = int(residual.dtype.itemsize) if has_res else 0
    out_isz = int(jnp.dtype(out_dtype).itemsize)
    req = (2 * tile * cpad * (4 + res_isz + out_isz) + 8 * cpad * 4 + (1 << 20))

    cost = pl.CostEstimate(
        flops=int(N * HW * cpad * (2 + int(has_res) + int(relu))),
        transcendentals=0,
        bytes_accessed=int(conv.size) * 4 + 2 * cpad * 4
        + (int(residual.size) * res_isz if has_res else 0)
        + N * HW * cpad * out_isz)

    return pl.pallas_call(
        kernel,
        out_shape=jax.ShapeDtypeStruct((N, HW, cpad), out_dtype),
        grid=grid,
        in_specs=in_specs,
        out_specs=pl.BlockSpec((1, tile, cpad), lambda n, t: (n, t, 0)),
        compiler_params=pltpu.CompilerParams(
            dimension_semantics=("parallel", "parallel"),
            vmem_limit_bytes=_vmem_limit(req)),
        cost_estimate=cost,
    )(*args)


# ---------------------------------------------------------------------------
# conv + BN(batch stats) [+ residual] [+ ReLU], padded-lane (N, HW, Cpad) out
# ---------------------------------------------------------------------------
def _conv_bn_act(x_nhwc, w_hwio, gamma, beta, *, residual=None, relu,
                 out_dtype=jnp.bfloat16):
    N, H, W, Cin = x_nhwc.shape
    Cout = w_hwio.shape[-1]
    cpad = _round_up(Cout, LANE)

    conv, sums, ssqs = _conv_stats(x_nhwc, w_hwio, cpad)

    # Tiny O(Cpad) wrapper-side reduction + BN affine folding.
    n_elems = float(N * H * W)
    mean = jnp.sum(sums, axis=(0, 1)) / n_elems
    # TODO(synk): E[x^2]-E[x]^2 in f32; move to a shifted/Welford variance if
    # conv outputs ever have large means relative to their spread.
    var = jnp.maximum(jnp.sum(ssqs, axis=(0, 1)) / n_elems - mean * mean, 0.0)
    g = jnp.pad(gamma.astype(jnp.float32), (0, cpad - Cout), constant_values=1.0)
    b = jnp.pad(beta.astype(jnp.float32), (0, cpad - Cout))
    scale = g * lax.rsqrt(var + BN_EPS)
    shift = b - mean * scale

    return _bn_apply(conv, scale.reshape(1, cpad), shift.reshape(1, cpad),
                     residual=residual, relu=relu, out_dtype=out_dtype)


def residual_block_forward(x_nchw, params, *, need_shortcut=False):
    """ResidualBlock: relu( BN2(conv2(relu(BN1(conv1(x))))) + shortcut(x) )."""
    # TODO(synk): stride=2 (spatial downsampling) blocks are not implemented.
    N, Cin, H, W = x_nchw.shape
    HW = H * W
    Cout = params["w1"].shape[-1]
    cpad = _round_up(Cout, LANE)

    # bf16 NHWC activations at the block edge (a full-network port would keep
    # the padded NHWC/bf16 layout end-to-end and skip this transpose).
    x = jnp.transpose(x_nchw, (0, 2, 3, 1)).astype(jnp.bfloat16)

    # Shortcut branch, produced directly in the (N, HW, Cpad) bf16 layout.
    if need_shortcut:
        sc = _conv_bn_act(x, params["w_sc"], params["gamma_sc"],
                          params["beta_sc"], relu=False, out_dtype=jnp.bfloat16)
    else:
        assert Cin == Cout, "identity shortcut requires inchannels == outchannels"
        sc = jnp.pad(x.reshape(N, HW, Cin), ((0, 0), (0, 0), (0, cpad - Cin)))

    # conv1 + bn1 + relu (stays in the padded bf16 layout).
    y = _conv_bn_act(x, params["w1"], params["gamma1"], params["beta1"],
                     relu=True, out_dtype=jnp.bfloat16)

    # conv2 consumes the padded layout directly: zero-pad w2's input channels
    # to Cpad instead of slicing y back to Cout (no HBM slice round trip, and
    # it makes conv2's contraction lane-tile aligned -> deep-K im2col path).
    w2 = jnp.pad(params["w2"], ((0, 0), (0, 0), (0, cpad - Cout), (0, 0)))
    out = _conv_bn_act(y.reshape(N, H, W, cpad), w2, params["gamma2"],
                       params["beta2"], residual=sc, relu=True,
                       out_dtype=jnp.float32)

    out = out[:, :, :Cout].reshape(N, H, W, Cout)
    return jnp.transpose(out, (0, 3, 1, 2))                      # back to NCHW


def reference_forward(x_nchw, params, *, need_shortcut=False):
    """Pure-JAX reference matching the PyTorch ResidualBlock (training-mode BN).

    Conv inputs/weights are quantized to bf16 to match the kernel's MXU operand
    precision (accumulation stays f32); conv bias is omitted since it cancels
    exactly under training-mode BatchNorm.
    """
    x = x_nchw.astype(jnp.float32)
    q = lambda a: a.astype(jnp.bfloat16).astype(jnp.float32)

    def conv(inp, w_hwio):
        p = w_hwio.shape[0] // 2
        return lax.conv_general_dilated(
            q(inp), q(w_hwio), window_strides=(1, 1), padding=((p, p), (p, p)),
            dimension_numbers=("NCHW", "HWIO", "NCHW"))

    def bn(t, g, b):
        mean = jnp.mean(t, axis=(0, 2, 3), keepdims=True)
        var = jnp.mean((t - mean) ** 2, axis=(0, 2, 3), keepdims=True)
        return ((t - mean) * lax.rsqrt(var + BN_EPS) * g.reshape(1, -1, 1, 1)
                + b.reshape(1, -1, 1, 1))

    right = jax.nn.relu(bn(conv(x, params["w1"]), params["gamma1"], params["beta1"]))
    right = bn(conv(right, params["w2"]), params["gamma2"], params["beta2"])
    if need_shortcut:
        short = bn(conv(x, params["w_sc"]), params["gamma_sc"], params["beta_sc"])
    else:
        short = x
    return jax.nn.relu(right + short)


if __name__ == "__main__":
    key = jax.random.PRNGKey(0)
    N, C, H, W = 2, 4, 16, 16          # batch=2, channels=4, spatial=16
    planes = 4
    k = jax.random.split(key, 11)
    x = jax.random.normal(k[0], (N, C, H, W), jnp.float32)
    params = dict(
        w1=0.1 * jax.random.normal(k[1], (3, 3, C, planes), jnp.float32),
        gamma1=1.0 + 0.1 * jax.random.normal(k[2], (planes,), jnp.float32),
        beta1=0.1 * jax.random.normal(k[3], (planes,), jnp.float32),
        w2=0.1 * jax.random.normal(k[4], (3, 3, planes, planes), jnp.float32),
        gamma2=1.0 + 0.1 * jax.random.normal(k[5], (planes,), jnp.float32),
        beta2=0.1 * jax.random.normal(k[6], (planes,), jnp.float32),
        w_sc=0.1 * jax.random.normal(k[7], (1, 1, C, planes), jnp.float32),
        gamma_sc=1.0 + 0.1 * jax.random.normal(k[8], (planes,), jnp.float32),
        beta_sc=0.1 * jax.random.normal(k[9], (planes,), jnp.float32),
    )

    block = jax.jit(residual_block_forward, static_argnames=("need_shortcut",))
    for need_shortcut in (False, True):
        out = jax.block_until_ready(block(x, params, need_shortcut=need_shortcut))
        ref = jax.block_until_ready(
            reference_forward(x, params, need_shortcut=need_shortcut))
        assert out.shape == (N, planes, H, W)
        max_err = float(jnp.max(jnp.abs(out - ref)))
        # bf16 MXU operands + bf16 inter-kernel activations / residual.
        assert max_err < 3e-2, f"need_shortcut={need_shortcut} max_err={max_err}"
    print("KERNEL_OK")
</pallas_src>

<mosaic_0001>
module attributes {stable_mosaic.version = 11 : i64} {
  func.func @kernel(%arg0: i32, %arg1: i32, %arg2: memref<1x256x128xf32, #tpu.memory_space<vmem>>, %arg3: memref<1x128xf32, #tpu.memory_space<vmem>>, %arg4: memref<1x128xf32, #tpu.memory_space<vmem>>, %arg5: memref<1x256x128xbf16, #tpu.memory_space<vmem>>) attributes {dimension_semantics = [#tpu.dimension_semantics<parallel>, #tpu.dimension_semantics<parallel>], iteration_bounds = array<i64: 2, 1>, scalar_prefetch = 0 : i64, scratch_operands = 0 : i64, tpu.core_type = #tpu.core_type<tc>, window_params = [{transform_indices = @transform_0, window_bounds = array<i64: 1, 256, 128>}, {pipeline_mode = #tpu.pipeline_mode<synchronous>, transform_indices = @transform_1, window_bounds = array<i64: 1, 128>}, {pipeline_mode = #tpu.pipeline_mode<synchronous>, transform_indices = @transform_2, window_bounds = array<i64: 1, 128>}, {transform_indices = @transform_3, window_bounds = array<i64: 1, 256, 128>}]} {
    %c0 = arith.constant 0 : index
    %c0_0 = arith.constant 0 : index
    %c0_1 = arith.constant 0 : index
    %0 = vector.load %arg2[%c0, %c0_0, %c0_1] : memref<1x256x128xf32, #tpu.memory_space<vmem>>, vector<1x256x128xf32>
    %1 = vector.shape_cast %0 : vector<1x256x128xf32> to vector<256x128xf32>
    %c0_2 = arith.constant 0 : index
    %c0_3 = arith.constant 0 : index
    %2 = vector.load %arg3[%c0_2, %c0_3] : memref<1x128xf32, #tpu.memory_space<vmem>>, vector<1x128xf32>
    %3 = vector.broadcast %2 : vector<1x128xf32> to vector<256x128xf32>
    %4 = arith.mulf %1, %3 : vector<256x128xf32>
    %c0_4 = arith.constant 0 : index
    %c0_5 = arith.constant 0 : index
    %5 = vector.load %arg4[%c0_4, %c0_5] : memref<1x128xf32, #tpu.memory_space<vmem>>, vector<1x128xf32>
    %6 = vector.broadcast %5 : vector<1x128xf32> to vector<256x128xf32>
    %7 = arith.addf %4, %6 : vector<256x128xf32>
    %cst = arith.constant 0.000000e+00 : f32
    %8 = vector.broadcast %cst : f32 to vector<256x128xf32>
    %9 = arith.maximumf %7, %8 : vector<256x128xf32>
    %10 = arith.truncf %9 : vector<256x128xf32> to vector<256x128xbf16>
    %c0_6 = arith.constant 0 : index
    %c0_7 = arith.constant 0 : index
    %c0_8 = arith.constant 0 : index
    %11 = vector.load %arg5[%c0_6, %c0_7, %c0_8] : memref<1x256x128xbf16, #tpu.memory_space<vmem>>, vector<1x256x128xbf16>
    %12 = vector.shape_cast %11 : vector<1x256x128xbf16> to vector<256x128xbf16>
    %13 = vector.shape_cast %10 : vector<256x128xbf16> to vector<1x256x128xbf16>
    tpu.vector_store %arg5[%c0_6, %c0_7, %c0_8], %13 {strides = array<i32>} : memref<1x256x128xbf16, #tpu.memory_space<vmem>>, vector<1x256x128xbf16>,
    return
  }
  func.func @transform_0(%arg0: i32, %arg1: i32) -> (i32, i32, i32) {
    %c0_i32 = arith.constant 0 : i32
    %c0_i32_0 = arith.constant 0 : i32
    return %arg0, %arg1, %c0_i32 : i32, i32, i32
  }
  func.func @transform_1(%arg0: i32, %arg1: i32) -> (i32, i32) {
    %c0_i32 = arith.constant 0 : i32
    %c0_i32_0 = arith.constant 0 : i32
    %c0_i32_1 = arith.constant 0 : i32
    return %c0_i32, %c0_i32_0 : i32, i32
  }
  func.func @transform_2(%arg0: i32, %arg1: i32) -> (i32, i32) {
    %c0_i32 = arith.constant 0 : i32
    %c0_i32_0 = arith.constant 0 : i32
    %c0_i32_1 = arith.constant 0 : i32
    return %c0_i32, %c0_i32_0 : i32, i32
  }
  func.func @transform_3(%arg0: i32, %arg1: i32) -> (i32, i32, i32) {
    %c0_i32 = arith.constant 0 : i32
    %c0_i32_0 = arith.constant 0 : i32
    return %arg0, %arg1, %c0_i32 : i32, i32, i32
  }
}

module attributes {stable_mosaic.version = 11 : i64} {
  func.func @kernel(%arg0: i32, %arg1: memref<1x16x16x4xbf16, #tpu.memory_space<vmem>>, %arg2: memref<9x4x128xbf16, #tpu.memory_space<vmem>>, %arg3: memref<1x256x128xf32, #tpu.memory_space<vmem>>, %arg4: memref<1x1x128xf32, #tpu.memory_space<vmem>>, %arg5: memref<1x1x128xf32, #tpu.memory_space<vmem>>, %arg6: memref<18x18x4xbf16, #tpu.memory_space<vmem>>) attributes {dimension_semantics = [#tpu.dimension_semantics<parallel>], iteration_bounds = array<i64: 2>, scalar_prefetch = 0 : i64, scratch_operands = 1 : i64, tpu.core_type = #tpu.core_type<tc>, window_params = [{transform_indices = @transform_0, window_bounds = array<i64: 1, 16, 16, 4>}, {pipeline_mode = #tpu.pipeline_mode<synchronous>, transform_indices = @transform_1, window_bounds = array<i64: 9, 4, 128>}, {transform_indices = @transform_2, window_bounds = array<i64: 1, 256, 128>}, {transform_indices = @transform_3, window_bounds = array<i64: 1, 1, 128>}, {transform_indices = @transform_4, window_bounds = array<i64: 1, 1, 128>}]} {
    %cst = arith.constant 0.000000e+00 : bf16
    %0 = vector.broadcast %cst : bf16 to vector<18x18x4xbf16>
    %c0 = arith.constant 0 : index
    %c0_0 = arith.constant 0 : index
    %c0_1 = arith.constant 0 : index
    %1 = vector.load %arg6[%c0, %c0_0, %c0_1] : memref<18x18x4xbf16, #tpu.memory_space<vmem>>, vector<18x18x4xbf16>
    tpu.vector_store %arg6[%c0, %c0_0, %c0_1], %0 {strides = array<i32>} : memref<18x18x4xbf16, #tpu.memory_space<vmem>>, vector<18x18x4xbf16>,
    %c0_2 = arith.constant 0 : index
    %c0_3 = arith.constant 0 : index
    %c0_4 = arith.constant 0 : index
    %c0_5 = arith.constant 0 : index
    %2 = vector.load %arg1[%c0_2, %c0_3, %c0_4, %c0_5] : memref<1x16x16x4xbf16, #tpu.memory_space<vmem>>, vector<1x16x16x4xbf16>
    %3 = vector.shape_cast %2 : vector<1x16x16x4xbf16> to vector<16x16x4xbf16>
    %c1 = arith.constant 1 : index
    %c1_6 = arith.constant 1 : index
    %c0_7 = arith.constant 0 : index
    %4 = vector.load %arg6[%c1, %c1_6, %c0_7] : memref<18x18x4xbf16, #tpu.memory_space<vmem>>, vector<16x16x4xbf16>
    tpu.vector_store %arg6[%c1, %c1_6, %c0_7], %3 {strides = array<i32>} : memref<18x18x4xbf16, #tpu.memory_space<vmem>>, vector<16x16x4xbf16>,
    %c0_8 = arith.constant 0 : index
    %c0_9 = arith.constant 0 : index
    %c0_10 = arith.constant 0 : index
    %5 = vector.load %arg6[%c0_8, %c0_9, %c0_10] : memref<18x18x4xbf16, #tpu.memory_space<vmem>>, vector<16x16x4xbf16>
    %6 = vector.shape_cast %5 : vector<16x16x4xbf16> to vector<256x4xbf16>
    %c0_11 = arith.constant 0 : index
    %c0_12 = arith.constant 0 : index
    %c0_13 = arith.constant 0 : index
    %7 = vector.load %arg2[%c0_11, %c0_12, %c0_13] : memref<9x4x128xbf16, #tpu.memory_space<vmem>>, vector<1x4x128xbf16>
    %8 = vector.shape_cast %7 : vector<1x4x128xbf16> to vector<4x128xbf16>
    %cst_14 = arith.constant dense<0.000000e+00> : vector<256x128xf32>
    %9 = tpu.matmul %6, %8, %cst_14 {dimension_numbers = #tpu.dot_dimension_numbers<[1], [0], [0], [1], [0, 0, 1, 1], [], []>} : vector<256x4xbf16>, vector<4x128xbf16>, vector<256x128xf32> -> vector<256x128xf32>
    %c0_15 = arith.constant 0 : index
    %c1_16 = arith.constant 1 : index
    %c0_17 = arith.constant 0 : index
    %10 = vector.load %arg6[%c0_15, %c1_16, %c0_17] : memref<18x18x4xbf16, #tpu.memory_space<vmem>>, vector<16x16x4xbf16>
    %11 = vector.shape_cast %10 : vector<16x16x4xbf16> to vector<256x4xbf16>
    %c1_18 = arith.constant 1 : index
    %c0_19 = arith.constant 0 : index
    %c0_20 = arith.constant 0 : index
    %12 = vector.load %arg2[%c1_18, %c0_19, %c0_20] : memref<9x4x128xbf16, #tpu.memory_space<vmem>>, vector<1x4x128xbf16>
    %13 = vector.shape_cast %12 : vector<1x4x128xbf16> to vector<4x128xbf16>
    %cst_21 = arith.constant dense<0.000000e+00> : vector<256x128xf32>
    %14 = tpu.matmul %11, %13, %cst_21 {dimension_numbers = #tpu.dot_dimension_numbers<[1], [0], [0], [1], [0, 0, 1, 1], [], []>} : vector<256x4xbf16>, vector<4x128xbf16>, vector<256x128xf32> -> vector<256x128xf32>
    %15 = arith.addf %9, %14 : vector<256x128xf32>
    %c0_22 = arith.constant 0 : index
    %c2 = arith.constant 2 : index
    %c0_23 = arith.constant 0 : index
    %16 = vector.load %arg6[%c0_22, %c2, %c0_23] : memref<18x18x4xbf16, #tpu.memory_space<vmem>>, vector<16x16x4xbf16>
    %17 = vector.shape_cast %16 : vector<16x16x4xbf16> to vector<256x4xbf16>
    %c2_24 = arith.constant 2 : index
    %c0_25 = arith.constant 0 : index
    %c0_26 = arith.constant 0 : index
    %18 = vector.load %arg2[%c2_24, %c0_25, %c0_26] : memref<9x4x128xbf16, #tpu.memory_space<vmem>>, vector<1x4x128xbf16>
    %19 = vector.shape_cast %18 : vector<1x4x128xbf16> to vector<4x128xbf16>
    %cst_27 = arith.constant dense<0.000000e+00> : vector<256x128xf32>
    %20 = tpu.matmul %17, %19, %cst_27 {dimension_numbers = #tpu.dot_dimension_numbers<[1], [0], [0], [1], [0, 0, 1, 1], [], []>} : vector<256x4xbf16>, vector<4x128xbf16>, vector<256x128xf32> -> vector<256x128xf32>
    %21 = arith.addf %15, %20 : vector<256x128xf32>
    %c1_28 = arith.constant 1 : index
    %c0_29 = arith.constant 0 : index
    %c0_30 = arith.constant 0 : index
    %22 = vector.load %arg6[%c1_28, %c0_29, %c0_30] : memref<18x18x4xbf16, #tpu.memory_space<vmem>>, vector<16x16x4xbf16>
    %23 = vector.shape_cast %22 : vector<16x16x4xbf16> to vector<256x4xbf16>
    %c3 = arith.constant 3 : index
    %c0_31 = arith.constant 0 : index
    %c0_32 = arith.constant 0 : index
    %24 = vector.load %arg2[%c3, %c0_31, %c0_32] : memref<9x4x128xbf16, #tpu.memory_space<vmem>>, vector<1x4x128xbf16>
    %25 = vector.shape_cast %24 : vector<1x4x128xbf16> to vector<4x128xbf16>
    %cst_33 = arith.constant dense<0.000000e+00> : vector<256x128xf32>
    %26 = tpu.matmul %23, %25, %cst_33 {dimension_numbers = #tpu.dot_dimension_numbers<[1], [0], [0], [1], [0, 0, 1, 1], [], []>} : vector<256x4xbf16>, vector<4x128xbf16>, vector<256x128xf32> -> vector<256x128xf32>
    %27 = arith.addf %21, %26 : vector<256x128xf32>
    %c1_34 = arith.constant 1 : index
    %c1_35 = arith.constant 1 : index
    %c0_36 = arith.constant 0 : index
    %28 = vector.load %arg6[%c1_34, %c1_35, %c0_36] : memref<18x18x4xbf16, #tpu.memory_space<vmem>>, vector<16x16x4xbf16>
    %29 = vector.shape_cast %28 : vector<16x16x4xbf16> to vector<256x4xbf16>
    %c4 = arith.constant 4 : index
    %c0_37 = arith.constant 0 : index
    %c0_38 = arith.constant 0 : index
    %30 = vector.load %arg2[%c4, %c0_37, %c0_38] : memref<9x4x128xbf16, #tpu.memory_space<vmem>>, vector<1x4x128xbf16>
    %31 = vector.shape_cast %30 : vector<1x4x128xbf16> to vector<4x128xbf16>
    %cst_39 = arith.constant dense<0.000000e+00> : vector<256x128xf32>
    %32 = tpu.matmul %29, %31, %cst_39 {dimension_numbers = #tpu.dot_dimension_numbers<[1], [0], [0], [1], [0, 0, 1, 1], [], []>} : vector<256x4xbf16>, vector<4x128xbf16>, vector<256x128xf32> -> vector<256x128xf32>
    %33 = arith.addf %27, %32 : vector<256x128xf32>
    %c1_40 = arith.constant 1 : index
    %c2_41 = arith.constant 2 : index
    %c0_42 = arith.constant 0 : index
    %34 = vector.load %arg6[%c1_40, %c2_41, %c0_42] : memref<18x18x4xbf16, #tpu.memory_space<vmem>>, vector<16x16x4xbf16>
    %35 = vector.shape_cast %34 : vector<16x16x4xbf16> to vector<256x4xbf16>
    %c5 = arith.constant 5 : index
    %c0_43 = arith.constant 0 : index
    %c0_44 = arith.constant 0 : index
    %36 = vector.load %arg2[%c5, %c0_43, %c0_44] : memref<9x4x128xbf16, #tpu.memory_space<vmem>>, vector<1x4x128xbf16>
    %37 = vector.shape_cast %36 : vector<1x4x128xbf16> to vector<4x128xbf16>
    %cst_45 = arith.constant dense<0.000000e+00> : vector<256x128xf32>
    %38 = tpu.matmul %35, %37, %cst_45 {dimension_numbers = #tpu.dot_dimension_numbers<[1], [0], [0], [1], [0, 0, 1, 1], [], []>} : vector<256x4xbf16>, vector<4x128xbf16>, vector<256x128xf32> -> vector<256x128xf32>
    %39 = arith.addf %33, %38 : vector<256x128xf32>
    %c2_46 = arith.constant 2 : index
    %c0_47 = arith.constant 0 : index
    %c0_48 = arith.constant 0 : index
    %40 = vector.load %arg6[%c2_46, %c0_47, %c0_48] : memref<18x18x4xbf16, #tpu.memory_space<vmem>>, vector<16x16x4xbf16>
    %41 = vector.shape_cast %40 : vector<16x16x4xbf16> to vector<256x4xbf16>
    %c6 = arith.constant 6 : index
    %c0_49 = arith.constant 0 : index
    %c0_50 = arith.constant 0 : index
    %42 = vector.load %arg2[%c6, %c0_49, %c0_50] : memref<9x4x128xbf16, #tpu.memory_space<vmem>>, vector<1x4x128xbf16>
    %43 = vector.shape_cast %42 : vector<1x4x128xbf16> to vector<4x128xbf16>
    %cst_51 = arith.constant dense<0.000000e+00> : vector<256x128xf32>
    %44 = tpu.matmul %41, %43, %cst_51 {dimension_numbers = #tpu.dot_dimension_numbers<[1], [0], [0], [1], [0, 0, 1, 1], [], []>} : vector<256x4xbf16>, vector<4x128xbf16>, vector<256x128xf32> -> vector<256x128xf32>
    %45 = arith.addf %39, %44 : vector<256x128xf32>
    %c2_52 = arith.constant 2 : index
    %c1_53 = arith.constant 1 : index
    %c0_54 = arith.constant 0 : index
    %46 = vector.load %arg6[%c2_52, %c1_53, %c0_54] : memref<18x18x4xbf16, #tpu.memory_space<vmem>>, vector<16x16x4xbf16>
    %47 = vector.shape_cast %46 : vector<16x16x4xbf16> to vector<256x4xbf16>
    %c7 = arith.constant 7 : index
    %c0_55 = arith.constant 0 : index
    %c0_56 = arith.constant 0 : index
    %48 = vector.load %arg2[%c7, %c0_55, %c0_56] : memref<9x4x128xbf16, #tpu.memory_space<vmem>>, vector<1x4x128xbf16>
    %49 = vector.shape_cast %48 : vector<1x4x128xbf16> to vector<4x128xbf16>
    %cst_57 = arith.constant dense<0.000000e+00> : vector<256x128xf32>
    %50 = tpu.matmul %47, %49, %cst_57 {dimension_numbers = #tpu.dot_dimension_numbers<[1], [0], [0], [1], [0, 0, 1, 1], [], []>} : vector<256x4xbf16>, vector<4x128xbf16>, vector<256x128xf32> -> vector<256x128xf32>
    %51 = arith.addf %45, %50 : vector<256x128xf32>
    %c2_58 = arith.constant 2 : index
    %c2_59 = arith.constant 2 : index
    %c0_60 = arith.constant 0 : index
    %52 = vector.load %arg6[%c2_58, %c2_59, %c0_60] : memref<18x18x4xbf16, #tpu.memory_space<vmem>>, vector<16x16x4xbf16>
    %53 = vector.shape_cast %52 : vector<16x16x4xbf16> to vector<256x4xbf16>
    %c8 = arith.constant 8 : index
    %c0_61 = arith.constant 0 : index
    %c0_62 = arith.constant 0 : index
    %54 = vector.load %arg2[%c8, %c0_61, %c0_62] : memref<9x4x128xbf16, #tpu.memory_space<vmem>>, vector<1x4x128xbf16>
    %55 = vector.shape_cast %54 : vector<1x4x128xbf16> to vector<4x128xbf16>
    %cst_63 = arith.constant dense<0.000000e+00> : vector<256x128xf32>
    %56 = tpu.matmul %53, %55, %cst_63 {dimension_numbers = #tpu.dot_dimension_numbers<[1], [0], [0], [1], [0, 0, 1, 1], [], []>} : vector<256x4xbf16>, vector<4x128xbf16>, vector<256x128xf32> -> vector<256x128xf32>
    %57 = arith.addf %51, %56 : vector<256x128xf32>
    %c0_64 = arith.constant 0 : index
    %c0_65 = arith.constant 0 : index
    %c0_66 = arith.constant 0 : index
    %58 = vector.load %arg3[%c0_64, %c0_65, %c0_66] : memref<1x256x128xf32, #tpu.memory_space<vmem>>, vector<1x256x128xf32>
    %59 = vector.shape_cast %58 : vector<1x256x128xf32> to vector<256x128xf32>
    %60 = vector.shape_cast %57 : vector<256x128xf32> to vector<1x256x128xf32>
    tpu.vector_store %arg3[%c0_64, %c0_65, %c0_66], %60 {strides = array<i32>} : memref<1x256x128xf32, #tpu.memory_space<vmem>>, vector<1x256x128xf32>,
    %cst_67 = arith.constant dense<0.000000e+00> : vector<128xf32>
    %61 = vector.multi_reduction <add>, %57, %cst_67 [0] : vector<256x128xf32> to vector<128xf32>
    %62 = vector.shape_cast %61 : vector<128xf32> to vector<1x128xf32>
    %c0_68 = arith.constant 0 : index
    %c0_69 = arith.constant 0 : index
    %c0_70 = arith.constant 0 : index
    %63 = vector.load %arg4[%c0_68, %c0_69, %c0_70] : memref<1x1x128xf32, #tpu.memory_space<vmem>>, vector<1x1x128xf32>
    %64 = vector.shape_cast %63 : vector<1x1x128xf32> to vector<1x128xf32>
    %65 = vector.shape_cast %62 : vector<1x128xf32> to vector<1x1x128xf32>
    tpu.vector_store %arg4[%c0_68, %c0_69, %c0_70], %65 {strides = array<i32>} : memref<1x1x128xf32, #tpu.memory_space<vmem>>, vector<1x1x128xf32>,
    %66 = arith.mulf %57, %57 : vector<256x128xf32>
    %cst_71 = arith.constant dense<0.000000e+00> : vector<128xf32>
    %67 = vector.multi_reduction <add>, %66, %cst_71 [0] : vector<256x128xf32> to vector<128xf32>
    %68 = vector.shape_cast %67 : vector<128xf32> to vector<1x128xf32>
    %c0_72 = arith.constant 0 : index
    %c0_73 = arith.constant 0 : index
    %c0_74 = arith.constant 0 : index
    %69 = vector.load %arg5[%c0_72, %c0_73, %c0_74] : memref<1x1x128xf32, #tpu.memory_space<vmem>>, vector<1x1x128xf32>
    %70 = vector.shape_cast %69 : vector<1x1x128xf32> to vector<1x128xf32>
    %71 = vector.shape_cast %68 : vector<1x128xf32> to vector<1x1x128xf32>
    tpu.vector_store %arg5[%c0_72, %c0_73, %c0_74], %71 {strides = array<i32>} : memref<1x1x128xf32, #tpu.memory_space<vmem>>, vector<1x1x128xf32>,
    return
  }
  func.func @transform_0(%arg0: i32) -> (i32, i32, i32, i32) {
    %c0_i32 = arith.constant 0 : i32
    %c0_i32_0 = arith.constant 0 : i32
    %c0_i32_1 = arith.constant 0 : i32
    %c0_i32_2 = arith.constant 0 : i32
    return %arg0, %c0_i32, %c0_i32_0, %c0_i32_1 : i32, i32, i32, i32
  }
  func.func @transform_1(%arg0: i32) -> (i32, i32, i32) {
    %c0_i32 = arith.constant 0 : i32
    %c0_i32_0 = arith.constant 0 : i32
    %c0_i32_1 = arith.constant 0 : i32
    %c0_i32_2 = arith.constant 0 : i32
    return %c0_i32, %c0_i32_0, %c0_i32_1 : i32, i32, i32
  }
  func.func @transform_2(%arg0: i32) -> (i32, i32, i32) {
    %c0_i32 = arith.constant 0 : i32
    %c0_i32_0 = arith.constant 0 : i32
    %c0_i32_1 = arith.constant 0 : i32
    return %arg0, %c0_i32, %c0_i32_0 : i32, i32, i32
  }
  func.func @transform_3(%arg0: i32) -> (i32, i32, i32) {
    %c0_i32 = arith.constant 0 : i32
    %c0_i32_0 = arith.constant 0 : i32
    %c0_i32_1 = arith.constant 0 : i32
    return %arg0, %c0_i32, %c0_i32_0 : i32, i32, i32
  }
  func.func @transform_4(%arg0: i32) -> (i32, i32, i32) {
    %c0_i32 = arith.constant 0 : i32
    %c0_i32_0 = arith.constant 0 : i32
    %c0_i32_1 = arith.constant 0 : i32
    return %arg0, %c0_i32, %c0_i32_0 : i32, i32, i32
  }
}

module attributes {stable_mosaic.version = 11 : i64} {
  func.func @kernel(%arg0: i32, %arg1: memref<1x16x16x128xbf16, #tpu.memory_space<vmem>>, %arg2: memref<1152x128xbf16, #tpu.memory_space<vmem>>, %arg3: memref<1x256x128xf32, #tpu.memory_space<vmem>>, %arg4: memref<1x1x128xf32, #tpu.memory_space<vmem>>, %arg5: memref<1x1x128xf32, #tpu.memory_space<vmem>>, %arg6: memref<18x18x128xbf16, #tpu.memory_space<vmem>>) attributes {dimension_semantics = [#tpu.dimension_semantics<parallel>], iteration_bounds = array<i64: 2>, scalar_prefetch = 0 : i64, scratch_operands = 1 : i64, tpu.core_type = #tpu.core_type<tc>, window_params = [{transform_indices = @transform_0, window_bounds = array<i64: 1, 16, 16, 128>}, {pipeline_mode = #tpu.pipeline_mode<synchronous>, transform_indices = @transform_1, window_bounds = array<i64: 1152, 128>}, {transform_indices = @transform_2, window_bounds = array<i64: 1, 256, 128>}, {transform_indices = @transform_3, window_bounds = array<i64: 1, 1, 128>}, {transform_indices = @transform_4, window_bounds = array<i64: 1, 1, 128>}]} {
    %cst = arith.constant 0.000000e+00 : bf16
    %0 = vector.broadcast %cst : bf16 to vector<18x18x128xbf16>
    %c0 = arith.constant 0 : index
    %c0_0 = arith.constant 0 : index
    %c0_1 = arith.constant 0 : index
    %1 = vector.load %arg6[%c0, %c0_0, %c0_1] : memref<18x18x128xbf16, #tpu.memory_space<vmem>>, vector<18x18x128xbf16>
    tpu.vector_store %arg6[%c0, %c0_0, %c0_1], %0 {strides = array<i32>} : memref<18x18x128xbf16, #tpu.memory_space<vmem>>, vector<18x18x128xbf16>,
    %c0_2 = arith.constant 0 : index
    %c0_3 = arith.constant 0 : index
    %c0_4 = arith.constant 0 : index
    %c0_5 = arith.constant 0 : index
    %2 = vector.load %arg1[%c0_2, %c0_3, %c0_4, %c0_5] : memref<1x16x16x128xbf16, #tpu.memory_space<vmem>>, vector<1x16x16x128xbf16>
    %3 = vector.shape_cast %2 : vector<1x16x16x128xbf16> to vector<16x16x128xbf16>
    %c1 = arith.constant 1 : index
    %c1_6 = arith.constant 1 : index
    %c0_7 = arith.constant 0 : index
    %4 = vector.load %arg6[%c1, %c1_6, %c0_7] : memref<18x18x128xbf16, #tpu.memory_space<vmem>>, vector<16x16x128xbf16>
    tpu.vector_store %arg6[%c1, %c1_6, %c0_7], %3 {strides = array<i32>} : memref<18x18x128xbf16, #tpu.memory_space<vmem>>, vector<16x16x128xbf16>,
    %c0_8 = arith.constant 0 : index
    %c0_9 = arith.constant 0 : index
    %c0_10 = arith.constant 0 : index
    %5 = vector.load %arg6[%c0_8, %c0_9, %c0_10] : memref<18x18x128xbf16, #tpu.memory_space<vmem>>, vector<16x16x128xbf16>
    %6 = vector.shape_cast %5 : vector<16x16x128xbf16> to vector<256x128xbf16>
    %c0_11 = arith.constant 0 : index
    %c1_12 = arith.constant 1 : index
    %c0_13 = arith.constant 0 : index
    %7 = vector.load %arg6[%c0_11, %c1_12, %c0_13] : memref<18x18x128xbf16, #tpu.memory_space<vmem>>, vector<16x16x128xbf16>
    %8 = vector.shape_cast %7 : vector<16x16x128xbf16> to vector<256x128xbf16>
    %c0_14 = arith.constant 0 : index
    %c2 = arith.constant 2 : index
    %c0_15 = arith.constant 0 : index
    %9 = vector.load %arg6[%c0_14, %c2, %c0_15] : memref<18x18x128xbf16, #tpu.memory_space<vmem>>, vector<16x16x128xbf16>
    %10 = vector.shape_cast %9 : vector<16x16x128xbf16> to vector<256x128xbf16>
    %c1_16 = arith.constant 1 : index
    %c0_17 = arith.constant 0 : index
    %c0_18 = arith.constant 0 : index
    %11 = vector.load %arg6[%c1_16, %c0_17, %c0_18] : memref<18x18x128xbf16, #tpu.memory_space<vmem>>, vector<16x16x128xbf16>
    %12 = vector.shape_cast %11 : vector<16x16x128xbf16> to vector<256x128xbf16>
    %c1_19 = arith.constant 1 : index
    %c1_20 = arith.constant 1 : index
    %c0_21 = arith.constant 0 : index
    %13 = vector.load %arg6[%c1_19, %c1_20, %c0_21] : memref<18x18x128xbf16, #tpu.memory_space<vmem>>, vector<16x16x128xbf16>
    %14 = vector.shape_cast %13 : vector<16x16x128xbf16> to vector<256x128xbf16>
    %c1_22 = arith.constant 1 : index
    %c2_23 = arith.constant 2 : index
    %c0_24 = arith.constant 0 : index
    %15 = vector.load %arg6[%c1_22, %c2_23, %c0_24] : memref<18x18x128xbf16, #tpu.memory_space<vmem>>, vector<16x16x128xbf16>
    %16 = vector.shape_cast %15 : vector<16x16x128xbf16> to vector<256x128xbf16>
    %c2_25 = arith.constant 2 : index
    %c0_26 = arith.constant 0 : index
    %c0_27 = arith.constant 0 : index
    %17 = vector.load %arg6[%c2_25, %c0_26, %c0_27] : memref<18x18x128xbf16, #tpu.memory_space<vmem>>, vector<16x16x128xbf16>
    %18 = vector.shape_cast %17 : vector<16x16x128xbf16> to vector<256x128xbf16>
    %c2_28 = arith.constant 2 : index
    %c1_29 = arith.constant 1 : index
    %c0_30 = arith.constant 0 : index
    %19 = vector.load %arg6[%c2_28, %c1_29, %c0_30] : memref<18x18x128xbf16, #tpu.memory_space<vmem>>, vector<16x16x128xbf16>
    %20 = vector.shape_cast %19 : vector<16x16x128xbf16> to vector<256x128xbf16>
    %c2_31 = arith.constant 2 : index
    %c2_32 = arith.constant 2 : index
    %c0_33 = arith.constant 0 : index
    %21 = vector.load %arg6[%c2_31, %c2_32, %c0_33] : memref<18x18x128xbf16, #tpu.memory_space<vmem>>, vector<16x16x128xbf16>
    %22 = vector.shape_cast %21 : vector<16x16x128xbf16> to vector<256x128xbf16>
    %23 = tpu.concatenate %6, %8, %10, %12, %14, %16, %18, %20, %22 in 1 : vector<256x128xbf16>, vector<256x128xbf16>, vector<256x128xbf16>, vector<256x128xbf16>, vector<256x128xbf16>, vector<256x128xbf16>, vector<256x128xbf16>, vector<256x128xbf16>, vector<256x128xbf16> -> vector<256x1152xbf16>
    %c0_34 = arith.constant 0 : index
    %c0_35 = arith.constant 0 : index
    %24 = vector.load %arg2[%c0_34, %c0_35] : memref<1152x128xbf16, #tpu.memory_space<vmem>>, vector<1152x128xbf16>
    %cst_36 = arith.constant dense<0.000000e+00> : vector<256x128xf32>
    %25 = tpu.matmul %23, %24, %cst_36 {dimension_numbers = #tpu.dot_dimension_numbers<[1], [0], [0], [1], [0, 0, 1, 1], [], []>} : vector<256x1152xbf16>, vector<1152x128xbf16>, vector<256x128xf32> -> vector<256x128xf32>
    %c0_37 = arith.constant 0 : index
    %c0_38 = arith.constant 0 : index
    %c0_39 = arith.constant 0 : index
    %26 = vector.load %arg3[%c0_37, %c0_38, %c0_39] : memref<1x256x128xf32, #tpu.memory_space<vmem>>, vector<1x256x128xf32>
    %27 = vector.shape_cast %26 : vector<1x256x128xf32> to vector<256x128xf32>
    %28 = vector.shape_cast %25 : vector<256x128xf32> to vector<1x256x128xf32>
    tpu.vector_store %arg3[%c0_37, %c0_38, %c0_39], %28 {strides = array<i32>} : memref<1x256x128xf32, #tpu.memory_space<vmem>>, vector<1x256x128xf32>,
    %cst_40 = arith.constant dense<0.000000e+00> : vector<128xf32>
    %29 = vector.multi_reduction <add>, %25, %cst_40 [0] : vector<256x128xf32> to vector<128xf32>
    %30 = vector.shape_cast %29 : vector<128xf32> to vector<1x128xf32>
    %c0_41 = arith.constant 0 : index
    %c0_42 = arith.constant 0 : index
    %c0_43 = arith.constant 0 : index
    %31 = vector.load %arg4[%c0_41, %c0_42, %c0_43] : memref<1x1x128xf32, #tpu.memory_space<vmem>>, vector<1x1x128xf32>
    %32 = vector.shape_cast %31 : vector<1x1x128xf32> to vector<1x128xf32>
    %33 = vector.shape_cast %30 : vector<1x128xf32> to vector<1x1x128xf32>
    tpu.vector_store %arg4[%c0_41, %c0_42, %c0_43], %33 {strides = array<i32>} : memref<1x1x128xf32, #tpu.memory_space<vmem>>, vector<1x1x128xf32>,
    %34 = arith.mulf %25, %25 : vector<256x128xf32>
    %cst_44 = arith.constant dense<0.000000e+00> : vector<128xf32>
    %35 = vector.multi_reduction <add>, %34, %cst_44 [0] : vector<256x128xf32> to vector<128xf32>
    %36 = vector.shape_cast %35 : vector<128xf32> to vector<1x128xf32>
    %c0_45 = arith.constant 0 : index
    %c0_46 = arith.constant 0 : index
    %c0_47 = arith.constant 0 : index
    %37 = vector.load %arg5[%c0_45, %c0_46, %c0_47] : memref<1x1x128xf32, #tpu.memory_space<vmem>>, vector<1x1x128xf32>
    %38 = vector.shape_cast %37 : vector<1x1x128xf32> to vector<1x128xf32>
    %39 = vector.shape_cast %36 : vector<1x128xf32> to vector<1x1x128xf32>
    tpu.vector_store %arg5[%c0_45, %c0_46, %c0_47], %39 {strides = array<i32>} : memref<1x1x128xf32, #tpu.memory_space<vmem>>, vector<1x1x128xf32>,
    return
  }
  func.func @transform_0(%arg0: i32) -> (i32, i32, i32, i32) {
    %c0_i32 = arith.constant 0 : i32
    %c0_i32_0 = arith.constant 0 : i32
    %c0_i32_1 = arith.constant 0 : i32
    %c0_i32_2 = arith.constant 0 : i32
    return %arg0, %c0_i32, %c0_i32_0, %c0_i32_1 : i32, i32, i32, i32
  }
  func.func @transform_1(%arg0: i32) -> (i32, i32) {
    %c0_i32 = arith.constant 0 : i32
    %c0_i32_0 = arith.constant 0 : i32
    %c0_i32_1 = arith.constant 0 : i32
    return %c0_i32, %c0_i32_0 : i32, i32
  }
  func.func @transform_2(%arg0: i32) -> (i32, i32, i32) {
    %c0_i32 = arith.constant 0 : i32
    %c0_i32_0 = arith.constant 0 : i32
    %c0_i32_1 = arith.constant 0 : i32
    return %arg0, %c0_i32, %c0_i32_0 : i32, i32, i32
  }
  func.func @transform_3(%arg0: i32) -> (i32, i32, i32) {
    %c0_i32 = arith.constant 0 : i32
    %c0_i32_0 = arith.constant 0 : i32
    %c0_i32_1 = arith.constant 0 : i32
    return %arg0, %c0_i32, %c0_i32_0 : i32, i32, i32
  }
  func.func @transform_4(%arg0: i32) -> (i32, i32, i32) {
    %c0_i32 = arith.constant 0 : i32
    %c0_i32_0 = arith.constant 0 : i32
    %c0_i32_1 = arith.constant 0 : i32
    return %arg0, %c0_i32, %c0_i32_0 : i32, i32, i32
  }
}

module attributes {stable_mosaic.version = 11 : i64} {
  func.func @kernel(%arg0: i32, %arg1: i32, %arg2: memref<1x256x128xf32, #tpu.memory_space<vmem>>, %arg3: memref<1x128xf32, #tpu.memory_space<vmem>>, %arg4: memref<1x128xf32, #tpu.memory_space<vmem>>, %arg5: memref<1x256x128xbf16, #tpu.memory_space<vmem>>, %arg6: memref<1x256x128xf32, #tpu.memory_space<vmem>>) attributes {dimension_semantics = [#tpu.dimension_semantics<parallel>, #tpu.dimension_semantics<parallel>], iteration_bounds = array<i64: 2, 1>, scalar_prefetch = 0 : i64, scratch_operands = 0 : i64, tpu.core_type = #tpu.core_type<tc>, window_params = [{transform_indices = @transform_0, window_bounds = array<i64: 1, 256, 128>}, {pipeline_mode = #tpu.pipeline_mode<synchronous>, transform_indices = @transform_1, window_bounds = array<i64: 1, 128>}, {pipeline_mode = #tpu.pipeline_mode<synchronous>, transform_indices = @transform_2, window_bounds = array<i64: 1, 128>}, {transform_indices = @transform_3, window_bounds = array<i64: 1, 256, 128>}, {transform_indices = @transform_4, window_bounds = array<i64: 1, 256, 128>}]} {
    %c0 = arith.constant 0 : index
    %c0_0 = arith.constant 0 : index
    %c0_1 = arith.constant 0 : index
    %0 = vector.load %arg2[%c0, %c0_0, %c0_1] : memref<1x256x128xf32, #tpu.memory_space<vmem>>, vector<1x256x128xf32>
    %1 = vector.shape_cast %0 : vector<1x256x128xf32> to vector<256x128xf32>
    %c0_2 = arith.constant 0 : index
    %c0_3 = arith.constant 0 : index
    %2 = vector.load %arg3[%c0_2, %c0_3] : memref<1x128xf32, #tpu.memory_space<vmem>>, vector<1x128xf32>
    %3 = vector.broadcast %2 : vector<1x128xf32> to vector<256x128xf32>
    %4 = arith.mulf %1, %3 : vector<256x128xf32>
    %c0_4 = arith.constant 0 : index
    %c0_5 = arith.constant 0 : index
    %5 = vector.load %arg4[%c0_4, %c0_5] : memref<1x128xf32, #tpu.memory_space<vmem>>, vector<1x128xf32>
    %6 = vector.broadcast %5 : vector<1x128xf32> to vector<256x128xf32>
    %7 = arith.addf %4, %6 : vector<256x128xf32>
    %c0_6 = arith.constant 0 : index
    %c0_7 = arith.constant 0 : index
    %c0_8 = arith.constant 0 : index
    %8 = vector.load %arg5[%c0_6, %c0_7, %c0_8] : memref<1x256x128xbf16, #tpu.memory_space<vmem>>, vector<1x256x128xbf16>
    %9 = vector.shape_cast %8 : vector<1x256x128xbf16> to vector<256x128xbf16>
    %10 = arith.extf %9 : vector<256x128xbf16> to vector<256x128xf32>
    %11 = arith.addf %7, %10 : vector<256x128xf32>
    %cst = arith.constant 0.000000e+00 : f32
    %12 = vector.broadcast %cst : f32 to vector<256x128xf32>
    %13 = arith.maximumf %11, %12 : vector<256x128xf32>
    %c0_9 = arith.constant 0 : index
    %c0_10 = arith.constant 0 : index
    %c0_11 = arith.constant 0 : index
    %14 = vector.load %arg6[%c0_9, %c0_10, %c0_11] : memref<1x256x128xf32, #tpu.memory_space<vmem>>, vector<1x256x128xf32>
    %15 = vector.shape_cast %14 : vector<1x256x128xf32> to vector<256x128xf32>
    %16 = vector.shape_cast %13 : vector<256x128xf32> to vector<1x256x128xf32>
    tpu.vector_store %arg6[%c0_9, %c0_10, %c0_11], %16 {strides = array<i32>} : memref<1x256x128xf32, #tpu.memory_space<vmem>>, vector<1x256x128xf32>,
    return
  }
  func.func @transform_0(%arg0: i32, %arg1: i32) -> (i32, i32, i32) {
    %c0_i32 = arith.constant 0 : i32
    %c0_i32_0 = arith.constant 0 : i32
    return %arg0, %arg1, %c0_i32 : i32, i32, i32
  }
  func.func @transform_1(%arg0: i32, %arg1: i32) -> (i32, i32) {
    %c0_i32 = arith.constant 0 : i32
    %c0_i32_0 = arith.constant 0 : i32
    %c0_i32_1 = arith.constant 0 : i32
    return %c0_i32, %c0_i32_0 : i32, i32
  }
  func.func @transform_2(%arg0: i32, %arg1: i32) -> (i32, i32) {
    %c0_i32 = arith.constant 0 : i32
    %c0_i32_0 = arith.constant 0 : i32
    %c0_i32_1 = arith.constant 0 : i32
    return %c0_i32, %c0_i32_0 : i32, i32
  }
  func.func @transform_3(%arg0: i32, %arg1: i32) -> (i32, i32, i32) {
    %c0_i32 = arith.constant 0 : i32
    %c0_i32_0 = arith.constant 0 : i32
    return %arg0, %arg1, %c0_i32 : i32, i32, i32
  }
  func.func @transform_4(%arg0: i32, %arg1: i32) -> (i32, i32, i32) {
    %c0_i32 = arith.constant 0 : i32
    %c0_i32_0 = arith.constant 0 : i32
    return %arg0, %arg1, %c0_i32 : i32, i32, i32
  }
}

</mosaic_0001>

<llo_original>
// kernel: residual_block_forward.5
$region0: #{residual_block_forward.5}
  #allocation0 [shape = 'u32[]', space=smem, size = 0x4, offset = 0x4, fixed_abs, tag = 'smem constant byte address 0x4 - core index']
  #allocation1 [shape = 'u32[72,128]{1,0:T(1,128)}', space=vmem, size = 0x9000, scoped, tag = 'internal scratch']
  %s0 = inlined_call_operand.vmem [shape: f32[2,256,128], index: 0, kind: input, shape index: {}]
  %s1 = inlined_call_operand.vmem [shape: f32[1,128], index: 1, kind: input, shape index: {}]
  %s2 = inlined_call_operand.vmem [shape: f32[1,128], index: 2, kind: input, shape index: {}]
  %s3 = inlined_call_operand.vmem [shape: bf16[2,256,128], index: 3, kind: output, shape index: {}]
  %s4 = sld [smem:[#allocation0]]
  $region45: #{residual_block_forward.5} parent=0
    _
  %s6 = ssub.s32 1, %s4
  %s7 = scalar_select 0, %s6, %s4
  loop: start=0, step=1, limit=4
  $region2: #{residual_block_forward.5} parent=0 // loop_pre_header
    _
  $region3: #{residual_block_forward.5} parent=0 // loop_header
    %s9 = sphi 0, %s13
    %p10 = scmp.ge.s32.totalorder %s9, 4
    %s16 = sphi 0, %s28
    %s17 = sphi 0, %s24
    %s18 = sphi 0, %s16
    %s19 = sphi 0, %s17
    %s20 = sphi 0, %s18
    %s21 = sphi 0, %s19
    %s33 = sphi 0, %s35
    %s36 = sphi 0, %s33
    %s37 = sphi 0, %s36
    %s53 = sphi 0, %s37
    %s57 = sphi 0, %s57
    %s59 = sphi 0, %s57
    %s60 = sphi 0, %s59
    %s74 = sphi 0, %s60
    %s78 = sphi 0, %s78
    %s80 = sphi 0, %s78
    %s81 = sphi 0, %s80
    %s95 = sphi 0, %s81
    %s103 = sphi 0, %s105
    %s106 = sphi 0, %s103
    %s107 = sphi 0, %s106
    %s123 = sphi 0, %s107
  $region4: #{residual_block_forward.5} parent=0 // loop_header_branch
    %12 = sbr.rel (%p10) target = $region8
  $region5: #{residual_block_forward.5} parent=0 // loop_body
    %s14 = ssub.s32 %s9, 1
    %s15 = ssub.s32 %s9, 2
    %s22 = sadd.s32 1, %s17
    %p23 = scmp.ge.s32.totalorder %s22, 1
    %s24 = scalar_select %p23, 0, %s22
    %s25 = sadd.s32 1, %s16
    %s26 = scalar_select %p23, %s25, %s16
    %p27 = scmp.ge.s32.totalorder %s26, 2
    %s28 = scalar_select %p27, 0, %s26
    %s29 = ssub.s32 %s16, %s28
    %s30 = ssub.s32 %s17, %s24
    %s31 = sor.u32 %s29, %s30
    %p32 = scmp.eq.s32.totalorder %s31, 0
    %s34 = sadd.s32 %s33, 1
    %s35 = scalar_select %p32, %s33, %s34
    %p38 = pneg %p32
    %p39 = scmp.eq.s32.totalorder %s9, 1
    %p40 = por %p38, %p39
    %p41 = scmp.ne.s32.totalorder %s33, %s36
    %p42 = scmp.eq.s32.totalorder %s9, 0
    %p43 = por %p41, %p42
    %p44 = scmp.ne.s32.totalorder %s33, %s36
    %p45 = scmp.eq.s32.totalorder %s14, 1
    %p46 = por %p44, %p45
    %p47 = scmp.ne.s32.totalorder %s36, %s37
    %p48 = scmp.eq.s32.totalorder %s14, 0
    %p49 = por %p47, %p48
    %p50 = scmp.ne.s32.totalorder %s36, %s37
    %p51 = scmp.eq.s32.totalorder %s15, 1
    %p52 = por %p50, %p51
    %p54 = scmp.ne.s32.totalorder %s37, %s53
    %p55 = scmp.eq.s32.totalorder %s15, 0
    %p56 = por %p54, %p55
    %s58 = sadd.s32 %s57, 1
    %p61 = scmp.eq.s32.totalorder %s9, 1
    %p62 = scmp.ne.s32.totalorder %s57, %s59
    %p63 = scmp.eq.s32.totalorder %s9, 0
    %p64 = por %p62, %p63
    %p65 = scmp.ne.s32.totalorder %s57, %s59
    %p66 = scmp.eq.s32.totalorder %s14, 1
    %p67 = por %p65, %p66
    %p68 = scmp.ne.s32.totalorder %s59, %s60
    %p69 = scmp.eq.s32.totalorder %s14, 0
    %p70 = por %p68, %p69
    %p71 = scmp.ne.s32.totalorder %s59, %s60
    %p72 = scmp.eq.s32.totalorder %s15, 1
    %p73 = por %p71, %p72
    %p75 = scmp.ne.s32.totalorder %s60, %s74
    %p76 = scmp.eq.s32.totalorder %s15, 0
    %p77 = por %p75, %p76
    %s79 = sadd.s32 %s78, 1
    %p82 = scmp.eq.s32.totalorder %s9, 1
    %p83 = scmp.ne.s32.totalorder %s78, %s80
    %p84 = scmp.eq.s32.totalorder %s9, 0
    %p85 = por %p83, %p84
    %p86 = scmp.ne.s32.totalorder %s78, %s80
    %p87 = scmp.eq.s32.totalorder %s14, 1
    %p88 = por %p86, %p87
    %p89 = scmp.ne.s32.totalorder %s80, %s81
    %p90 = scmp.eq.s32.totalorder %s14, 0
    %p91 = por %p89, %p90
    %p92 = scmp.ne.s32.totalorder %s80, %s81
    %p93 = scmp.eq.s32.totalorder %s15, 1
    %p94 = por %p92, %p93
    %p96 = scmp.ne.s32.totalorder %s81, %s95
    %p97 = scmp.eq.s32.totalorder %s15, 0
    %p98 = por %p96, %p97
    %s99 = ssub.s32 %s16, %s28
    %s100 = ssub.s32 %s17, %s24
    %s101 = sor.u32 %s99, %s100
    %p102 = scmp.eq.s32.totalorder %s101, 0
    %s104 = sadd.s32 %s103, 1
    %s105 = scalar_select %p102, %s103, %s104
    %p108 = pneg %p102
    %p109 = scmp.eq.s32.totalorder %s9, 1
    %p110 = por %p108, %p109
    %p111 = scmp.ne.s32.totalorder %s103, %s106
    %p112 = scmp.eq.s32.totalorder %s9, 0
    %p113 = por %p111, %p112
    %p114 = scmp.ne.s32.totalorder %s103, %s106
    %p115 = scmp.eq.s32.totalorder %s14, 1
    %p116 = por %p114, %p115
    %p117 = scmp.ne.s32.totalorder %s106, %s107
    %p118 = scmp.eq.s32.totalorder %s14, 0
    %p119 = por %p117, %p118
    %p120 = scmp.ne.s32.totalorder %s106, %s107
    %p121 = scmp.eq.s32.totalorder %s15, 1
    %p122 = por %p120, %p121
    %p124 = scmp.ne.s32.totalorder %s107, %s123
    %p125 = scmp.eq.s32.totalorder %s15, 0
    %p126 = por %p124, %p125
    %p127 = scmp.le.s32.totalorder 1, %s9
    %p128 = scmp.lt.s32.totalorder %s9, 3
    %p129 = pnand %p127, %p128
    %p130 = pneg %p129
    // Predicated region
    $region9: #{residual_block_forward.5} parent=5 // pred_check
      _
    $region10: #{residual_block_forward.5} parent=5 // pred_check_branch
      %132 = sbr.rel (%p129) target = $region12
    $region11: #{residual_block_forward.5} parent=5 // pred_region
      %s133 = ssub.s32 %s9, 1
      // Predicated region
      $region13: #{residual_block_forward.5} parent=11 // pred_check
        %p134 = pneg %p70
      $region14: #{residual_block_forward.5} parent=11 // pred_check_branch
        %136 = sbr.rel (%p134) target = $region16
      $region15: #{residual_block_forward.5} parent=11 // pred_region
        _
      $region16: #{residual_block_forward.5} parent=11 // pred_fallthru
        _
      // Predicated region
      $region17: #{residual_block_forward.5} parent=11 // pred_check
        %p137 = pneg %p91
      $region18: #{residual_block_forward.5} parent=11 // pred_check_branch
        %139 = sbr.rel (%p137) target = $region20
      $region19: #{residual_block_forward.5} parent=11 // pred_region
        _
      $region20: #{residual_block_forward.5} parent=11 // pred_fallthru
        _
    $region12: #{residual_block_forward.5} parent=5 // pred_fallthru
      _
    %p140 = scmp.lt.s32.totalorder %s9, 2
    // Predicated region
    $region21: #{residual_block_forward.5} parent=5 // pred_check
      %p141 = pneg %p140
    $region22: #{residual_block_forward.5} parent=5 // pred_check_branch
      %143 = sbr.rel (%p141) target = $region24
    $region23: #{residual_block_forward.5} parent=5 // pred_region
      // Predicated region
      $region25: #{residual_block_forward.5} parent=23 // pred_check
        %p144 = pneg %p43
      $region26: #{residual_block_forward.5} parent=23 // pred_check_branch
        %146 = sbr.rel (%p144) target = $region28
      $region27: #{residual_block_forward.5} parent=23 // pred_region
        %s147 = smul.u32 32, %s17
        %p148 = scmp.lt.s32.totalorder %s16, 1
        %s149 = scalar_select %p148, %s16, 1
        %p150 = scmp.lt.s32.totalorder %s147, 31
        %s151 = scalar_select %p150, %s147, 31
        %s152 = smul.addr %s149, 32
        %s153 = sadd.s32 %s151, %s152
        %s154 = smul.addr %s153, 8
        %s155 = scalar_lea.vmem %s0, %s154
        %s156 = smul.u32 32, %s17
      $region28: #{residual_block_forward.5} parent=23 // pred_fallthru
        _
    $region24: #{residual_block_forward.5} parent=5 // pred_fallthru
      _
    %p157 = scmp.le.s32.totalorder 1, %s9
    %p158 = scmp.lt.s32.totalorder %s9, 3
    %p159 = pnand %p157, %p158
    %p160 = pneg %p159
    // Predicated region
    $region29: #{residual_block_forward.5} parent=5 // pred_check
      _
    $region30: #{residual_block_forward.5} parent=5 // pred_check_branch
      %162 = sbr.rel (%p159) target = $region32
    $region31: #{residual_block_forward.5} parent=5 // pred_region
      %s163 = ssub.s32 %s9, 1
      %s164 = smul.u32 32, %s19
      %p165 = scmp.lt.s32.totalorder %s18, 1
      %s166 = scalar_select %p165, %s18, 1
      %p167 = scmp.lt.s32.totalorder %s164, 31
      %s168 = scalar_select %p167, %s164, 31
      %s169 = smul.addr %s166, 32
      %s170 = sadd.s32 %s168, %s169
      %s171 = smul.addr %s170, 8
      %s172 = scalar_lea.vmem %s0, %s171
      %p173 = pneg %p49
      %p174 = pneg %p46
      %p175 = pneg %p70
      %p176 = pneg %p67
      %p177 = pneg %p91
      %p178 = pneg %p88
      %p179 = pneg %p119
      %p180 = pneg %p116
      %s181 = smul.u32 32, %s19
      %p182 = scmp.lt.s32.totalorder %s18, 1
      %s183 = scalar_select %p182, %s18, 1
      %p184 = scmp.lt.s32.totalorder %s181, 31
      %s185 = scalar_select %p184, %s181, 31
      %s186 = smul.addr %s183, 32
      %s187 = sadd.s32 %s185, %s186
      %s188 = smul.addr %s187, 4
      %s189 = scalar_lea.vmem %s3, %s188
      %s190 = smul.u32 32, %s19
      %p191 = scmp.lt.s32.totalorder %s18, 1
      %s192 = scalar_select %p191, %s18, 1
      %p193 = scmp.lt.s32.totalorder %s190, 31
      %s194 = scalar_select %p193, %s190, 31
      %s195 = smul.addr %s192, 32
      %s196 = sadd.s32 %s194, %s195
      %s197 = smul.addr %s196, 8
      %s198 = scalar_lea.vmem %s0, %s197
      %s199 = smul.u32 32, %s19
      %s200 = smul.u32 32, %s19
      %p201 = scmp.lt.s32.totalorder %s18, 1
      %s202 = scalar_select %p201, %s18, 1
      %p203 = scmp.lt.s32.totalorder %s200, 31
      %s204 = scalar_select %p203, %s200, 31
      %s205 = smul.addr %s202, 32
      %s206 = sadd.s32 %s204, %s205
      %s207 = smul.addr %s206, 4
      %s208 = scalar_lea.vmem %s3, %s207
      %s209 = smul.u32 32, %s19
      %v210 = vld [vmem:[%s198] sm:$0xff]
      %v211 = vld [vmem:[%s198 + $0x8] sm:$0xff]
      %v212 = vld [vmem:[%s198 + $0x10] sm:$0xff]
      %v213 = vld [vmem:[%s198 + $0x18] sm:$0xff]
      %v214 = vld [vmem:[%s198 + $0x20] sm:$0xff]
      %v215 = vld [vmem:[%s198 + $0x28] sm:$0xff]
      %v216 = vld [vmem:[%s198 + $0x30] sm:$0xff]
      %v217 = vld [vmem:[%s198 + $0x38] sm:$0xff]
      %v218 = vld [vmem:[%s198 + $0x40] sm:$0xff]
      %v219 = vld [vmem:[%s198 + $0x48] sm:$0xff]
      %v220 = vld [vmem:[%s198 + $0x50] sm:$0xff]
      %v221 = vld [vmem:[%s198 + $0x58] sm:$0xff]
      %v222 = vld [vmem:[%s198 + $0x60] sm:$0xff]
      %v223 = vld [vmem:[%s198 + $0x68] sm:$0xff]
      %v224 = vld [vmem:[%s198 + $0x70] sm:$0xff]
      %v225 = vld [vmem:[%s198 + $0x78] sm:$0xff]
      %v226 = vld [vmem:[%s198 + $0x80] sm:$0xff]
      %v227 = vld [vmem:[%s198 + $0x88] sm:$0xff]
      %v228 = vld [vmem:[%s198 + $0x90] sm:$0xff]
      %v229 = vld [vmem:[%s198 + $0x98] sm:$0xff]
      %v230 = vld [vmem:[%s198 + $0xa0] sm:$0xff]
      %v231 = vld [vmem:[%s198 + $0xa8] sm:$0xff]
      %v232 = vld [vmem:[%s198 + $0xb0] sm:$0xff]
      %v233 = vld [vmem:[%s198 + $0xb8] sm:$0xff]
      %v234 = vld [vmem:[%s198 + $0xc0] sm:$0xff]
      %v235 = vld [vmem:[%s198 + $0xc8] sm:$0xff]
      %v236 = vld [vmem:[%s198 + $0xd0] sm:$0xff]
      %v237 = vld [vmem:[%s198 + $0xd8] sm:$0xff]
      %v238 = vld [vmem:[%s198 + $0xe0] sm:$0xff]
      %v239 = vld [vmem:[%s198 + $0xe8] sm:$0xff]
      %v240 = vld [vmem:[%s198 + $0xf0] sm:$0xff]
      %v241 = vld [vmem:[%s198 + $0xf8] sm:$0xff]
      %v242 = vld [vmem:[%s1] sm:$0x1]
      %v244 = vperm.slane %v242, 0
      %v246 = vmul.f32 %v210, %v244
      %v247 = vmul.f32 %v211, %v244
      %v248 = vmul.f32 %v212, %v244
      %v249 = vmul.f32 %v213, %v244
      %v250 = vmul.f32 %v214, %v244
      %v251 = vmul.f32 %v215, %v244
      %v252 = vmul.f32 %v216, %v244
      %v253 = vmul.f32 %v217, %v244
      %v254 = vmul.f32 %v218, %v244
      %v255 = vmul.f32 %v219, %v244
      %v256 = vmul.f32 %v220, %v244
      %v257 = vmul.f32 %v221, %v244
      %v258 = vmul.f32 %v222, %v244
      %v259 = vmul.f32 %v223, %v244
      %v260 = vmul.f32 %v224, %v244
      %v261 = vmul.f32 %v225, %v244
      %v262 = vmul.f32 %v226, %v244
      %v263 = vmul.f32 %v227, %v244
      %v264 = vmul.f32 %v228, %v244
      %v265 = vmul.f32 %v229, %v244
      %v266 = vmul.f32 %v230, %v244
      %v267 = vmul.f32 %v231, %v244
      %v268 = vmul.f32 %v232, %v244
      %v269 = vmul.f32 %v233, %v244
      %v270 = vmul.f32 %v234, %v244
      %v271 = vmul.f32 %v235, %v244
      %v272 = vmul.f32 %v236, %v244
      %v273 = vmul.f32 %v237, %v244
      %v274 = vmul.f32 %v238, %v244
      %v275 = vmul.f32 %v239, %v244
      %v276 = vmul.f32 %v240, %v244
      %v277 = vmul.f32 %v241, %v244
      %v278 = vld [vmem:[%s2] sm:$0x1]
      %v280 = vperm.slane %v278, 0
      %v282 = vadd.f32 %v246, %v280
      %v283 = vadd.f32 %v247, %v280
      %v284 = vadd.f32 %v248, %v280
      %v285 = vadd.f32 %v249, %v280
      %v286 = vadd.f32 %v250, %v280
      %v287 = vadd.f32 %v251, %v280
      %v288 = vadd.f32 %v252, %v280
      %v289 = vadd.f32 %v253, %v280
      %v290 = vadd.f32 %v254, %v280
      %v291 = vadd.f32 %v255, %v280
      %v292 = vadd.f32 %v256, %v280
      %v293 = vadd.f32 %v257, %v280
      %v294 = vadd.f32 %v258, %v280
      %v295 = vadd.f32 %v259, %v280
      %v296 = vadd.f32 %v260, %v280
      %v297 = vadd.f32 %v261, %v280
      %v298 = vadd.f32 %v262, %v280
      %v299 = vadd.f32 %v263, %v280
      %v300 = vadd.f32 %v264, %v280
      %v301 = vadd.f32 %v265, %v280
      %v302 = vadd.f32 %v266, %v280
      %v303 = vadd.f32 %v267, %v280
      %v304 = vadd.f32 %v268, %v280
      %v305 = vadd.f32 %v269, %v280
      %v306 = vadd.f32 %v270, %v280
      %v307 = vadd.f32 %v271, %v280
      %v308 = vadd.f32 %v272, %v280
      %v309 = vadd.f32 %v273, %v280
      %v310 = vadd.f32 %v274, %v280
      %v311 = vadd.f32 %v275, %v280
      %v312 = vadd.f32 %v276, %v280
      %v313 = vadd.f32 %v277, %v280
      %v314 = vmax.f32 %v282, 0.0
      %v315 = vmax.f32 %v283, 0.0
      %v316 = vmax.f32 %v284, 0.0
      %v317 = vmax.f32 %v285, 0.0
      %v318 = vmax.f32 %v286, 0.0
      %v319 = vmax.f32 %v287, 0.0
      %v320 = vmax.f32 %v288, 0.0
      %v321 = vmax.f32 %v289, 0.0
      %v322 = vmax.f32 %v290, 0.0
      %v323 = vmax.f32 %v291, 0.0
      %v324 = vmax.f32 %v292, 0.0
      %v325 = vmax.f32 %v293, 0.0
      %v326 = vmax.f32 %v294, 0.0
      %v327 = vmax.f32 %v295, 0.0
      %v328 = vmax.f32 %v296, 0.0
      %v329 = vmax.f32 %v297, 0.0
      %v330 = vmax.f32 %v298, 0.0
      %v331 = vmax.f32 %v299, 0.0
      %v332 = vmax.f32 %v300, 0.0
      %v333 = vmax.f32 %v301, 0.0
      %v334 = vmax.f32 %v302, 0.0
      %v335 = vmax.f32 %v303, 0.0
      %v336 = vmax.f32 %v304, 0.0
      %v337 = vmax.f32 %v305, 0.0
      %v338 = vmax.f32 %v306, 0.0
      %v339 = vmax.f32 %v307, 0.0
      %v340 = vmax.f32 %v308, 0.0
      %v341 = vmax.f32 %v309, 0.0
      %v342 = vmax.f32 %v310, 0.0
      %v343 = vmax.f32 %v311, 0.0
      %v344 = vmax.f32 %v312, 0.0
      %v345 = vmax.f32 %v313, 0.0
      %v346 = vpack.c.bf16 %v314, %v314
      %v347 = vpack.c.bf16 %v315, %v315
      %v348 = vpack.c.bf16 %v316, %v316
      %v349 = vpack.c.bf16 %v317, %v317
      %v350 = vpack.c.bf16 %v318, %v318
      %v351 = vpack.c.bf16 %v319, %v319
      %v352 = vpack.c.bf16 %v320, %v320
      %v353 = vpack.c.bf16 %v321, %v321
      %v354 = vpack.c.bf16 %v322, %v322
      %v355 = vpack.c.bf16 %v323, %v323
      %v356 = vpack.c.bf16 %v324, %v324
      %v357 = vpack.c.bf16 %v325, %v325
      %v358 = vpack.c.bf16 %v326, %v326
      %v359 = vpack.c.bf16 %v327, %v327
      %v360 = vpack.c.bf16 %v328, %v328
      %v361 = vpack.c.bf16 %v329, %v329
      %v362 = vpack.c.bf16 %v330, %v330
      %v363 = vpack.c.bf16 %v331, %v331
      %v364 = vpack.c.bf16 %v332, %v332
      %v365 = vpack.c.bf16 %v333, %v333
      %v366 = vpack.c.bf16 %v334, %v334
      %v367 = vpack.c.bf16 %v335, %v335
      %v368 = vpack.c.bf16 %v336, %v336
      %v369 = vpack.c.bf16 %v337, %v337
      %v370 = vpack.c.bf16 %v338, %v338
      %v371 = vpack.c.bf16 %v339, %v339
      %v372 = vpack.c.bf16 %v340, %v340
      %v373 = vpack.c.bf16 %v341, %v341
      %v374 = vpack.c.bf16 %v342, %v342
      %v375 = vpack.c.bf16 %v343, %v343
      %v376 = vpack.c.bf16 %v344, %v344
      %v377 = vpack.c.bf16 %v345, %v345
      %378 = vst [vmem:[%s208] sm:$0xf] %v346
      %379 = vst [vmem:[%s208 + $0x4] sm:$0xf] %v347
      %380 = vst [vmem:[%s208 + $0x8] sm:$0xf] %v348
      %381 = vst [vmem:[%s208 + $0xc] sm:$0xf] %v349
      %382 = vst [vmem:[%s208 + $0x10] sm:$0xf] %v350
      %383 = vst [vmem:[%s208 + $0x14] sm:$0xf] %v351
      %384 = vst [vmem:[%s208 + $0x18] sm:$0xf] %v352
      %385 = vst [vmem:[%s208 + $0x1c] sm:$0xf] %v353
      %386 = vst [vmem:[%s208 + $0x20] sm:$0xf] %v354
      %387 = vst [vmem:[%s208 + $0x24] sm:$0xf] %v355
      %388 = vst [vmem:[%s208 + $0x28] sm:$0xf] %v356
      %389 = vst [vmem:[%s208 + $0x2c] sm:$0xf] %v357
      %390 = vst [vmem:[%s208 + $0x30] sm:$0xf] %v358
      %391 = vst [vmem:[%s208 + $0x34] sm:$0xf] %v359
      %392 = vst [vmem:[%s208 + $0x38] sm:$0xf] %v360
      %393 = vst [vmem:[%s208 + $0x3c] sm:$0xf] %v361
      %394 = vst [vmem:[%s208 + $0x40] sm:$0xf] %v362
      %395 = vst [vmem:[%s208 + $0x44] sm:$0xf] %v363
      %396 = vst [vmem:[%s208 + $0x48] sm:$0xf] %v364
      %397 = vst [vmem:[%s208 + $0x4c] sm:$0xf] %v365
      %398 = vst [vmem:[%s208 + $0x50] sm:$0xf] %v366
      %399 = vst [vmem:[%s208 + $0x54] sm:$0xf] %v367
      %400 = vst [vmem:[%s208 + $0x58] sm:$0xf] %v368
      %401 = vst [vmem:[%s208 + $0x5c] sm:$0xf] %v369
      %402 = vst [vmem:[%s208 + $0x60] sm:$0xf] %v370
      %403 = vst [vmem:[%s208 + $0x64] sm:$0xf] %v371
      %404 = vst [vmem:[%s208 + $0x68] sm:$0xf] %v372
      %405 = vst [vmem:[%s208 + $0x6c] sm:$0xf] %v373
      %406 = vst [vmem:[%s208 + $0x70] sm:$0xf] %v374
      %407 = vst [vmem:[%s208 + $0x74] sm:$0xf] %v375
      %408 = vst [vmem:[%s208 + $0x78] sm:$0xf] %v376
      %409 = vst [vmem:[%s208 + $0x7c] sm:$0xf] %v377
      %s410 = smul.u32 32, %s19
      %p411 = scmp.lt.s32.totalorder %s18, 1
      %s412 = scalar_select %p411, %s18, 1
      %p413 = scmp.lt.s32.totalorder %s410, 31
      %s414 = scalar_select %p413, %s410, 31
      %s415 = smul.addr %s412, 32
      %s416 = sadd.s32 %s414, %s415
      %s417 = smul.addr %s416, 4
      %s418 = scalar_lea.vmem %s3, %s417
      // Predicated region
      $region33: #{residual_block_forward.5} parent=31 // pred_check
        %p419 = pneg %p116
      $region34: #{residual_block_forward.5} parent=31 // pred_check_branch
        %421 = sbr.rel (%p419) target = $region36
      $region35: #{residual_block_forward.5} parent=31 // pred_region
        %s422 = smul.u32 32, %s19
      $region36: #{residual_block_forward.5} parent=31 // pred_fallthru
        _
    $region32: #{residual_block_forward.5} parent=5 // pred_fallthru
      _
    %p423 = scmp.le.s32.totalorder 2, %s9
    // Predicated region
    $region37: #{residual_block_forward.5} parent=5 // pred_check
      %p424 = pneg %p423
    $region38: #{residual_block_forward.5} parent=5 // pred_check_branch
      %426 = sbr.rel (%p424) target = $region40
    $region39: #{residual_block_forward.5} parent=5 // pred_region
      %s427 = ssub.s32 %s9, 2
      // Predicated region
      $region41: #{residual_block_forward.5} parent=39 // pred_check
        %p428 = pneg %p122
      $region42: #{residual_block_forward.5} parent=39 // pred_check_branch
        %430 = sbr.rel (%p428) target = $region44
      $region43: #{residual_block_forward.5} parent=39 // pred_region
        %s431 = smul.u32 32, %s21
        %p432 = scmp.lt.s32.totalorder %s20, 1
        %s433 = scalar_select %p432, %s20, 1
        %p434 = scmp.lt.s32.totalorder %s431, 31
        %s435 = scalar_select %p434, %s431, 31
        %s436 = smul.addr %s433, 32
        %s437 = sadd.s32 %s435, %s436
        %s438 = smul.addr %s437, 4
        %s439 = scalar_lea.vmem %s3, %s438
      $region44: #{residual_block_forward.5} parent=39 // pred_fallthru
        _
    $region40: #{residual_block_forward.5} parent=5 // pred_fallthru
      _
  $region6: #{residual_block_forward.5} parent=0 // loop_footer
    %s13 = sadd.s32 1, %s9
  $region7: #{residual_block_forward.5} parent=0 // loop_footer_branch
    %8 = sbr.rel target = $region3
  $region8: #{residual_block_forward.5} parent=0 // loop_exit
    _

// kernel: residual_block_forward.7
$region0: #{residual_block_forward.7}
  #allocation0 [shape = 'u32[]', space=smem, size = 0x4, offset = 0x4, fixed_abs, tag = 'smem constant byte address 0x4 - core index']
  #allocation1 [shape = 'u32[72,128]{1,0:T(1,128)}', space=vmem, size = 0x9000, scoped, tag = 'internal scratch']
  %s0 = inlined_call_operand.vmem [shape: f32[2,256,128], index: 0, kind: input, shape index: {}]
  %s1 = inlined_call_operand.vmem [shape: f32[1,128], index: 1, kind: input, shape index: {}]
  %s2 = inlined_call_operand.vmem [shape: f32[1,128], index: 2, kind: input, shape index: {}]
  %s3 = inlined_call_operand.vmem [shape: bf16[2,256,128], index: 3, kind: input, shape index: {}]
  %s4 = inlined_call_operand.vmem [shape: f32[2,256,128], index: 4, kind: output, shape index: {}]
  %s5 = sld [smem:[#allocation0]]
  $region49: #{residual_block_forward.7} parent=0
    _
  %s7 = ssub.s32 1, %s5
  %s8 = scalar_select 0, %s7, %s5
  loop: start=0, step=1, limit=4
  $region2: #{residual_block_forward.7} parent=0 // loop_pre_header
    _
  $region3: #{residual_block_forward.7} parent=0 // loop_header
    %s10 = sphi 0, %s14
    %p11 = scmp.ge.s32.totalorder %s10, 4
    %s17 = sphi 0, %s29
    %s18 = sphi 0, %s25
    %s19 = sphi 0, %s17
    %s20 = sphi 0, %s18
    %s21 = sphi 0, %s19
    %s22 = sphi 0, %s20
    %s34 = sphi 0, %s36
    %s37 = sphi 0, %s34
    %s38 = sphi 0, %s37
    %s54 = sphi 0, %s38
    %s58 = sphi 0, %s58
    %s60 = sphi 0, %s58
    %s61 = sphi 0, %s60
    %s75 = sphi 0, %s61
    %s79 = sphi 0, %s79
    %s81 = sphi 0, %s79
    %s82 = sphi 0, %s81
    %s96 = sphi 0, %s82
    %s104 = sphi 0, %s106
    %s107 = sphi 0, %s104
    %s108 = sphi 0, %s107
    %s124 = sphi 0, %s108
    %s132 = sphi 0, %s134
    %s135 = sphi 0, %s132
    %s136 = sphi 0, %s135
    %s152 = sphi 0, %s136
  $region4: #{residual_block_forward.7} parent=0 // loop_header_branch
    %13 = sbr.rel (%p11) target = $region8
  $region5: #{residual_block_forward.7} parent=0 // loop_body
    %s15 = ssub.s32 %s10, 1
    %s16 = ssub.s32 %s10, 2
    %s23 = sadd.s32 1, %s18
    %p24 = scmp.ge.s32.totalorder %s23, 1
    %s25 = scalar_select %p24, 0, %s23
    %s26 = sadd.s32 1, %s17
    %s27 = scalar_select %p24, %s26, %s17
    %p28 = scmp.ge.s32.totalorder %s27, 2
    %s29 = scalar_select %p28, 0, %s27
    %s30 = ssub.s32 %s17, %s29
    %s31 = ssub.s32 %s18, %s25
    %s32 = sor.u32 %s30, %s31
    %p33 = scmp.eq.s32.totalorder %s32, 0
    %s35 = sadd.s32 %s34, 1
    %s36 = scalar_select %p33, %s34, %s35
    %p39 = pneg %p33
    %p40 = scmp.eq.s32.totalorder %s10, 1
    %p41 = por %p39, %p40
    %p42 = scmp.ne.s32.totalorder %s34, %s37
    %p43 = scmp.eq.s32.totalorder %s10, 0
    %p44 = por %p42, %p43
    %p45 = scmp.ne.s32.totalorder %s34, %s37
    %p46 = scmp.eq.s32.totalorder %s15, 1
    %p47 = por %p45, %p46
    %p48 = scmp.ne.s32.totalorder %s37, %s38
    %p49 = scmp.eq.s32.totalorder %s15, 0
    %p50 = por %p48, %p49
    %p51 = scmp.ne.s32.totalorder %s37, %s38
    %p52 = scmp.eq.s32.totalorder %s16, 1
    %p53 = por %p51, %p52
    %p55 = scmp.ne.s32.totalorder %s38, %s54
    %p56 = scmp.eq.s32.totalorder %s16, 0
    %p57 = por %p55, %p56
    %s59 = sadd.s32 %s58, 1
    %p62 = scmp.eq.s32.totalorder %s10, 1
    %p63 = scmp.ne.s32.totalorder %s58, %s60
    %p64 = scmp.eq.s32.totalorder %s10, 0
    %p65 = por %p63, %p64
    %p66 = scmp.ne.s32.totalorder %s58, %s60
    %p67 = scmp.eq.s32.totalorder %s15, 1
    %p68 = por %p66, %p67
    %p69 = scmp.ne.s32.totalorder %s60, %s61
    %p70 = scmp.eq.s32.totalorder %s15, 0
    %p71 = por %p69, %p70
    %p72 = scmp.ne.s32.totalorder %s60, %s61
    %p73 = scmp.eq.s32.totalorder %s16, 1
    %p74 = por %p72, %p73
    %p76 = scmp.ne.s32.totalorder %s61, %s75
    %p77 = scmp.eq.s32.totalorder %s16, 0
    %p78 = por %p76, %p77
    %s80 = sadd.s32 %s79, 1
    %p83 = scmp.eq.s32.totalorder %s10, 1
    %p84 = scmp.ne.s32.totalorder %s79, %s81
    %p85 = scmp.eq.s32.totalorder %s10, 0
    %p86 = por %p84, %p85
    %p87 = scmp.ne.s32.totalorder %s79, %s81
    %p88 = scmp.eq.s32.totalorder %s15, 1
    %p89 = por %p87, %p88
    %p90 = scmp.ne.s32.totalorder %s81, %s82
    %p91 = scmp.eq.s32.totalorder %s15, 0
    %p92 = por %p90, %p91
    %p93 = scmp.ne.s32.totalorder %s81, %s82
    %p94 = scmp.eq.s32.totalorder %s16, 1
    %p95 = por %p93, %p94
    %p97 = scmp.ne.s32.totalorder %s82, %s96
    %p98 = scmp.eq.s32.totalorder %s16, 0
    %p99 = por %p97, %p98
    %s100 = ssub.s32 %s17, %s29
    %s101 = ssub.s32 %s18, %s25
    %s102 = sor.u32 %s100, %s101
    %p103 = scmp.eq.s32.totalorder %s102, 0
    %s105 = sadd.s32 %s104, 1
    %s106 = scalar_select %p103, %s104, %s105
    %p109 = pneg %p103
    %p110 = scmp.eq.s32.totalorder %s10, 1
    %p111 = por %p109, %p110
    %p112 = scmp.ne.s32.totalorder %s104, %s107
    %p113 = scmp.eq.s32.totalorder %s10, 0
    %p114 = por %p112, %p113
    %p115 = scmp.ne.s32.totalorder %s104, %s107
    %p116 = scmp.eq.s32.totalorder %s15, 1
    %p117 = por %p115, %p116
    %p118 = scmp.ne.s32.totalorder %s107, %s108
    %p119 = scmp.eq.s32.totalorder %s15, 0
    %p120 = por %p118, %p119
    %p121 = scmp.ne.s32.totalorder %s107, %s108
    %p122 = scmp.eq.s32.totalorder %s16, 1
    %p123 = por %p121, %p122
    %p125 = scmp.ne.s32.totalorder %s108, %s124
    %p126 = scmp.eq.s32.totalorder %s16, 0
    %p127 = por %p125, %p126
    %s128 = ssub.s32 %s17, %s29
    %s129 = ssub.s32 %s18, %s25
    %s130 = sor.u32 %s128, %s129
    %p131 = scmp.eq.s32.totalorder %s130, 0
    %s133 = sadd.s32 %s132, 1
    %s134 = scalar_select %p131, %s132, %s133
    %p137 = pneg %p131
    %p138 = scmp.eq.s32.totalorder %s10, 1
    %p139 = por %p137, %p138
    %p140 = scmp.ne.s32.totalorder %s132, %s135
    %p141 = scmp.eq.s32.totalorder %s10, 0
    %p142 = por %p140, %p141
    %p143 = scmp.ne.s32.totalorder %s132, %s135
    %p144 = scmp.eq.s32.totalorder %s15, 1
    %p145 = por %p143, %p144
    %p146 = scmp.ne.s32.totalorder %s135, %s136
    %p147 = scmp.eq.s32.totalorder %s15, 0
    %p148 = por %p146, %p147
    %p149 = scmp.ne.s32.totalorder %s135, %s136
    %p150 = scmp.eq.s32.totalorder %s16, 1
    %p151 = por %p149, %p150
    %p153 = scmp.ne.s32.totalorder %s136, %s152
    %p154 = scmp.eq.s32.totalorder %s16, 0
    %p155 = por %p153, %p154
    %p156 = scmp.le.s32.totalorder 1, %s10
    %p157 = scmp.lt.s32.totalorder %s10, 3
    %p158 = pnand %p156, %p157
    %p159 = pneg %p158
    // Predicated region
    $region9: #{residual_block_forward.7} parent=5 // pred_check
      _
    $region10: #{residual_block_forward.7} parent=5 // pred_check_branch
      %161 = sbr.rel (%p158) target = $region12
    $region11: #{residual_block_forward.7} parent=5 // pred_region
      %s162 = ssub.s32 %s10, 1
      // Predicated region
      $region13: #{residual_block_forward.7} parent=11 // pred_check
        %p163 = pneg %p71
      $region14: #{residual_block_forward.7} parent=11 // pred_check_branch
        %165 = sbr.rel (%p163) target = $region16
      $region15: #{residual_block_forward.7} parent=11 // pred_region
        _
      $region16: #{residual_block_forward.7} parent=11 // pred_fallthru
        _
      // Predicated region
      $region17: #{residual_block_forward.7} parent=11 // pred_check
        %p166 = pneg %p92
      $region18: #{residual_block_forward.7} parent=11 // pred_check_branch
        %168 = sbr.rel (%p166) target = $region20
      $region19: #{residual_block_forward.7} parent=11 // pred_region
        _
      $region20: #{residual_block_forward.7} parent=11 // pred_fallthru
        _
    $region12: #{residual_block_forward.7} parent=5 // pred_fallthru
      _
    %p169 = scmp.lt.s32.totalorder %s10, 2
    // Predicated region
    $region21: #{residual_block_forward.7} parent=5 // pred_check
      %p170 = pneg %p169
    $region22: #{residual_block_forward.7} parent=5 // pred_check_branch
      %172 = sbr.rel (%p170) target = $region24
    $region23: #{residual_block_forward.7} parent=5 // pred_region
      // Predicated region
      $region25: #{residual_block_forward.7} parent=23 // pred_check
        %p173 = pneg %p44
      $region26: #{residual_block_forward.7} parent=23 // pred_check_branch
        %175 = sbr.rel (%p173) target = $region28
      $region27: #{residual_block_forward.7} parent=23 // pred_region
        %s176 = smul.u32 32, %s18
        %p177 = scmp.lt.s32.totalorder %s17, 1
        %s178 = scalar_select %p177, %s17, 1
        %p179 = scmp.lt.s32.totalorder %s176, 31
        %s180 = scalar_select %p179, %s176, 31
        %s181 = smul.addr %s178, 32
        %s182 = sadd.s32 %s180, %s181
        %s183 = smul.addr %s182, 8
        %s184 = scalar_lea.vmem %s0, %s183
        %s185 = smul.u32 32, %s18
      $region28: #{residual_block_forward.7} parent=23 // pred_fallthru
        _
      // Predicated region
      $region29: #{residual_block_forward.7} parent=23 // pred_check
        %p186 = pneg %p114
      $region30: #{residual_block_forward.7} parent=23 // pred_check_branch
        %188 = sbr.rel (%p186) target = $region32
      $region31: #{residual_block_forward.7} parent=23 // pred_region
        %s189 = smul.u32 32, %s18
        %p190 = scmp.lt.s32.totalorder %s17, 1
        %s191 = scalar_select %p190, %s17, 1
        %p192 = scmp.lt.s32.totalorder %s189, 31
        %s193 = scalar_select %p192, %s189, 31
        %s194 = smul.addr %s191, 32
        %s195 = sadd.s32 %s193, %s194
        %s196 = smul.addr %s195, 4
        %s197 = scalar_lea.vmem %s3, %s196
        %s198 = smul.u32 32, %s18
      $region32: #{residual_block_forward.7} parent=23 // pred_fallthru
        _
    $region24: #{residual_block_forward.7} parent=5 // pred_fallthru
      _
    %p199 = scmp.le.s32.totalorder 1, %s10
    %p200 = scmp.lt.s32.totalorder %s10, 3
    %p201 = pnand %p199, %p200
    %p202 = pneg %p201
    // Predicated region
    $region33: #{residual_block_forward.7} parent=5 // pred_check
      _
    $region34: #{residual_block_forward.7} parent=5 // pred_check_branch
      %204 = sbr.rel (%p201) target = $region36
    $region35: #{residual_block_forward.7} parent=5 // pred_region
      %s205 = ssub.s32 %s10, 1
      %s206 = smul.u32 32, %s20
      %p207 = scmp.lt.s32.totalorder %s19, 1
      %s208 = scalar_select %p207, %s19, 1
      %p209 = scmp.lt.s32.totalorder %s206, 31
      %s210 = scalar_select %p209, %s206, 31
      %s211 = smul.addr %s208, 32
      %s212 = sadd.s32 %s210, %s211
      %s213 = smul.addr %s212, 8
      %s214 = scalar_lea.vmem %s0, %s213
      %p215 = pneg %p50
      %p216 = pneg %p47
      %p217 = pneg %p71
      %p218 = pneg %p68
      %p219 = pneg %p92
      %p220 = pneg %p89
      %s221 = smul.u32 32, %s20
      %p222 = scmp.lt.s32.totalorder %s19, 1
      %s223 = scalar_select %p222, %s19, 1
      %p224 = scmp.lt.s32.totalorder %s221, 31
      %s225 = scalar_select %p224, %s221, 31
      %s226 = smul.addr %s223, 32
      %s227 = sadd.s32 %s225, %s226
      %s228 = smul.addr %s227, 4
      %s229 = scalar_lea.vmem %s3, %s228
      %p230 = pneg %p120
      %p231 = pneg %p117
      %p232 = pneg %p148
      %p233 = pneg %p145
      %s234 = smul.u32 32, %s20
      %p235 = scmp.lt.s32.totalorder %s19, 1
      %s236 = scalar_select %p235, %s19, 1
      %p237 = scmp.lt.s32.totalorder %s234, 31
      %s238 = scalar_select %p237, %s234, 31
      %s239 = smul.addr %s236, 32
      %s240 = sadd.s32 %s238, %s239
      %s241 = smul.addr %s240, 8
      %s242 = scalar_lea.vmem %s4, %s241
      %s243 = smul.u32 32, %s20
      %p244 = scmp.lt.s32.totalorder %s19, 1
      %s245 = scalar_select %p244, %s19, 1
      %p246 = scmp.lt.s32.totalorder %s243, 31
      %s247 = scalar_select %p246, %s243, 31
      %s248 = smul.addr %s245, 32
      %s249 = sadd.s32 %s247, %s248
      %s250 = smul.addr %s249, 8
      %s251 = scalar_lea.vmem %s0, %s250
      %s252 = smul.u32 32, %s20
      %s253 = smul.u32 32, %s20
      %p254 = scmp.lt.s32.totalorder %s19, 1
      %s255 = scalar_select %p254, %s19, 1
      %p256 = scmp.lt.s32.totalorder %s253, 31
      %s257 = scalar_select %p256, %s253, 31
      %s258 = smul.addr %s255, 32
      %s259 = sadd.s32 %s257, %s258
      %s260 = smul.addr %s259, 4
      %s261 = scalar_lea.vmem %s3, %s260
      %s262 = smul.u32 32, %s20
      %s263 = smul.u32 32, %s20
      %p264 = scmp.lt.s32.totalorder %s19, 1
      %s265 = scalar_select %p264, %s19, 1
      %p266 = scmp.lt.s32.totalorder %s263, 31
      %s267 = scalar_select %p266, %s263, 31
      %s268 = smul.addr %s265, 32
      %s269 = sadd.s32 %s267, %s268
      %s270 = smul.addr %s269, 8
      %s271 = scalar_lea.vmem %s4, %s270
      %s272 = smul.u32 32, %s20
      %v273 = vld [vmem:[%s251] sm:$0xff]
      %v274 = vld [vmem:[%s251 + $0x8] sm:$0xff]
      %v275 = vld [vmem:[%s251 + $0x10] sm:$0xff]
      %v276 = vld [vmem:[%s251 + $0x18] sm:$0xff]
      %v277 = vld [vmem:[%s251 + $0x20] sm:$0xff]
      %v278 = vld [vmem:[%s251 + $0x28] sm:$0xff]
      %v279 = vld [vmem:[%s251 + $0x30] sm:$0xff]
      %v280 = vld [vmem:[%s251 + $0x38] sm:$0xff]
      %v281 = vld [vmem:[%s251 + $0x40] sm:$0xff]
      %v282 = vld [vmem:[%s251 + $0x48] sm:$0xff]
      %v283 = vld [vmem:[%s251 + $0x50] sm:$0xff]
      %v284 = vld [vmem:[%s251 + $0x58] sm:$0xff]
      %v285 = vld [vmem:[%s251 + $0x60] sm:$0xff]
      %v286 = vld [vmem:[%s251 + $0x68] sm:$0xff]
      %v287 = vld [vmem:[%s251 + $0x70] sm:$0xff]
      %v288 = vld [vmem:[%s251 + $0x78] sm:$0xff]
      %v289 = vld [vmem:[%s251 + $0x80] sm:$0xff]
      %v290 = vld [vmem:[%s251 + $0x88] sm:$0xff]
      %v291 = vld [vmem:[%s251 + $0x90] sm:$0xff]
      %v292 = vld [vmem:[%s251 + $0x98] sm:$0xff]
      %v293 = vld [vmem:[%s251 + $0xa0] sm:$0xff]
      %v294 = vld [vmem:[%s251 + $0xa8] sm:$0xff]
      %v295 = vld [vmem:[%s251 + $0xb0] sm:$0xff]
      %v296 = vld [vmem:[%s251 + $0xb8] sm:$0xff]
      %v297 = vld [vmem:[%s251 + $0xc0] sm:$0xff]
      %v298 = vld [vmem:[%s251 + $0xc8] sm:$0xff]
      %v299 = vld [vmem:[%s251 + $0xd0] sm:$0xff]
      %v300 = vld [vmem:[%s251 + $0xd8] sm:$0xff]
      %v301 = vld [vmem:[%s251 + $0xe0] sm:$0xff]
      %v302 = vld [vmem:[%s251 + $0xe8] sm:$0xff]
      %v303 = vld [vmem:[%s251 + $0xf0] sm:$0xff]
      %v304 = vld [vmem:[%s251 + $0xf8] sm:$0xff]
      %v305 = vld [vmem:[%s1] sm:$0x1]
      %v307 = vperm.slane %v305, 0
      %v309 = vmul.f32 %v273, %v307
      %v310 = vmul.f32 %v274, %v307
      %v311 = vmul.f32 %v275, %v307
      %v312 = vmul.f32 %v276, %v307
      %v313 = vmul.f32 %v277, %v307
      %v314 = vmul.f32 %v278, %v307
      %v315 = vmul.f32 %v279, %v307
      %v316 = vmul.f32 %v280, %v307
      %v317 = vmul.f32 %v281, %v307
      %v318 = vmul.f32 %v282, %v307
      %v319 = vmul.f32 %v283, %v307
      %v320 = vmul.f32 %v284, %v307
      %v321 = vmul.f32 %v285, %v307
      %v322 = vmul.f32 %v286, %v307
      %v323 = vmul.f32 %v287, %v307
      %v324 = vmul.f32 %v288, %v307
      %v325 = vmul.f32 %v289, %v307
      %v326 = vmul.f32 %v290, %v307
      %v327 = vmul.f32 %v291, %v307
      %v328 = vmul.f32 %v292, %v307
      %v329 = vmul.f32 %v293, %v307
      %v330 = vmul.f32 %v294, %v307
      %v331 = vmul.f32 %v295, %v307
      %v332 = vmul.f32 %v296, %v307
      %v333 = vmul.f32 %v297, %v307
      %v334 = vmul.f32 %v298, %v307
      %v335 = vmul.f32 %v299, %v307
      %v336 = vmul.f32 %v300, %v307
      %v337 = vmul.f32 %v301, %v307
      %v338 = vmul.f32 %v302, %v307
      %v339 = vmul.f32 %v303, %v307
      %v340 = vmul.f32 %v304, %v307
      %v341 = vld [vmem:[%s2] sm:$0x1]
      %v343 = vperm.slane %v341, 0
      %v345 = vadd.f32 %v309, %v343
      %v346 = vadd.f32 %v310, %v343
      %v347 = vadd.f32 %v311, %v343
      %v348 = vadd.f32 %v312, %v343
      %v349 = vadd.f32 %v313, %v343
      %v350 = vadd.f32 %v314, %v343
      %v351 = vadd.f32 %v315, %v343
      %v352 = vadd.f32 %v316, %v343
      %v353 = vadd.f32 %v317, %v343
      %v354 = vadd.f32 %v318, %v343
      %v355 = vadd.f32 %v319, %v343
      %v356 = vadd.f32 %v320, %v343
      %v357 = vadd.f32 %v321, %v343
      %v358 = vadd.f32 %v322, %v343
      %v359 = vadd.f32 %v323, %v343
      %v360 = vadd.f32 %v324, %v343
      %v361 = vadd.f32 %v325, %v343
      %v362 = vadd.f32 %v326, %v343
      %v363 = vadd.f32 %v327, %v343
      %v364 = vadd.f32 %v328, %v343
      %v365 = vadd.f32 %v329, %v343
      %v366 = vadd.f32 %v330, %v343
      %v367 = vadd.f32 %v331, %v343
      %v368 = vadd.f32 %v332, %v343
      %v369 = vadd.f32 %v333, %v343
      %v370 = vadd.f32 %v334, %v343
      %v371 = vadd.f32 %v335, %v343
      %v372 = vadd.f32 %v336, %v343
      %v373 = vadd.f32 %v337, %v343
      %v374 = vadd.f32 %v338, %v343
      %v375 = vadd.f32 %v339, %v343
      %v376 = vadd.f32 %v340, %v343
      %v377 = vld [vmem:[%s261] sm:$0xf]
      %v378 = vld [vmem:[%s261 + $0x4] sm:$0xf]
      %v379 = vld [vmem:[%s261 + $0x8] sm:$0xf]
      %v380 = vld [vmem:[%s261 + $0xc] sm:$0xf]
      %v381 = vld [vmem:[%s261 + $0x10] sm:$0xf]
      %v382 = vld [vmem:[%s261 + $0x14] sm:$0xf]
      %v383 = vld [vmem:[%s261 + $0x18] sm:$0xf]
      %v384 = vld [vmem:[%s261 + $0x1c] sm:$0xf]
      %v385 = vld [vmem:[%s261 + $0x20] sm:$0xf]
      %v386 = vld [vmem:[%s261 + $0x24] sm:$0xf]
      %v387 = vld [vmem:[%s261 + $0x28] sm:$0xf]
      %v388 = vld [vmem:[%s261 + $0x2c] sm:$0xf]
      %v389 = vld [vmem:[%s261 + $0x30] sm:$0xf]
      %v390 = vld [vmem:[%s261 + $0x34] sm:$0xf]
      %v391 = vld [vmem:[%s261 + $0x38] sm:$0xf]
      %v392 = vld [vmem:[%s261 + $0x3c] sm:$0xf]
      %v393 = vld [vmem:[%s261 + $0x40] sm:$0xf]
      %v394 = vld [vmem:[%s261 + $0x44] sm:$0xf]
      %v395 = vld [vmem:[%s261 + $0x48] sm:$0xf]
      %v396 = vld [vmem:[%s261 + $0x4c] sm:$0xf]
      %v397 = vld [vmem:[%s261 + $0x50] sm:$0xf]
      %v398 = vld [vmem:[%s261 + $0x54] sm:$0xf]
      %v399 = vld [vmem:[%s261 + $0x58] sm:$0xf]
      %v400 = vld [vmem:[%s261 + $0x5c] sm:$0xf]
      %v401 = vld [vmem:[%s261 + $0x60] sm:$0xf]
      %v402 = vld [vmem:[%s261 + $0x64] sm:$0xf]
      %v403 = vld [vmem:[%s261 + $0x68] sm:$0xf]
      %v404 = vld [vmem:[%s261 + $0x6c] sm:$0xf]
      %v405 = vld [vmem:[%s261 + $0x70] sm:$0xf]
      %v406 = vld [vmem:[%s261 + $0x74] sm:$0xf]
      %v407 = vld [vmem:[%s261 + $0x78] sm:$0xf]
      %v408 = vld [vmem:[%s261 + $0x7c] sm:$0xf]
      %v409 = vunpack.c.l.bf16 %v377
      %v410 = vunpack.c.l.bf16 %v378
      %v411 = vunpack.c.l.bf16 %v379
      %v412 = vunpack.c.l.bf16 %v380
      %v413 = vunpack.c.l.bf16 %v381
      %v414 = vunpack.c.l.bf16 %v382
      %v415 = vunpack.c.l.bf16 %v383
      %v416 = vunpack.c.l.bf16 %v384
      %v417 = vunpack.c.l.bf16 %v385
      %v418 = vunpack.c.l.bf16 %v386
      %v419 = vunpack.c.l.bf16 %v387
      %v420 = vunpack.c.l.bf16 %v388
      %v421 = vunpack.c.l.bf16 %v389
      %v422 = vunpack.c.l.bf16 %v390
      %v423 = vunpack.c.l.bf16 %v391
      %v424 = vunpack.c.l.bf16 %v392
      %v425 = vunpack.c.l.bf16 %v393
      %v426 = vunpack.c.l.bf16 %v394
      %v427 = vunpack.c.l.bf16 %v395
      %v428 = vunpack.c.l.bf16 %v396
      %v429 = vunpack.c.l.bf16 %v397
      %v430 = vunpack.c.l.bf16 %v398
      %v431 = vunpack.c.l.bf16 %v399
      %v432 = vunpack.c.l.bf16 %v400
      %v433 = vunpack.c.l.bf16 %v401
      %v434 = vunpack.c.l.bf16 %v402
      %v435 = vunpack.c.l.bf16 %v403
      %v436 = vunpack.c.l.bf16 %v404
      %v437 = vunpack.c.l.bf16 %v405
      %v438 = vunpack.c.l.bf16 %v406
      %v439 = vunpack.c.l.bf16 %v407
      %v440 = vunpack.c.l.bf16 %v408
      %v441 = vadd.f32 %v345, %v409
      %v442 = vadd.f32 %v346, %v410
      %v443 = vadd.f32 %v347, %v411
      %v444 = vadd.f32 %v348, %v412
      %v445 = vadd.f32 %v349, %v413
      %v446 = vadd.f32 %v350, %v414
      %v447 = vadd.f32 %v351, %v415
      %v448 = vadd.f32 %v352, %v416
      %v449 = vadd.f32 %v353, %v417
      %v450 = vadd.f32 %v354, %v418
      %v451 = vadd.f32 %v355, %v419
      %v452 = vadd.f32 %v356, %v420
      %v453 = vadd.f32 %v357, %v421
      %v454 = vadd.f32 %v358, %v422
      %v455 = vadd.f32 %v359, %v423
      %v456 = vadd.f32 %v360, %v424
      %v457 = vadd.f32 %v361, %v425
      %v458 = vadd.f32 %v362, %v426
      %v459 = vadd.f32 %v363, %v427
      %v460 = vadd.f32 %v364, %v428
      %v461 = vadd.f32 %v365, %v429
      %v462 = vadd.f32 %v366, %v430
      %v463 = vadd.f32 %v367, %v431
      %v464 = vadd.f32 %v368, %v432
      %v465 = vadd.f32 %v369, %v433
      %v466 = vadd.f32 %v370, %v434
      %v467 = vadd.f32 %v371, %v435
      %v468 = vadd.f32 %v372, %v436
      %v469 = vadd.f32 %v373, %v437
      %v470 = vadd.f32 %v374, %v438
      %v471 = vadd.f32 %v375, %v439
      %v472 = vadd.f32 %v376, %v440
      %v473 = vmax.f32 %v441, 0.0
      %v474 = vmax.f32 %v442, 0.0
      %v475 = vmax.f32 %v443, 0.0
      %v476 = vmax.f32 %v444, 0.0
      %v477 = vmax.f32 %v445, 0.0
      %v478 = vmax.f32 %v446, 0.0
      %v479 = vmax.f32 %v447, 0.0
      %v480 = vmax.f32 %v448, 0.0
      %v481 = vmax.f32 %v449, 0.0
      %v482 = vmax.f32 %v450, 0.0
      %v483 = vmax.f32 %v451, 0.0
      %v484 = vmax.f32 %v452, 0.0
      %v485 = vmax.f32 %v453, 0.0
      %v486 = vmax.f32 %v454, 0.0
      %v487 = vmax.f32 %v455, 0.0
      %v488 = vmax.f32 %v456, 0.0
      %v489 = vmax.f32 %v457, 0.0
      %v490 = vmax.f32 %v458, 0.0
      %v491 = vmax.f32 %v459, 0.0
      %v492 = vmax.f32 %v460, 0.0
      %v493 = vmax.f32 %v461, 0.0
      %v494 = vmax.f32 %v462, 0.0
      %v495 = vmax.f32 %v463, 0.0
      %v496 = vmax.f32 %v464, 0.0
      %v497 = vmax.f32 %v465, 0.0
      %v498 = vmax.f32 %v466, 0.0
      %v499 = vmax.f32 %v467, 0.0
      %v500 = vmax.f32 %v468, 0.0
      %v501 = vmax.f32 %v469, 0.0
      %v502 = vmax.f32 %v470, 0.0
      %v503 = vmax.f32 %v471, 0.0
      %v504 = vmax.f32 %v472, 0.0
      %505 = vst [vmem:[%s271] sm:$0xff] %v473
      %506 = vst [vmem:[%s271 + $0x8] sm:$0xff] %v474
      %507 = vst [vmem:[%s271 + $0x10] sm:$0xff] %v475
      %508 = vst [vmem:[%s271 + $0x18] sm:$0xff] %v476
      %509 = vst [vmem:[%s271 + $0x20] sm:$0xff] %v477
      %510 = vst [vmem:[%s271 + $0x28] sm:$0xff] %v478
      %511 = vst [vmem:[%s271 + $0x30] sm:$0xff] %v479
      %512 = vst [vmem:[%s271 + $0x38] sm:$0xff] %v480
      %513 = vst [vmem:[%s271 + $0x40] sm:$0xff] %v481
      %514 = vst [vmem:[%s271 + $0x48] sm:$0xff] %v482
      %515 = vst [vmem:[%s271 + $0x50] sm:$0xff] %v483
      %516 = vst [vmem:[%s271 + $0x58] sm:$0xff] %v484
      %517 = vst [vmem:[%s271 + $0x60] sm:$0xff] %v485
      %518 = vst [vmem:[%s271 + $0x68] sm:$0xff] %v486
      %519 = vst [vmem:[%s271 + $0x70] sm:$0xff] %v487
      %520 = vst [vmem:[%s271 + $0x78] sm:$0xff] %v488
      %521 = vst [vmem:[%s271 + $0x80] sm:$0xff] %v489
      %522 = vst [vmem:[%s271 + $0x88] sm:$0xff] %v490
      %523 = vst [vmem:[%s271 + $0x90] sm:$0xff] %v491
      %524 = vst [vmem:[%s271 + $0x98] sm:$0xff] %v492
      %525 = vst [vmem:[%s271 + $0xa0] sm:$0xff] %v493
      %526 = vst [vmem:[%s271 + $0xa8] sm:$0xff] %v494
      %527 = vst [vmem:[%s271 + $0xb0] sm:$0xff] %v495
      %528 = vst [vmem:[%s271 + $0xb8] sm:$0xff] %v496
      %529 = vst [vmem:[%s271 + $0xc0] sm:$0xff] %v497
      %530 = vst [vmem:[%s271 + $0xc8] sm:$0xff] %v498
      %531 = vst [vmem:[%s271 + $0xd0] sm:$0xff] %v499
      %532 = vst [vmem:[%s271 + $0xd8] sm:$0xff] %v500
      %533 = vst [vmem:[%s271 + $0xe0] sm:$0xff] %v501
      %534 = vst [vmem:[%s271 + $0xe8] sm:$0xff] %v502
      %535 = vst [vmem:[%s271 + $0xf0] sm:$0xff] %v503
      %536 = vst [vmem:[%s271 + $0xf8] sm:$0xff] %v504
      %s537 = smul.u32 32, %s20
      %p538 = scmp.lt.s32.totalorder %s19, 1
      %s539 = scalar_select %p538, %s19, 1
      %p540 = scmp.lt.s32.totalorder %s537, 31
      %s541 = scalar_select %p540, %s537, 31
      %s542 = smul.addr %s539, 32
      %s543 = sadd.s32 %s541, %s542
      %s544 = smul.addr %s543, 8
      %s545 = scalar_lea.vmem %s4, %s544
      // Predicated region
      $region37: #{residual_block_forward.7} parent=35 // pred_check
        %p546 = pneg %p145
      $region38: #{residual_block_forward.7} parent=35 // pred_check_branch
        %548 = sbr.rel (%p546) target = $region40
      $region39: #{residual_block_forward.7} parent=35 // pred_region
        %s549 = smul.u32 32, %s20
      $region40: #{residual_block_forward.7} parent=35 // pred_fallthru
        _
    $region36: #{residual_block_forward.7} parent=5 // pred_fallthru
      _
    %p550 = scmp.le.s32.totalorder 2, %s10
    // Predicated region
    $region41: #{residual_block_forward.7} parent=5 // pred_check
      %p551 = pneg %p550
    $region42: #{residual_block_forward.7} parent=5 // pred_check_branch
      %553 = sbr.rel (%p551) target = $region44
    $region43: #{residual_block_forward.7} parent=5 // pred_region
      %s554 = ssub.s32 %s10, 2
      // Predicated region
      $region45: #{residual_block_forward.7} parent=43 // pred_check
        %p555 = pneg %p151
      $region46: #{residual_block_forward.7} parent=43 // pred_check_branch
        %557 = sbr.rel (%p555) target = $region48
      $region47: #{residual_block_forward.7} parent=43 // pred_region
        %s558 = smul.u32 32, %s22
        %p559 = scmp.lt.s32.totalorder %s21, 1
        %s560 = scalar_select %p559, %s21, 1
        %p561 = scmp.lt.s32.totalorder %s558, 31
        %s562 = scalar_select %p561, %s558, 31
        %s563 = smul.addr %s560, 32
        %s564 = sadd.s32 %s562, %s563
        %s565 = smul.addr %s564, 8
        %s566 = scalar_lea.vmem %s4, %s565
      $region48: #{residual_block_forward.7} parent=43 // pred_fallthru
        _
    $region44: #{residual_block_forward.7} parent=5 // pred_fallthru
      _
  $region6: #{residual_block_forward.7} parent=0 // loop_footer
    %s14 = sadd.s32 1, %s10
  $region7: #{residual_block_forward.7} parent=0 // loop_footer_branch
    %9 = sbr.rel target = $region3
  $region8: #{residual_block_forward.7} parent=0 // loop_exit
    _

// kernel: residual_block_forward.6
$region0: #{residual_block_forward.6}
  #allocation0 [shape = 'u32[]', space=smem, size = 0x4, offset = 0x4, fixed_abs, tag = 'smem constant byte address 0x4 - core index']
  #allocation1 [shape = 'u32[72,128]{1,0:T(1,128)}', space=vmem, size = 0x9000, scoped, tag = 'internal scratch']
  #allocation2 [shape = 'bf16[18,18,128]{2,1,0:T(8,128)(2,1)}', space=vmem, size = 0x1b000, scoped, tag = 'scratch operand']
  %s0 = inlined_call_operand.vmem [shape: bf16[2,16,16,128], index: 0, kind: input, shape index: {}]
  %s1 = inlined_call_operand.vmem [shape: bf16[1152,128], index: 1, kind: input, shape index: {}]
  %s2 = inlined_call_operand.vmem [shape: f32[2,256,128], index: 2, kind: output, shape index: {0}]
  %s3 = inlined_call_operand.vmem [shape: f32[2,1,128], index: 3, kind: output, shape index: {1}]
  %s4 = inlined_call_operand.vmem [shape: f32[2,1,128], index: 4, kind: output, shape index: {2}]
  %5 = xla_tuple %s2, %s3, %s4
  %s6 = sld [smem:[#allocation0]]
  $region57: #{residual_block_forward.6} parent=0
    _
  %s8 = ssub.s32 1, %s6
  %s9 = scalar_select 0, %s8, %s6
  loop: start=0, step=1, limit=4
  $region2: #{residual_block_forward.6} parent=0 // loop_pre_header
    _
  $region3: #{residual_block_forward.6} parent=0 // loop_header
    %s11 = sphi 0, %s15
    %p12 = scmp.ge.s32.totalorder %s11, 4
    %s21 = sphi 0, %s23
    %s24 = sphi 0, %s21
    %s25 = sphi 0, %s24
    %s41 = sphi 0, %s25
    %s45 = sphi 0, %s45
    %s47 = sphi 0, %s45
    %s48 = sphi 0, %s47
    %s62 = sphi 0, %s48
    %s68 = sphi 0, %s70
    %s71 = sphi 0, %s68
    %s72 = sphi 0, %s71
    %s88 = sphi 0, %s72
    %s94 = sphi 0, %s96
    %s97 = sphi 0, %s94
    %s98 = sphi 0, %s97
    %s114 = sphi 0, %s98
    %s120 = sphi 0, %s122
    %s123 = sphi 0, %s120
    %s124 = sphi 0, %s123
    %s140 = sphi 0, %s124
  $region4: #{residual_block_forward.6} parent=0 // loop_header_branch
    %14 = sbr.rel (%p12) target = $region8
  $region5: #{residual_block_forward.6} parent=0 // loop_body
    %s16 = ssub.s32 %s11, 1
    %s17 = ssub.s32 %s11, 2
    %s18 = sadd.s32 %s11, 1
    %s19 = ssub.s32 %s11, %s18
    %p20 = scmp.eq.s32.totalorder %s19, 0
    %s22 = sadd.s32 %s21, 1
    %s23 = scalar_select %p20, %s21, %s22
    %p26 = pneg %p20
    %p27 = scmp.eq.s32.totalorder %s11, 1
    %p28 = por %p26, %p27
    %p29 = scmp.ne.s32.totalorder %s21, %s24
    %p30 = scmp.eq.s32.totalorder %s11, 0
    %p31 = por %p29, %p30
    %p32 = scmp.ne.s32.totalorder %s21, %s24
    %p33 = scmp.eq.s32.totalorder %s16, 1
    %p34 = por %p32, %p33
    %p35 = scmp.ne.s32.totalorder %s24, %s25
    %p36 = scmp.eq.s32.totalorder %s16, 0
    %p37 = por %p35, %p36
    %p38 = scmp.ne.s32.totalorder %s24, %s25
    %p39 = scmp.eq.s32.totalorder %s17, 1
    %p40 = por %p38, %p39
    %p42 = scmp.ne.s32.totalorder %s25, %s41
    %p43 = scmp.eq.s32.totalorder %s17, 0
    %p44 = por %p42, %p43
    %s46 = sadd.s32 %s45, 1
    %p49 = scmp.eq.s32.totalorder %s11, 1
    %p50 = scmp.ne.s32.totalorder %s45, %s47
    %p51 = scmp.eq.s32.totalorder %s11, 0
    %p52 = por %p50, %p51
    %p53 = scmp.ne.s32.totalorder %s45, %s47
    %p54 = scmp.eq.s32.totalorder %s16, 1
    %p55 = por %p53, %p54
    %p56 = scmp.ne.s32.totalorder %s47, %s48
    %p57 = scmp.eq.s32.totalorder %s16, 0
    %p58 = por %p56, %p57
    %p59 = scmp.ne.s32.totalorder %s47, %s48
    %p60 = scmp.eq.s32.totalorder %s17, 1
    %p61 = por %p59, %p60
    %p63 = scmp.ne.s32.totalorder %s48, %s62
    %p64 = scmp.eq.s32.totalorder %s17, 0
    %p65 = por %p63, %p64
    %s66 = ssub.s32 %s11, %s18
    %p67 = scmp.eq.s32.totalorder %s66, 0
    %s69 = sadd.s32 %s68, 1
    %s70 = scalar_select %p67, %s68, %s69
    %p73 = pneg %p67
    %p74 = scmp.eq.s32.totalorder %s11, 1
    %p75 = por %p73, %p74
    %p76 = scmp.ne.s32.totalorder %s68, %s71
    %p77 = scmp.eq.s32.totalorder %s11, 0
    %p78 = por %p76, %p77
    %p79 = scmp.ne.s32.totalorder %s68, %s71
    %p80 = scmp.eq.s32.totalorder %s16, 1
    %p81 = por %p79, %p80
    %p82 = scmp.ne.s32.totalorder %s71, %s72
    %p83 = scmp.eq.s32.totalorder %s16, 0
    %p84 = por %p82, %p83
    %p85 = scmp.ne.s32.totalorder %s71, %s72
    %p86 = scmp.eq.s32.totalorder %s17, 1
    %p87 = por %p85, %p86
    %p89 = scmp.ne.s32.totalorder %s72, %s88
    %p90 = scmp.eq.s32.totalorder %s17, 0
    %p91 = por %p89, %p90
    %s92 = ssub.s32 %s11, %s18
    %p93 = scmp.eq.s32.totalorder %s92, 0
    %s95 = sadd.s32 %s94, 1
    %s96 = scalar_select %p93, %s94, %s95
    %p99 = pneg %p93
    %p100 = scmp.eq.s32.totalorder %s11, 1
    %p101 = por %p99, %p100
    %p102 = scmp.ne.s32.totalorder %s94, %s97
    %p103 = scmp.eq.s32.totalorder %s11, 0
    %p104 = por %p102, %p103
    %p105 = scmp.ne.s32.totalorder %s94, %s97
    %p106 = scmp.eq.s32.totalorder %s16, 1
    %p107 = por %p105, %p106
    %p108 = scmp.ne.s32.totalorder %s97, %s98
    %p109 = scmp.eq.s32.totalorder %s16, 0
    %p110 = por %p108, %p109
    %p111 = scmp.ne.s32.totalorder %s97, %s98
    %p112 = scmp.eq.s32.totalorder %s17, 1
    %p113 = por %p111, %p112
    %p115 = scmp.ne.s32.totalorder %s98, %s114
    %p116 = scmp.eq.s32.totalorder %s17, 0
    %p117 = por %p115, %p116
    %s118 = ssub.s32 %s11, %s18
    %p119 = scmp.eq.s32.totalorder %s118, 0
    %s121 = sadd.s32 %s120, 1
    %s122 = scalar_select %p119, %s120, %s121
    %p125 = pneg %p119
    %p126 = scmp.eq.s32.totalorder %s11, 1
    %p127 = por %p125, %p126
    %p128 = scmp.ne.s32.totalorder %s120, %s123
    %p129 = scmp.eq.s32.totalorder %s11, 0
    %p130 = por %p128, %p129
    %p131 = scmp.ne.s32.totalorder %s120, %s123
    %p132 = scmp.eq.s32.totalorder %s16, 1
    %p133 = por %p131, %p132
    %p134 = scmp.ne.s32.totalorder %s123, %s124
    %p135 = scmp.eq.s32.totalorder %s16, 0
    %p136 = por %p134, %p135
    %p137 = scmp.ne.s32.totalorder %s123, %s124
    %p138 = scmp.eq.s32.totalorder %s17, 1
    %p139 = por %p137, %p138
    %p141 = scmp.ne.s32.totalorder %s124, %s140
    %p142 = scmp.eq.s32.totalorder %s17, 0
    %p143 = por %p141, %p142
    %p144 = scmp.le.s32.totalorder 1, %s11
    %p145 = scmp.lt.s32.totalorder %s11, 3
    %p146 = pnand %p144, %p145
    %p147 = pneg %p146
    // Predicated region
    $region9: #{residual_block_forward.6} parent=5 // pred_check
      _
    $region10: #{residual_block_forward.6} parent=5 // pred_check_branch
      %149 = sbr.rel (%p146) target = $region12
    $region11: #{residual_block_forward.6} parent=5 // pred_region
      %s150 = ssub.s32 %s11, 1
      // Predicated region
      $region13: #{residual_block_forward.6} parent=11 // pred_check
        %p151 = pneg %p58
      $region14: #{residual_block_forward.6} parent=11 // pred_check_branch
        %153 = sbr.rel (%p151) target = $region16
      $region15: #{residual_block_forward.6} parent=11 // pred_region
        _
      $region16: #{residual_block_forward.6} parent=11 // pred_fallthru
        _
    $region12: #{residual_block_forward.6} parent=5 // pred_fallthru
      _
    %p154 = scmp.lt.s32.totalorder %s11, 2
    // Predicated region
    $region17: #{residual_block_forward.6} parent=5 // pred_check
      %p155 = pneg %p154
    $region18: #{residual_block_forward.6} parent=5 // pred_check_branch
      %157 = sbr.rel (%p155) target = $region20
    $region19: #{residual_block_forward.6} parent=5 // pred_region
      // Predicated region
      $region21: #{residual_block_forward.6} parent=19 // pred_check
        %p158 = pneg %p31
      $region22: #{residual_block_forward.6} parent=19 // pred_check_branch
        %160 = sbr.rel (%p158) target = $region24
      $region23: #{residual_block_forward.6} parent=19 // pred_region
        %p161 = scmp.lt.s32.totalorder %s11, 1
        %s162 = scalar_select %p161, %s11, 1
        %s163 = smul.addr %s162, 32
        %s164 = smul.addr %s163, 4
        %s165 = scalar_lea.vmem %s0, %s164
      $region24: #{residual_block_forward.6} parent=19 // pred_fallthru
        _
    $region20: #{residual_block_forward.6} parent=5 // pred_fallthru
      _
    %p166 = scmp.le.s32.totalorder 1, %s11
    %p167 = scmp.lt.s32.totalorder %s11, 3
    %p168 = pnand %p166, %p167
    %p169 = pneg %p168
    // Predicated region
    $region25: #{residual_block_forward.6} parent=5 // pred_check
      _
    $region26: #{residual_block_forward.6} parent=5 // pred_check_branch
      %171 = sbr.rel (%p168) target = $region28
    $region27: #{residual_block_forward.6} parent=5 // pred_region
      %s172 = ssub.s32 %s11, 1
      %p173 = scmp.lt.s32.totalorder %s16, 1
      %s174 = scalar_select %p173, %s16, 1
      %s175 = smul.addr %s174, 32
      %s176 = smul.addr %s175, 4
      %s177 = scalar_lea.vmem %s0, %s176
      %p178 = pneg %p37
      %p179 = pneg %p34
      %p180 = pneg %p58
      %p181 = pneg %p55
      %p182 = pneg %p84
      %p183 = pneg %p81
      %p184 = scmp.lt.s32.totalorder %s16, 1
      %s185 = scalar_select %p184, %s16, 1
      %s186 = smul.addr %s185, 32
      %s187 = smul.addr %s186, 8
      %s188 = scalar_lea.vmem %s2, %s187
      %p189 = pneg %p110
      %p190 = pneg %p107
      %p191 = scmp.lt.s32.totalorder %s16, 1
      %s192 = scalar_select %p191, %s16, 1
      %s193 = scalar_lea.vmem %s3, %s192
      %p194 = pneg %p136
      %p195 = pneg %p133
      %p196 = scmp.lt.s32.totalorder %s16, 1
      %s197 = scalar_select %p196, %s16, 1
      %s198 = scalar_lea.vmem %s4, %s197
      %p199 = scmp.lt.s32.totalorder %s16, 1
      %s200 = scalar_select %p199, %s16, 1
      %s201 = smul.addr %s200, 32
      %s202 = smul.addr %s201, 4
      %s203 = scalar_lea.vmem %s0, %s202
      %p204 = scmp.lt.s32.totalorder %s16, 1
      %s205 = scalar_select %p204, %s16, 1
      %s206 = smul.addr %s205, 32
      %s207 = smul.addr %s206, 8
      %s208 = scalar_lea.vmem %s2, %s207
      %p209 = scmp.lt.s32.totalorder %s16, 1
      %s210 = scalar_select %p209, %s16, 1
      %s211 = scalar_lea.vmem %s3, %s210
      %p212 = scmp.lt.s32.totalorder %s16, 1
      %s213 = scalar_select %p212, %s16, 1
      %s214 = scalar_lea.vmem %s4, %s213
      %216 = vst [vmem:[#allocation2] sm:$0xf] 0
      %217 = vst [vmem:[#allocation2 + $0x4] sm:$0xf] 0
      %218 = vst [vmem:[#allocation2 + $0x8] sm:$0x1] 0
      %219 = vst [vmem:[#allocation2 + $0xc] sm:$0xf] 0
      %220 = vst [vmem:[#allocation2 + $0x10] sm:$0xf] 0
      %221 = vst [vmem:[#allocation2 + $0x14] sm:$0x1] 0
      %222 = vst [vmem:[#allocation2 + $0x18] sm:$0xf] 0
      %223 = vst [vmem:[#allocation2 + $0x1c] sm:$0xf] 0
      %224 = vst [vmem:[#allocation2 + $0x20] sm:$0x1] 0
      %225 = vst [vmem:[#allocation2 + $0x24] sm:$0xf] 0
      %226 = vst [vmem:[#allocation2 + $0x28] sm:$0xf] 0
      %227 = vst [vmem:[#allocation2 + $0x2c] sm:$0x1] 0
      %228 = vst [vmem:[#allocation2 + $0x30] sm:$0xf] 0
      %229 = vst [vmem:[#allocation2 + $0x34] sm:$0xf] 0
      %230 = vst [vmem:[#allocation2 + $0x38] sm:$0x1] 0
      %231 = vst [vmem:[#allocation2 + $0x3c] sm:$0xf] 0
      %232 = vst [vmem:[#allocation2 + $0x40] sm:$0xf] 0
      %233 = vst [vmem:[#allocation2 + $0x44] sm:$0x1] 0
      %234 = vst [vmem:[#allocation2 + $0x48] sm:$0xf] 0
      %235 = vst [vmem:[#allocation2 + $0x4c] sm:$0xf] 0
      %236 = vst [vmem:[#allocation2 + $0x50] sm:$0x1] 0
      %237 = vst [vmem:[#allocation2 + $0x54] sm:$0xf] 0
      %238 = vst [vmem:[#allocation2 + $0x58] sm:$0xf] 0
      %239 = vst [vmem:[#allocation2 + $0x5c] sm:$0x1] 0
      %240 = vst [vmem:[#allocation2 + $0x60] sm:$0xf] 0
      %241 = vst [vmem:[#allocation2 + $0x64] sm:$0xf] 0
      %242 = vst [vmem:[#allocation2 + $0x68] sm:$0x1] 0
      %243 = vst [vmem:[#allocation2 + $0x6c] sm:$0xf] 0
      %244 = vst [vmem:[#allocation2 + $0x70] sm:$0xf] 0
      %245 = vst [vmem:[#allocation2 + $0x74] sm:$0x1] 0
      %246 = vst [vmem:[#allocation2 + $0x78] sm:$0xf] 0
      %247 = vst [vmem:[#allocation2 + $0x7c] sm:$0xf] 0
      %248 = vst [vmem:[#allocation2 + $0x80] sm:$0x1] 0
      %249 = vst [vmem:[#allocation2 + $0x84] sm:$0xf] 0
      %250 = vst [vmem:[#allocation2 + $0x88] sm:$0xf] 0
      %251 = vst [vmem:[#allocation2 + $0x8c] sm:$0x1] 0
      %252 = vst [vmem:[#allocation2 + $0x90] sm:$0xf] 0
      %253 = vst [vmem:[#allocation2 + $0x94] sm:$0xf] 0
      %254 = vst [vmem:[#allocation2 + $0x98] sm:$0x1] 0
      %255 = vst [vmem:[#allocation2 + $0x9c] sm:$0xf] 0
      %256 = vst [vmem:[#allocation2 + $0xa0] sm:$0xf] 0
      %257 = vst [vmem:[#allocation2 + $0xa4] sm:$0x1] 0
      %258 = vst [vmem:[#allocation2 + $0xa8] sm:$0xf] 0
      %259 = vst [vmem:[#allocation2 + $0xac] sm:$0xf] 0
      %260 = vst [vmem:[#allocation2 + $0xb0] sm:$0x1] 0
      %261 = vst [vmem:[#allocation2 + $0xb4] sm:$0xf] 0
      %262 = vst [vmem:[#allocation2 + $0xb8] sm:$0xf] 0
      %263 = vst [vmem:[#allocation2 + $0xbc] sm:$0x1] 0
      %264 = vst [vmem:[#allocation2 + $0xc0] sm:$0xf] 0
      %265 = vst [vmem:[#allocation2 + $0xc4] sm:$0xf] 0
      %266 = vst [vmem:[#allocation2 + $0xc8] sm:$0x1] 0
      %267 = vst [vmem:[#allocation2 + $0xcc] sm:$0xf] 0
      %268 = vst [vmem:[#allocation2 + $0xd0] sm:$0xf] 0
      %269 = vst [vmem:[#allocation2 + $0xd4] sm:$0x1] 0
      %v270 = vld [vmem:[%s203] sm:$0xf]
      %v271 = vld [vmem:[%s203 + $0x4] sm:$0xf]
      %v272 = vld [vmem:[%s203 + $0x8] sm:$0xf]
      %v273 = vld [vmem:[%s203 + $0xc] sm:$0xf]
      %v274 = vld [vmem:[%s203 + $0x10] sm:$0xf]
      %v275 = vld [vmem:[%s203 + $0x14] sm:$0xf]
      %v276 = vld [vmem:[%s203 + $0x18] sm:$0xf]
      %v277 = vld [vmem:[%s203 + $0x1c] sm:$0xf]
      %v278 = vld [vmem:[%s203 + $0x20] sm:$0xf]
      %v279 = vld [vmem:[%s203 + $0x24] sm:$0xf]
      %v280 = vld [vmem:[%s203 + $0x28] sm:$0xf]
      %v281 = vld [vmem:[%s203 + $0x2c] sm:$0xf]
      %v282 = vld [vmem:[%s203 + $0x30] sm:$0xf]
      %v283 = vld [vmem:[%s203 + $0x34] sm:$0xf]
      %v284 = vld [vmem:[%s203 + $0x38] sm:$0xf]
      %v285 = vld [vmem:[%s203 + $0x3c] sm:$0xf]
      %v286 = vld [vmem:[%s203 + $0x40] sm:$0xf]
      %v287 = vld [vmem:[%s203 + $0x44] sm:$0xf]
      %v288 = vld [vmem:[%s203 + $0x48] sm:$0xf]
      %v289 = vld [vmem:[%s203 + $0x4c] sm:$0xf]
      %v290 = vld [vmem:[%s203 + $0x50] sm:$0xf]
      %v291 = vld [vmem:[%s203 + $0x54] sm:$0xf]
      %v292 = vld [vmem:[%s203 + $0x58] sm:$0xf]
      %v293 = vld [vmem:[%s203 + $0x5c] sm:$0xf]
      %v294 = vld [vmem:[%s203 + $0x60] sm:$0xf]
      %v295 = vld [vmem:[%s203 + $0x64] sm:$0xf]
      %v296 = vld [vmem:[%s203 + $0x68] sm:$0xf]
      %v297 = vld [vmem:[%s203 + $0x6c] sm:$0xf]
      %v298 = vld [vmem:[%s203 + $0x70] sm:$0xf]
      %v299 = vld [vmem:[%s203 + $0x74] sm:$0xf]
      %v300 = vld [vmem:[%s203 + $0x78] sm:$0xf]
      %v301 = vld [vmem:[%s203 + $0x7c] sm:$0xf]
      %vm302 = vsmask.f32 256
      %vm303 = vsmask.f32 4368
      %vm304 = vmor %vm302, %vm303
      %v306 = vshrl.u32 %v270, 16
      %v308 = vrot.slane %v306, 7
      %v309 = vshll.u32 %v270, 16
      %v311 = vor.u32 %v308, %v309
      %v312 = vrot.slane %v308, 4
      %v314 = vshrl.u32 %v271, 16
      %v316 = vrot.slane %v314, 7
      %v317 = vshll.u32 %v271, 16
      %v319 = vor.u32 %v316, %v317
      %v320 = vsel %vm304, %v312, %v319
      %v321 = vrot.slane %v316, 4
      %v323 = vshrl.u32 %v272, 16
      %v325 = vrot.slane %v323, 7
      %v326 = vshll.u32 %v272, 16
      %v328 = vor.u32 %v325, %v326
      %v329 = vrot.slane %v325, 4
      %v331 = vshrl.u32 %v273, 16
      %v333 = vrot.slane %v331, 7
      %v334 = vshll.u32 %v273, 16
      %v336 = vor.u32 %v333, %v334
      %v337 = vsel %vm304, %v329, %v336
      %v338 = vrot.slane %v333, 4
      %v340 = vshrl.u32 %v274, 16
      %v342 = vrot.slane %v340, 7
      %v343 = vshll.u32 %v274, 16
      %v345 = vor.u32 %v342, %v343
      %v346 = vrot.slane %v342, 4
      %v348 = vshrl.u32 %v275, 16
      %v350 = vrot.slane %v348, 7
      %v351 = vshll.u32 %v275, 16
      %v353 = vor.u32 %v350, %v351
      %v354 = vsel %vm304, %v346, %v353
      %v355 = vrot.slane %v350, 4
      %v357 = vshrl.u32 %v276, 16
      %v359 = vrot.slane %v357, 7
      %v360 = vshll.u32 %v276, 16
      %v362 = vor.u32 %v359, %v360
      %v363 = vrot.slane %v359, 4
      %v365 = vshrl.u32 %v277, 16
      %v367 = vrot.slane %v365, 7
      %v368 = vshll.u32 %v277, 16
      %v370 = vor.u32 %v367, %v368
      %v371 = vsel %vm304, %v363, %v370
      %v372 = vrot.slane %v367, 4
      %v374 = vshrl.u32 %v278, 16
      %v376 = vrot.slane %v374, 7
      %v377 = vshll.u32 %v278, 16
      %v379 = vor.u32 %v376, %v377
      %v380 = vrot.slane %v376, 4
      %v382 = vshrl.u32 %v279, 16
      %v384 = vrot.slane %v382, 7
      %v385 = vshll.u32 %v279, 16
      %v387 = vor.u32 %v384, %v385
      %v388 = vsel %vm304, %v380, %v387
      %v389 = vrot.slane %v384, 4
      %v391 = vshrl.u32 %v280, 16
      %v393 = vrot.slane %v391, 7
      %v394 = vshll.u32 %v280, 16
      %v396 = vor.u32 %v393, %v394
      %v397 = vrot.slane %v393, 4
      %v399 = vshrl.u32 %v281, 16
      %v401 = vrot.slane %v399, 7
      %v402 = vshll.u32 %v281, 16
      %v404 = vor.u32 %v401, %v402
      %v405 = vsel %vm304, %v397, %v404
      %v406 = vrot.slane %v401, 4
      %v408 = vshrl.u32 %v282, 16
      %v410 = vrot.slane %v408, 7
      %v411 = vshll.u32 %v282, 16
      %v413 = vor.u32 %v410, %v411
      %v414 = vrot.slane %v410, 4
      %v416 = vshrl.u32 %v283, 16
      %v418 = vrot.slane %v416, 7
      %v419 = vshll.u32 %v283, 16
      %v421 = vor.u32 %v418, %v419
      %v422 = vsel %vm304, %v414, %v421
      %v423 = vrot.slane %v418, 4
      %v425 = vshrl.u32 %v284, 16
      %v427 = vrot.slane %v425, 7
      %v428 = vshll.u32 %v284, 16
      %v430 = vor.u32 %v427, %v428
      %v431 = vrot.slane %v427, 4
      %v433 = vshrl.u32 %v285, 16
      %v435 = vrot.slane %v433, 7
      %v436 = vshll.u32 %v285, 16
      %v438 = vor.u32 %v435, %v436
      %v439 = vsel %vm304, %v431, %v438
      %v440 = vrot.slane %v435, 4
      %v442 = vshrl.u32 %v286, 16
      %v444 = vrot.slane %v442, 7
      %v445 = vshll.u32 %v286, 16
      %v447 = vor.u32 %v444, %v445
      %v448 = vrot.slane %v444, 4
      %v450 = vshrl.u32 %v287, 16
      %v452 = vrot.slane %v450, 7
      %v453 = vshll.u32 %v287, 16
      %v455 = vor.u32 %v452, %v453
      %v456 = vsel %vm304, %v448, %v455
      %v457 = vrot.slane %v452, 4
      %v459 = vshrl.u32 %v288, 16
      %v461 = vrot.slane %v459, 7
      %v462 = vshll.u32 %v288, 16
      %v464 = vor.u32 %v461, %v462
      %v465 = vrot.slane %v461, 4
      %v467 = vshrl.u32 %v289, 16
      %v469 = vrot.slane %v467, 7
      %v470 = vshll.u32 %v289, 16
      %v472 = vor.u32 %v469, %v470
      %v473 = vsel %vm304, %v465, %v472
      %v474 = vrot.slane %v469, 4
      %v476 = vshrl.u32 %v290, 16
      %v478 = vrot.slane %v476, 7
      %v479 = vshll.u32 %v290, 16
      %v481 = vor.u32 %v478, %v479
      %v482 = vrot.slane %v478, 4
      %v484 = vshrl.u32 %v291, 16
      %v486 = vrot.slane %v484, 7
      %v487 = vshll.u32 %v291, 16
      %v489 = vor.u32 %v486, %v487
      %v490 = vsel %vm304, %v482, %v489
      %v491 = vrot.slane %v486, 4
      %v493 = vshrl.u32 %v292, 16
      %v495 = vrot.slane %v493, 7
      %v496 = vshll.u32 %v292, 16
      %v498 = vor.u32 %v495, %v496
      %v499 = vrot.slane %v495, 4
      %v501 = vshrl.u32 %v293, 16
      %v503 = vrot.slane %v501, 7
      %v504 = vshll.u32 %v293, 16
      %v506 = vor.u32 %v503, %v504
      %v507 = vsel %vm304, %v499, %v506
      %v508 = vrot.slane %v503, 4
      %v510 = vshrl.u32 %v294, 16
      %v512 = vrot.slane %v510, 7
      %v513 = vshll.u32 %v294, 16
      %v515 = vor.u32 %v512, %v513
      %v516 = vrot.slane %v512, 4
      %v518 = vshrl.u32 %v295, 16
      %v520 = vrot.slane %v518, 7
      %v521 = vshll.u32 %v295, 16
      %v523 = vor.u32 %v520, %v521
      %v524 = vsel %vm304, %v516, %v523
      %v525 = vrot.slane %v520, 4
      %v527 = vshrl.u32 %v296, 16
      %v529 = vrot.slane %v527, 7
      %v530 = vshll.u32 %v296, 16
      %v532 = vor.u32 %v529, %v530
      %v533 = vrot.slane %v529, 4
      %v535 = vshrl.u32 %v297, 16
      %v537 = vrot.slane %v535, 7
      %v538 = vshll.u32 %v297, 16
      %v540 = vor.u32 %v537, %v538
      %v541 = vsel %vm304, %v533, %v540
      %v542 = vrot.slane %v537, 4
      %v544 = vshrl.u32 %v298, 16
      %v546 = vrot.slane %v544, 7
      %v547 = vshll.u32 %v298, 16
      %v549 = vor.u32 %v546, %v547
      %v550 = vrot.slane %v546, 4
      %v552 = vshrl.u32 %v299, 16
      %v554 = vrot.slane %v552, 7
      %v555 = vshll.u32 %v299, 16
      %v557 = vor.u32 %v554, %v555
      %v558 = vsel %vm304, %v550, %v557
      %v559 = vrot.slane %v554, 4
      %v561 = vshrl.u32 %v300, 16
      %v563 = vrot.slane %v561, 7
      %v564 = vshll.u32 %v300, 16
      %v566 = vor.u32 %v563, %v564
      %v567 = vrot.slane %v563, 4
      %v569 = vshrl.u32 %v301, 16
      %v571 = vrot.slane %v569, 7
      %v572 = vshll.u32 %v301, 16
      %v574 = vor.u32 %v571, %v572
      %v575 = vsel %vm304, %v567, %v574
      %v576 = vrot.slane %v571, 4
      %s625 = scalar_lea.vmem [#allocation2], 12
      %vm626 = vcmask 1043456
      %vm627 = vsmask.f32 7938
      %vm628 = vmand %vm626, %vm627
      %v629 = vld [vmem:[%s625] sm:$0xf]
      %v630 = vsel %vm628, %v311, %v629
      %631 = vst [vmem:[%s625] sm:$0xf] %v630
      %632 = vst [vmem:[%s625 + $0x4] sm:$0xf] %v320
      %vm633 = vcmask 1040384
      %vm634 = vmand %vm633, %vm302
      %v635 = vld [vmem:[%s625 + $0x8] sm:$0x1]
      %v636 = vsel %vm634, %v321, %v635
      %637 = vst [vmem:[%s625 + $0x8] sm:$0x1] %v636
      %v638 = vld [vmem:[%s625 + $0xc] sm:$0xf]
      %v639 = vsel %vm628, %v328, %v638
      %640 = vst [vmem:[%s625 + $0xc] sm:$0xf] %v639
      %641 = vst [vmem:[%s625 + $0x10] sm:$0xf] %v337
      %v642 = vld [vmem:[%s625 + $0x14] sm:$0x1]
      %v643 = vsel %vm634, %v338, %v642
      %644 = vst [vmem:[%s625 + $0x14] sm:$0x1] %v643
      %v645 = vld [vmem:[%s625 + $0x18] sm:$0xf]
      %v646 = vsel %vm628, %v345, %v645
      %647 = vst [vmem:[%s625 + $0x18] sm:$0xf] %v646
      %648 = vst [vmem:[%s625 + $0x1c] sm:$0xf] %v354
      %v649 = vld [vmem:[%s625 + $0x20] sm:$0x1]
      %v650 = vsel %vm634, %v355, %v649
      %651 = vst [vmem:[%s625 + $0x20] sm:$0x1] %v650
      %v652 = vld [vmem:[%s625 + $0x24] sm:$0xf]
      %v653 = vsel %vm628, %v362, %v652
      %654 = vst [vmem:[%s625 + $0x24] sm:$0xf] %v653
      %655 = vst [vmem:[%s625 + $0x28] sm:$0xf] %v371
      %v656 = vld [vmem:[%s625 + $0x2c] sm:$0x1]
      %v657 = vsel %vm634, %v372, %v656
      %658 = vst [vmem:[%s625 + $0x2c] sm:$0x1] %v657
      %v659 = vld [vmem:[%s625 + $0x30] sm:$0xf]
      %v660 = vsel %vm628, %v379, %v659
      %661 = vst [vmem:[%s625 + $0x30] sm:$0xf] %v660
      %662 = vst [vmem:[%s625 + $0x34] sm:$0xf] %v388
      %v663 = vld [vmem:[%s625 + $0x38] sm:$0x1]
      %v664 = vsel %vm634, %v389, %v663
      %665 = vst [vmem:[%s625 + $0x38] sm:$0x1] %v664
      %v666 = vld [vmem:[%s625 + $0x3c] sm:$0xf]
      %v667 = vsel %vm628, %v396, %v666
      %668 = vst [vmem:[%s625 + $0x3c] sm:$0xf] %v667
      %669 = vst [vmem:[%s625 + $0x40] sm:$0xf] %v405
      %v670 = vld [vmem:[%s625 + $0x44] sm:$0x1]
      %v671 = vsel %vm634, %v406, %v670
      %672 = vst [vmem:[%s625 + $0x44] sm:$0x1] %v671
      %v673 = vld [vmem:[%s625 + $0x48] sm:$0xf]
      %v674 = vsel %vm628, %v413, %v673
      %675 = vst [vmem:[%s625 + $0x48] sm:$0xf] %v674
      %676 = vst [vmem:[%s625 + $0x4c] sm:$0xf] %v422
      %v677 = vld [vmem:[%s625 + $0x50] sm:$0x1]
      %v678 = vsel %vm634, %v423, %v677
      %679 = vst [vmem:[%s625 + $0x50] sm:$0x1] %v678
      %v680 = vld [vmem:[%s625 + $0x54] sm:$0xf]
      %v681 = vsel %vm628, %v430, %v680
      %682 = vst [vmem:[%s625 + $0x54] sm:$0xf] %v681
      %683 = vst [vmem:[%s625 + $0x58] sm:$0xf] %v439
      %v684 = vld [vmem:[%s625 + $0x5c] sm:$0x1]
      %v685 = vsel %vm634, %v440, %v684
      %686 = vst [vmem:[%s625 + $0x5c] sm:$0x1] %v685
      %v687 = vld [vmem:[%s625 + $0x60] sm:$0xf]
      %v688 = vsel %vm628, %v447, %v687
      %689 = vst [vmem:[%s625 + $0x60] sm:$0xf] %v688
      %690 = vst [vmem:[%s625 + $0x64] sm:$0xf] %v456
      %v691 = vld [vmem:[%s625 + $0x68] sm:$0x1]
      %v692 = vsel %vm634, %v457, %v691
      %693 = vst [vmem:[%s625 + $0x68] sm:$0x1] %v692
      %v694 = vld [vmem:[%s625 + $0x6c] sm:$0xf]
      %v695 = vsel %vm628, %v464, %v694
      %696 = vst [vmem:[%s625 + $0x6c] sm:$0xf] %v695
      %697 = vst [vmem:[%s625 + $0x70] sm:$0xf] %v473
      %v698 = vld [vmem:[%s625 + $0x74] sm:$0x1]
      %v699 = vsel %vm634, %v474, %v698
      %700 = vst [vmem:[%s625 + $0x74] sm:$0x1] %v699
      %v701 = vld [vmem:[%s625 + $0x78] sm:$0xf]
      %v702 = vsel %vm628, %v481, %v701
      %703 = vst [vmem:[%s625 + $0x78] sm:$0xf] %v702
      %704 = vst [vmem:[%s625 + $0x7c] sm:$0xf] %v490
      %v705 = vld [vmem:[%s625 + $0x80] sm:$0x1]
      %v706 = vsel %vm634, %v491, %v705
      %707 = vst [vmem:[%s625 + $0x80] sm:$0x1] %v706
      %v708 = vld [vmem:[%s625 + $0x84] sm:$0xf]
      %v709 = vsel %vm628, %v498, %v708
      %710 = vst [vmem:[%s625 + $0x84] sm:$0xf] %v709
      %711 = vst [vmem:[%s625 + $0x88] sm:$0xf] %v507
      %v712 = vld [vmem:[%s625 + $0x8c] sm:$0x1]
      %v713 = vsel %vm634, %v508, %v712
      %714 = vst [vmem:[%s625 + $0x8c] sm:$0x1] %v713
      %v715 = vld [vmem:[%s625 + $0x90] sm:$0xf]
      %v716 = vsel %vm628, %v515, %v715
      %717 = vst [vmem:[%s625 + $0x90] sm:$0xf] %v716
      %718 = vst [vmem:[%s625 + $0x94] sm:$0xf] %v524
      %v719 = vld [vmem:[%s625 + $0x98] sm:$0x1]
      %v720 = vsel %vm634, %v525, %v719
      %721 = vst [vmem:[%s625 + $0x98] sm:$0x1] %v720
      %v722 = vld [vmem:[%s625 + $0x9c] sm:$0xf]
      %v723 = vsel %vm628, %v532, %v722
      %724 = vst [vmem:[%s625 + $0x9c] sm:$0xf] %v723
      %725 = vst [vmem:[%s625 + $0xa0] sm:$0xf] %v541
      %v726 = vld [vmem:[%s625 + $0xa4] sm:$0x1]
      %v727 = vsel %vm634, %v542, %v726
      %728 = vst [vmem:[%s625 + $0xa4] sm:$0x1] %v727
      %v729 = vld [vmem:[%s625 + $0xa8] sm:$0xf]
      %v730 = vsel %vm628, %v549, %v729
      %731 = vst [vmem:[%s625 + $0xa8] sm:$0xf] %v730
      %732 = vst [vmem:[%s625 + $0xac] sm:$0xf] %v558
      %v733 = vld [vmem:[%s625 + $0xb0] sm:$0x1]
      %v734 = vsel %vm634, %v559, %v733
      %735 = vst [vmem:[%s625 + $0xb0] sm:$0x1] %v734
      %v736 = vld [vmem:[%s625 + $0xb4] sm:$0xf]
      %v737 = vsel %vm628, %v566, %v736
      %738 = vst [vmem:[%s625 + $0xb4] sm:$0xf] %v737
      %739 = vst [vmem:[%s625 + $0xb8] sm:$0xf] %v575
      %v740 = vld [vmem:[%s625 + $0xbc] sm:$0x1]
      %v741 = vsel %vm634, %v576, %v740
      %742 = vst [vmem:[%s625 + $0xbc] sm:$0x1] %v741
      %v743 = vld [vmem:[#allocation2] sm:$0xf]
      %v744 = vld [vmem:[#allocation2 + $0x4] sm:$0xf]
      %v745 = vld [vmem:[#allocation2 + $0xc] sm:$0xf]
      %v746 = vld [vmem:[#allocation2 + $0x10] sm:$0xf]
      %v747 = vld [vmem:[#allocation2 + $0x18] sm:$0xf]
      %v748 = vld [vmem:[#allocation2 + $0x1c] sm:$0xf]
      %v749 = vld [vmem:[#allocation2 + $0x24] sm:$0xf]
      %v750 = vld [vmem:[#allocation2 + $0x28] sm:$0xf]
      %v751 = vld [vmem:[#allocation2 + $0x30] sm:$0xf]
      %v752 = vld [vmem:[#allocation2 + $0x34] sm:$0xf]
      %v753 = vld [vmem:[#allocation2 + $0x3c] sm:$0xf]
      %v754 = vld [vmem:[#allocation2 + $0x40] sm:$0xf]
      %v755 = vld [vmem:[#allocation2 + $0x48] sm:$0xf]
      %v756 = vld [vmem:[#allocation2 + $0x4c] sm:$0xf]
      %v757 = vld [vmem:[#allocation2 + $0x54] sm:$0xf]
      %v758 = vld [vmem:[#allocation2 + $0x58] sm:$0xf]
      %v759 = vld [vmem:[#allocation2 + $0x60] sm:$0xf]
      %v760 = vld [vmem:[#allocation2 + $0x64] sm:$0xf]
      %v761 = vld [vmem:[#allocation2 + $0x6c] sm:$0xf]
      %v762 = vld [vmem:[#allocation2 + $0x70] sm:$0xf]
      %v763 = vld [vmem:[#allocation2 + $0x78] sm:$0xf]
      %v764 = vld [vmem:[#allocation2 + $0x7c] sm:$0xf]
      %v765 = vld [vmem:[#allocation2 + $0x84] sm:$0xf]
      %v766 = vld [vmem:[#allocation2 + $0x88] sm:$0xf]
      %v767 = vld [vmem:[#allocation2 + $0x90] sm:$0xf]
      %v768 = vld [vmem:[#allocation2 + $0x94] sm:$0xf]
      %v769 = vld [vmem:[#allocation2 + $0x9c] sm:$0xf]
      %v770 = vld [vmem:[#allocation2 + $0xa0] sm:$0xf]
      %v771 = vld [vmem:[#allocation2 + $0xa8] sm:$0xf]
      %v772 = vld [vmem:[#allocation2 + $0xac] sm:$0xf]
      %v773 = vld [vmem:[#allocation2 + $0xb4] sm:$0xf]
      %v774 = vld [vmem:[#allocation2 + $0xb8] sm:$0xf]
      %v775 = vld [vmem:[#allocation2 + $0x8] sm:$0x1]
      %v776 = vld [vmem:[#allocation2 + $0x14] sm:$0x1]
      %v777 = vld [vmem:[#allocation2 + $0x20] sm:$0x1]
      %v778 = vld [vmem:[#allocation2 + $0x2c] sm:$0x1]
      %v779 = vld [vmem:[#allocation2 + $0x38] sm:$0x1]
      %v780 = vld [vmem:[#allocation2 + $0x44] sm:$0x1]
      %v781 = vld [vmem:[#allocation2 + $0x50] sm:$0x1]
      %v782 = vld [vmem:[#allocation2 + $0x5c] sm:$0x1]
      %v783 = vld [vmem:[#allocation2 + $0x68] sm:$0x1]
      %v784 = vld [vmem:[#allocation2 + $0x74] sm:$0x1]
      %v785 = vld [vmem:[#allocation2 + $0x80] sm:$0x1]
      %v786 = vld [vmem:[#allocation2 + $0x8c] sm:$0x1]
      %v787 = vld [vmem:[#allocation2 + $0x98] sm:$0x1]
      %v788 = vld [vmem:[#allocation2 + $0xa4] sm:$0x1]
      %v789 = vld [vmem:[#allocation2 + $0xb0] sm:$0x1]
      %v790 = vld [vmem:[#allocation2 + $0xbc] sm:$0x1]
      %vm791 = vsmask.f32 3328
      %vm792 = vsmask.f32 7440
      %vm793 = vmor %vm791, %vm792
      %v795 = vshrl.u32 %v743, 16
      %v797 = vrot.slane %v795, 4
      %v798 = vshll.u32 %v743, 16
      %v800 = vrot.slane %v798, 5
      %v801 = vor.u32 %v797, %v800
      %v802 = vrot.slane %v801, 4
      %v804 = vshll.u32 %v744, 16
      %v806 = vrot.slane %v804, 5
      %v807 = vsel %vm793, %v802, %v806
      %v808 = vshrl.u32 %v744, 16
      %v810 = vrot.slane %v808, 4
      %v811 = vor.u32 %v810, %v806
      %v812 = vrot.slane %v811, 4
      %v814 = vshll.u32 %v775, 16
      %v816 = vrot.slane %v814, 5
      %v817 = vsel %vm793, %v812, %v816
      %v819 = vshrl.u32 %v745, 16
      %v821 = vrot.slane %v819, 4
      %v822 = vshll.u32 %v745, 16
      %v824 = vrot.slane %v822, 5
      %v825 = vor.u32 %v821, %v824
      %v826 = vrot.slane %v825, 4
      %v828 = vshll.u32 %v746, 16
      %v830 = vrot.slane %v828, 5
      %v831 = vsel %vm793, %v826, %v830
      %v832 = vshrl.u32 %v746, 16
      %v834 = vrot.slane %v832, 4
      %v835 = vor.u32 %v834, %v830
      %v836 = vrot.slane %v835, 4
      %v838 = vshll.u32 %v776, 16
      %v840 = vrot.slane %v838, 5
      %v841 = vsel %vm793, %v836, %v840
      %v843 = vshrl.u32 %v747, 16
      %v845 = vrot.slane %v843, 4
      %v846 = vshll.u32 %v747, 16
      %v848 = vrot.slane %v846, 5
      %v849 = vor.u32 %v845, %v848
      %v850 = vrot.slane %v849, 4
      %v852 = vshll.u32 %v748, 16
      %v854 = vrot.slane %v852, 5
      %v855 = vsel %vm793, %v850, %v854
      %v856 = vshrl.u32 %v748, 16
      %v858 = vrot.slane %v856, 4
      %v859 = vor.u32 %v858, %v854
      %v860 = vrot.slane %v859, 4
      %v862 = vshll.u32 %v777, 16
      %v864 = vrot.slane %v862, 5
      %v865 = vsel %vm793, %v860, %v864
      %v867 = vshrl.u32 %v749, 16
      %v869 = vrot.slane %v867, 4
      %v870 = vshll.u32 %v749, 16
      %v872 = vrot.slane %v870, 5
      %v873 = vor.u32 %v869, %v872
      %v874 = vrot.slane %v873, 4
      %v876 = vshll.u32 %v750, 16
      %v878 = vrot.slane %v876, 5
      %v879 = vsel %vm793, %v874, %v878
      %v880 = vshrl.u32 %v750, 16
      %v882 = vrot.slane %v880, 4
      %v883 = vor.u32 %v882, %v878
      %v884 = vrot.slane %v883, 4
      %v886 = vshll.u32 %v778, 16
      %v888 = vrot.slane %v886, 5
      %v889 = vsel %vm793, %v884, %v888
      %v891 = vshrl.u32 %v751, 16
      %v893 = vrot.slane %v891, 4
      %v894 = vshll.u32 %v751, 16
      %v896 = vrot.slane %v894, 5
      %v897 = vor.u32 %v893, %v896
      %v898 = vrot.slane %v897, 4
      %v900 = vshll.u32 %v752, 16
      %v902 = vrot.slane %v900, 5
      %v903 = vsel %vm793, %v898, %v902
      %v904 = vshrl.u32 %v752, 16
      %v906 = vrot.slane %v904, 4
      %v907 = vor.u32 %v906, %v902
      %v908 = vrot.slane %v907, 4
      %v910 = vshll.u32 %v779, 16
      %v912 = vrot.slane %v910, 5
      %v913 = vsel %vm793, %v908, %v912
      %v915 = vshrl.u32 %v753, 16
      %v917 = vrot.slane %v915, 4
      %v918 = vshll.u32 %v753, 16
      %v920 = vrot.slane %v918, 5
      %v921 = vor.u32 %v917, %v920
      %v922 = vrot.slane %v921, 4
      %v924 = vshll.u32 %v754, 16
      %v926 = vrot.slane %v924, 5
      %v927 = vsel %vm793, %v922, %v926
      %v928 = vshrl.u32 %v754, 16
      %v930 = vrot.slane %v928, 4
      %v931 = vor.u32 %v930, %v926
      %v932 = vrot.slane %v931, 4
      %v934 = vshll.u32 %v780, 16
      %v936 = vrot.slane %v934, 5
      %v937 = vsel %vm793, %v932, %v936
      %v939 = vshrl.u32 %v755, 16
      %v941 = vrot.slane %v939, 4
      %v942 = vshll.u32 %v755, 16
      %v944 = vrot.slane %v942, 5
      %v945 = vor.u32 %v941, %v944
      %v946 = vrot.slane %v945, 4
      %v948 = vshll.u32 %v756, 16
      %v950 = vrot.slane %v948, 5
      %v951 = vsel %vm793, %v946, %v950
      %v952 = vshrl.u32 %v756, 16
      %v954 = vrot.slane %v952, 4
      %v955 = vor.u32 %v954, %v950
      %v956 = vrot.slane %v955, 4
      %v958 = vshll.u32 %v781, 16
      %v960 = vrot.slane %v958, 5
      %v961 = vsel %vm793, %v956, %v960
      %v963 = vshrl.u32 %v757, 16
      %v965 = vrot.slane %v963, 4
      %v966 = vshll.u32 %v757, 16
      %v968 = vrot.slane %v966, 5
      %v969 = vor.u32 %v965, %v968
      %v970 = vrot.slane %v969, 4
      %v972 = vshll.u32 %v758, 16
      %v974 = vrot.slane %v972, 5
      %v975 = vsel %vm793, %v970, %v974
      %v976 = vshrl.u32 %v758, 16
      %v978 = vrot.slane %v976, 4
      %v979 = vor.u32 %v978, %v974
      %v980 = vrot.slane %v979, 4
      %v982 = vshll.u32 %v782, 16
      %v984 = vrot.slane %v982, 5
      %v985 = vsel %vm793, %v980, %v984
      %v987 = vshrl.u32 %v759, 16
      %v989 = vrot.slane %v987, 4
      %v990 = vshll.u32 %v759, 16
      %v992 = vrot.slane %v990, 5
      %v993 = vor.u32 %v989, %v992
      %v994 = vrot.slane %v993, 4
      %v996 = vshll.u32 %v760, 16
      %v998 = vrot.slane %v996, 5
      %v999 = vsel %vm793, %v994, %v998
      %v1000 = vshrl.u32 %v760, 16
      %v1002 = vrot.slane %v1000, 4
      %v1003 = vor.u32 %v1002, %v998
      %v1004 = vrot.slane %v1003, 4
      %v1006 = vshll.u32 %v783, 16
      %v1008 = vrot.slane %v1006, 5
      %v1009 = vsel %vm793, %v1004, %v1008
      %v1011 = vshrl.u32 %v761, 16
      %v1013 = vrot.slane %v1011, 4
      %v1014 = vshll.u32 %v761, 16
      %v1016 = vrot.slane %v1014, 5
      %v1017 = vor.u32 %v1013, %v1016
      %v1018 = vrot.slane %v1017, 4
      %v1020 = vshll.u32 %v762, 16
      %v1022 = vrot.slane %v1020, 5
      %v1023 = vsel %vm793, %v1018, %v1022
      %v1024 = vshrl.u32 %v762, 16
      %v1026 = vrot.slane %v1024, 4
      %v1027 = vor.u32 %v1026, %v1022
      %v1028 = vrot.slane %v1027, 4
      %v1030 = vshll.u32 %v784, 16
      %v1032 = vrot.slane %v1030, 5
      %v1033 = vsel %vm793, %v1028, %v1032
      %v1035 = vshrl.u32 %v763, 16
      %v1037 = vrot.slane %v1035, 4
      %v1038 = vshll.u32 %v763, 16
      %v1040 = vrot.slane %v1038, 5
      %v1041 = vor.u32 %v1037, %v1040
      %v1042 = vrot.slane %v1041, 4
      %v1044 = vshll.u32 %v764, 16
      %v1046 = vrot.slane %v1044, 5
      %v1047 = vsel %vm793, %v1042, %v1046
      %v1048 = vshrl.u32 %v764, 16
      %v1050 = vrot.slane %v1048, 4
      %v1051 = vor.u32 %v1050, %v1046
      %v1052 = vrot.slane %v1051, 4
      %v1054 = vshll.u32 %v785, 16
      %v1056 = vrot.slane %v1054, 5
      %v1057 = vsel %vm793, %v1052, %v1056
      %v1059 = vshrl.u32 %v765, 16
      %v1061 = vrot.slane %v1059, 4
      %v1062 = vshll.u32 %v765, 16
      %v1064 = vrot.slane %v1062, 5
      %v1065 = vor.u32 %v1061, %v1064
      %v1066 = vrot.slane %v1065, 4
      %v1068 = vshll.u32 %v766, 16
      %v1070 = vrot.slane %v1068, 5
      %v1071 = vsel %vm793, %v1066, %v1070
      %v1072 = vshrl.u32 %v766, 16
      %v1074 = vrot.slane %v1072, 4
      %v1075 = vor.u32 %v1074, %v1070
      %v1076 = vrot.slane %v1075, 4
      %v1078 = vshll.u32 %v786, 16
      %v1080 = vrot.slane %v1078, 5
      %v1081 = vsel %vm793, %v1076, %v1080
      %v1083 = vshrl.u32 %v767, 16
      %v1085 = vrot.slane %v1083, 4
      %v1086 = vshll.u32 %v767, 16
      %v1088 = vrot.slane %v1086, 5
      %v1089 = vor.u32 %v1085, %v1088
      %v1090 = vrot.slane %v1089, 4
      %v1092 = vshll.u32 %v768, 16
      %v1094 = vrot.slane %v1092, 5
      %v1095 = vsel %vm793, %v1090, %v1094
      %v1096 = vshrl.u32 %v768, 16
      %v1098 = vrot.slane %v1096, 4
      %v1099 = vor.u32 %v1098, %v1094
      %v1100 = vrot.slane %v1099, 4
      %v1102 = vshll.u32 %v787, 16
      %v1104 = vrot.slane %v1102, 5
      %v1105 = vsel %vm793, %v1100, %v1104
      %v1107 = vshrl.u32 %v769, 16
      %v1109 = vrot.slane %v1107, 4
      %v1110 = vshll.u32 %v769, 16
      %v1112 = vrot.slane %v1110, 5
      %v1113 = vor.u32 %v1109, %v1112
      %v1114 = vrot.slane %v1113, 4
      %v1116 = vshll.u32 %v770, 16
      %v1118 = vrot.slane %v1116, 5
      %v1119 = vsel %vm793, %v1114, %v1118
      %v1120 = vshrl.u32 %v770, 16
      %v1122 = vrot.slane %v1120, 4
      %v1123 = vor.u32 %v1122, %v1118
      %v1124 = vrot.slane %v1123, 4
      %v1126 = vshll.u32 %v788, 16
      %v1128 = vrot.slane %v1126, 5
      %v1129 = vsel %vm793, %v1124, %v1128
      %v1131 = vshrl.u32 %v771, 16
      %v1133 = vrot.slane %v1131, 4
      %v1134 = vshll.u32 %v771, 16
      %v1136 = vrot.slane %v1134, 5
      %v1137 = vor.u32 %v1133, %v1136
      %v1138 = vrot.slane %v1137, 4
      %v1140 = vshll.u32 %v772, 16
      %v1142 = vrot.slane %v1140, 5
      %v1143 = vsel %vm793, %v1138, %v1142
      %v1144 = vshrl.u32 %v772, 16
      %v1146 = vrot.slane %v1144, 4
      %v1147 = vor.u32 %v1146, %v1142
      %v1148 = vrot.slane %v1147, 4
      %v1150 = vshll.u32 %v789, 16
      %v1152 = vrot.slane %v1150, 5
      %v1153 = vsel %vm793, %v1148, %v1152
      %v1155 = vshrl.u32 %v773, 16
      %v1157 = vrot.slane %v1155, 4
      %v1158 = vshll.u32 %v773, 16
      %v1160 = vrot.slane %v1158, 5
      %v1161 = vor.u32 %v1157, %v1160
      %v1162 = vrot.slane %v1161, 4
      %v1164 = vshll.u32 %v774, 16
      %v1166 = vrot.slane %v1164, 5
      %v1167 = vsel %vm793, %v1162, %v1166
      %v1168 = vshrl.u32 %v774, 16
      %v1170 = vrot.slane %v1168, 4
      %v1171 = vor.u32 %v1170, %v1166
      %v1172 = vrot.slane %v1171, 4
      %v1174 = vshll.u32 %v790, 16
      %v1176 = vrot.slane %v1174, 5
      %v1177 = vsel %vm793, %v1172, %v1176
      %v1178 = vld [vmem:[#allocation2] sm:$0xe]
      %v1179 = vld [vmem:[#allocation2 + $0xc] sm:$0xe]
      %v1180 = vld [vmem:[#allocation2 + $0x18] sm:$0xe]
      %v1181 = vld [vmem:[#allocation2 + $0x24] sm:$0xe]
      %v1182 = vld [vmem:[#allocation2 + $0x30] sm:$0xe]
      %v1183 = vld [vmem:[#allocation2 + $0x3c] sm:$0xe]
      %v1184 = vld [vmem:[#allocation2 + $0x48] sm:$0xe]
      %v1185 = vld [vmem:[#allocation2 + $0x54] sm:$0xe]
      %v1186 = vld [vmem:[#allocation2 + $0x60] sm:$0xe]
      %v1187 = vld [vmem:[#allocation2 + $0x6c] sm:$0xe]
      %v1188 = vld [vmem:[#allocation2 + $0x78] sm:$0xe]
      %v1189 = vld [vmem:[#allocation2 + $0x84] sm:$0xe]
      %v1190 = vld [vmem:[#allocation2 + $0x90] sm:$0xe]
      %v1191 = vld [vmem:[#allocation2 + $0x9c] sm:$0xe]
      %v1192 = vld [vmem:[#allocation2 + $0xa8] sm:$0xe]
      %v1193 = vld [vmem:[#allocation2 + $0xb4] sm:$0xe]
      %vm1242 = vcmask 1042432
      %vm1243 = vcmask 1046532
      %vm1244 = vmor %vm1242, %vm1243
      %v1245 = vrot.slane %v1178, 5
      %v1246 = vrot.slane %v1245, 4
      %v1247 = vrot.slane %v744, 5
      %v1248 = vsel %vm1244, %v1246, %v1247
      %v1249 = vrot.slane %v1247, 4
      %v1250 = vrot.slane %v775, 5
      %v1251 = vsel %vm1244, %v1249, %v1250
      %v1252 = vrot.slane %v1179, 5
      %v1253 = vrot.slane %v1252, 4
      %v1254 = vrot.slane %v746, 5
      %v1255 = vsel %vm1244, %v1253, %v1254
      %v1256 = vrot.slane %v1254, 4
      %v1257 = vrot.slane %v776, 5
      %v1258 = vsel %vm1244, %v1256, %v1257
      %v1259 = vrot.slane %v1180, 5
      %v1260 = vrot.slane %v1259, 4
      %v1261 = vrot.slane %v748, 5
      %v1262 = vsel %vm1244, %v1260, %v1261
      %v1263 = vrot.slane %v1261, 4
      %v1264 = vrot.slane %v777, 5
      %v1265 = vsel %vm1244, %v1263, %v1264
      %v1266 = vrot.slane %v1181, 5
      %v1267 = vrot.slane %v1266, 4
      %v1268 = vrot.slane %v750, 5
      %v1269 = vsel %vm1244, %v1267, %v1268
      %v1270 = vrot.slane %v1268, 4
      %v1271 = vrot.slane %v778, 5
      %v1272 = vsel %vm1244, %v1270, %v1271
      %v1273 = vrot.slane %v1182, 5
      %v1274 = vrot.slane %v1273, 4
      %v1275 = vrot.slane %v752, 5
      %v1276 = vsel %vm1244, %v1274, %v1275
      %v1277 = vrot.slane %v1275, 4
      %v1278 = vrot.slane %v779, 5
      %v1279 = vsel %vm1244, %v1277, %v1278
      %v1280 = vrot.slane %v1183, 5
      %v1281 = vrot.slane %v1280, 4
      %v1282 = vrot.slane %v754, 5
      %v1283 = vsel %vm1244, %v1281, %v1282
      %v1284 = vrot.slane %v1282, 4
      %v1285 = vrot.slane %v780, 5
      %v1286 = vsel %vm1244, %v1284, %v1285
      %v1287 = vrot.slane %v1184, 5
      %v1288 = vrot.slane %v1287, 4
      %v1289 = vrot.slane %v756, 5
      %v1290 = vsel %vm1244, %v1288, %v1289
      %v1291 = vrot.slane %v1289, 4
      %v1292 = vrot.slane %v781, 5
      %v1293 = vsel %vm1244, %v1291, %v1292
      %v1294 = vrot.slane %v1185, 5
      %v1295 = vrot.slane %v1294, 4
      %v1296 = vrot.slane %v758, 5
      %v1297 = vsel %vm1244, %v1295, %v1296
      %v1298 = vrot.slane %v1296, 4
      %v1299 = vrot.slane %v782, 5
      %v1300 = vsel %vm1244, %v1298, %v1299
      %v1301 = vrot.slane %v1186, 5
      %v1302 = vrot.slane %v1301, 4
      %v1303 = vrot.slane %v760, 5
      %v1304 = vsel %vm1244, %v1302, %v1303
      %v1305 = vrot.slane %v1303, 4
      %v1306 = vrot.slane %v783, 5
      %v1307 = vsel %vm1244, %v1305, %v1306
      %v1308 = vrot.slane %v1187, 5
      %v1309 = vrot.slane %v1308, 4
      %v1310 = vrot.slane %v762, 5
      %v1311 = vsel %vm1244, %v1309, %v1310
      %v1312 = vrot.slane %v1310, 4
      %v1313 = vrot.slane %v784, 5
      %v1314 = vsel %vm1244, %v1312, %v1313
      %v1315 = vrot.slane %v1188, 5
      %v1316 = vrot.slane %v1315, 4
      %v1317 = vrot.slane %v764, 5
      %v1318 = vsel %vm1244, %v1316, %v1317
      %v1319 = vrot.slane %v1317, 4
      %v1320 = vrot.slane %v785, 5
      %v1321 = vsel %vm1244, %v1319, %v1320
      %v1322 = vrot.slane %v1189, 5
      %v1323 = vrot.slane %v1322, 4
      %v1324 = vrot.slane %v766, 5
      %v1325 = vsel %vm1244, %v1323, %v1324
      %v1326 = vrot.slane %v1324, 4
      %v1327 = vrot.slane %v786, 5
      %v1328 = vsel %vm1244, %v1326, %v1327
      %v1329 = vrot.slane %v1190, 5
      %v1330 = vrot.slane %v1329, 4
      %v1331 = vrot.slane %v768, 5
      %v1332 = vsel %vm1244, %v1330, %v1331
      %v1333 = vrot.slane %v1331, 4
      %v1334 = vrot.slane %v787, 5
      %v1335 = vsel %vm1244, %v1333, %v1334
      %v1336 = vrot.slane %v1191, 5
      %v1337 = vrot.slane %v1336, 4
      %v1338 = vrot.slane %v770, 5
      %v1339 = vsel %vm1244, %v1337, %v1338
      %v1340 = vrot.slane %v1338, 4
      %v1341 = vrot.slane %v788, 5
      %v1342 = vsel %vm1244, %v1340, %v1341
      %v1343 = vrot.slane %v1192, 5
      %v1344 = vrot.slane %v1343, 4
      %v1345 = vrot.slane %v772, 5
      %v1346 = vsel %vm1244, %v1344, %v1345
      %v1347 = vrot.slane %v1345, 4
      %v1348 = vrot.slane %v789, 5
      %v1349 = vsel %vm1244, %v1347, %v1348
      %v1350 = vrot.slane %v1193, 5
      %v1351 = vrot.slane %v1350, 4
      %v1352 = vrot.slane %v774, 5
      %v1353 = vsel %vm1244, %v1351, %v1352
      %v1354 = vrot.slane %v1352, 4
      %v1355 = vrot.slane %v790, 5
      %v1356 = vsel %vm1244, %v1354, %v1355
      %v1357 = vld [vmem:[%s625] sm:$0xf]
      %v1358 = vld [vmem:[%s625 + $0x4] sm:$0xf]
      %v1359 = vld [vmem:[%s625 + $0xc] sm:$0xf]
      %v1360 = vld [vmem:[%s625 + $0x10] sm:$0xf]
      %v1361 = vld [vmem:[%s625 + $0x18] sm:$0xf]
      %v1362 = vld [vmem:[%s625 + $0x1c] sm:$0xf]
      %v1363 = vld [vmem:[%s625 + $0x24] sm:$0xf]
      %v1364 = vld [vmem:[%s625 + $0x28] sm:$0xf]
      %v1365 = vld [vmem:[%s625 + $0x30] sm:$0xf]
      %v1366 = vld [vmem:[%s625 + $0x34] sm:$0xf]
      %v1367 = vld [vmem:[%s625 + $0x3c] sm:$0xf]
      %v1368 = vld [vmem:[%s625 + $0x40] sm:$0xf]
      %v1369 = vld [vmem:[%s625 + $0x48] sm:$0xf]
      %v1370 = vld [vmem:[%s625 + $0x4c] sm:$0xf]
      %v1371 = vld [vmem:[%s625 + $0x54] sm:$0xf]
      %v1372 = vld [vmem:[%s625 + $0x58] sm:$0xf]
      %v1373 = vld [vmem:[%s625 + $0x60] sm:$0xf]
      %v1374 = vld [vmem:[%s625 + $0x64] sm:$0xf]
      %v1375 = vld [vmem:[%s625 + $0x6c] sm:$0xf]
      %v1376 = vld [vmem:[%s625 + $0x70] sm:$0xf]
      %v1377 = vld [vmem:[%s625 + $0x78] sm:$0xf]
      %v1378 = vld [vmem:[%s625 + $0x7c] sm:$0xf]
      %v1379 = vld [vmem:[%s625 + $0x84] sm:$0xf]
      %v1380 = vld [vmem:[%s625 + $0x88] sm:$0xf]
      %v1381 = vld [vmem:[%s625 + $0x90] sm:$0xf]
      %v1382 = vld [vmem:[%s625 + $0x94] sm:$0xf]
      %v1383 = vld [vmem:[%s625 + $0x9c] sm:$0xf]
      %v1384 = vld [vmem:[%s625 + $0xa0] sm:$0xf]
      %v1385 = vld [vmem:[%s625 + $0xa8] sm:$0xf]
      %v1386 = vld [vmem:[%s625 + $0xac] sm:$0xf]
      %v1387 = vld [vmem:[%s625 + $0xb4] sm:$0xf]
      %v1388 = vld [vmem:[%s625 + $0xb8] sm:$0xf]
      %v1389 = vld [vmem:[%s625 + $0x8] sm:$0x1]
      %v1390 = vld [vmem:[%s625 + $0x14] sm:$0x1]
      %v1391 = vld [vmem:[%s625 + $0x20] sm:$0x1]
      %v1392 = vld [vmem:[%s625 + $0x2c] sm:$0x1]
      %v1393 = vld [vmem:[%s625 + $0x38] sm:$0x1]
      %v1394 = vld [vmem:[%s625 + $0x44] sm:$0x1]
      %v1395 = vld [vmem:[%s625 + $0x50] sm:$0x1]
      %v1396 = vld [vmem:[%s625 + $0x5c] sm:$0x1]
      %v1397 = vld [vmem:[%s625 + $0x68] sm:$0x1]
      %v1398 = vld [vmem:[%s625 + $0x74] sm:$0x1]
      %v1399 = vld [vmem:[%s625 + $0x80] sm:$0x1]
      %v1400 = vld [vmem:[%s625 + $0x8c] sm:$0x1]
      %v1401 = vld [vmem:[%s625 + $0x98] sm:$0x1]
      %v1402 = vld [vmem:[%s625 + $0xa4] sm:$0x1]
      %v1403 = vld [vmem:[%s625 + $0xb0] sm:$0x1]
      %v1404 = vld [vmem:[%s625 + $0xbc] sm:$0x1]
      %v1406 = vshrl.u32 %v1357, 16
      %v1408 = vrot.slane %v1406, 4
      %v1409 = vshll.u32 %v1357, 16
      %v1411 = vrot.slane %v1409, 5
      %v1412 = vor.u32 %v1408, %v1411
      %v1413 = vrot.slane %v1412, 4
      %v1415 = vshll.u32 %v1358, 16
      %v1417 = vrot.slane %v1415, 5
      %v1418 = vsel %vm793, %v1413, %v1417
      %v1419 = vshrl.u32 %v1358, 16
      %v1421 = vrot.slane %v1419, 4
      %v1422 = vor.u32 %v1421, %v1417
      %v1423 = vrot.slane %v1422, 4
      %v1425 = vshll.u32 %v1389, 16
      %v1427 = vrot.slane %v1425, 5
      %v1428 = vsel %vm793, %v1423, %v1427
      %v1430 = vshrl.u32 %v1359, 16
      %v1432 = vrot.slane %v1430, 4
      %v1433 = vshll.u32 %v1359, 16
      %v1435 = vrot.slane %v1433, 5
      %v1436 = vor.u32 %v1432, %v1435
      %v1437 = vrot.slane %v1436, 4
      %v1439 = vshll.u32 %v1360, 16
      %v1441 = vrot.slane %v1439, 5
      %v1442 = vsel %vm793, %v1437, %v1441
      %v1443 = vshrl.u32 %v1360, 16
      %v1445 = vrot.slane %v1443, 4
      %v1446 = vor.u32 %v1445, %v1441
      %v1447 = vrot.slane %v1446, 4
      %v1449 = vshll.u32 %v1390, 16
      %v1451 = vrot.slane %v1449, 5
      %v1452 = vsel %vm793, %v1447, %v1451
      %v1454 = vshrl.u32 %v1361, 16
      %v1456 = vrot.slane %v1454, 4
      %v1457 = vshll.u32 %v1361, 16
      %v1459 = vrot.slane %v1457, 5
      %v1460 = vor.u32 %v1456, %v1459
      %v1461 = vrot.slane %v1460, 4
      %v1463 = vshll.u32 %v1362, 16
      %v1465 = vrot.slane %v1463, 5
      %v1466 = vsel %vm793, %v1461, %v1465
      %v1467 = vshrl.u32 %v1362, 16
      %v1469 = vrot.slane %v1467, 4
      %v1470 = vor.u32 %v1469, %v1465
      %v1471 = vrot.slane %v1470, 4
      %v1473 = vshll.u32 %v1391, 16
      %v1475 = vrot.slane %v1473, 5
      %v1476 = vsel %vm793, %v1471, %v1475
      %v1478 = vshrl.u32 %v1363, 16
      %v1480 = vrot.slane %v1478, 4
      %v1481 = vshll.u32 %v1363, 16
      %v1483 = vrot.slane %v1481, 5
      %v1484 = vor.u32 %v1480, %v1483
      %v1485 = vrot.slane %v1484, 4
      %v1487 = vshll.u32 %v1364, 16
      %v1489 = vrot.slane %v1487, 5
      %v1490 = vsel %vm793, %v1485, %v1489
      %v1491 = vshrl.u32 %v1364, 16
      %v1493 = vrot.slane %v1491, 4
      %v1494 = vor.u32 %v1493, %v1489
      %v1495 = vrot.slane %v1494, 4
      %v1497 = vshll.u32 %v1392, 16
      %v1499 = vrot.slane %v1497, 5
      %v1500 = vsel %vm793, %v1495, %v1499
      %v1502 = vshrl.u32 %v1365, 16
      %v1504 = vrot.slane %v1502, 4
      %v1505 = vshll.u32 %v1365, 16
      %v1507 = vrot.slane %v1505, 5
      %v1508 = vor.u32 %v1504, %v1507
      %v1509 = vrot.slane %v1508, 4
      %v1511 = vshll.u32 %v1366, 16
      %v1513 = vrot.slane %v1511, 5
      %v1514 = vsel %vm793, %v1509, %v1513
      %v1515 = vshrl.u32 %v1366, 16
      %v1517 = vrot.slane %v1515, 4
      %v1518 = vor.u32 %v1517, %v1513
      %v1519 = vrot.slane %v1518, 4
      %v1521 = vshll.u32 %v1393, 16
      %v1523 = vrot.slane %v1521, 5
      %v1524 = vsel %vm793, %v1519, %v1523
      %v1526 = vshrl.u32 %v1367, 16
      %v1528 = vrot.slane %v1526, 4
      %v1529 = vshll.u32 %v1367, 16
      %v1531 = vrot.slane %v1529, 5
      %v1532 = vor.u32 %v1528, %v1531
      %v1533 = vrot.slane %v1532, 4
      %v1535 = vshll.u32 %v1368, 16
      %v1537 = vrot.slane %v1535, 5
      %v1538 = vsel %vm793, %v1533, %v1537
      %v1539 = vshrl.u32 %v1368, 16
      %v1541 = vrot.slane %v1539, 4
      %v1542 = vor.u32 %v1541, %v1537
      %v1543 = vrot.slane %v1542, 4
      %v1545 = vshll.u32 %v1394, 16
      %v1547 = vrot.slane %v1545, 5
      %v1548 = vsel %vm793, %v1543, %v1547
      %v1550 = vshrl.u32 %v1369, 16
      %v1552 = vrot.slane %v1550, 4
      %v1553 = vshll.u32 %v1369, 16
      %v1555 = vrot.slane %v1553, 5
      %v1556 = vor.u32 %v1552, %v1555
      %v1557 = vrot.slane %v1556, 4
      %v1559 = vshll.u32 %v1370, 16
      %v1561 = vrot.slane %v1559, 5
      %v1562 = vsel %vm793, %v1557, %v1561
      %v1563 = vshrl.u32 %v1370, 16
      %v1565 = vrot.slane %v1563, 4
      %v1566 = vor.u32 %v1565, %v1561
      %v1567 = vrot.slane %v1566, 4
      %v1569 = vshll.u32 %v1395, 16
      %v1571 = vrot.slane %v1569, 5
      %v1572 = vsel %vm793, %v1567, %v1571
      %v1574 = vshrl.u32 %v1371, 16
      %v1576 = vrot.slane %v1574, 4
      %v1577 = vshll.u32 %v1371, 16
      %v1579 = vrot.slane %v1577, 5
      %v1580 = vor.u32 %v1576, %v1579
      %v1581 = vrot.slane %v1580, 4
      %v1583 = vshll.u32 %v1372, 16
      %v1585 = vrot.slane %v1583, 5
      %v1586 = vsel %vm793, %v1581, %v1585
      %v1587 = vshrl.u32 %v1372, 16
      %v1589 = vrot.slane %v1587, 4
      %v1590 = vor.u32 %v1589, %v1585
      %v1591 = vrot.slane %v1590, 4
      %v1593 = vshll.u32 %v1396, 16
      %v1595 = vrot.slane %v1593, 5
      %v1596 = vsel %vm793, %v1591, %v1595
      %v1598 = vshrl.u32 %v1373, 16
      %v1600 = vrot.slane %v1598, 4
      %v1601 = vshll.u32 %v1373, 16
      %v1603 = vrot.slane %v1601, 5
      %v1604 = vor.u32 %v1600, %v1603
      %v1605 = vrot.slane %v1604, 4
      %v1607 = vshll.u32 %v1374, 16
      %v1609 = vrot.slane %v1607, 5
      %v1610 = vsel %vm793, %v1605, %v1609
      %v1611 = vshrl.u32 %v1374, 16
      %v1613 = vrot.slane %v1611, 4
      %v1614 = vor.u32 %v1613, %v1609
      %v1615 = vrot.slane %v1614, 4
      %v1617 = vshll.u32 %v1397, 16
      %v1619 = vrot.slane %v1617, 5
      %v1620 = vsel %vm793, %v1615, %v1619
      %v1622 = vshrl.u32 %v1375, 16
      %v1624 = vrot.slane %v1622, 4
      %v1625 = vshll.u32 %v1375, 16
      %v1627 = vrot.slane %v1625, 5
      %v1628 = vor.u32 %v1624, %v1627
      %v1629 = vrot.slane %v1628, 4
      %v1631 = vshll.u32 %v1376, 16
      %v1633 = vrot.slane %v1631, 5
      %v1634 = vsel %vm793, %v1629, %v1633
      %v1635 = vshrl.u32 %v1376, 16
      %v1637 = vrot.slane %v1635, 4
      %v1638 = vor.u32 %v1637, %v1633
      %v1639 = vrot.slane %v1638, 4
      %v1641 = vshll.u32 %v1398, 16
      %v1643 = vrot.slane %v1641, 5
      %v1644 = vsel %vm793, %v1639, %v1643
      %v1646 = vshrl.u32 %v1377, 16
      %v1648 = vrot.slane %v1646, 4
      %v1649 = vshll.u32 %v1377, 16
      %v1651 = vrot.slane %v1649, 5
      %v1652 = vor.u32 %v1648, %v1651
      %v1653 = vrot.slane %v1652, 4
      %v1655 = vshll.u32 %v1378, 16
      %v1657 = vrot.slane %v1655, 5
      %v1658 = vsel %vm793, %v1653, %v1657
      %v1659 = vshrl.u32 %v1378, 16
      %v1661 = vrot.slane %v1659, 4
      %v1662 = vor.u32 %v1661, %v1657
      %v1663 = vrot.slane %v1662, 4
      %v1665 = vshll.u32 %v1399, 16
      %v1667 = vrot.slane %v1665, 5
      %v1668 = vsel %vm793, %v1663, %v1667
      %v1670 = vshrl.u32 %v1379, 16
      %v1672 = vrot.slane %v1670, 4
      %v1673 = vshll.u32 %v1379, 16
      %v1675 = vrot.slane %v1673, 5
      %v1676 = vor.u32 %v1672, %v1675
      %v1677 = vrot.slane %v1676, 4
      %v1679 = vshll.u32 %v1380, 16
      %v1681 = vrot.slane %v1679, 5
      %v1682 = vsel %vm793, %v1677, %v1681
      %v1683 = vshrl.u32 %v1380, 16
      %v1685 = vrot.slane %v1683, 4
      %v1686 = vor.u32 %v1685, %v1681
      %v1687 = vrot.slane %v1686, 4
      %v1689 = vshll.u32 %v1400, 16
      %v1691 = vrot.slane %v1689, 5
      %v1692 = vsel %vm793, %v1687, %v1691
      %v1694 = vshrl.u32 %v1381, 16
      %v1696 = vrot.slane %v1694, 4
      %v1697 = vshll.u32 %v1381, 16
      %v1699 = vrot.slane %v1697, 5
      %v1700 = vor.u32 %v1696, %v1699
      %v1701 = vrot.slane %v1700, 4
      %v1703 = vshll.u32 %v1382, 16
      %v1705 = vrot.slane %v1703, 5
      %v1706 = vsel %vm793, %v1701, %v1705
      %v1707 = vshrl.u32 %v1382, 16
      %v1709 = vrot.slane %v1707, 4
      %v1710 = vor.u32 %v1709, %v1705
      %v1711 = vrot.slane %v1710, 4
      %v1713 = vshll.u32 %v1401, 16
      %v1715 = vrot.slane %v1713, 5
      %v1716 = vsel %vm793, %v1711, %v1715
      %v1718 = vshrl.u32 %v1383, 16
      %v1720 = vrot.slane %v1718, 4
      %v1721 = vshll.u32 %v1383, 16
      %v1723 = vrot.slane %v1721, 5
      %v1724 = vor.u32 %v1720, %v1723
      %v1725 = vrot.slane %v1724, 4
      %v1727 = vshll.u32 %v1384, 16
      %v1729 = vrot.slane %v1727, 5
      %v1730 = vsel %vm793, %v1725, %v1729
      %v1731 = vshrl.u32 %v1384, 16
      %v1733 = vrot.slane %v1731, 4
      %v1734 = vor.u32 %v1733, %v1729
      %v1735 = vrot.slane %v1734, 4
      %v1737 = vshll.u32 %v1402, 16
      %v1739 = vrot.slane %v1737, 5
      %v1740 = vsel %vm793, %v1735, %v1739
      %v1742 = vshrl.u32 %v1385, 16
      %v1744 = vrot.slane %v1742, 4
      %v1745 = vshll.u32 %v1385, 16
      %v1747 = vrot.slane %v1745, 5
      %v1748 = vor.u32 %v1744, %v1747
      %v1749 = vrot.slane %v1748, 4
      %v1751 = vshll.u32 %v1386, 16
      %v1753 = vrot.slane %v1751, 5
      %v1754 = vsel %vm793, %v1749, %v1753
      %v1755 = vshrl.u32 %v1386, 16
      %v1757 = vrot.slane %v1755, 4
      %v1758 = vor.u32 %v1757, %v1753
      %v1759 = vrot.slane %v1758, 4
      %v1761 = vshll.u32 %v1403, 16
      %v1763 = vrot.slane %v1761, 5
      %v1764 = vsel %vm793, %v1759, %v1763
      %v1766 = vshrl.u32 %v1387, 16
      %v1768 = vrot.slane %v1766, 4
      %v1769 = vshll.u32 %v1387, 16
      %v1771 = vrot.slane %v1769, 5
      %v1772 = vor.u32 %v1768, %v1771
      %v1773 = vrot.slane %v1772, 4
      %v1775 = vshll.u32 %v1388, 16
      %v1777 = vrot.slane %v1775, 5
      %v1778 = vsel %vm793, %v1773, %v1777
      %v1779 = vshrl.u32 %v1388, 16
      %v1781 = vrot.slane %v1779, 4
      %v1782 = vor.u32 %v1781, %v1777
      %v1783 = vrot.slane %v1782, 4
      %v1785 = vshll.u32 %v1404, 16
      %v1787 = vrot.slane %v1785, 5
      %v1788 = vsel %vm793, %v1783, %v1787
      %v1789 = vld [vmem:[%s625] sm:$0xe]
      %v1790 = vld [vmem:[%s625 + $0xc] sm:$0xe]
      %v1791 = vld [vmem:[%s625 + $0x18] sm:$0xe]
      %v1792 = vld [vmem:[%s625 + $0x24] sm:$0xe]
      %v1793 = vld [vmem:[%s625 + $0x30] sm:$0xe]
      %v1794 = vld [vmem:[%s625 + $0x3c] sm:$0xe]
      %v1795 = vld [vmem:[%s625 + $0x48] sm:$0xe]
      %v1796 = vld [vmem:[%s625 + $0x54] sm:$0xe]
      %v1797 = vld [vmem:[%s625 + $0x60] sm:$0xe]
      %v1798 = vld [vmem:[%s625 + $0x6c] sm:$0xe]
      %v1799 = vld [vmem:[%s625 + $0x78] sm:$0xe]
      %v1800 = vld [vmem:[%s625 + $0x84] sm:$0xe]
      %v1801 = vld [vmem:[%s625 + $0x90] sm:$0xe]
      %v1802 = vld [vmem:[%s625 + $0x9c] sm:$0xe]
      %v1803 = vld [vmem:[%s625 + $0xa8] sm:$0xe]
      %v1804 = vld [vmem:[%s625 + $0xb4] sm:$0xe]
      %v1853 = vrot.slane %v1789, 5
      %v1854 = vrot.slane %v1853, 4
      %v1855 = vrot.slane %v1358, 5
      %v1856 = vsel %vm1244, %v1854, %v1855
      %v1857 = vrot.slane %v1855, 4
      %v1858 = vrot.slane %v1389, 5
      %v1859 = vsel %vm1244, %v1857, %v1858
      %v1860 = vrot.slane %v1790, 5
      %v1861 = vrot.slane %v1860, 4
      %v1862 = vrot.slane %v1360, 5
      %v1863 = vsel %vm1244, %v1861, %v1862
      %v1864 = vrot.slane %v1862, 4
      %v1865 = vrot.slane %v1390, 5
      %v1866 = vsel %vm1244, %v1864, %v1865
      %v1867 = vrot.slane %v1791, 5
      %v1868 = vrot.slane %v1867, 4
      %v1869 = vrot.slane %v1362, 5
      %v1870 = vsel %vm1244, %v1868, %v1869
      %v1871 = vrot.slane %v1869, 4
      %v1872 = vrot.slane %v1391, 5
      %v1873 = vsel %vm1244, %v1871, %v1872
      %v1874 = vrot.slane %v1792, 5
      %v1875 = vrot.slane %v1874, 4
      %v1876 = vrot.slane %v1364, 5
      %v1877 = vsel %vm1244, %v1875, %v1876
      %v1878 = vrot.slane %v1876, 4
      %v1879 = vrot.slane %v1392, 5
      %v1880 = vsel %vm1244, %v1878, %v1879
      %v1881 = vrot.slane %v1793, 5
      %v1882 = vrot.slane %v1881, 4
      %v1883 = vrot.slane %v1366, 5
      %v1884 = vsel %vm1244, %v1882, %v1883
      %v1885 = vrot.slane %v1883, 4
      %v1886 = vrot.slane %v1393, 5
      %v1887 = vsel %vm1244, %v1885, %v1886
      %v1888 = vrot.slane %v1794, 5
      %v1889 = vrot.slane %v1888, 4
      %v1890 = vrot.slane %v1368, 5
      %v1891 = vsel %vm1244, %v1889, %v1890
      %v1892 = vrot.slane %v1890, 4
      %v1893 = vrot.slane %v1394, 5
      %v1894 = vsel %vm1244, %v1892, %v1893
      %v1895 = vrot.slane %v1795, 5
      %v1896 = vrot.slane %v1895, 4
      %v1897 = vrot.slane %v1370, 5
      %v1898 = vsel %vm1244, %v1896, %v1897
      %v1899 = vrot.slane %v1897, 4
      %v1900 = vrot.slane %v1395, 5
      %v1901 = vsel %vm1244, %v1899, %v1900
      %v1902 = vrot.slane %v1796, 5
      %v1903 = vrot.slane %v1902, 4
      %v1904 = vrot.slane %v1372, 5
      %v1905 = vsel %vm1244, %v1903, %v1904
      %v1906 = vrot.slane %v1904, 4
      %v1907 = vrot.slane %v1396, 5
      %v1908 = vsel %vm1244, %v1906, %v1907
      %v1909 = vrot.slane %v1797, 5
      %v1910 = vrot.slane %v1909, 4
      %v1911 = vrot.slane %v1374, 5
      %v1912 = vsel %vm1244, %v1910, %v1911
      %v1913 = vrot.slane %v1911, 4
      %v1914 = vrot.slane %v1397, 5
      %v1915 = vsel %vm1244, %v1913, %v1914
      %v1916 = vrot.slane %v1798, 5
      %v1917 = vrot.slane %v1916, 4
      %v1918 = vrot.slane %v1376, 5
      %v1919 = vsel %vm1244, %v1917, %v1918
      %v1920 = vrot.slane %v1918, 4
      %v1921 = vrot.slane %v1398, 5
      %v1922 = vsel %vm1244, %v1920, %v1921
      %v1923 = vrot.slane %v1799, 5
      %v1924 = vrot.slane %v1923, 4
      %v1925 = vrot.slane %v1378, 5
      %v1926 = vsel %vm1244, %v1924, %v1925
      %v1927 = vrot.slane %v1925, 4
      %v1928 = vrot.slane %v1399, 5
      %v1929 = vsel %vm1244, %v1927, %v1928
      %v1930 = vrot.slane %v1800, 5
      %v1931 = vrot.slane %v1930, 4
      %v1932 = vrot.slane %v1380, 5
      %v1933 = vsel %vm1244, %v1931, %v1932
      %v1934 = vrot.slane %v1932, 4
      %v1935 = vrot.slane %v1400, 5
      %v1936 = vsel %vm1244, %v1934, %v1935
      %v1937 = vrot.slane %v1801, 5
      %v1938 = vrot.slane %v1937, 4
      %v1939 = vrot.slane %v1382, 5
      %v1940 = vsel %vm1244, %v1938, %v1939
      %v1941 = vrot.slane %v1939, 4
      %v1942 = vrot.slane %v1401, 5
      %v1943 = vsel %vm1244, %v1941, %v1942
      %v1944 = vrot.slane %v1802, 5
      %v1945 = vrot.slane %v1944, 4
      %v1946 = vrot.slane %v1384, 5
      %v1947 = vsel %vm1244, %v1945, %v1946
      %v1948 = vrot.slane %v1946, 4
      %v1949 = vrot.slane %v1402, 5
      %v1950 = vsel %vm1244, %v1948, %v1949
      %v1951 = vrot.slane %v1803, 5
      %v1952 = vrot.slane %v1951, 4
      %v1953 = vrot.slane %v1386, 5
      %v1954 = vsel %vm1244, %v1952, %v1953
      %v1955 = vrot.slane %v1953, 4
      %v1956 = vrot.slane %v1403, 5
      %v1957 = vsel %vm1244, %v1955, %v1956
      %v1958 = vrot.slane %v1804, 5
      %v1959 = vrot.slane %v1958, 4
      %v1960 = vrot.slane %v1388, 5
      %v1961 = vsel %vm1244, %v1959, %v1960
      %v1962 = vrot.slane %v1960, 4
      %v1963 = vrot.slane %v1404, 5
      %v1964 = vsel %vm1244, %v1962, %v1963
      %s1965 = scalar_lea.vmem [#allocation2], 24
      %v1966 = vld [vmem:[%s1965] sm:$0xf]
      %v1967 = vld [vmem:[%s1965 + $0x4] sm:$0xf]
      %v1968 = vld [vmem:[%s1965 + $0xc] sm:$0xf]
      %v1969 = vld [vmem:[%s1965 + $0x10] sm:$0xf]
      %v1970 = vld [vmem:[%s1965 + $0x18] sm:$0xf]
      %v1971 = vld [vmem:[%s1965 + $0x1c] sm:$0xf]
      %v1972 = vld [vmem:[%s1965 + $0x24] sm:$0xf]
      %v1973 = vld [vmem:[%s1965 + $0x28] sm:$0xf]
      %v1974 = vld [vmem:[%s1965 + $0x30] sm:$0xf]
      %v1975 = vld [vmem:[%s1965 + $0x34] sm:$0xf]
      %v1976 = vld [vmem:[%s1965 + $0x3c] sm:$0xf]
      %v1977 = vld [vmem:[%s1965 + $0x40] sm:$0xf]
      %v1978 = vld [vmem:[%s1965 + $0x48] sm:$0xf]
      %v1979 = vld [vmem:[%s1965 + $0x4c] sm:$0xf]
      %v1980 = vld [vmem:[%s1965 + $0x54] sm:$0xf]
      %v1981 = vld [vmem:[%s1965 + $0x58] sm:$0xf]
      %v1982 = vld [vmem:[%s1965 + $0x60] sm:$0xf]
      %v1983 = vld [vmem:[%s1965 + $0x64] sm:$0xf]
      %v1984 = vld [vmem:[%s1965 + $0x6c] sm:$0xf]
      %v1985 = vld [vmem:[%s1965 + $0x70] sm:$0xf]
      %v1986 = vld [vmem:[%s1965 + $0x78] sm:$0xf]
      %v1987 = vld [vmem:[%s1965 + $0x7c] sm:$0xf]
      %v1988 = vld [vmem:[%s1965 + $0x84] sm:$0xf]
      %v1989 = vld [vmem:[%s1965 + $0x88] sm:$0xf]
      %v1990 = vld [vmem:[%s1965 + $0x90] sm:$0xf]
      %v1991 = vld [vmem:[%s1965 + $0x94] sm:$0xf]
      %v1992 = vld [vmem:[%s1965 + $0x9c] sm:$0xf]
      %v1993 = vld [vmem:[%s1965 + $0xa0] sm:$0xf]
      %v1994 = vld [vmem:[%s1965 + $0xa8] sm:$0xf]
      %v1995 = vld [vmem:[%s1965 + $0xac] sm:$0xf]
      %v1996 = vld [vmem:[%s1965 + $0xb4] sm:$0xf]
      %v1997 = vld [vmem:[%s1965 + $0xb8] sm:$0xf]
      %v1998 = vld [vmem:[%s1965 + $0x8] sm:$0x1]
      %v1999 = vld [vmem:[%s1965 + $0x14] sm:$0x1]
      %v2000 = vld [vmem:[%s1965 + $0x20] sm:$0x1]
      %v2001 = vld [vmem:[%s1965 + $0x2c] sm:$0x1]
      %v2002 = vld [vmem:[%s1965 + $0x38] sm:$0x1]
      %v2003 = vld [vmem:[%s1965 + $0x44] sm:$0x1]
      %v2004 = vld [vmem:[%s1965 + $0x50] sm:$0x1]
      %v2005 = vld [vmem:[%s1965 + $0x5c] sm:$0x1]
      %v2006 = vld [vmem:[%s1965 + $0x68] sm:$0x1]
      %v2007 = vld [vmem:[%s1965 + $0x74] sm:$0x1]
      %v2008 = vld [vmem:[%s1965 + $0x80] sm:$0x1]
      %v2009 = vld [vmem:[%s1965 + $0x8c] sm:$0x1]
      %v2010 = vld [vmem:[%s1965 + $0x98] sm:$0x1]
      %v2011 = vld [vmem:[%s1965 + $0xa4] sm:$0x1]
      %v2012 = vld [vmem:[%s1965 + $0xb0] sm:$0x1]
      %v2013 = vld [vmem:[%s1965 + $0xbc] sm:$0x1]
      %v2015 = vshrl.u32 %v1966, 16
      %v2017 = vrot.slane %v2015, 4
      %v2018 = vshll.u32 %v1966, 16
      %v2020 = vrot.slane %v2018, 5
      %v2021 = vor.u32 %v2017, %v2020
      %v2022 = vrot.slane %v2021, 4
      %v2024 = vshll.u32 %v1967, 16
      %v2026 = vrot.slane %v2024, 5
      %v2027 = vsel %vm793, %v2022, %v2026
      %v2028 = vshrl.u32 %v1967, 16
      %v2030 = vrot.slane %v2028, 4
      %v2031 = vor.u32 %v2030, %v2026
      %v2032 = vrot.slane %v2031, 4
      %v2034 = vshll.u32 %v1998, 16
      %v2036 = vrot.slane %v2034, 5
      %v2037 = vsel %vm793, %v2032, %v2036
      %v2039 = vshrl.u32 %v1968, 16
      %v2041 = vrot.slane %v2039, 4
      %v2042 = vshll.u32 %v1968, 16
      %v2044 = vrot.slane %v2042, 5
      %v2045 = vor.u32 %v2041, %v2044
      %v2046 = vrot.slane %v2045, 4
      %v2048 = vshll.u32 %v1969, 16
      %v2050 = vrot.slane %v2048, 5
      %v2051 = vsel %vm793, %v2046, %v2050
      %v2052 = vshrl.u32 %v1969, 16
      %v2054 = vrot.slane %v2052, 4
      %v2055 = vor.u32 %v2054, %v2050
      %v2056 = vrot.slane %v2055, 4
      %v2058 = vshll.u32 %v1999, 16
      %v2060 = vrot.slane %v2058, 5
      %v2061 = vsel %vm793, %v2056, %v2060
      %v2063 = vshrl.u32 %v1970, 16
      %v2065 = vrot.slane %v2063, 4
      %v2066 = vshll.u32 %v1970, 16
      %v2068 = vrot.slane %v2066, 5
      %v2069 = vor.u32 %v2065, %v2068
      %v2070 = vrot.slane %v2069, 4
      %v2072 = vshll.u32 %v1971, 16
      %v2074 = vrot.slane %v2072, 5
      %v2075 = vsel %vm793, %v2070, %v2074
      %v2076 = vshrl.u32 %v1971, 16
      %v2078 = vrot.slane %v2076, 4
      %v2079 = vor.u32 %v2078, %v2074
      %v2080 = vrot.slane %v2079, 4
      %v2082 = vshll.u32 %v2000, 16
      %v2084 = vrot.slane %v2082, 5
      %v2085 = vsel %vm793, %v2080, %v2084
      %v2087 = vshrl.u32 %v1972, 16
      %v2089 = vrot.slane %v2087, 4
      %v2090 = vshll.u32 %v1972, 16
      %v2092 = vrot.slane %v2090, 5
      %v2093 = vor.u32 %v2089, %v2092
      %v2094 = vrot.slane %v2093, 4
      %v2096 = vshll.u32 %v1973, 16
      %v2098 = vrot.slane %v2096, 5
      %v2099 = vsel %vm793, %v2094, %v2098
      %v2100 = vshrl.u32 %v1973, 16
      %v2102 = vrot.slane %v2100, 4
      %v2103 = vor.u32 %v2102, %v2098
      %v2104 = vrot.slane %v2103, 4
      %v2106 = vshll.u32 %v2001, 16
      %v2108 = vrot.slane %v2106, 5
      %v2109 = vsel %vm793, %v2104, %v2108
      %v2111 = vshrl.u32 %v1974, 16
      %v2113 = vrot.slane %v2111, 4
      %v2114 = vshll.u32 %v1974, 16
      %v2116 = vrot.slane %v2114, 5
      %v2117 = vor.u32 %v2113, %v2116
      %v2118 = vrot.slane %v2117, 4
      %v2120 = vshll.u32 %v1975, 16
      %v2122 = vrot.slane %v2120, 5
      %v2123 = vsel %vm793, %v2118, %v2122
      %v2124 = vshrl.u32 %v1975, 16
      %v2126 = vrot.slane %v2124, 4
      %v2127 = vor.u32 %v2126, %v2122
      %v2128 = vrot.slane %v2127, 4
      %v2130 = vshll.u32 %v2002, 16
      %v2132 = vrot.slane %v2130, 5
      %v2133 = vsel %vm793, %v2128, %v2132
      %v2135 = vshrl.u32 %v1976, 16
      %v2137 = vrot.slane %v2135, 4
      %v2138 = vshll.u32 %v1976, 16
      %v2140 = vrot.slane %v2138, 5
      %v2141 = vor.u32 %v2137, %v2140
      %v2142 = vrot.slane %v2141, 4
      %v2144 = vshll.u32 %v1977, 16
      %v2146 = vrot.slane %v2144, 5
      %v2147 = vsel %vm793, %v2142, %v2146
      %v2148 = vshrl.u32 %v1977, 16
      %v2150 = vrot.slane %v2148, 4
      %v2151 = vor.u32 %v2150, %v2146
      %v2152 = vrot.slane %v2151, 4
      %v2154 = vshll.u32 %v2003, 16
      %v2156 = vrot.slane %v2154, 5
      %v2157 = vsel %vm793, %v2152, %v2156
      %v2159 = vshrl.u32 %v1978, 16
      %v2161 = vrot.slane %v2159, 4
      %v2162 = vshll.u32 %v1978, 16
      %v2164 = vrot.slane %v2162, 5
      %v2165 = vor.u32 %v2161, %v2164
      %v2166 = vrot.slane %v2165, 4
      %v2168 = vshll.u32 %v1979, 16
      %v2170 = vrot.slane %v2168, 5
      %v2171 = vsel %vm793, %v2166, %v2170
      %v2172 = vshrl.u32 %v1979, 16
      %v2174 = vrot.slane %v2172, 4
      %v2175 = vor.u32 %v2174, %v2170
      %v2176 = vrot.slane %v2175, 4
      %v2178 = vshll.u32 %v2004, 16
      %v2180 = vrot.slane %v2178, 5
      %v2181 = vsel %vm793, %v2176, %v2180
      %v2183 = vshrl.u32 %v1980, 16
      %v2185 = vrot.slane %v2183, 4
      %v2186 = vshll.u32 %v1980, 16
      %v2188 = vrot.slane %v2186, 5
      %v2189 = vor.u32 %v2185, %v2188
      %v2190 = vrot.slane %v2189, 4
      %v2192 = vshll.u32 %v1981, 16
      %v2194 = vrot.slane %v2192, 5
      %v2195 = vsel %vm793, %v2190, %v2194
      %v2196 = vshrl.u32 %v1981, 16
      %v2198 = vrot.slane %v2196, 4
      %v2199 = vor.u32 %v2198, %v2194
      %v2200 = vrot.slane %v2199, 4
      %v2202 = vshll.u32 %v2005, 16
      %v2204 = vrot.slane %v2202, 5
      %v2205 = vsel %vm793, %v2200, %v2204
      %v2207 = vshrl.u32 %v1982, 16
      %v2209 = vrot.slane %v2207, 4
      %v2210 = vshll.u32 %v1982, 16
      %v2212 = vrot.slane %v2210, 5
      %v2213 = vor.u32 %v2209, %v2212
      %v2214 = vrot.slane %v2213, 4
      %v2216 = vshll.u32 %v1983, 16
      %v2218 = vrot.slane %v2216, 5
      %v2219 = vsel %vm793, %v2214, %v2218
      %v2220 = vshrl.u32 %v1983, 16
      %v2222 = vrot.slane %v2220, 4
      %v2223 = vor.u32 %v2222, %v2218
      %v2224 = vrot.slane %v2223, 4
      %v2226 = vshll.u32 %v2006, 16
      %v2228 = vrot.slane %v2226, 5
      %v2229 = vsel %vm793, %v2224, %v2228
      %v2231 = vshrl.u32 %v1984, 16
      %v2233 = vrot.slane %v2231, 4
      %v2234 = vshll.u32 %v1984, 16
      %v2236 = vrot.slane %v2234, 5
      %v2237 = vor.u32 %v2233, %v2236
      %v2238 = vrot.slane %v2237, 4
      %v2240 = vshll.u32 %v1985, 16
      %v2242 = vrot.slane %v2240, 5
      %v2243 = vsel %vm793, %v2238, %v2242
      %v2244 = vshrl.u32 %v1985, 16
      %v2246 = vrot.slane %v2244, 4
      %v2247 = vor.u32 %v2246, %v2242
      %v2248 = vrot.slane %v2247, 4
      %v2250 = vshll.u32 %v2007, 16
      %v2252 = vrot.slane %v2250, 5
      %v2253 = vsel %vm793, %v2248, %v2252
      %v2255 = vshrl.u32 %v1986, 16
      %v2257 = vrot.slane %v2255, 4
      %v2258 = vshll.u32 %v1986, 16
      %v2260 = vrot.slane %v2258, 5
      %v2261 = vor.u32 %v2257, %v2260
      %v2262 = vrot.slane %v2261, 4
      %v2264 = vshll.u32 %v1987, 16
      %v2266 = vrot.slane %v2264, 5
      %v2267 = vsel %vm793, %v2262, %v2266
      %v2268 = vshrl.u32 %v1987, 16
      %v2270 = vrot.slane %v2268, 4
      %v2271 = vor.u32 %v2270, %v2266
      %v2272 = vrot.slane %v2271, 4
      %v2274 = vshll.u32 %v2008, 16
      %v2276 = vrot.slane %v2274, 5
      %v2277 = vsel %vm793, %v2272, %v2276
      %v2279 = vshrl.u32 %v1988, 16
      %v2281 = vrot.slane %v2279, 4
      %v2282 = vshll.u32 %v1988, 16
      %v2284 = vrot.slane %v2282, 5
      %v2285 = vor.u32 %v2281, %v2284
      %v2286 = vrot.slane %v2285, 4
      %v2288 = vshll.u32 %v1989, 16
      %v2290 = vrot.slane %v2288, 5
      %v2291 = vsel %vm793, %v2286, %v2290
      %v2292 = vshrl.u32 %v1989, 16
      %v2294 = vrot.slane %v2292, 4
      %v2295 = vor.u32 %v2294, %v2290
      %v2296 = vrot.slane %v2295, 4
      %v2298 = vshll.u32 %v2009, 16
      %v2300 = vrot.slane %v2298, 5
      %v2301 = vsel %vm793, %v2296, %v2300
      %v2303 = vshrl.u32 %v1990, 16
      %v2305 = vrot.slane %v2303, 4
      %v2306 = vshll.u32 %v1990, 16
      %v2308 = vrot.slane %v2306, 5
      %v2309 = vor.u32 %v2305, %v2308
      %v2310 = vrot.slane %v2309, 4
      %v2312 = vshll.u32 %v1991, 16
      %v2314 = vrot.slane %v2312, 5
      %v2315 = vsel %vm793, %v2310, %v2314
      %v2316 = vshrl.u32 %v1991, 16
      %v2318 = vrot.slane %v2316, 4
      %v2319 = vor.u32 %v2318, %v2314
      %v2320 = vrot.slane %v2319, 4
      %v2322 = vshll.u32 %v2010, 16
      %v2324 = vrot.slane %v2322, 5
      %v2325 = vsel %vm793, %v2320, %v2324
      %v2327 = vshrl.u32 %v1992, 16
      %v2329 = vrot.slane %v2327, 4
      %v2330 = vshll.u32 %v1992, 16
      %v2332 = vrot.slane %v2330, 5
      %v2333 = vor.u32 %v2329, %v2332
      %v2334 = vrot.slane %v2333, 4
      %v2336 = vshll.u32 %v1993, 16
      %v2338 = vrot.slane %v2336, 5
      %v2339 = vsel %vm793, %v2334, %v2338
      %v2340 = vshrl.u32 %v1993, 16
      %v2342 = vrot.slane %v2340, 4
      %v2343 = vor.u32 %v2342, %v2338
      %v2344 = vrot.slane %v2343, 4
      %v2346 = vshll.u32 %v2011, 16
      %v2348 = vrot.slane %v2346, 5
      %v2349 = vsel %vm793, %v2344, %v2348
      %v2351 = vshrl.u32 %v1994, 16
      %v2353 = vrot.slane %v2351, 4
      %v2354 = vshll.u32 %v1994, 16
      %v2356 = vrot.slane %v2354, 5
      %v2357 = vor.u32 %v2353, %v2356
      %v2358 = vrot.slane %v2357, 4
      %v2360 = vshll.u32 %v1995, 16
      %v2362 = vrot.slane %v2360, 5
      %v2363 = vsel %vm793, %v2358, %v2362
      %v2364 = vshrl.u32 %v1995, 16
      %v2366 = vrot.slane %v2364, 4
      %v2367 = vor.u32 %v2366, %v2362
      %v2368 = vrot.slane %v2367, 4
      %v2370 = vshll.u32 %v2012, 16
      %v2372 = vrot.slane %v2370, 5
      %v2373 = vsel %vm793, %v2368, %v2372
      %v2375 = vshrl.u32 %v1996, 16
      %v2377 = vrot.slane %v2375, 4
      %v2378 = vshll.u32 %v1996, 16
      %v2380 = vrot.slane %v2378, 5
      %v2381 = vor.u32 %v2377, %v2380
      %v2382 = vrot.slane %v2381, 4
      %v2384 = vshll.u32 %v1997, 16
      %v2386 = vrot.slane %v2384, 5
      %v2387 = vsel %vm793, %v2382, %v2386
      %v2388 = vshrl.u32 %v1997, 16
      %v2390 = vrot.slane %v2388, 4
      %v2391 = vor.u32 %v2390, %v2386
      %v2392 = vrot.slane %v2391, 4
      %v2394 = vshll.u32 %v2013, 16
      %v2396 = vrot.slane %v2394, 5
      %v2397 = vsel %vm793, %v2392, %v2396
      %v2398 = vld [vmem:[%s1965] sm:$0xe]
      %v2399 = vld [vmem:[%s1965 + $0xc] sm:$0xe]
      %v2400 = vld [vmem:[%s1965 + $0x18] sm:$0xe]
      %v2401 = vld [vmem:[%s1965 + $0x24] sm:$0xe]
      %v2402 = vld [vmem:[%s1965 + $0x30] sm:$0xe]
      %v2403 = vld [vmem:[%s1965 + $0x3c] sm:$0xe]
      %v2404 = vld [vmem:[%s1965 + $0x48] sm:$0xe]
      %v2405 = vld [vmem:[%s1965 + $0x54] sm:$0xe]
      %v2406 = vld [vmem:[%s1965 + $0x60] sm:$0xe]
      %v2407 = vld [vmem:[%s1965 + $0x6c] sm:$0xe]
      %v2408 = vld [vmem:[%s1965 + $0x78] sm:$0xe]
      %v2409 = vld [vmem:[%s1965 + $0x84] sm:$0xe]
      %v2410 = vld [vmem:[%s1965 + $0x90] sm:$0xe]
      %v2411 = vld [vmem:[%s1965 + $0x9c] sm:$0xe]
      %v2412 = vld [vmem:[%s1965 + $0xa8] sm:$0xe]
      %v2413 = vld [vmem:[%s1965 + $0xb4] sm:$0xe]
      %v2462 = vrot.slane %v2398, 5
      %v2463 = vrot.slane %v2462, 4
      %v2464 = vrot.slane %v1967, 5
      %v2465 = vsel %vm1244, %v2463, %v2464
      %v2466 = vrot.slane %v2464, 4
      %v2467 = vrot.slane %v1998, 5
      %v2468 = vsel %vm1244, %v2466, %v2467
      %v2469 = vrot.slane %v2399, 5
      %v2470 = vrot.slane %v2469, 4
      %v2471 = vrot.slane %v1969, 5
      %v2472 = vsel %vm1244, %v2470, %v2471
      %v2473 = vrot.slane %v2471, 4
      %v2474 = vrot.slane %v1999, 5
      %v2475 = vsel %vm1244, %v2473, %v2474
      %v2476 = vrot.slane %v2400, 5
      %v2477 = vrot.slane %v2476, 4
      %v2478 = vrot.slane %v1971, 5
      %v2479 = vsel %vm1244, %v2477, %v2478
      %v2480 = vrot.slane %v2478, 4
      %v2481 = vrot.slane %v2000, 5
      %v2482 = vsel %vm1244, %v2480, %v2481
      %v2483 = vrot.slane %v2401, 5
      %v2484 = vrot.slane %v2483, 4
      %v2485 = vrot.slane %v1973, 5
      %v2486 = vsel %vm1244, %v2484, %v2485
      %v2487 = vrot.slane %v2485, 4
      %v2488 = vrot.slane %v2001, 5
      %v2489 = vsel %vm1244, %v2487, %v2488
      %v2490 = vrot.slane %v2402, 5
      %v2491 = vrot.slane %v2490, 4
      %v2492 = vrot.slane %v1975, 5
      %v2493 = vsel %vm1244, %v2491, %v2492
      %v2494 = vrot.slane %v2492, 4
      %v2495 = vrot.slane %v2002, 5
      %v2496 = vsel %vm1244, %v2494, %v2495
      %v2497 = vrot.slane %v2403, 5
      %v2498 = vrot.slane %v2497, 4
      %v2499 = vrot.slane %v1977, 5
      %v2500 = vsel %vm1244, %v2498, %v2499
      %v2501 = vrot.slane %v2499, 4
      %v2502 = vrot.slane %v2003, 5
      %v2503 = vsel %vm1244, %v2501, %v2502
      %v2504 = vrot.slane %v2404, 5
      %v2505 = vrot.slane %v2504, 4
      %v2506 = vrot.slane %v1979, 5
      %v2507 = vsel %vm1244, %v2505, %v2506
      %v2508 = vrot.slane %v2506, 4
      %v2509 = vrot.slane %v2004, 5
      %v2510 = vsel %vm1244, %v2508, %v2509
      %v2511 = vrot.slane %v2405, 5
      %v2512 = vrot.slane %v2511, 4
      %v2513 = vrot.slane %v1981, 5
      %v2514 = vsel %vm1244, %v2512, %v2513
      %v2515 = vrot.slane %v2513, 4
      %v2516 = vrot.slane %v2005, 5
      %v2517 = vsel %vm1244, %v2515, %v2516
      %v2518 = vrot.slane %v2406, 5
      %v2519 = vrot.slane %v2518, 4
      %v2520 = vrot.slane %v1983, 5
      %v2521 = vsel %vm1244, %v2519, %v2520
      %v2522 = vrot.slane %v2520, 4
      %v2523 = vrot.slane %v2006, 5
      %v2524 = vsel %vm1244, %v2522, %v2523
      %v2525 = vrot.slane %v2407, 5
      %v2526 = vrot.slane %v2525, 4
      %v2527 = vrot.slane %v1985, 5
      %v2528 = vsel %vm1244, %v2526, %v2527
      %v2529 = vrot.slane %v2527, 4
      %v2530 = vrot.slane %v2007, 5
      %v2531 = vsel %vm1244, %v2529, %v2530
      %v2532 = vrot.slane %v2408, 5
      %v2533 = vrot.slane %v2532, 4
      %v2534 = vrot.slane %v1987, 5
      %v2535 = vsel %vm1244, %v2533, %v2534
      %v2536 = vrot.slane %v2534, 4
      %v2537 = vrot.slane %v2008, 5
      %v2538 = vsel %vm1244, %v2536, %v2537
      %v2539 = vrot.slane %v2409, 5
      %v2540 = vrot.slane %v2539, 4
      %v2541 = vrot.slane %v1989, 5
      %v2542 = vsel %vm1244, %v2540, %v2541
      %v2543 = vrot.slane %v2541, 4
      %v2544 = vrot.slane %v2009, 5
      %v2545 = vsel %vm1244, %v2543, %v2544
      %v2546 = vrot.slane %v2410, 5
      %v2547 = vrot.slane %v2546, 4
      %v2548 = vrot.slane %v1991, 5
      %v2549 = vsel %vm1244, %v2547, %v2548
      %v2550 = vrot.slane %v2548, 4
      %v2551 = vrot.slane %v2010, 5
      %v2552 = vsel %vm1244, %v2550, %v2551
      %v2553 = vrot.slane %v2411, 5
      %v2554 = vrot.slane %v2553, 4
      %v2555 = vrot.slane %v1993, 5
      %v2556 = vsel %vm1244, %v2554, %v2555
      %v2557 = vrot.slane %v2555, 4
      %v2558 = vrot.slane %v2011, 5
      %v2559 = vsel %vm1244, %v2557, %v2558
      %v2560 = vrot.slane %v2412, 5
      %v2561 = vrot.slane %v2560, 4
      %v2562 = vrot.slane %v1995, 5
      %v2563 = vsel %vm1244, %v2561, %v2562
      %v2564 = vrot.slane %v2562, 4
      %v2565 = vrot.slane %v2012, 5
      %v2566 = vsel %vm1244, %v2564, %v2565
      %v2567 = vrot.slane %v2413, 5
      %v2568 = vrot.slane %v2567, 4
      %v2569 = vrot.slane %v1997, 5
      %v2570 = vsel %vm1244, %v2568, %v2569
      %v2571 = vrot.slane %v2569, 4
      %v2572 = vrot.slane %v2013, 5
      %v2573 = vsel %vm1244, %v2571, %v2572
      %v2590 = vunpack.c.l.b16 %v743
      %v2591 = vunpack.c.l.b16 %v744
      %v2592 = vunpack.c.l.b16 %v745
      %v2593 = vunpack.c.l.b16 %v746
      %v2594 = vunpack.c.l.b16 %v747
      %v2595 = vunpack.c.l.b16 %v748
      %v2596 = vunpack.c.l.b16 %v749
      %v2597 = vunpack.c.l.b16 %v750
      %v2598 = vunpack.c.l.b16 %v751
      %v2599 = vunpack.c.l.b16 %v752
      %v2600 = vunpack.c.l.b16 %v753
      %v2601 = vunpack.c.l.b16 %v754
      %v2602 = vunpack.c.l.b16 %v755
      %v2603 = vunpack.c.l.b16 %v756
      %v2604 = vunpack.c.l.b16 %v757
      %v2605 = vunpack.c.l.b16 %v758
      %v2606 = vunpack.c.l.b16 %v759
      %v2607 = vunpack.c.l.b16 %v760
      %v2608 = vunpack.c.l.b16 %v761
      %v2609 = vunpack.c.l.b16 %v762
      %v2610 = vunpack.c.l.b16 %v763
      %v2611 = vunpack.c.l.b16 %v764
      %v2612 = vunpack.c.l.b16 %v765
      %v2613 = vunpack.c.l.b16 %v766
      %v2614 = vunpack.c.l.b16 %v767
      %v2615 = vunpack.c.l.b16 %v768
      %v2616 = vunpack.c.l.b16 %v769
      %v2617 = vunpack.c.l.b16 %v770
      %v2618 = vunpack.c.l.b16 %v771
      %v2619 = vunpack.c.l.b16 %v772
      %v2620 = vunpack.c.l.b16 %v773
      %v2621 = vunpack.c.l.b16 %v774
      %v2622 = vpack.c.b16 %v2591, %v2590
      %v2623 = vpack.c.b16 %v2593, %v2592
      %v2624 = vpack.c.b16 %v2595, %v2594
      %v2625 = vpack.c.b16 %v2597, %v2596
      %v2626 = vpack.c.b16 %v2599, %v2598
      %v2627 = vpack.c.b16 %v2601, %v2600
      %v2628 = vpack.c.b16 %v2603, %v2602
      %v2629 = vpack.c.b16 %v2605, %v2604
      %v2630 = vpack.c.b16 %v2607, %v2606
      %v2631 = vpack.c.b16 %v2609, %v2608
      %v2632 = vpack.c.b16 %v2611, %v2610
      %v2633 = vpack.c.b16 %v2613, %v2612
      %v2634 = vpack.c.b16 %v2615, %v2614
      %v2635 = vpack.c.b16 %v2617, %v2616
      %v2636 = vpack.c.b16 %v2619, %v2618
      %v2637 = vpack.c.b16 %v2621, %v2620
      %v2654 = vunpack.c.l.b16 %v807
      %v2655 = vunpack.c.l.b16 %v817
      %v2656 = vunpack.c.l.b16 %v831
      %v2657 = vunpack.c.l.b16 %v841
      %v2658 = vunpack.c.l.b16 %v855
      %v2659 = vunpack.c.l.b16 %v865
      %v2660 = vunpack.c.l.b16 %v879
      %v2661 = vunpack.c.l.b16 %v889
      %v2662 = vunpack.c.l.b16 %v903
      %v2663 = vunpack.c.l.b16 %v913
      %v2664 = vunpack.c.l.b16 %v927
      %v2665 = vunpack.c.l.b16 %v937
      %v2666 = vunpack.c.l.b16 %v951
      %v2667 = vunpack.c.l.b16 %v961
      %v2668 = vunpack.c.l.b16 %v975
      %v2669 = vunpack.c.l.b16 %v985
      %v2670 = vunpack.c.l.b16 %v999
      %v2671 = vunpack.c.l.b16 %v1009
      %v2672 = vunpack.c.l.b16 %v1023
      %v2673 = vunpack.c.l.b16 %v1033
      %v2674 = vunpack.c.l.b16 %v1047
      %v2675 = vunpack.c.l.b16 %v1057
      %v2676 = vunpack.c.l.b16 %v1071
      %v2677 = vunpack.c.l.b16 %v1081
      %v2678 = vunpack.c.l.b16 %v1095
      %v2679 = vunpack.c.l.b16 %v1105
      %v2680 = vunpack.c.l.b16 %v1119
      %v2681 = vunpack.c.l.b16 %v1129
      %v2682 = vunpack.c.l.b16 %v1143
      %v2683 = vunpack.c.l.b16 %v1153
      %v2684 = vunpack.c.l.b16 %v1167
      %v2685 = vunpack.c.l.b16 %v1177
      %v2686 = vpack.c.b16 %v2655, %v2654
      %v2687 = vpack.c.b16 %v2657, %v2656
      %v2688 = vpack.c.b16 %v2659, %v2658
      %v2689 = vpack.c.b16 %v2661, %v2660
      %v2690 = vpack.c.b16 %v2663, %v2662
      %v2691 = vpack.c.b16 %v2665, %v2664
      %v2692 = vpack.c.b16 %v2667, %v2666
      %v2693 = vpack.c.b16 %v2669, %v2668
      %v2694 = vpack.c.b16 %v2671, %v2670
      %v2695 = vpack.c.b16 %v2673, %v2672
      %v2696 = vpack.c.b16 %v2675, %v2674
      %v2697 = vpack.c.b16 %v2677, %v2676
      %v2698 = vpack.c.b16 %v2679, %v2678
      %v2699 = vpack.c.b16 %v2681, %v2680
      %v2700 = vpack.c.b16 %v2683, %v2682
      %v2701 = vpack.c.b16 %v2685, %v2684
      %v2718 = vunpack.c.l.b16 %v1248
      %v2719 = vunpack.c.l.b16 %v1251
      %v2720 = vunpack.c.l.b16 %v1255
      %v2721 = vunpack.c.l.b16 %v1258
      %v2722 = vunpack.c.l.b16 %v1262
      %v2723 = vunpack.c.l.b16 %v1265
      %v2724 = vunpack.c.l.b16 %v1269
      %v2725 = vunpack.c.l.b16 %v1272
      %v2726 = vunpack.c.l.b16 %v1276
      %v2727 = vunpack.c.l.b16 %v1279
      %v2728 = vunpack.c.l.b16 %v1283
      %v2729 = vunpack.c.l.b16 %v1286
      %v2730 = vunpack.c.l.b16 %v1290
      %v2731 = vunpack.c.l.b16 %v1293
      %v2732 = vunpack.c.l.b16 %v1297
      %v2733 = vunpack.c.l.b16 %v1300
      %v2734 = vunpack.c.l.b16 %v1304
      %v2735 = vunpack.c.l.b16 %v1307
      %v2736 = vunpack.c.l.b16 %v1311
      %v2737 = vunpack.c.l.b16 %v1314
      %v2738 = vunpack.c.l.b16 %v1318
      %v2739 = vunpack.c.l.b16 %v1321
      %v2740 = vunpack.c.l.b16 %v1325
      %v2741 = vunpack.c.l.b16 %v1328
      %v2742 = vunpack.c.l.b16 %v1332
      %v2743 = vunpack.c.l.b16 %v1335
      %v2744 = vunpack.c.l.b16 %v1339
      %v2745 = vunpack.c.l.b16 %v1342
      %v2746 = vunpack.c.l.b16 %v1346
      %v2747 = vunpack.c.l.b16 %v1349
      %v2748 = vunpack.c.l.b16 %v1353
      %v2749 = vunpack.c.l.b16 %v1356
      %v2750 = vpack.c.b16 %v2719, %v2718
      %v2751 = vpack.c.b16 %v2721, %v2720
      %v2752 = vpack.c.b16 %v2723, %v2722
      %v2753 = vpack.c.b16 %v2725, %v2724
      %v2754 = vpack.c.b16 %v2727, %v2726
      %v2755 = vpack.c.b16 %v2729, %v2728
      %v2756 = vpack.c.b16 %v2731, %v2730
      %v2757 = vpack.c.b16 %v2733, %v2732
      %v2758 = vpack.c.b16 %v2735, %v2734
      %v2759 = vpack.c.b16 %v2737, %v2736
      %v2760 = vpack.c.b16 %v2739, %v2738
      %v2761 = vpack.c.b16 %v2741, %v2740
      %v2762 = vpack.c.b16 %v2743, %v2742
      %v2763 = vpack.c.b16 %v2745, %v2744
      %v2764 = vpack.c.b16 %v2747, %v2746
      %v2765 = vpack.c.b16 %v2749, %v2748
      %v2798 = vunpack.c.l.b16 %v1357
      %v2799 = vunpack.c.l.b16 %v1358
      %v2800 = vunpack.c.l.b16 %v1359
      %v2801 = vunpack.c.l.b16 %v1360
      %v2802 = vunpack.c.l.b16 %v1361
      %v2803 = vunpack.c.l.b16 %v1362
      %v2804 = vunpack.c.l.b16 %v1363
      %v2805 = vunpack.c.l.b16 %v1364
      %v2806 = vunpack.c.l.b16 %v1365
      %v2807 = vunpack.c.l.b16 %v1366
      %v2808 = vunpack.c.l.b16 %v1367
      %v2809 = vunpack.c.l.b16 %v1368
      %v2810 = vunpack.c.l.b16 %v1369
      %v2811 = vunpack.c.l.b16 %v1370
      %v2812 = vunpack.c.l.b16 %v1371
      %v2813 = vunpack.c.l.b16 %v1372
      %v2814 = vunpack.c.l.b16 %v1373
      %v2815 = vunpack.c.l.b16 %v1374
      %v2816 = vunpack.c.l.b16 %v1375
      %v2817 = vunpack.c.l.b16 %v1376
      %v2818 = vunpack.c.l.b16 %v1377
      %v2819 = vunpack.c.l.b16 %v1378
      %v2820 = vunpack.c.l.b16 %v1379
      %v2821 = vunpack.c.l.b16 %v1380
      %v2822 = vunpack.c.l.b16 %v1381
      %v2823 = vunpack.c.l.b16 %v1382
      %v2824 = vunpack.c.l.b16 %v1383
      %v2825 = vunpack.c.l.b16 %v1384
      %v2826 = vunpack.c.l.b16 %v1385
      %v2827 = vunpack.c.l.b16 %v1386
      %v2828 = vunpack.c.l.b16 %v1387
      %v2829 = vunpack.c.l.b16 %v1388
      %v2830 = vpack.c.b16 %v2799, %v2798
      %v2831 = vpack.c.b16 %v2801, %v2800
      %v2832 = vpack.c.b16 %v2803, %v2802
      %v2833 = vpack.c.b16 %v2805, %v2804
      %v2834 = vpack.c.b16 %v2807, %v2806
      %v2835 = vpack.c.b16 %v2809, %v2808
      %v2836 = vpack.c.b16 %v2811, %v2810
      %v2837 = vpack.c.b16 %v2813, %v2812
      %v2838 = vpack.c.b16 %v2815, %v2814
      %v2839 = vpack.c.b16 %v2817, %v2816
      %v2840 = vpack.c.b16 %v2819, %v2818
      %v2841 = vpack.c.b16 %v2821, %v2820
      %v2842 = vpack.c.b16 %v2823, %v2822
      %v2843 = vpack.c.b16 %v2825, %v2824
      %v2844 = vpack.c.b16 %v2827, %v2826
      %v2845 = vpack.c.b16 %v2829, %v2828
      %v2862 = vunpack.c.l.b16 %v1418
      %v2863 = vunpack.c.l.b16 %v1428
      %v2864 = vunpack.c.l.b16 %v1442
      %v2865 = vunpack.c.l.b16 %v1452
      %v2866 = vunpack.c.l.b16 %v1466
      %v2867 = vunpack.c.l.b16 %v1476
      %v2868 = vunpack.c.l.b16 %v1490
      %v2869 = vunpack.c.l.b16 %v1500
      %v2870 = vunpack.c.l.b16 %v1514
      %v2871 = vunpack.c.l.b16 %v1524
      %v2872 = vunpack.c.l.b16 %v1538
      %v2873 = vunpack.c.l.b16 %v1548
      %v2874 = vunpack.c.l.b16 %v1562
      %v2875 = vunpack.c.l.b16 %v1572
      %v2876 = vunpack.c.l.b16 %v1586
      %v2877 = vunpack.c.l.b16 %v1596
      %v2878 = vunpack.c.l.b16 %v1610
      %v2879 = vunpack.c.l.b16 %v1620
      %v2880 = vunpack.c.l.b16 %v1634
      %v2881 = vunpack.c.l.b16 %v1644
      %v2882 = vunpack.c.l.b16 %v1658
      %v2883 = vunpack.c.l.b16 %v1668
      %v2884 = vunpack.c.l.b16 %v1682
      %v2885 = vunpack.c.l.b16 %v1692
      %v2886 = vunpack.c.l.b16 %v1706
      %v2887 = vunpack.c.l.b16 %v1716
      %v2888 = vunpack.c.l.b16 %v1730
      %v2889 = vunpack.c.l.b16 %v1740
      %v2890 = vunpack.c.l.b16 %v1754
      %v2891 = vunpack.c.l.b16 %v1764
      %v2892 = vunpack.c.l.b16 %v1778
      %v2893 = vunpack.c.l.b16 %v1788
      %v2894 = vpack.c.b16 %v2863, %v2862
      %v2895 = vpack.c.b16 %v2865, %v2864
      %v2896 = vpack.c.b16 %v2867, %v2866
      %v2897 = vpack.c.b16 %v2869, %v2868
      %v2898 = vpack.c.b16 %v2871, %v2870
      %v2899 = vpack.c.b16 %v2873, %v2872
      %v2900 = vpack.c.b16 %v2875, %v2874
      %v2901 = vpack.c.b16 %v2877, %v2876
      %v2902 = vpack.c.b16 %v2879, %v2878
      %v2903 = vpack.c.b16 %v2881, %v2880
      %v2904 = vpack.c.b16 %v2883, %v2882
      %v2905 = vpack.c.b16 %v2885, %v2884
      %v2906 = vpack.c.b16 %v2887, %v2886
      %v2907 = vpack.c.b16 %v2889, %v2888
      %v2908 = vpack.c.b16 %v2891, %v2890
      %v2909 = vpack.c.b16 %v2893, %v2892
      %v2926 = vunpack.c.l.b16 %v1856
      %v2927 = vunpack.c.l.b16 %v1859
      %v2928 = vunpack.c.l.b16 %v1863
      %v2929 = vunpack.c.l.b16 %v1866
      %v2930 = vunpack.c.l.b16 %v1870
      %v2931 = vunpack.c.l.b16 %v1873
      %v2932 = vunpack.c.l.b16 %v1877
      %v2933 = vunpack.c.l.b16 %v1880
      %v2934 = vunpack.c.l.b16 %v1884
      %v2935 = vunpack.c.l.b16 %v1887
      %v2936 = vunpack.c.l.b16 %v1891
      %v2937 = vunpack.c.l.b16 %v1894
      %v2938 = vunpack.c.l.b16 %v1898
      %v2939 = vunpack.c.l.b16 %v1901
      %v2940 = vunpack.c.l.b16 %v1905
      %v2941 = vunpack.c.l.b16 %v1908
      %v2942 = vunpack.c.l.b16 %v1912
      %v2943 = vunpack.c.l.b16 %v1915
      %v2944 = vunpack.c.l.b16 %v1919
      %v2945 = vunpack.c.l.b16 %v1922
      %v2946 = vunpack.c.l.b16 %v1926
      %v2947 = vunpack.c.l.b16 %v1929
      %v2948 = vunpack.c.l.b16 %v1933
      %v2949 = vunpack.c.l.b16 %v1936
      %v2950 = vunpack.c.l.b16 %v1940
      %v2951 = vunpack.c.l.b16 %v1943
      %v2952 = vunpack.c.l.b16 %v1947
      %v2953 = vunpack.c.l.b16 %v1950
      %v2954 = vunpack.c.l.b16 %v1954
      %v2955 = vunpack.c.l.b16 %v1957
      %v2956 = vunpack.c.l.b16 %v1961
      %v2957 = vunpack.c.l.b16 %v1964
      %v2958 = vpack.c.b16 %v2927, %v2926
      %v2959 = vpack.c.b16 %v2929, %v2928
      %v2960 = vpack.c.b16 %v2931, %v2930
      %v2961 = vpack.c.b16 %v2933, %v2932
      %v2962 = vpack.c.b16 %v2935, %v2934
      %v2963 = vpack.c.b16 %v2937, %v2936
      %v2964 = vpack.c.b16 %v2939, %v2938
      %v2965 = vpack.c.b16 %v2941, %v2940
      %v2966 = vpack.c.b16 %v2943, %v2942
      %v2967 = vpack.c.b16 %v2945, %v2944
      %v2968 = vpack.c.b16 %v2947, %v2946
      %v2969 = vpack.c.b16 %v2949, %v2948
      %v2970 = vpack.c.b16 %v2951, %v2950
      %v2971 = vpack.c.b16 %v2953, %v2952
      %v2972 = vpack.c.b16 %v2955, %v2954
      %v2973 = vpack.c.b16 %v2957, %v2956
      %v3006 = vunpack.c.l.b16 %v1966
      %v3007 = vunpack.c.l.b16 %v1967
      %v3008 = vunpack.c.l.b16 %v1968
      %v3009 = vunpack.c.l.b16 %v1969
      %v3010 = vunpack.c.l.b16 %v1970
      %v3011 = vunpack.c.l.b16 %v1971
      %v3012 = vunpack.c.l.b16 %v1972
      %v3013 = vunpack.c.l.b16 %v1973
      %v3014 = vunpack.c.l.b16 %v1974
      %v3015 = vunpack.c.l.b16 %v1975
      %v3016 = vunpack.c.l.b16 %v1976
      %v3017 = vunpack.c.l.b16 %v1977
      %v3018 = vunpack.c.l.b16 %v1978
      %v3019 = vunpack.c.l.b16 %v1979
      %v3020 = vunpack.c.l.b16 %v1980
      %v3021 = vunpack.c.l.b16 %v1981
      %v3022 = vunpack.c.l.b16 %v1982
      %v3023 = vunpack.c.l.b16 %v1983
      %v3024 = vunpack.c.l.b16 %v1984
      %v3025 = vunpack.c.l.b16 %v1985
      %v3026 = vunpack.c.l.b16 %v1986
      %v3027 = vunpack.c.l.b16 %v1987
      %v3028 = vunpack.c.l.b16 %v1988
      %v3029 = vunpack.c.l.b16 %v1989
      %v3030 = vunpack.c.l.b16 %v1990
      %v3031 = vunpack.c.l.b16 %v1991
      %v3032 = vunpack.c.l.b16 %v1992
      %v3033 = vunpack.c.l.b16 %v1993
      %v3034 = vunpack.c.l.b16 %v1994
      %v3035 = vunpack.c.l.b16 %v1995
      %v3036 = vunpack.c.l.b16 %v1996
      %v3037 = vunpack.c.l.b16 %v1997
      %v3038 = vpack.c.b16 %v3007, %v3006
      %v3039 = vpack.c.b16 %v3009, %v3008
      %v3040 = vpack.c.b16 %v3011, %v3010
      %v3041 = vpack.c.b16 %v3013, %v3012
      %v3042 = vpack.c.b16 %v3015, %v3014
      %v3043 = vpack.c.b16 %v3017, %v3016
      %v3044 = vpack.c.b16 %v3019, %v3018
      %v3045 = vpack.c.b16 %v3021, %v3020
      %v3046 = vpack.c.b16 %v3023, %v3022
      %v3047 = vpack.c.b16 %v3025, %v3024
      %v3048 = vpack.c.b16 %v3027, %v3026
      %v3049 = vpack.c.b16 %v3029, %v3028
      %v3050 = vpack.c.b16 %v3031, %v3030
      %v3051 = vpack.c.b16 %v3033, %v3032
      %v3052 = vpack.c.b16 %v3035, %v3034
      %v3053 = vpack.c.b16 %v3037, %v3036
      %v3070 = vunpack.c.l.b16 %v2027
      %v3071 = vunpack.c.l.b16 %v2037
      %v3072 = vunpack.c.l.b16 %v2051
      %v3073 = vunpack.c.l.b16 %v2061
      %v3074 = vunpack.c.l.b16 %v2075
      %v3075 = vunpack.c.l.b16 %v2085
      %v3076 = vunpack.c.l.b16 %v2099
      %v3077 = vunpack.c.l.b16 %v2109
      %v3078 = vunpack.c.l.b16 %v2123
      %v3079 = vunpack.c.l.b16 %v2133
      %v3080 = vunpack.c.l.b16 %v2147
      %v3081 = vunpack.c.l.b16 %v2157
      %v3082 = vunpack.c.l.b16 %v2171
      %v3083 = vunpack.c.l.b16 %v2181
      %v3084 = vunpack.c.l.b16 %v2195
      %v3085 = vunpack.c.l.b16 %v2205
      %v3086 = vunpack.c.l.b16 %v2219
      %v3087 = vunpack.c.l.b16 %v2229
      %v3088 = vunpack.c.l.b16 %v2243
      %v3089 = vunpack.c.l.b16 %v2253
      %v3090 = vunpack.c.l.b16 %v2267
      %v3091 = vunpack.c.l.b16 %v2277
      %v3092 = vunpack.c.l.b16 %v2291
      %v3093 = vunpack.c.l.b16 %v2301
      %v3094 = vunpack.c.l.b16 %v2315
      %v3095 = vunpack.c.l.b16 %v2325
      %v3096 = vunpack.c.l.b16 %v2339
      %v3097 = vunpack.c.l.b16 %v2349
      %v3098 = vunpack.c.l.b16 %v2363
      %v3099 = vunpack.c.l.b16 %v2373
      %v3100 = vunpack.c.l.b16 %v2387
      %v3101 = vunpack.c.l.b16 %v2397
      %v3102 = vpack.c.b16 %v3071, %v3070
      %v3103 = vpack.c.b16 %v3073, %v3072
      %v3104 = vpack.c.b16 %v3075, %v3074
      %v3105 = vpack.c.b16 %v3077, %v3076
      %v3106 = vpack.c.b16 %v3079, %v3078
      %v3107 = vpack.c.b16 %v3081, %v3080
      %v3108 = vpack.c.b16 %v3083, %v3082
      %v3109 = vpack.c.b16 %v3085, %v3084
      %v3110 = vpack.c.b16 %v3087, %v3086
      %v3111 = vpack.c.b16 %v3089, %v3088
      %v3112 = vpack.c.b16 %v3091, %v3090
      %v3113 = vpack.c.b16 %v3093, %v3092
      %v3114 = vpack.c.b16 %v3095, %v3094
      %v3115 = vpack.c.b16 %v3097, %v3096
      %v3116 = vpack.c.b16 %v3099, %v3098
      %v3117 = vpack.c.b16 %v3101, %v3100
      %v3134 = vunpack.c.l.b16 %v2465
      %v3135 = vunpack.c.l.b16 %v2468
      %v3136 = vunpack.c.l.b16 %v2472
      %v3137 = vunpack.c.l.b16 %v2475
      %v3138 = vunpack.c.l.b16 %v2479
      %v3139 = vunpack.c.l.b16 %v2482
      %v3140 = vunpack.c.l.b16 %v2486
      %v3141 = vunpack.c.l.b16 %v2489
      %v3142 = vunpack.c.l.b16 %v2493
      %v3143 = vunpack.c.l.b16 %v2496
      %v3144 = vunpack.c.l.b16 %v2500
      %v3145 = vunpack.c.l.b16 %v2503
      %v3146 = vunpack.c.l.b16 %v2507
      %v3147 = vunpack.c.l.b16 %v2510
      %v3148 = vunpack.c.l.b16 %v2514
      %v3149 = vunpack.c.l.b16 %v2517
      %v3150 = vunpack.c.l.b16 %v2521
      %v3151 = vunpack.c.l.b16 %v2524
      %v3152 = vunpack.c.l.b16 %v2528
      %v3153 = vunpack.c.l.b16 %v2531
      %v3154 = vunpack.c.l.b16 %v2535
      %v3155 = vunpack.c.l.b16 %v2538
      %v3156 = vunpack.c.l.b16 %v2542
      %v3157 = vunpack.c.l.b16 %v2545
      %v3158 = vunpack.c.l.b16 %v2549
      %v3159 = vunpack.c.l.b16 %v2552
      %v3160 = vunpack.c.l.b16 %v2556
      %v3161 = vunpack.c.l.b16 %v2559
      %v3162 = vunpack.c.l.b16 %v2563
      %v3163 = vunpack.c.l.b16 %v2566
      %v3164 = vunpack.c.l.b16 %v2570
      %v3165 = vunpack.c.l.b16 %v2573
      %v3166 = vpack.c.b16 %v3135, %v3134
      %v3167 = vpack.c.b16 %v3137, %v3136
      %v3168 = vpack.c.b16 %v3139, %v3138
      %v3169 = vpack.c.b16 %v3141, %v3140
      %v3170 = vpack.c.b16 %v3143, %v3142
      %v3171 = vpack.c.b16 %v3145, %v3144
      %v3172 = vpack.c.b16 %v3147, %v3146
      %v3173 = vpack.c.b16 %v3149, %v3148
      %v3174 = vpack.c.b16 %v3151, %v3150
      %v3175 = vpack.c.b16 %v3153, %v3152
      %v3176 = vpack.c.b16 %v3155, %v3154
      %v3177 = vpack.c.b16 %v3157, %v3156
      %v3178 = vpack.c.b16 %v3159, %v3158
      %v3179 = vpack.c.b16 %v3161, %v3160
      %v3180 = vpack.c.b16 %v3163, %v3162
      %v3181 = vpack.c.b16 %v3165, %v3164
      %v3198 = vld [vmem:[%s1] sm:$0xf]
      %v3199 = vld [vmem:[%s1 + $0x4] sm:$0xf]
      %v3200 = vld [vmem:[%s1 + $0x8] sm:$0xf]
      %v3201 = vld [vmem:[%s1 + $0xc] sm:$0xf]
      %v3202 = vld [vmem:[%s1 + $0x10] sm:$0xf]
      %v3203 = vld [vmem:[%s1 + $0x14] sm:$0xf]
      %v3204 = vld [vmem:[%s1 + $0x18] sm:$0xf]
      %v3205 = vld [vmem:[%s1 + $0x1c] sm:$0xf]
      %v3206 = vld [vmem:[%s1 + $0x20] sm:$0xf]
      %v3207 = vld [vmem:[%s1 + $0x24] sm:$0xf]
      %v3208 = vld [vmem:[%s1 + $0x28] sm:$0xf]
      %v3209 = vld [vmem:[%s1 + $0x2c] sm:$0xf]
      %v3210 = vld [vmem:[%s1 + $0x30] sm:$0xf]
      %v3211 = vld [vmem:[%s1 + $0x34] sm:$0xf]
      %v3212 = vld [vmem:[%s1 + $0x38] sm:$0xf]
      %v3213 = vld [vmem:[%s1 + $0x3c] sm:$0xf]
      %v3214 = vld [vmem:[%s1 + $0x40] sm:$0xf]
      %v3215 = vld [vmem:[%s1 + $0x44] sm:$0xf]
      %v3216 = vld [vmem:[%s1 + $0x48] sm:$0xf]
      %v3217 = vld [vmem:[%s1 + $0x4c] sm:$0xf]
      %v3218 = vld [vmem:[%s1 + $0x50] sm:$0xf]
      %v3219 = vld [vmem:[%s1 + $0x54] sm:$0xf]
      %v3220 = vld [vmem:[%s1 + $0x58] sm:$0xf]
      %v3221 = vld [vmem:[%s1 + $0x5c] sm:$0xf]
      %v3222 = vld [vmem:[%s1 + $0x60] sm:$0xf]
      %v3223 = vld [vmem:[%s1 + $0x64] sm:$0xf]
      %v3224 = vld [vmem:[%s1 + $0x68] sm:$0xf]
      %v3225 = vld [vmem:[%s1 + $0x6c] sm:$0xf]
      %v3226 = vld [vmem:[%s1 + $0x70] sm:$0xf]
      %v3227 = vld [vmem:[%s1 + $0x74] sm:$0xf]
      %v3228 = vld [vmem:[%s1 + $0x78] sm:$0xf]
      %v3229 = vld [vmem:[%s1 + $0x7c] sm:$0xf]
      %v3230 = vld [vmem:[%s1 + $0x80] sm:$0xf]
      %v3231 = vld [vmem:[%s1 + $0x84] sm:$0xf]
      %v3232 = vld [vmem:[%s1 + $0x88] sm:$0xf]
      %v3233 = vld [vmem:[%s1 + $0x8c] sm:$0xf]
      %v3234 = vld [vmem:[%s1 + $0x90] sm:$0xf]
      %v3235 = vld [vmem:[%s1 + $0x94] sm:$0xf]
      %v3236 = vld [vmem:[%s1 + $0x98] sm:$0xf]
      %v3237 = vld [vmem:[%s1 + $0x9c] sm:$0xf]
      %v3238 = vld [vmem:[%s1 + $0xa0] sm:$0xf]
      %v3239 = vld [vmem:[%s1 + $0xa4] sm:$0xf]
      %v3240 = vld [vmem:[%s1 + $0xa8] sm:$0xf]
      %v3241 = vld [vmem:[%s1 + $0xac] sm:$0xf]
      %v3242 = vld [vmem:[%s1 + $0xb0] sm:$0xf]
      %v3243 = vld [vmem:[%s1 + $0xb4] sm:$0xf]
      %v3244 = vld [vmem:[%s1 + $0xb8] sm:$0xf]
      %v3245 = vld [vmem:[%s1 + $0xbc] sm:$0xf]
      %v3246 = vld [vmem:[%s1 + $0xc0] sm:$0xf]
      %v3247 = vld [vmem:[%s1 + $0xc4] sm:$0xf]
      %v3248 = vld [vmem:[%s1 + $0xc8] sm:$0xf]
      %v3249 = vld [vmem:[%s1 + $0xcc] sm:$0xf]
      %v3250 = vld [vmem:[%s1 + $0xd0] sm:$0xf]
      %v3251 = vld [vmem:[%s1 + $0xd4] sm:$0xf]
      %v3252 = vld [vmem:[%s1 + $0xd8] sm:$0xf]
      %v3253 = vld [vmem:[%s1 + $0xdc] sm:$0xf]
      %v3254 = vld [vmem:[%s1 + $0xe0] sm:$0xf]
      %v3255 = vld [vmem:[%s1 + $0xe4] sm:$0xf]
      %v3256 = vld [vmem:[%s1 + $0xe8] sm:$0xf]
      %v3257 = vld [vmem:[%s1 + $0xec] sm:$0xf]
      %v3258 = vld [vmem:[%s1 + $0xf0] sm:$0xf]
      %v3259 = vld [vmem:[%s1 + $0xf4] sm:$0xf]
      %v3260 = vld [vmem:[%s1 + $0xf8] sm:$0xf]
      %v3261 = vld [vmem:[%s1 + $0xfc] sm:$0xf]
      %v3262 = vld [vmem:[%s1 + $0x100] sm:$0xf]
      %v3263 = vld [vmem:[%s1 + $0x104] sm:$0xf]
      %v3264 = vld [vmem:[%s1 + $0x108] sm:$0xf]
      %v3265 = vld [vmem:[%s1 + $0x10c] sm:$0xf]
      %v3266 = vld [vmem:[%s1 + $0x110] sm:$0xf]
      %v3267 = vld [vmem:[%s1 + $0x114] sm:$0xf]
      %v3268 = vld [vmem:[%s1 + $0x118] sm:$0xf]
      %v3269 = vld [vmem:[%s1 + $0x11c] sm:$0xf]
      %v3270 = vld [vmem:[%s1 + $0x120] sm:$0xf]
      %v3271 = vld [vmem:[%s1 + $0x124] sm:$0xf]
      %v3272 = vld [vmem:[%s1 + $0x128] sm:$0xf]
      %v3273 = vld [vmem:[%s1 + $0x12c] sm:$0xf]
      %v3274 = vld [vmem:[%s1 + $0x130] sm:$0xf]
      %v3275 = vld [vmem:[%s1 + $0x134] sm:$0xf]
      %v3276 = vld [vmem:[%s1 + $0x138] sm:$0xf]
      %v3277 = vld [vmem:[%s1 + $0x13c] sm:$0xf]
      %v3278 = vld [vmem:[%s1 + $0x140] sm:$0xf]
      %v3279 = vld [vmem:[%s1 + $0x144] sm:$0xf]
      %v3280 = vld [vmem:[%s1 + $0x148] sm:$0xf]
      %v3281 = vld [vmem:[%s1 + $0x14c] sm:$0xf]
      %v3282 = vld [vmem:[%s1 + $0x150] sm:$0xf]
      %v3283 = vld [vmem:[%s1 + $0x154] sm:$0xf]
      %v3284 = vld [vmem:[%s1 + $0x158] sm:$0xf]
      %v3285 = vld [vmem:[%s1 + $0x15c] sm:$0xf]
      %v3286 = vld [vmem:[%s1 + $0x160] sm:$0xf]
      %v3287 = vld [vmem:[%s1 + $0x164] sm:$0xf]
      %v3288 = vld [vmem:[%s1 + $0x168] sm:$0xf]
      %v3289 = vld [vmem:[%s1 + $0x16c] sm:$0xf]
      %v3290 = vld [vmem:[%s1 + $0x170] sm:$0xf]
      %v3291 = vld [vmem:[%s1 + $0x174] sm:$0xf]
      %v3292 = vld [vmem:[%s1 + $0x178] sm:$0xf]
      %v3293 = vld [vmem:[%s1 + $0x17c] sm:$0xf]
      %v3294 = vld [vmem:[%s1 + $0x180] sm:$0xf]
      %v3295 = vld [vmem:[%s1 + $0x184] sm:$0xf]
      %v3296 = vld [vmem:[%s1 + $0x188] sm:$0xf]
      %v3297 = vld [vmem:[%s1 + $0x18c] sm:$0xf]
      %v3298 = vld [vmem:[%s1 + $0x190] sm:$0xf]
      %v3299 = vld [vmem:[%s1 + $0x194] sm:$0xf]
      %v3300 = vld [vmem:[%s1 + $0x198] sm:$0xf]
      %v3301 = vld [vmem:[%s1 + $0x19c] sm:$0xf]
      %v3302 = vld [vmem:[%s1 + $0x1a0] sm:$0xf]
      %v3303 = vld [vmem:[%s1 + $0x1a4] sm:$0xf]
      %v3304 = vld [vmem:[%s1 + $0x1a8] sm:$0xf]
      %v3305 = vld [vmem:[%s1 + $0x1ac] sm:$0xf]
      %v3306 = vld [vmem:[%s1 + $0x1b0] sm:$0xf]
      %v3307 = vld [vmem:[%s1 + $0x1b4] sm:$0xf]
      %v3308 = vld [vmem:[%s1 + $0x1b8] sm:$0xf]
      %v3309 = vld [vmem:[%s1 + $0x1bc] sm:$0xf]
      %v3310 = vld [vmem:[%s1 + $0x1c0] sm:$0xf]
      %v3311 = vld [vmem:[%s1 + $0x1c4] sm:$0xf]
      %v3312 = vld [vmem:[%s1 + $0x1c8] sm:$0xf]
      %v3313 = vld [vmem:[%s1 + $0x1cc] sm:$0xf]
      %v3314 = vld [vmem:[%s1 + $0x1d0] sm:$0xf]
      %v3315 = vld [vmem:[%s1 + $0x1d4] sm:$0xf]
      %v3316 = vld [vmem:[%s1 + $0x1d8] sm:$0xf]
      %v3317 = vld [vmem:[%s1 + $0x1dc] sm:$0xf]
      %v3318 = vld [vmem:[%s1 + $0x1e0] sm:$0xf]
      %v3319 = vld [vmem:[%s1 + $0x1e4] sm:$0xf]
      %v3320 = vld [vmem:[%s1 + $0x1e8] sm:$0xf]
      %v3321 = vld [vmem:[%s1 + $0x1ec] sm:$0xf]
      %v3322 = vld [vmem:[%s1 + $0x1f0] sm:$0xf]
      %v3323 = vld [vmem:[%s1 + $0x1f4] sm:$0xf]
      %v3324 = vld [vmem:[%s1 + $0x1f8] sm:$0xf]
      %v3325 = vld [vmem:[%s1 + $0x1fc] sm:$0xf]
      %v3326 = vld [vmem:[%s1 + $0x200] sm:$0xf]
      %v3327 = vld [vmem:[%s1 + $0x204] sm:$0xf]
      %v3328 = vld [vmem:[%s1 + $0x208] sm:$0xf]
      %v3329 = vld [vmem:[%s1 + $0x20c] sm:$0xf]
      %v3330 = vld [vmem:[%s1 + $0x210] sm:$0xf]
      %v3331 = vld [vmem:[%s1 + $0x214] sm:$0xf]
      %v3332 = vld [vmem:[%s1 + $0x218] sm:$0xf]
      %v3333 = vld [vmem:[%s1 + $0x21c] sm:$0xf]
      %v3334 = vld [vmem:[%s1 + $0x220] sm:$0xf]
      %v3335 = vld [vmem:[%s1 + $0x224] sm:$0xf]
      %v3336 = vld [vmem:[%s1 + $0x228] sm:$0xf]
      %v3337 = vld [vmem:[%s1 + $0x22c] sm:$0xf]
      %v3338 = vld [vmem:[%s1 + $0x230] sm:$0xf]
      %v3339 = vld [vmem:[%s1 + $0x234] sm:$0xf]
      %v3340 = vld [vmem:[%s1 + $0x238] sm:$0xf]
      %v3341 = vld [vmem:[%s1 + $0x23c] sm:$0xf]
      %v3486 = vunpack.c.l.b16 %v3198
      %v3487 = vunpack.c.l.b16 %v3199
      %v3488 = vunpack.c.l.b16 %v3200
      %v3489 = vunpack.c.l.b16 %v3201
      %v3490 = vunpack.c.l.b16 %v3202
      %v3491 = vunpack.c.l.b16 %v3203
      %v3492 = vunpack.c.l.b16 %v3204
      %v3493 = vunpack.c.l.b16 %v3205
      %v3494 = vunpack.c.l.b16 %v3206
      %v3495 = vunpack.c.l.b16 %v3207
      %v3496 = vunpack.c.l.b16 %v3208
      %v3497 = vunpack.c.l.b16 %v3209
      %v3498 = vunpack.c.l.b16 %v3210
      %v3499 = vunpack.c.l.b16 %v3211
      %v3500 = vunpack.c.l.b16 %v3212
      %v3501 = vunpack.c.l.b16 %v3213
      %v3502 = vunpack.c.l.b16 %v3214
      %v3503 = vunpack.c.l.b16 %v3215
      %v3504 = vunpack.c.l.b16 %v3216
      %v3505 = vunpack.c.l.b16 %v3217
      %v3506 = vunpack.c.l.b16 %v3218
      %v3507 = vunpack.c.l.b16 %v3219
      %v3508 = vunpack.c.l.b16 %v3220
      %v3509 = vunpack.c.l.b16 %v3221
      %v3510 = vunpack.c.l.b16 %v3222
      %v3511 = vunpack.c.l.b16 %v3223
      %v3512 = vunpack.c.l.b16 %v3224
      %v3513 = vunpack.c.l.b16 %v3225
      %v3514 = vunpack.c.l.b16 %v3226
      %v3515 = vunpack.c.l.b16 %v3227
      %v3516 = vunpack.c.l.b16 %v3228
      %v3517 = vunpack.c.l.b16 %v3229
      %v3518 = vunpack.c.l.b16 %v3230
      %v3519 = vunpack.c.l.b16 %v3231
      %v3520 = vunpack.c.l.b16 %v3232
      %v3521 = vunpack.c.l.b16 %v3233
      %v3522 = vunpack.c.l.b16 %v3234
      %v3523 = vunpack.c.l.b16 %v3235
      %v3524 = vunpack.c.l.b16 %v3236
      %v3525 = vunpack.c.l.b16 %v3237
      %v3526 = vunpack.c.l.b16 %v3238
      %v3527 = vunpack.c.l.b16 %v3239
      %v3528 = vunpack.c.l.b16 %v3240
      %v3529 = vunpack.c.l.b16 %v3241
      %v3530 = vunpack.c.l.b16 %v3242
      %v3531 = vunpack.c.l.b16 %v3243
      %v3532 = vunpack.c.l.b16 %v3244
      %v3533 = vunpack.c.l.b16 %v3245
      %v3534 = vunpack.c.l.b16 %v3246
      %v3535 = vunpack.c.l.b16 %v3247
      %v3536 = vunpack.c.l.b16 %v3248
      %v3537 = vunpack.c.l.b16 %v3249
      %v3538 = vunpack.c.l.b16 %v3250
      %v3539 = vunpack.c.l.b16 %v3251
      %v3540 = vunpack.c.l.b16 %v3252
      %v3541 = vunpack.c.l.b16 %v3253
      %v3542 = vunpack.c.l.b16 %v3254
      %v3543 = vunpack.c.l.b16 %v3255
      %v3544 = vunpack.c.l.b16 %v3256
      %v3545 = vunpack.c.l.b16 %v3257
      %v3546 = vunpack.c.l.b16 %v3258
      %v3547 = vunpack.c.l.b16 %v3259
      %v3548 = vunpack.c.l.b16 %v3260
      %v3549 = vunpack.c.l.b16 %v3261
      %v3550 = vunpack.c.l.b16 %v3262
      %v3551 = vunpack.c.l.b16 %v3263
      %v3552 = vunpack.c.l.b16 %v3264
      %v3553 = vunpack.c.l.b16 %v3265
      %v3554 = vunpack.c.l.b16 %v3266
      %v3555 = vunpack.c.l.b16 %v3267
      %v3556 = vunpack.c.l.b16 %v3268
      %v3557 = vunpack.c.l.b16 %v3269
      %v3558 = vunpack.c.l.b16 %v3270
      %v3559 = vunpack.c.l.b16 %v3271
      %v3560 = vunpack.c.l.b16 %v3272
      %v3561 = vunpack.c.l.b16 %v3273
      %v3562 = vunpack.c.l.b16 %v3274
      %v3563 = vunpack.c.l.b16 %v3275
      %v3564 = vunpack.c.l.b16 %v3276
      %v3565 = vunpack.c.l.b16 %v3277
      %v3566 = vunpack.c.l.b16 %v3278
      %v3567 = vunpack.c.l.b16 %v3279
      %v3568 = vunpack.c.l.b16 %v3280
      %v3569 = vunpack.c.l.b16 %v3281
      %v3570 = vunpack.c.l.b16 %v3282
      %v3571 = vunpack.c.l.b16 %v3283
      %v3572 = vunpack.c.l.b16 %v3284
      %v3573 = vunpack.c.l.b16 %v3285
      %v3574 = vunpack.c.l.b16 %v3286
      %v3575 = vunpack.c.l.b16 %v3287
      %v3576 = vunpack.c.l.b16 %v3288
      %v3577 = vunpack.c.l.b16 %v3289
      %v3578 = vunpack.c.l.b16 %v3290
      %v3579 = vunpack.c.l.b16 %v3291
      %v3580 = vunpack.c.l.b16 %v3292
      %v3581 = vunpack.c.l.b16 %v3293
      %v3582 = vunpack.c.l.b16 %v3294
      %v3583 = vunpack.c.l.b16 %v3295
      %v3584 = vunpack.c.l.b16 %v3296
      %v3585 = vunpack.c.l.b16 %v3297
      %v3586 = vunpack.c.l.b16 %v3298
      %v3587 = vunpack.c.l.b16 %v3299
      %v3588 = vunpack.c.l.b16 %v3300
      %v3589 = vunpack.c.l.b16 %v3301
      %v3590 = vunpack.c.l.b16 %v3302
      %v3591 = vunpack.c.l.b16 %v3303
      %v3592 = vunpack.c.l.b16 %v3304
      %v3593 = vunpack.c.l.b16 %v3305
      %v3594 = vunpack.c.l.b16 %v3306
      %v3595 = vunpack.c.l.b16 %v3307
      %v3596 = vunpack.c.l.b16 %v3308
      %v3597 = vunpack.c.l.b16 %v3309
      %v3598 = vunpack.c.l.b16 %v3310
      %v3599 = vunpack.c.l.b16 %v3311
      %v3600 = vunpack.c.l.b16 %v3312
      %v3601 = vunpack.c.l.b16 %v3313
      %v3602 = vunpack.c.l.b16 %v3314
      %v3603 = vunpack.c.l.b16 %v3315
      %v3604 = vunpack.c.l.b16 %v3316
      %v3605 = vunpack.c.l.b16 %v3317
      %v3606 = vunpack.c.l.b16 %v3318
      %v3607 = vunpack.c.l.b16 %v3319
      %v3608 = vunpack.c.l.b16 %v3320
      %v3609 = vunpack.c.l.b16 %v3321
      %v3610 = vunpack.c.l.b16 %v3322
      %v3611 = vunpack.c.l.b16 %v3323
      %v3612 = vunpack.c.l.b16 %v3324
      %v3613 = vunpack.c.l.b16 %v3325
      %v3614 = vunpack.c.l.b16 %v3326
      %v3615 = vunpack.c.l.b16 %v3327
      %v3616 = vunpack.c.l.b16 %v3328
      %v3617 = vunpack.c.l.b16 %v3329
      %v3618 = vunpack.c.l.b16 %v3330
      %v3619 = vunpack.c.l.b16 %v3331
      %v3620 = vunpack.c.l.b16 %v3332
      %v3621 = vunpack.c.l.b16 %v3333
      %v3622 = vunpack.c.l.b16 %v3334
      %v3623 = vunpack.c.l.b16 %v3335
      %v3624 = vunpack.c.l.b16 %v3336
      %v3625 = vunpack.c.l.b16 %v3337
      %v3626 = vunpack.c.l.b16 %v3338
      %v3627 = vunpack.c.l.b16 %v3339
      %v3628 = vunpack.c.l.b16 %v3340
      %v3629 = vunpack.c.l.b16 %v3341
      %v3630 = vpack.c.b16 %v3487, %v3486
      %v3631 = vpack.c.b16 %v3489, %v3488
      %v3632 = vpack.c.b16 %v3491, %v3490
      %v3633 = vpack.c.b16 %v3493, %v3492
      %v3634 = vpack.c.b16 %v3495, %v3494
      %v3635 = vpack.c.b16 %v3497, %v3496
      %v3636 = vpack.c.b16 %v3499, %v3498
      %v3637 = vpack.c.b16 %v3501, %v3500
      %v3638 = vpack.c.b16 %v3503, %v3502
      %v3639 = vpack.c.b16 %v3505, %v3504
      %v3640 = vpack.c.b16 %v3507, %v3506
      %v3641 = vpack.c.b16 %v3509, %v3508
      %v3642 = vpack.c.b16 %v3511, %v3510
      %v3643 = vpack.c.b16 %v3513, %v3512
      %v3644 = vpack.c.b16 %v3515, %v3514
      %v3645 = vpack.c.b16 %v3517, %v3516
      %v3646 = vpack.c.b16 %v3519, %v3518
      %v3647 = vpack.c.b16 %v3521, %v3520
      %v3648 = vpack.c.b16 %v3523, %v3522
      %v3649 = vpack.c.b16 %v3525, %v3524
      %v3650 = vpack.c.b16 %v3527, %v3526
      %v3651 = vpack.c.b16 %v3529, %v3528
      %v3652 = vpack.c.b16 %v3531, %v3530
      %v3653 = vpack.c.b16 %v3533, %v3532
      %v3654 = vpack.c.b16 %v3535, %v3534
      %v3655 = vpack.c.b16 %v3537, %v3536
      %v3656 = vpack.c.b16 %v3539, %v3538
      %v3657 = vpack.c.b16 %v3541, %v3540
      %v3658 = vpack.c.b16 %v3543, %v3542
      %v3659 = vpack.c.b16 %v3545, %v3544
      %v3660 = vpack.c.b16 %v3547, %v3546
      %v3661 = vpack.c.b16 %v3549, %v3548
      %v3662 = vpack.c.b16 %v3551, %v3550
      %v3663 = vpack.c.b16 %v3553, %v3552
      %v3664 = vpack.c.b16 %v3555, %v3554
      %v3665 = vpack.c.b16 %v3557, %v3556
      %v3666 = vpack.c.b16 %v3559, %v3558
      %v3667 = vpack.c.b16 %v3561, %v3560
      %v3668 = vpack.c.b16 %v3563, %v3562
      %v3669 = vpack.c.b16 %v3565, %v3564
      %v3670 = vpack.c.b16 %v3567, %v3566
      %v3671 = vpack.c.b16 %v3569, %v3568
      %v3672 = vpack.c.b16 %v3571, %v3570
      %v3673 = vpack.c.b16 %v3573, %v3572
      %v3674 = vpack.c.b16 %v3575, %v3574
      %v3675 = vpack.c.b16 %v3577, %v3576
      %v3676 = vpack.c.b16 %v3579, %v3578
      %v3677 = vpack.c.b16 %v3581, %v3580
      %v3678 = vpack.c.b16 %v3583, %v3582
      %v3679 = vpack.c.b16 %v3585, %v3584
      %v3680 = vpack.c.b16 %v3587, %v3586
      %v3681 = vpack.c.b16 %v3589, %v3588
      %v3682 = vpack.c.b16 %v3591, %v3590
      %v3683 = vpack.c.b16 %v3593, %v3592
      %v3684 = vpack.c.b16 %v3595, %v3594
      %v3685 = vpack.c.b16 %v3597, %v3596
      %v3686 = vpack.c.b16 %v3599, %v3598
      %v3687 = vpack.c.b16 %v3601, %v3600
      %v3688 = vpack.c.b16 %v3603, %v3602
      %v3689 = vpack.c.b16 %v3605, %v3604
      %v3690 = vpack.c.b16 %v3607, %v3606
      %v3691 = vpack.c.b16 %v3609, %v3608
      %v3692 = vpack.c.b16 %v3611, %v3610
      %v3693 = vpack.c.b16 %v3613, %v3612
      %v3694 = vpack.c.b16 %v3615, %v3614
      %v3695 = vpack.c.b16 %v3617, %v3616
      %v3696 = vpack.c.b16 %v3619, %v3618
      %v3697 = vpack.c.b16 %v3621, %v3620
      %v3698 = vpack.c.b16 %v3623, %v3622
      %v3699 = vpack.c.b16 %v3625, %v3624
      %v3700 = vpack.c.b16 %v3627, %v3626
      %v3701 = vpack.c.b16 %v3629, %v3628
      %3774 = vmatpush.bf16.msra.mxu0 %v3637
      %3775 = vmatpush.bf16.msra.mxu0 %v3636
      %3776 = vmatpush.bf16.msra.mxu0 %v3635
      %3777 = vmatpush.bf16.msra.mxu0 %v3634
      %3778 = vmatpush.bf16.msra.mxu0 %v3633
      %3779 = vmatpush.bf16.msra.mxu0 %v3632
      %3780 = vmatpush.bf16.msra.mxu0 %v3631
      %3781 = vmatpush.bf16.msra.mxu0 %v3630
      %3782 = vmatmul.bf16.gmra.mxu0 %v2622
      %v3783 = vpop.f32.mrf.mxu0
      %v3784 = vadd.f32 0.0, %v3783
      %v3785 = vpop.f32.mrf.mxu0
      %v3786 = vadd.f32 0.0, %v3785
      %3787 = vmatmul.bf16.gmra.mxu0 %v2623
      %v3788 = vpop.f32.mrf.mxu0
      %v3789 = vadd.f32 0.0, %v3788
      %v3790 = vpop.f32.mrf.mxu0
      %v3791 = vadd.f32 0.0, %v3790
      %3792 = vmatmul.bf16.gmra.mxu0 %v2624
      %v3793 = vpop.f32.mrf.mxu0
      %v3794 = vadd.f32 0.0, %v3793
      %v3795 = vpop.f32.mrf.mxu0
      %v3796 = vadd.f32 0.0, %v3795
      %3797 = vmatmul.bf16.gmra.mxu0 %v2625
      %v3798 = vpop.f32.mrf.mxu0
      %v3799 = vadd.f32 0.0, %v3798
      %v3800 = vpop.f32.mrf.mxu0
      %v3801 = vadd.f32 0.0, %v3800
      %3802 = vmatmul.bf16.gmra.mxu0 %v2626
      %v3803 = vpop.f32.mrf.mxu0
      %v3804 = vadd.f32 0.0, %v3803
      %v3805 = vpop.f32.mrf.mxu0
      %v3806 = vadd.f32 0.0, %v3805
      %3807 = vmatmul.bf16.gmra.mxu0 %v2627
      %v3808 = vpop.f32.mrf.mxu0
      %v3809 = vadd.f32 0.0, %v3808
      %v3810 = vpop.f32.mrf.mxu0
      %v3811 = vadd.f32 0.0, %v3810
      %3812 = vmatmul.bf16.gmra.mxu0 %v2628
      %v3813 = vpop.f32.mrf.mxu0
      %v3814 = vadd.f32 0.0, %v3813
      %v3815 = vpop.f32.mrf.mxu0
      %v3816 = vadd.f32 0.0, %v3815
      %3817 = vmatmul.bf16.gmra.mxu0 %v2629
      %v3818 = vpop.f32.mrf.mxu0
      %v3819 = vadd.f32 0.0, %v3818
      %v3820 = vpop.f32.mrf.mxu0
      %v3821 = vadd.f32 0.0, %v3820
      %3822 = vmatmul.bf16.gmra.mxu0 %v2630
      %v3823 = vpop.f32.mrf.mxu0
      %v3824 = vadd.f32 0.0, %v3823
      %v3825 = vpop.f32.mrf.mxu0
      %v3826 = vadd.f32 0.0, %v3825
      %3827 = vmatmul.bf16.gmra.mxu0 %v2631
      %v3828 = vpop.f32.mrf.mxu0
      %v3829 = vadd.f32 0.0, %v3828
      %v3830 = vpop.f32.mrf.mxu0
      %v3831 = vadd.f32 0.0, %v3830
      %3832 = vmatmul.bf16.gmra.mxu0 %v2632
      %v3833 = vpop.f32.mrf.mxu0
      %v3834 = vadd.f32 0.0, %v3833
      %v3835 = vpop.f32.mrf.mxu0
      %v3836 = vadd.f32 0.0, %v3835
      %3837 = vmatmul.bf16.gmra.mxu0 %v2633
      %v3838 = vpop.f32.mrf.mxu0
      %v3839 = vadd.f32 0.0, %v3838
      %v3840 = vpop.f32.mrf.mxu0
      %v3841 = vadd.f32 0.0, %v3840
      %3842 = vmatmul.bf16.gmra.mxu0 %v2634
      %v3843 = vpop.f32.mrf.mxu0
      %v3844 = vadd.f32 0.0, %v3843
      %v3845 = vpop.f32.mrf.mxu0
      %v3846 = vadd.f32 0.0, %v3845
      %3847 = vmatmul.bf16.gmra.mxu0 %v2635
      %v3848 = vpop.f32.mrf.mxu0
      %v3849 = vadd.f32 0.0, %v3848
      %v3850 = vpop.f32.mrf.mxu0
      %v3851 = vadd.f32 0.0, %v3850
      %3852 = vmatmul.bf16.gmra.mxu0 %v2636
      %v3853 = vpop.f32.mrf.mxu0
      %v3854 = vadd.f32 0.0, %v3853
      %v3855 = vpop.f32.mrf.mxu0
      %v3856 = vadd.f32 0.0, %v3855
      %3857 = vmatmul.bf16.gmra.mxu0 %v2637
      %v3858 = vpop.f32.mrf.mxu0
      %v3859 = vadd.f32 0.0, %v3858
      %v3860 = vpop.f32.mrf.mxu0
      %v3861 = vadd.f32 0.0, %v3860
      %3862 = vdwg.mxu0
      %3863 = vmatpush.bf16.msra.mxu0 %v3645
      %3864 = vmatpush.bf16.msra.mxu0 %v3644
      %3865 = vmatpush.bf16.msra.mxu0 %v3643
      %3866 = vmatpush.bf16.msra.mxu0 %v3642
      %3867 = vmatpush.bf16.msra.mxu0 %v3641
      %3868 = vmatpush.bf16.msra.mxu0 %v3640
      %3869 = vmatpush.bf16.msra.mxu0 %v3639
      %3870 = vmatpush.bf16.msra.mxu0 %v3638
      %3871 = vmatmul.bf16.gmra.mxu0 %v2686
      %v3872 = vpop.f32.mrf.mxu0
      %v3873 = vadd.f32 %v3784, %v3872
      %v3874 = vpop.f32.mrf.mxu0
      %v3875 = vadd.f32 %v3786, %v3874
      %3876 = vmatmul.bf16.gmra.mxu0 %v2687
      %v3877 = vpop.f32.mrf.mxu0
      %v3878 = vadd.f32 %v3789, %v3877
      %v3879 = vpop.f32.mrf.mxu0
      %v3880 = vadd.f32 %v3791, %v3879
      %3881 = vmatmul.bf16.gmra.mxu0 %v2688
      %v3882 = vpop.f32.mrf.mxu0
      %v3883 = vadd.f32 %v3794, %v3882
      %v3884 = vpop.f32.mrf.mxu0
      %v3885 = vadd.f32 %v3796, %v3884
      %3886 = vmatmul.bf16.gmra.mxu0 %v2689
      %v3887 = vpop.f32.mrf.mxu0
      %v3888 = vadd.f32 %v3799, %v3887
      %v3889 = vpop.f32.mrf.mxu0
      %v3890 = vadd.f32 %v3801, %v3889
      %3891 = vmatmul.bf16.gmra.mxu0 %v2690
      %v3892 = vpop.f32.mrf.mxu0
      %v3893 = vadd.f32 %v3804, %v3892
      %v3894 = vpop.f32.mrf.mxu0
      %v3895 = vadd.f32 %v3806, %v3894
      %3896 = vmatmul.bf16.gmra.mxu0 %v2691
      %v3897 = vpop.f32.mrf.mxu0
      %v3898 = vadd.f32 %v3809, %v3897
      %v3899 = vpop.f32.mrf.mxu0
      %v3900 = vadd.f32 %v3811, %v3899
      %3901 = vmatmul.bf16.gmra.mxu0 %v2692
      %v3902 = vpop.f32.mrf.mxu0
      %v3903 = vadd.f32 %v3814, %v3902
      %v3904 = vpop.f32.mrf.mxu0
      %v3905 = vadd.f32 %v3816, %v3904
      %3906 = vmatmul.bf16.gmra.mxu0 %v2693
      %v3907 = vpop.f32.mrf.mxu0
      %v3908 = vadd.f32 %v3819, %v3907
      %v3909 = vpop.f32.mrf.mxu0
      %v3910 = vadd.f32 %v3821, %v3909
      %3911 = vmatmul.bf16.gmra.mxu0 %v2694
      %v3912 = vpop.f32.mrf.mxu0
      %v3913 = vadd.f32 %v3824, %v3912
      %v3914 = vpop.f32.mrf.mxu0
      %v3915 = vadd.f32 %v3826, %v3914
      %3916 = vmatmul.bf16.gmra.mxu0 %v2695
      %v3917 = vpop.f32.mrf.mxu0
      %v3918 = vadd.f32 %v3829, %v3917
      %v3919 = vpop.f32.mrf.mxu0
      %v3920 = vadd.f32 %v3831, %v3919
      %3921 = vmatmul.bf16.gmra.mxu0 %v2696
      %v3922 = vpop.f32.mrf.mxu0
      %v3923 = vadd.f32 %v3834, %v3922
      %v3924 = vpop.f32.mrf.mxu0
      %v3925 = vadd.f32 %v3836, %v3924
      %3926 = vmatmul.bf16.gmra.mxu0 %v2697
      %v3927 = vpop.f32.mrf.mxu0
      %v3928 = vadd.f32 %v3839, %v3927
      %v3929 = vpop.f32.mrf.mxu0
      %v3930 = vadd.f32 %v3841, %v3929
      %3931 = vmatmul.bf16.gmra.mxu0 %v2698
      %v3932 = vpop.f32.mrf.mxu0
      %v3933 = vadd.f32 %v3844, %v3932
      %v3934 = vpop.f32.mrf.mxu0
      %v3935 = vadd.f32 %v3846, %v3934
      %3936 = vmatmul.bf16.gmra.mxu0 %v2699
      %v3937 = vpop.f32.mrf.mxu0
      %v3938 = vadd.f32 %v3849, %v3937
      %v3939 = vpop.f32.mrf.mxu0
      %v3940 = vadd.f32 %v3851, %v3939
      %3941 = vmatmul.bf16.gmra.mxu0 %v2700
      %v3942 = vpop.f32.mrf.mxu0
      %v3943 = vadd.f32 %v3854, %v3942
      %v3944 = vpop.f32.mrf.mxu0
      %v3945 = vadd.f32 %v3856, %v3944
      %3946 = vmatmul.bf16.gmra.mxu0 %v2701
      %v3947 = vpop.f32.mrf.mxu0
      %v3948 = vadd.f32 %v3859, %v3947
      %v3949 = vpop.f32.mrf.mxu0
      %v3950 = vadd.f32 %v3861, %v3949
      %3951 = vdwg.mxu0
      %3952 = vmatpush.bf16.msra.mxu0 %v3653
      %3953 = vmatpush.bf16.msra.mxu0 %v3652
      %3954 = vmatpush.bf16.msra.mxu0 %v3651
      %3955 = vmatpush.bf16.msra.mxu0 %v3650
      %3956 = vmatpush.bf16.msra.mxu0 %v3649
      %3957 = vmatpush.bf16.msra.mxu0 %v3648
      %3958 = vmatpush.bf16.msra.mxu0 %v3647
      %3959 = vmatpush.bf16.msra.mxu0 %v3646
      %3960 = vmatmul.bf16.gmra.mxu0 %v2750
      %v3961 = vpop.f32.mrf.mxu0
      %v3962 = vadd.f32 %v3873, %v3961
      %v3963 = vpop.f32.mrf.mxu0
      %v3964 = vadd.f32 %v3875, %v3963
      %3965 = vmatmul.bf16.gmra.mxu0 %v2751
      %v3966 = vpop.f32.mrf.mxu0
      %v3967 = vadd.f32 %v3878, %v3966
      %v3968 = vpop.f32.mrf.mxu0
      %v3969 = vadd.f32 %v3880, %v3968
      %3970 = vmatmul.bf16.gmra.mxu0 %v2752
      %v3971 = vpop.f32.mrf.mxu0
      %v3972 = vadd.f32 %v3883, %v3971
      %v3973 = vpop.f32.mrf.mxu0
      %v3974 = vadd.f32 %v3885, %v3973
      %3975 = vmatmul.bf16.gmra.mxu0 %v2753
      %v3976 = vpop.f32.mrf.mxu0
      %v3977 = vadd.f32 %v3888, %v3976
      %v3978 = vpop.f32.mrf.mxu0
      %v3979 = vadd.f32 %v3890, %v3978
      %3980 = vmatmul.bf16.gmra.mxu0 %v2754
      %v3981 = vpop.f32.mrf.mxu0
      %v3982 = vadd.f32 %v3893, %v3981
      %v3983 = vpop.f32.mrf.mxu0
      %v3984 = vadd.f32 %v3895, %v3983
      %3985 = vmatmul.bf16.gmra.mxu0 %v2755
      %v3986 = vpop.f32.mrf.mxu0
      %v3987 = vadd.f32 %v3898, %v3986
      %v3988 = vpop.f32.mrf.mxu0
      %v3989 = vadd.f32 %v3900, %v3988
      %3990 = vmatmul.bf16.gmra.mxu0 %v2756
      %v3991 = vpop.f32.mrf.mxu0
      %v3992 = vadd.f32 %v3903, %v3991
      %v3993 = vpop.f32.mrf.mxu0
      %v3994 = vadd.f32 %v3905, %v3993
      %3995 = vmatmul.bf16.gmra.mxu0 %v2757
      %v3996 = vpop.f32.mrf.mxu0
      %v3997 = vadd.f32 %v3908, %v3996
      %v3998 = vpop.f32.mrf.mxu0
      %v3999 = vadd.f32 %v3910, %v3998
      %4000 = vmatmul.bf16.gmra.mxu0 %v2758
      %v4001 = vpop.f32.mrf.mxu0
      %v4002 = vadd.f32 %v3913, %v4001
      %v4003 = vpop.f32.mrf.mxu0
      %v4004 = vadd.f32 %v3915, %v4003
      %4005 = vmatmul.bf16.gmra.mxu0 %v2759
      %v4006 = vpop.f32.mrf.mxu0
      %v4007 = vadd.f32 %v3918, %v4006
      %v4008 = vpop.f32.mrf.mxu0
      %v4009 = vadd.f32 %v3920, %v4008
      %4010 = vmatmul.bf16.gmra.mxu0 %v2760
      %v4011 = vpop.f32.mrf.mxu0
      %v4012 = vadd.f32 %v3923, %v4011
      %v4013 = vpop.f32.mrf.mxu0
      %v4014 = vadd.f32 %v3925, %v4013
      %4015 = vmatmul.bf16.gmra.mxu0 %v2761
      %v4016 = vpop.f32.mrf.mxu0
      %v4017 = vadd.f32 %v3928, %v4016
      %v4018 = vpop.f32.mrf.mxu0
      %v4019 = vadd.f32 %v3930, %v4018
      %4020 = vmatmul.bf16.gmra.mxu0 %v2762
      %v4021 = vpop.f32.mrf.mxu0
      %v4022 = vadd.f32 %v3933, %v4021
      %v4023 = vpop.f32.mrf.mxu0
      %v4024 = vadd.f32 %v3935, %v4023
      %4025 = vmatmul.bf16.gmra.mxu0 %v2763
      %v4026 = vpop.f32.mrf.mxu0
      %v4027 = vadd.f32 %v3938, %v4026
      %v4028 = vpop.f32.mrf.mxu0
      %v4029 = vadd.f32 %v3940, %v4028
      %4030 = vmatmul.bf16.gmra.mxu0 %v2764
      %v4031 = vpop.f32.mrf.mxu0
      %v4032 = vadd.f32 %v3943, %v4031
      %v4033 = vpop.f32.mrf.mxu0
      %v4034 = vadd.f32 %v3945, %v4033
      %4035 = vmatmul.bf16.gmra.mxu0 %v2765
      %v4036 = vpop.f32.mrf.mxu0
      %v4037 = vadd.f32 %v3948, %v4036
      %v4038 = vpop.f32.mrf.mxu0
      %v4039 = vadd.f32 %v3950, %v4038
      %4040 = vdwg.mxu0
      %4041 = vmatpush.bf16.msra.mxu0 %v3661
      %4042 = vmatpush.bf16.msra.mxu0 %v3660
      %4043 = vmatpush.bf16.msra.mxu0 %v3659
      %4044 = vmatpush.bf16.msra.mxu0 %v3658
      %4045 = vmatpush.bf16.msra.mxu0 %v3657
      %4046 = vmatpush.bf16.msra.mxu0 %v3656
      %4047 = vmatpush.bf16.msra.mxu0 %v3655
      %4048 = vmatpush.bf16.msra.mxu0 %v3654
      %4049 = vmatmul.bf16.gmra.mxu0 %v2830
      %v4050 = vpop.f32.mrf.mxu0
      %v4051 = vadd.f32 %v3962, %v4050
      %v4052 = vpop.f32.mrf.mxu0
      %v4053 = vadd.f32 %v3964, %v4052
      %4054 = vmatmul.bf16.gmra.mxu0 %v2831
      %v4055 = vpop.f32.mrf.mxu0
      %v4056 = vadd.f32 %v3967, %v4055
      %v4057 = vpop.f32.mrf.mxu0
      %v4058 = vadd.f32 %v3969, %v4057
      %4059 = vmatmul.bf16.gmra.mxu0 %v2832
      %v4060 = vpop.f32.mrf.mxu0
      %v4061 = vadd.f32 %v3972, %v4060
      %v4062 = vpop.f32.mrf.mxu0
      %v4063 = vadd.f32 %v3974, %v4062
      %4064 = vmatmul.bf16.gmra.mxu0 %v2833
      %v4065 = vpop.f32.mrf.mxu0
      %v4066 = vadd.f32 %v3977, %v4065
      %v4067 = vpop.f32.mrf.mxu0
      %v4068 = vadd.f32 %v3979, %v4067
      %4069 = vmatmul.bf16.gmra.mxu0 %v2834
      %v4070 = vpop.f32.mrf.mxu0
      %v4071 = vadd.f32 %v3982, %v4070
      %v4072 = vpop.f32.mrf.mxu0
      %v4073 = vadd.f32 %v3984, %v4072
      %4074 = vmatmul.bf16.gmra.mxu0 %v2835
      %v4075 = vpop.f32.mrf.mxu0
      %v4076 = vadd.f32 %v3987, %v4075
      %v4077 = vpop.f32.mrf.mxu0
      %v4078 = vadd.f32 %v3989, %v4077
      %4079 = vmatmul.bf16.gmra.mxu0 %v2836
      %v4080 = vpop.f32.mrf.mxu0
      %v4081 = vadd.f32 %v3992, %v4080
      %v4082 = vpop.f32.mrf.mxu0
      %v4083 = vadd.f32 %v3994, %v4082
      %4084 = vmatmul.bf16.gmra.mxu0 %v2837
      %v4085 = vpop.f32.mrf.mxu0
      %v4086 = vadd.f32 %v3997, %v4085
      %v4087 = vpop.f32.mrf.mxu0
      %v4088 = vadd.f32 %v3999, %v4087
      %4089 = vmatmul.bf16.gmra.mxu0 %v2838
      %v4090 = vpop.f32.mrf.mxu0
      %v4091 = vadd.f32 %v4002, %v4090
      %v4092 = vpop.f32.mrf.mxu0
      %v4093 = vadd.f32 %v4004, %v4092
      %4094 = vmatmul.bf16.gmra.mxu0 %v2839
      %v4095 = vpop.f32.mrf.mxu0
      %v4096 = vadd.f32 %v4007, %v4095
      %v4097 = vpop.f32.mrf.mxu0
      %v4098 = vadd.f32 %v4009, %v4097
      %4099 = vmatmul.bf16.gmra.mxu0 %v2840
      %v4100 = vpop.f32.mrf.mxu0
      %v4101 = vadd.f32 %v4012, %v4100
      %v4102 = vpop.f32.mrf.mxu0
      %v4103 = vadd.f32 %v4014, %v4102
      %4104 = vmatmul.bf16.gmra.mxu0 %v2841
      %v4105 = vpop.f32.mrf.mxu0
      %v4106 = vadd.f32 %v4017, %v4105
      %v4107 = vpop.f32.mrf.mxu0
      %v4108 = vadd.f32 %v4019, %v4107
      %4109 = vmatmul.bf16.gmra.mxu0 %v2842
      %v4110 = vpop.f32.mrf.mxu0
      %v4111 = vadd.f32 %v4022, %v4110
      %v4112 = vpop.f32.mrf.mxu0
      %v4113 = vadd.f32 %v4024, %v4112
      %4114 = vmatmul.bf16.gmra.mxu0 %v2843
      %v4115 = vpop.f32.mrf.mxu0
      %v4116 = vadd.f32 %v4027, %v4115
      %v4117 = vpop.f32.mrf.mxu0
      %v4118 = vadd.f32 %v4029, %v4117
      %4119 = vmatmul.bf16.gmra.mxu0 %v2844
      %v4120 = vpop.f32.mrf.mxu0
      %v4121 = vadd.f32 %v4032, %v4120
      %v4122 = vpop.f32.mrf.mxu0
      %v4123 = vadd.f32 %v4034, %v4122
      %4124 = vmatmul.bf16.gmra.mxu0 %v2845
      %v4125 = vpop.f32.mrf.mxu0
      %v4126 = vadd.f32 %v4037, %v4125
      %v4127 = vpop.f32.mrf.mxu0
      %v4128 = vadd.f32 %v4039, %v4127
      %4129 = vdwg.mxu0
      %4130 = vmatpush.bf16.msra.mxu0 %v3669
      %4131 = vmatpush.bf16.msra.mxu0 %v3668
      %4132 = vmatpush.bf16.msra.mxu0 %v3667
      %4133 = vmatpush.bf16.msra.mxu0 %v3666
      %4134 = vmatpush.bf16.msra.mxu0 %v3665
      %4135 = vmatpush.bf16.msra.mxu0 %v3664
      %4136 = vmatpush.bf16.msra.mxu0 %v3663
      %4137 = vmatpush.bf16.msra.mxu0 %v3662
      %4138 = vmatmul.bf16.gmra.mxu0 %v2894
      %v4139 = vpop.f32.mrf.mxu0
      %v4140 = vadd.f32 %v4051, %v4139
      %v4141 = vpop.f32.mrf.mxu0
      %v4142 = vadd.f32 %v4053, %v4141
      %4143 = vmatmul.bf16.gmra.mxu0 %v2895
      %v4144 = vpop.f32.mrf.mxu0
      %v4145 = vadd.f32 %v4056, %v4144
      %v4146 = vpop.f32.mrf.mxu0
      %v4147 = vadd.f32 %v4058, %v4146
      %4148 = vmatmul.bf16.gmra.mxu0 %v2896
      %v4149 = vpop.f32.mrf.mxu0
      %v4150 = vadd.f32 %v4061, %v4149
      %v4151 = vpop.f32.mrf.mxu0
      %v4152 = vadd.f32 %v4063, %v4151
      %4153 = vmatmul.bf16.gmra.mxu0 %v2897
      %v4154 = vpop.f32.mrf.mxu0
      %v4155 = vadd.f32 %v4066, %v4154
      %v4156 = vpop.f32.mrf.mxu0
      %v4157 = vadd.f32 %v4068, %v4156
      %4158 = vmatmul.bf16.gmra.mxu0 %v2898
      %v4159 = vpop.f32.mrf.mxu0
      %v4160 = vadd.f32 %v4071, %v4159
      %v4161 = vpop.f32.mrf.mxu0
      %v4162 = vadd.f32 %v4073, %v4161
      %4163 = vmatmul.bf16.gmra.mxu0 %v2899
      %v4164 = vpop.f32.mrf.mxu0
      %v4165 = vadd.f32 %v4076, %v4164
      %v4166 = vpop.f32.mrf.mxu0
      %v4167 = vadd.f32 %v4078, %v4166
      %4168 = vmatmul.bf16.gmra.mxu0 %v2900
      %v4169 = vpop.f32.mrf.mxu0
      %v4170 = vadd.f32 %v4081, %v4169
      %v4171 = vpop.f32.mrf.mxu0
      %v4172 = vadd.f32 %v4083, %v4171
      %4173 = vmatmul.bf16.gmra.mxu0 %v2901
      %v4174 = vpop.f32.mrf.mxu0
      %v4175 = vadd.f32 %v4086, %v4174
      %v4176 = vpop.f32.mrf.mxu0
      %v4177 = vadd.f32 %v4088, %v4176
      %4178 = vmatmul.bf16.gmra.mxu0 %v2902
      %v4179 = vpop.f32.mrf.mxu0
      %v4180 = vadd.f32 %v4091, %v4179
      %v4181 = vpop.f32.mrf.mxu0
      %v4182 = vadd.f32 %v4093, %v4181
      %4183 = vmatmul.bf16.gmra.mxu0 %v2903
      %v4184 = vpop.f32.mrf.mxu0
      %v4185 = vadd.f32 %v4096, %v4184
      %v4186 = vpop.f32.mrf.mxu0
      %v4187 = vadd.f32 %v4098, %v4186
      %4188 = vmatmul.bf16.gmra.mxu0 %v2904
      %v4189 = vpop.f32.mrf.mxu0
      %v4190 = vadd.f32 %v4101, %v4189
      %v4191 = vpop.f32.mrf.mxu0
      %v4192 = vadd.f32 %v4103, %v4191
      %4193 = vmatmul.bf16.gmra.mxu0 %v2905
      %v4194 = vpop.f32.mrf.mxu0
      %v4195 = vadd.f32 %v4106, %v4194
      %v4196 = vpop.f32.mrf.mxu0
      %v4197 = vadd.f32 %v4108, %v4196
      %4198 = vmatmul.bf16.gmra.mxu0 %v2906
      %v4199 = vpop.f32.mrf.mxu0
      %v4200 = vadd.f32 %v4111, %v4199
      %v4201 = vpop.f32.mrf.mxu0
      %v4202 = vadd.f32 %v4113, %v4201
      %4203 = vmatmul.bf16.gmra.mxu0 %v2907
      %v4204 = vpop.f32.mrf.mxu0
      %v4205 = vadd.f32 %v4116, %v4204
      %v4206 = vpop.f32.mrf.mxu0
      %v4207 = vadd.f32 %v4118, %v4206
      %4208 = vmatmul.bf16.gmra.mxu0 %v2908
      %v4209 = vpop.f32.mrf.mxu0
      %v4210 = vadd.f32 %v4121, %v4209
      %v4211 = vpop.f32.mrf.mxu0
      %v4212 = vadd.f32 %v4123, %v4211
      %4213 = vmatmul.bf16.gmra.mxu0 %v2909
      %v4214 = vpop.f32.mrf.mxu0
      %v4215 = vadd.f32 %v4126, %v4214
      %v4216 = vpop.f32.mrf.mxu0
      %v4217 = vadd.f32 %v4128, %v4216
      %4218 = vdwg.mxu0
      %4219 = vmatpush.bf16.msra.mxu0 %v3677
      %4220 = vmatpush.bf16.msra.mxu0 %v3676
      %4221 = vmatpush.bf16.msra.mxu0 %v3675
      %4222 = vmatpush.bf16.msra.mxu0 %v3674
      %4223 = vmatpush.bf16.msra.mxu0 %v3673
      %4224 = vmatpush.bf16.msra.mxu0 %v3672
      %4225 = vmatpush.bf16.msra.mxu0 %v3671
      %4226 = vmatpush.bf16.msra.mxu0 %v3670
      %4227 = vmatmul.bf16.gmra.mxu0 %v2958
      %v4228 = vpop.f32.mrf.mxu0
      %v4229 = vadd.f32 %v4140, %v4228
      %v4230 = vpop.f32.mrf.mxu0
      %v4231 = vadd.f32 %v4142, %v4230
      %4232 = vmatmul.bf16.gmra.mxu0 %v2959
      %v4233 = vpop.f32.mrf.mxu0
      %v4234 = vadd.f32 %v4145, %v4233
      %v4235 = vpop.f32.mrf.mxu0
      %v4236 = vadd.f32 %v4147, %v4235
      %4237 = vmatmul.bf16.gmra.mxu0 %v2960
      %v4238 = vpop.f32.mrf.mxu0
      %v4239 = vadd.f32 %v4150, %v4238
      %v4240 = vpop.f32.mrf.mxu0
      %v4241 = vadd.f32 %v4152, %v4240
      %4242 = vmatmul.bf16.gmra.mxu0 %v2961
      %v4243 = vpop.f32.mrf.mxu0
      %v4244 = vadd.f32 %v4155, %v4243
      %v4245 = vpop.f32.mrf.mxu0
      %v4246 = vadd.f32 %v4157, %v4245
      %4247 = vmatmul.bf16.gmra.mxu0 %v2962
      %v4248 = vpop.f32.mrf.mxu0
      %v4249 = vadd.f32 %v4160, %v4248
      %v4250 = vpop.f32.mrf.mxu0
      %v4251 = vadd.f32 %v4162, %v4250
      %4252 = vmatmul.bf16.gmra.mxu0 %v2963
      %v4253 = vpop.f32.mrf.mxu0
      %v4254 = vadd.f32 %v4165, %v4253
      %v4255 = vpop.f32.mrf.mxu0
      %v4256 = vadd.f32 %v4167, %v4255
      %4257 = vmatmul.bf16.gmra.mxu0 %v2964
      %v4258 = vpop.f32.mrf.mxu0
      %v4259 = vadd.f32 %v4170, %v4258
      %v4260 = vpop.f32.mrf.mxu0
      %v4261 = vadd.f32 %v4172, %v4260
      %4262 = vmatmul.bf16.gmra.mxu0 %v2965
      %v4263 = vpop.f32.mrf.mxu0
      %v4264 = vadd.f32 %v4175, %v4263
      %v4265 = vpop.f32.mrf.mxu0
      %v4266 = vadd.f32 %v4177, %v4265
      %4267 = vmatmul.bf16.gmra.mxu0 %v2966
      %v4268 = vpop.f32.mrf.mxu0
      %v4269 = vadd.f32 %v4180, %v4268
      %v4270 = vpop.f32.mrf.mxu0
      %v4271 = vadd.f32 %v4182, %v4270
      %4272 = vmatmul.bf16.gmra.mxu0 %v2967
      %v4273 = vpop.f32.mrf.mxu0
      %v4274 = vadd.f32 %v4185, %v4273
      %v4275 = vpop.f32.mrf.mxu0
      %v4276 = vadd.f32 %v4187, %v4275
      %4277 = vmatmul.bf16.gmra.mxu0 %v2968
      %v4278 = vpop.f32.mrf.mxu0
      %v4279 = vadd.f32 %v4190, %v4278
      %v4280 = vpop.f32.mrf.mxu0
      %v4281 = vadd.f32 %v4192, %v4280
      %4282 = vmatmul.bf16.gmra.mxu0 %v2969
      %v4283 = vpop.f32.mrf.mxu0
      %v4284 = vadd.f32 %v4195, %v4283
      %v4285 = vpop.f32.mrf.mxu0
      %v4286 = vadd.f32 %v4197, %v4285
      %4287 = vmatmul.bf16.gmra.mxu0 %v2970
      %v4288 = vpop.f32.mrf.mxu0
      %v4289 = vadd.f32 %v4200, %v4288
      %v4290 = vpop.f32.mrf.mxu0
      %v4291 = vadd.f32 %v4202, %v4290
      %4292 = vmatmul.bf16.gmra.mxu0 %v2971
      %v4293 = vpop.f32.mrf.mxu0
      %v4294 = vadd.f32 %v4205, %v4293
      %v4295 = vpop.f32.mrf.mxu0
      %v4296 = vadd.f32 %v4207, %v4295
      %4297 = vmatmul.bf16.gmra.mxu0 %v2972
      %v4298 = vpop.f32.mrf.mxu0
      %v4299 = vadd.f32 %v4210, %v4298
      %v4300 = vpop.f32.mrf.mxu0
      %v4301 = vadd.f32 %v4212, %v4300
      %4302 = vmatmul.bf16.gmra.mxu0 %v2973
      %v4303 = vpop.f32.mrf.mxu0
      %v4304 = vadd.f32 %v4215, %v4303
      %v4305 = vpop.f32.mrf.mxu0
      %v4306 = vadd.f32 %v4217, %v4305
      %4307 = vdwg.mxu0
      %4308 = vmatpush.bf16.msra.mxu0 %v3685
      %4309 = vmatpush.bf16.msra.mxu0 %v3684
      %4310 = vmatpush.bf16.msra.mxu0 %v3683
      %4311 = vmatpush.bf16.msra.mxu0 %v3682
      %4312 = vmatpush.bf16.msra.mxu0 %v3681
      %4313 = vmatpush.bf16.msra.mxu0 %v3680
      %4314 = vmatpush.bf16.msra.mxu0 %v3679
      %4315 = vmatpush.bf16.msra.mxu0 %v3678
      %4316 = vmatmul.bf16.gmra.mxu0 %v3038
      %v4317 = vpop.f32.mrf.mxu0
      %v4318 = vadd.f32 %v4229, %v4317
      %v4319 = vpop.f32.mrf.mxu0
      %v4320 = vadd.f32 %v4231, %v4319
      %4321 = vmatmul.bf16.gmra.mxu0 %v3039
      %v4322 = vpop.f32.mrf.mxu0
      %v4323 = vadd.f32 %v4234, %v4322
      %v4324 = vpop.f32.mrf.mxu0
      %v4325 = vadd.f32 %v4236, %v4324
      %4326 = vmatmul.bf16.gmra.mxu0 %v3040
      %v4327 = vpop.f32.mrf.mxu0
      %v4328 = vadd.f32 %v4239, %v4327
      %v4329 = vpop.f32.mrf.mxu0
      %v4330 = vadd.f32 %v4241, %v4329
      %4331 = vmatmul.bf16.gmra.mxu0 %v3041
      %v4332 = vpop.f32.mrf.mxu0
      %v4333 = vadd.f32 %v4244, %v4332
      %v4334 = vpop.f32.mrf.mxu0
      %v4335 = vadd.f32 %v4246, %v4334
      %4336 = vmatmul.bf16.gmra.mxu0 %v3042
      %v4337 = vpop.f32.mrf.mxu0
      %v4338 = vadd.f32 %v4249, %v4337
      %v4339 = vpop.f32.mrf.mxu0
      %v4340 = vadd.f32 %v4251, %v4339
      %4341 = vmatmul.bf16.gmra.mxu0 %v3043
      %v4342 = vpop.f32.mrf.mxu0
      %v4343 = vadd.f32 %v4254, %v4342
      %v4344 = vpop.f32.mrf.mxu0
      %v4345 = vadd.f32 %v4256, %v4344
      %4346 = vmatmul.bf16.gmra.mxu0 %v3044
      %v4347 = vpop.f32.mrf.mxu0
      %v4348 = vadd.f32 %v4259, %v4347
      %v4349 = vpop.f32.mrf.mxu0
      %v4350 = vadd.f32 %v4261, %v4349
      %4351 = vmatmul.bf16.gmra.mxu0 %v3045
      %v4352 = vpop.f32.mrf.mxu0
      %v4353 = vadd.f32 %v4264, %v4352
      %v4354 = vpop.f32.mrf.mxu0
      %v4355 = vadd.f32 %v4266, %v4354
      %4356 = vmatmul.bf16.gmra.mxu0 %v3046
      %v4357 = vpop.f32.mrf.mxu0
      %v4358 = vadd.f32 %v4269, %v4357
      %v4359 = vpop.f32.mrf.mxu0
      %v4360 = vadd.f32 %v4271, %v4359
      %4361 = vmatmul.bf16.gmra.mxu0 %v3047
      %v4362 = vpop.f32.mrf.mxu0
      %v4363 = vadd.f32 %v4274, %v4362
      %v4364 = vpop.f32.mrf.mxu0
      %v4365 = vadd.f32 %v4276, %v4364
      %4366 = vmatmul.bf16.gmra.mxu0 %v3048
      %v4367 = vpop.f32.mrf.mxu0
      %v4368 = vadd.f32 %v4279, %v4367
      %v4369 = vpop.f32.mrf.mxu0
      %v4370 = vadd.f32 %v4281, %v4369
      %4371 = vmatmul.bf16.gmra.mxu0 %v3049
      %v4372 = vpop.f32.mrf.mxu0
      %v4373 = vadd.f32 %v4284, %v4372
      %v4374 = vpop.f32.mrf.mxu0
      %v4375 = vadd.f32 %v4286, %v4374
      %4376 = vmatmul.bf16.gmra.mxu0 %v3050
      %v4377 = vpop.f32.mrf.mxu0
      %v4378 = vadd.f32 %v4289, %v4377
      %v4379 = vpop.f32.mrf.mxu0
      %v4380 = vadd.f32 %v4291, %v4379
      %4381 = vmatmul.bf16.gmra.mxu0 %v3051
      %v4382 = vpop.f32.mrf.mxu0
      %v4383 = vadd.f32 %v4294, %v4382
      %v4384 = vpop.f32.mrf.mxu0
      %v4385 = vadd.f32 %v4296, %v4384
      %4386 = vmatmul.bf16.gmra.mxu0 %v3052
      %v4387 = vpop.f32.mrf.mxu0
      %v4388 = vadd.f32 %v4299, %v4387
      %v4389 = vpop.f32.mrf.mxu0
      %v4390 = vadd.f32 %v4301, %v4389
      %4391 = vmatmul.bf16.gmra.mxu0 %v3053
      %v4392 = vpop.f32.mrf.mxu0
      %v4393 = vadd.f32 %v4304, %v4392
      %v4394 = vpop.f32.mrf.mxu0
      %v4395 = vadd.f32 %v4306, %v4394
      %4396 = vdwg.mxu0
      %4397 = vmatpush.bf16.msra.mxu0 %v3693
      %4398 = vmatpush.bf16.msra.mxu0 %v3692
      %4399 = vmatpush.bf16.msra.mxu0 %v3691
      %4400 = vmatpush.bf16.msra.mxu0 %v3690
      %4401 = vmatpush.bf16.msra.mxu0 %v3689
      %4402 = vmatpush.bf16.msra.mxu0 %v3688
      %4403 = vmatpush.bf16.msra.mxu0 %v3687
      %4404 = vmatpush.bf16.msra.mxu0 %v3686
      %4405 = vmatmul.bf16.gmra.mxu0 %v3102
      %v4406 = vpop.f32.mrf.mxu0
      %v4407 = vadd.f32 %v4318, %v4406
      %v4408 = vpop.f32.mrf.mxu0
      %v4409 = vadd.f32 %v4320, %v4408
      %4410 = vmatmul.bf16.gmra.mxu0 %v3103
      %v4411 = vpop.f32.mrf.mxu0
      %v4412 = vadd.f32 %v4323, %v4411
      %v4413 = vpop.f32.mrf.mxu0
      %v4414 = vadd.f32 %v4325, %v4413
      %4415 = vmatmul.bf16.gmra.mxu0 %v3104
      %v4416 = vpop.f32.mrf.mxu0
      %v4417 = vadd.f32 %v4328, %v4416
      %v4418 = vpop.f32.mrf.mxu0
      %v4419 = vadd.f32 %v4330, %v4418
      %4420 = vmatmul.bf16.gmra.mxu0 %v3105
      %v4421 = vpop.f32.mrf.mxu0
      %v4422 = vadd.f32 %v4333, %v4421
      %v4423 = vpop.f32.mrf.mxu0
      %v4424 = vadd.f32 %v4335, %v4423
      %4425 = vmatmul.bf16.gmra.mxu0 %v3106
      %v4426 = vpop.f32.mrf.mxu0
      %v4427 = vadd.f32 %v4338, %v4426
      %v4428 = vpop.f32.mrf.mxu0
      %v4429 = vadd.f32 %v4340, %v4428
      %4430 = vmatmul.bf16.gmra.mxu0 %v3107
      %v4431 = vpop.f32.mrf.mxu0
      %v4432 = vadd.f32 %v4343, %v4431
      %v4433 = vpop.f32.mrf.mxu0
      %v4434 = vadd.f32 %v4345, %v4433
      %4435 = vmatmul.bf16.gmra.mxu0 %v3108
      %v4436 = vpop.f32.mrf.mxu0
      %v4437 = vadd.f32 %v4348, %v4436
      %v4438 = vpop.f32.mrf.mxu0
      %v4439 = vadd.f32 %v4350, %v4438
      %4440 = vmatmul.bf16.gmra.mxu0 %v3109
      %v4441 = vpop.f32.mrf.mxu0
      %v4442 = vadd.f32 %v4353, %v4441
      %v4443 = vpop.f32.mrf.mxu0
      %v4444 = vadd.f32 %v4355, %v4443
      %4445 = vmatmul.bf16.gmra.mxu0 %v3110
      %v4446 = vpop.f32.mrf.mxu0
      %v4447 = vadd.f32 %v4358, %v4446
      %v4448 = vpop.f32.mrf.mxu0
      %v4449 = vadd.f32 %v4360, %v4448
      %4450 = vmatmul.bf16.gmra.mxu0 %v3111
      %v4451 = vpop.f32.mrf.mxu0
      %v4452 = vadd.f32 %v4363, %v4451
      %v4453 = vpop.f32.mrf.mxu0
      %v4454 = vadd.f32 %v4365, %v4453
      %4455 = vmatmul.bf16.gmra.mxu0 %v3112
      %v4456 = vpop.f32.mrf.mxu0
      %v4457 = vadd.f32 %v4368, %v4456
      %v4458 = vpop.f32.mrf.mxu0
      %v4459 = vadd.f32 %v4370, %v4458
      %4460 = vmatmul.bf16.gmra.mxu0 %v3113
      %v4461 = vpop.f32.mrf.mxu0
      %v4462 = vadd.f32 %v4373, %v4461
      %v4463 = vpop.f32.mrf.mxu0
      %v4464 = vadd.f32 %v4375, %v4463
      %4465 = vmatmul.bf16.gmra.mxu0 %v3114
      %v4466 = vpop.f32.mrf.mxu0
      %v4467 = vadd.f32 %v4378, %v4466
      %v4468 = vpop.f32.mrf.mxu0
      %v4469 = vadd.f32 %v4380, %v4468
      %4470 = vmatmul.bf16.gmra.mxu0 %v3115
      %v4471 = vpop.f32.mrf.mxu0
      %v4472 = vadd.f32 %v4383, %v4471
      %v4473 = vpop.f32.mrf.mxu0
      %v4474 = vadd.f32 %v4385, %v4473
      %4475 = vmatmul.bf16.gmra.mxu0 %v3116
      %v4476 = vpop.f32.mrf.mxu0
      %v4477 = vadd.f32 %v4388, %v4476
      %v4478 = vpop.f32.mrf.mxu0
      %v4479 = vadd.f32 %v4390, %v4478
      %4480 = vmatmul.bf16.gmra.mxu0 %v3117
      %v4481 = vpop.f32.mrf.mxu0
      %v4482 = vadd.f32 %v4393, %v4481
      %v4483 = vpop.f32.mrf.mxu0
      %v4484 = vadd.f32 %v4395, %v4483
      %4485 = vdwg.mxu0
      %4486 = vmatpush.bf16.msra.mxu0 %v3701
      %4487 = vmatpush.bf16.msra.mxu0 %v3700
      %4488 = vmatpush.bf16.msra.mxu0 %v3699
      %4489 = vmatpush.bf16.msra.mxu0 %v3698
      %4490 = vmatpush.bf16.msra.mxu0 %v3697
      %4491 = vmatpush.bf16.msra.mxu0 %v3696
      %4492 = vmatpush.bf16.msra.mxu0 %v3695
      %4493 = vmatpush.bf16.msra.mxu0 %v3694
      %4494 = vmatmul.bf16.gmra.mxu0 %v3166
      %v4495 = vpop.f32.mrf.mxu0
      %v4496 = vadd.f32 %v4407, %v4495
      %v4497 = vpop.f32.mrf.mxu0
      %v4498 = vadd.f32 %v4409, %v4497
      %4499 = vmatmul.bf16.gmra.mxu0 %v3167
      %v4500 = vpop.f32.mrf.mxu0
      %v4501 = vadd.f32 %v4412, %v4500
      %v4502 = vpop.f32.mrf.mxu0
      %v4503 = vadd.f32 %v4414, %v4502
      %4504 = vmatmul.bf16.gmra.mxu0 %v3168
      %v4505 = vpop.f32.mrf.mxu0
      %v4506 = vadd.f32 %v4417, %v4505
      %v4507 = vpop.f32.mrf.mxu0
      %v4508 = vadd.f32 %v4419, %v4507
      %4509 = vmatmul.bf16.gmra.mxu0 %v3169
      %v4510 = vpop.f32.mrf.mxu0
      %v4511 = vadd.f32 %v4422, %v4510
      %v4512 = vpop.f32.mrf.mxu0
      %v4513 = vadd.f32 %v4424, %v4512
      %4514 = vmatmul.bf16.gmra.mxu0 %v3170
      %v4515 = vpop.f32.mrf.mxu0
      %v4516 = vadd.f32 %v4427, %v4515
      %v4517 = vpop.f32.mrf.mxu0
      %v4518 = vadd.f32 %v4429, %v4517
      %4519 = vmatmul.bf16.gmra.mxu0 %v3171
      %v4520 = vpop.f32.mrf.mxu0
      %v4521 = vadd.f32 %v4432, %v4520
      %v4522 = vpop.f32.mrf.mxu0
      %v4523 = vadd.f32 %v4434, %v4522
      %4524 = vmatmul.bf16.gmra.mxu0 %v3172
      %v4525 = vpop.f32.mrf.mxu0
      %v4526 = vadd.f32 %v4437, %v4525
      %v4527 = vpop.f32.mrf.mxu0
      %v4528 = vadd.f32 %v4439, %v4527
      %4529 = vmatmul.bf16.gmra.mxu0 %v3173
      %v4530 = vpop.f32.mrf.mxu0
      %v4531 = vadd.f32 %v4442, %v4530
      %v4532 = vpop.f32.mrf.mxu0
      %v4533 = vadd.f32 %v4444, %v4532
      %4534 = vmatmul.bf16.gmra.mxu0 %v3174
      %v4535 = vpop.f32.mrf.mxu0
      %v4536 = vadd.f32 %v4447, %v4535
      %v4537 = vpop.f32.mrf.mxu0
      %v4538 = vadd.f32 %v4449, %v4537
      %4539 = vmatmul.bf16.gmra.mxu0 %v3175
      %v4540 = vpop.f32.mrf.mxu0
      %v4541 = vadd.f32 %v4452, %v4540
      %v4542 = vpop.f32.mrf.mxu0
      %v4543 = vadd.f32 %v4454, %v4542
      %4544 = vmatmul.bf16.gmra.mxu0 %v3176
      %v4545 = vpop.f32.mrf.mxu0
      %v4546 = vadd.f32 %v4457, %v4545
      %v4547 = vpop.f32.mrf.mxu0
      %v4548 = vadd.f32 %v4459, %v4547
      %4549 = vmatmul.bf16.gmra.mxu0 %v3177
      %v4550 = vpop.f32.mrf.mxu0
      %v4551 = vadd.f32 %v4462, %v4550
      %v4552 = vpop.f32.mrf.mxu0
      %v4553 = vadd.f32 %v4464, %v4552
      %4554 = vmatmul.bf16.gmra.mxu0 %v3178
      %v4555 = vpop.f32.mrf.mxu0
      %v4556 = vadd.f32 %v4467, %v4555
      %v4557 = vpop.f32.mrf.mxu0
      %v4558 = vadd.f32 %v4469, %v4557
      %4559 = vmatmul.bf16.gmra.mxu0 %v3179
      %v4560 = vpop.f32.mrf.mxu0
      %v4561 = vadd.f32 %v4472, %v4560
      %v4562 = vpop.f32.mrf.mxu0
      %v4563 = vadd.f32 %v4474, %v4562
      %4564 = vmatmul.bf16.gmra.mxu0 %v3180
      %v4565 = vpop.f32.mrf.mxu0
      %v4566 = vadd.f32 %v4477, %v4565
      %v4567 = vpop.f32.mrf.mxu0
      %v4568 = vadd.f32 %v4479, %v4567
      %4569 = vmatmul.bf16.gmra.mxu0 %v3181
      %v4570 = vpop.f32.mrf.mxu0
      %v4571 = vadd.f32 %v4482, %v4570
      %v4572 = vpop.f32.mrf.mxu0
      %v4573 = vadd.f32 %v4484, %v4572
      %4574 = vdwg.mxu0
      %4575 = vst [vmem:[%s208] sm:$0xff] %v4496
      %4576 = vst [vmem:[%s208 + $0x8] sm:$0xff] %v4498
      %4577 = vst [vmem:[%s208 + $0x10] sm:$0xff] %v4501
      %4578 = vst [vmem:[%s208 + $0x18] sm:$0xff] %v4503
      %4579 = vst [vmem:[%s208 + $0x20] sm:$0xff] %v4506
      %4580 = vst [vmem:[%s208 + $0x28] sm:$0xff] %v4508
      %4581 = vst [vmem:[%s208 + $0x30] sm:$0xff] %v4511
      %4582 = vst [vmem:[%s208 + $0x38] sm:$0xff] %v4513
      %4583 = vst [vmem:[%s208 + $0x40] sm:$0xff] %v4516
      %4584 = vst [vmem:[%s208 + $0x48] sm:$0xff] %v4518
      %4585 = vst [vmem:[%s208 + $0x50] sm:$0xff] %v4521
      %4586 = vst [vmem:[%s208 + $0x58] sm:$0xff] %v4523
      %4587 = vst [vmem:[%s208 + $0x60] sm:$0xff] %v4526
      %4588 = vst [vmem:[%s208 + $0x68] sm:$0xff] %v4528
      %4589 = vst [vmem:[%s208 + $0x70] sm:$0xff] %v4531
      %4590 = vst [vmem:[%s208 + $0x78] sm:$0xff] %v4533
      %4591 = vst [vmem:[%s208 + $0x80] sm:$0xff] %v4536
      %4592 = vst [vmem:[%s208 + $0x88] sm:$0xff] %v4538
      %4593 = vst [vmem:[%s208 + $0x90] sm:$0xff] %v4541
      %4594 = vst [vmem:[%s208 + $0x98] sm:$0xff] %v4543
      %4595 = vst [vmem:[%s208 + $0xa0] sm:$0xff] %v4546
      %4596 = vst [vmem:[%s208 + $0xa8] sm:$0xff] %v4548
      %4597 = vst [vmem:[%s208 + $0xb0] sm:$0xff] %v4551
      %4598 = vst [vmem:[%s208 + $0xb8] sm:$0xff] %v4553
      %4599 = vst [vmem:[%s208 + $0xc0] sm:$0xff] %v4556
      %4600 = vst [vmem:[%s208 + $0xc8] sm:$0xff] %v4558
      %4601 = vst [vmem:[%s208 + $0xd0] sm:$0xff] %v4561
      %4602 = vst [vmem:[%s208 + $0xd8] sm:$0xff] %v4563
      %4603 = vst [vmem:[%s208 + $0xe0] sm:$0xff] %v4566
      %4604 = vst [vmem:[%s208 + $0xe8] sm:$0xff] %v4568
      %4605 = vst [vmem:[%s208 + $0xf0] sm:$0xff] %v4571
      %4606 = vst [vmem:[%s208 + $0xf8] sm:$0xff] %v4573
      %v4607 = vadd.f32 %v4496, %v4498
      %v4608 = vadd.f32 %v4607, %v4501
      %v4609 = vadd.f32 %v4608, %v4503
      %v4610 = vadd.f32 %v4609, %v4506
      %v4611 = vadd.f32 %v4610, %v4508
      %v4612 = vadd.f32 %v4611, %v4511
      %v4613 = vadd.f32 %v4612, %v4513
      %v4614 = vadd.f32 %v4613, %v4516
      %v4615 = vadd.f32 %v4614, %v4518
      %v4616 = vadd.f32 %v4615, %v4521
      %v4617 = vadd.f32 %v4616, %v4523
      %v4618 = vadd.f32 %v4617, %v4526
      %v4619 = vadd.f32 %v4618, %v4528
      %v4620 = vadd.f32 %v4619, %v4531
      %v4621 = vadd.f32 %v4620, %v4533
      %v4622 = vadd.f32 %v4621, %v4536
      %v4623 = vadd.f32 %v4622, %v4538
      %v4624 = vadd.f32 %v4623, %v4541
      %v4625 = vadd.f32 %v4624, %v4543
      %v4626 = vadd.f32 %v4625, %v4546
      %v4627 = vadd.f32 %v4626, %v4548
      %v4628 = vadd.f32 %v4627, %v4551
      %v4629 = vadd.f32 %v4628, %v4553
      %v4630 = vadd.f32 %v4629, %v4556
      %v4631 = vadd.f32 %v4630, %v4558
      %v4632 = vadd.f32 %v4631, %v4561
      %v4633 = vadd.f32 %v4632, %v4563
      %v4634 = vadd.f32 %v4633, %v4566
      %v4635 = vadd.f32 %v4634, %v4568
      %v4636 = vadd.f32 %v4635, %v4571
      %v4637 = vadd.f32 %v4636, %v4573
      %v4638 = vrot.slane %v4637, 4
      %v4639 = vadd.f32 %v4637, %v4638
      %v4640 = vrot.slane %v4639, 2
      %v4641 = vadd.f32 %v4639, %v4640
      %v4642 = vrot.slane %v4641, 1
      %v4643 = vadd.f32 %v4641, %v4642
      %4644 = vst [vmem:[%s211] sm:$0x1] %v4643
      %v4645 = vmul.f32 %v4496, %v4496
      %v4646 = vmul.f32 %v4498, %v4498
      %v4647 = vmul.f32 %v4501, %v4501
      %v4648 = vmul.f32 %v4503, %v4503
      %v4649 = vmul.f32 %v4506, %v4506
      %v4650 = vmul.f32 %v4508, %v4508
      %v4651 = vmul.f32 %v4511, %v4511
      %v4652 = vmul.f32 %v4513, %v4513
      %v4653 = vmul.f32 %v4516, %v4516
      %v4654 = vmul.f32 %v4518, %v4518
      %v4655 = vmul.f32 %v4521, %v4521
      %v4656 = vmul.f32 %v4523, %v4523
      %v4657 = vmul.f32 %v4526, %v4526
      %v4658 = vmul.f32 %v4528, %v4528
      %v4659 = vmul.f32 %v4531, %v4531
      %v4660 = vmul.f32 %v4533, %v4533
      %v4661 = vmul.f32 %v4536, %v4536
      %v4662 = vmul.f32 %v4538, %v4538
      %v4663 = vmul.f32 %v4541, %v4541
      %v4664 = vmul.f32 %v4543, %v4543
      %v4665 = vmul.f32 %v4546, %v4546
      %v4666 = vmul.f32 %v4548, %v4548
      %v4667 = vmul.f32 %v4551, %v4551
      %v4668 = vmul.f32 %v4553, %v4553
      %v4669 = vmul.f32 %v4556, %v4556
      %v4670 = vmul.f32 %v4558, %v4558
      %v4671 = vmul.f32 %v4561, %v4561
      %v4672 = vmul.f32 %v4563, %v4563
      %v4673 = vmul.f32 %v4566, %v4566
      %v4674 = vmul.f32 %v4568, %v4568
      %v4675 = vmul.f32 %v4571, %v4571
      %v4676 = vmul.f32 %v4573, %v4573
      %v4677 = vadd.f32 %v4645, %v4646
      %v4678 = vadd.f32 %v4677, %v4647
      %v4679 = vadd.f32 %v4678, %v4648
      %v4680 = vadd.f32 %v4679, %v4649
      %v4681 = vadd.f32 %v4680, %v4650
      %v4682 = vadd.f32 %v4681, %v4651
      %v4683 = vadd.f32 %v4682, %v4652
      %v4684 = vadd.f32 %v4683, %v4653
      %v4685 = vadd.f32 %v4684, %v4654
      %v4686 = vadd.f32 %v4685, %v4655
      %v4687 = vadd.f32 %v4686, %v4656
      %v4688 = vadd.f32 %v4687, %v4657
      %v4689 = vadd.f32 %v4688, %v4658
      %v4690 = vadd.f32 %v4689, %v4659
      %v4691 = vadd.f32 %v4690, %v4660
      %v4692 = vadd.f32 %v4691, %v4661
      %v4693 = vadd.f32 %v4692, %v4662
      %v4694 = vadd.f32 %v4693, %v4663
      %v4695 = vadd.f32 %v4694, %v4664
      %v4696 = vadd.f32 %v4695, %v4665
      %v4697 = vadd.f32 %v4696, %v4666
      %v4698 = vadd.f32 %v4697, %v4667
      %v4699 = vadd.f32 %v4698, %v4668
      %v4700 = vadd.f32 %v4699, %v4669
      %v4701 = vadd.f32 %v4700, %v4670
      %v4702 = vadd.f32 %v4701, %v4671
      %v4703 = vadd.f32 %v4702, %v4672
      %v4704 = vadd.f32 %v4703, %v4673
      %v4705 = vadd.f32 %v4704, %v4674
      %v4706 = vadd.f32 %v4705, %v4675
      %v4707 = vadd.f32 %v4706, %v4676
      %v4708 = vrot.slane %v4707, 4
      %v4709 = vadd.f32 %v4707, %v4708
      %v4710 = vrot.slane %v4709, 2
      %v4711 = vadd.f32 %v4709, %v4710
      %v4712 = vrot.slane %v4711, 1
      %v4713 = vadd.f32 %v4711, %v4712
      %4714 = vst [vmem:[%s214] sm:$0x1] %v4713
      %p4715 = scmp.lt.s32.totalorder %s16, 1
      %s4716 = scalar_select %p4715, %s16, 1
      %s4717 = smul.addr %s4716, 32
      %s4718 = smul.addr %s4717, 8
      %s4719 = scalar_lea.vmem %s2, %s4718
      %p4720 = scmp.lt.s32.totalorder %s16, 1
      %s4721 = scalar_select %p4720, %s16, 1
      %s4722 = scalar_lea.vmem %s3, %s4721
      %p4723 = scmp.lt.s32.totalorder %s16, 1
      %s4724 = scalar_select %p4723, %s16, 1
      %s4725 = scalar_lea.vmem %s4, %s4724
      // Predicated region
      $region29: #{residual_block_forward.6} parent=27 // pred_check
        %p4726 = pneg %p81
      $region30: #{residual_block_forward.6} parent=27 // pred_check_branch
        %4728 = sbr.rel (%p4726) target = $region32
      $region31: #{residual_block_forward.6} parent=27 // pred_region
        _
      $region32: #{residual_block_forward.6} parent=27 // pred_fallthru
        _
      // Predicated region
      $region33: #{residual_block_forward.6} parent=27 // pred_check
        %p4729 = pneg %p107
      $region34: #{residual_block_forward.6} parent=27 // pred_check_branch
        %4731 = sbr.rel (%p4729) target = $region36
      $region35: #{residual_block_forward.6} parent=27 // pred_region
        _
      $region36: #{residual_block_forward.6} parent=27 // pred_fallthru
        _
      // Predicated region
      $region37: #{residual_block_forward.6} parent=27 // pred_check
        %p4732 = pneg %p133
      $region38: #{residual_block_forward.6} parent=27 // pred_check_branch
        %4734 = sbr.rel (%p4732) target = $region40
      $region39: #{residual_block_forward.6} parent=27 // pred_region
        _
      $region40: #{residual_block_forward.6} parent=27 // pred_fallthru
        _
    $region28: #{residual_block_forward.6} parent=5 // pred_fallthru
      _
    %p4735 = scmp.le.s32.totalorder 2, %s11
    // Predicated region
    $region41: #{residual_block_forward.6} parent=5 // pred_check
      %p4736 = pneg %p4735
    $region42: #{residual_block_forward.6} parent=5 // pred_check_branch
      %4738 = sbr.rel (%p4736) target = $region44
    $region43: #{residual_block_forward.6} parent=5 // pred_region
      %s4739 = ssub.s32 %s11, 2
      // Predicated region
      $region45: #{residual_block_forward.6} parent=43 // pred_check
        %p4740 = pneg %p87
      $region46: #{residual_block_forward.6} parent=43 // pred_check_branch
        %4742 = sbr.rel (%p4740) target = $region48
      $region47: #{residual_block_forward.6} parent=43 // pred_region
        %p4743 = scmp.lt.s32.totalorder %s17, 1
        %s4744 = scalar_select %p4743, %s17, 1
        %s4745 = smul.addr %s4744, 32
        %s4746 = smul.addr %s4745, 8
        %s4747 = scalar_lea.vmem %s2, %s4746
      $region48: #{residual_block_forward.6} parent=43 // pred_fallthru
        _
      // Predicated region
      $region49: #{residual_block_forward.6} parent=43 // pred_check
        %p4748 = pneg %p113
      $region50: #{residual_block_forward.6} parent=43 // pred_check_branch
        %4750 = sbr.rel (%p4748) target = $region52
      $region51: #{residual_block_forward.6} parent=43 // pred_region
        %p4751 = scmp.lt.s32.totalorder %s17, 1
        %s4752 = scalar_select %p4751, %s17, 1
        %s4753 = scalar_lea.vmem %s3, %s4752
      $region52: #{residual_block_forward.6} parent=43 // pred_fallthru
        _
      // Predicated region
      $region53: #{residual_block_forward.6} parent=43 // pred_check
        %p4754 = pneg %p139
      $region54: #{residual_block_forward.6} parent=43 // pred_check_branch
        %4756 = sbr.rel (%p4754) target = $region56
      $region55: #{residual_block_forward.6} parent=43 // pred_region
        %p4757 = scmp.lt.s32.totalorder %s17, 1
        %s4758 = scalar_select %p4757, %s17, 1
        %s4759 = scalar_lea.vmem %s4, %s4758
      $region56: #{residual_block_forward.6} parent=43 // pred_fallthru
        _
    $region44: #{residual_block_forward.6} parent=5 // pred_fallthru
      _
  $region6: #{residual_block_forward.6} parent=0 // loop_footer
    %s15 = sadd.s32 1, %s11
  $region7: #{residual_block_forward.6} parent=0 // loop_footer_branch
    %10 = sbr.rel target = $region3
  $region8: #{residual_block_forward.6} parent=0 // loop_exit
    _

// kernel: residual_block_forward.4
$region0: #{residual_block_forward.4}
  #allocation0 [shape = 'u32[]', space=smem, size = 0x4, offset = 0x4, fixed_abs, tag = 'smem constant byte address 0x4 - core index']
  #allocation1 [shape = 'u32[72,128]{1,0:T(1,128)}', space=vmem, size = 0x9000, scoped, tag = 'internal scratch']
  #allocation2 [shape = 'bf16[18,18,4]{2,1,0:T(8,128)(2,1)}', space=vmem, size = 0x1b000, scoped, tag = 'scratch operand']
  %s0 = inlined_call_operand.vmem [shape: bf16[2,16,16,4], index: 0, kind: input, shape index: {}]
  %s1 = inlined_call_operand.vmem [shape: bf16[9,4,128], index: 1, kind: input, shape index: {}]
  %s2 = inlined_call_operand.vmem [shape: f32[2,256,128], index: 2, kind: output, shape index: {0}]
  %s3 = inlined_call_operand.vmem [shape: f32[2,1,128], index: 3, kind: output, shape index: {1}]
  %s4 = inlined_call_operand.vmem [shape: f32[2,1,128], index: 4, kind: output, shape index: {2}]
  %5 = xla_tuple %s2, %s3, %s4
  %s6 = sld [smem:[#allocation0]]
  $region57: #{residual_block_forward.4} parent=0
    _
  %s8 = ssub.s32 1, %s6
  %s9 = scalar_select 0, %s8, %s6
  loop: start=0, step=1, limit=4
  $region2: #{residual_block_forward.4} parent=0 // loop_pre_header
    _
  $region3: #{residual_block_forward.4} parent=0 // loop_header
    %s11 = sphi 0, %s15
    %p12 = scmp.ge.s32.totalorder %s11, 4
    %s21 = sphi 0, %s23
    %s24 = sphi 0, %s21
    %s25 = sphi 0, %s24
    %s41 = sphi 0, %s25
    %s45 = sphi 0, %s45
    %s47 = sphi 0, %s45
    %s48 = sphi 0, %s47
    %s62 = sphi 0, %s48
    %s68 = sphi 0, %s70
    %s71 = sphi 0, %s68
    %s72 = sphi 0, %s71
    %s88 = sphi 0, %s72
    %s94 = sphi 0, %s96
    %s97 = sphi 0, %s94
    %s98 = sphi 0, %s97
    %s114 = sphi 0, %s98
    %s120 = sphi 0, %s122
    %s123 = sphi 0, %s120
    %s124 = sphi 0, %s123
    %s140 = sphi 0, %s124
  $region4: #{residual_block_forward.4} parent=0 // loop_header_branch
    %14 = sbr.rel (%p12) target = $region8
  $region5: #{residual_block_forward.4} parent=0 // loop_body
    %s16 = ssub.s32 %s11, 1
    %s17 = ssub.s32 %s11, 2
    %s18 = sadd.s32 %s11, 1
    %s19 = ssub.s32 %s11, %s18
    %p20 = scmp.eq.s32.totalorder %s19, 0
    %s22 = sadd.s32 %s21, 1
    %s23 = scalar_select %p20, %s21, %s22
    %p26 = pneg %p20
    %p27 = scmp.eq.s32.totalorder %s11, 1
    %p28 = por %p26, %p27
    %p29 = scmp.ne.s32.totalorder %s21, %s24
    %p30 = scmp.eq.s32.totalorder %s11, 0
    %p31 = por %p29, %p30
    %p32 = scmp.ne.s32.totalorder %s21, %s24
    %p33 = scmp.eq.s32.totalorder %s16, 1
    %p34 = por %p32, %p33
    %p35 = scmp.ne.s32.totalorder %s24, %s25
    %p36 = scmp.eq.s32.totalorder %s16, 0
    %p37 = por %p35, %p36
    %p38 = scmp.ne.s32.totalorder %s24, %s25
    %p39 = scmp.eq.s32.totalorder %s17, 1
    %p40 = por %p38, %p39
    %p42 = scmp.ne.s32.totalorder %s25, %s41
    %p43 = scmp.eq.s32.totalorder %s17, 0
    %p44 = por %p42, %p43
    %s46 = sadd.s32 %s45, 1
    %p49 = scmp.eq.s32.totalorder %s11, 1
    %p50 = scmp.ne.s32.totalorder %s45, %s47
    %p51 = scmp.eq.s32.totalorder %s11, 0
    %p52 = por %p50, %p51
    %p53 = scmp.ne.s32.totalorder %s45, %s47
    %p54 = scmp.eq.s32.totalorder %s16, 1
    %p55 = por %p53, %p54
    %p56 = scmp.ne.s32.totalorder %s47, %s48
    %p57 = scmp.eq.s32.totalorder %s16, 0
    %p58 = por %p56, %p57
    %p59 = scmp.ne.s32.totalorder %s47, %s48
    %p60 = scmp.eq.s32.totalorder %s17, 1
    %p61 = por %p59, %p60
    %p63 = scmp.ne.s32.totalorder %s48, %s62
    %p64 = scmp.eq.s32.totalorder %s17, 0
    %p65 = por %p63, %p64
    %s66 = ssub.s32 %s11, %s18
    %p67 = scmp.eq.s32.totalorder %s66, 0
    %s69 = sadd.s32 %s68, 1
    %s70 = scalar_select %p67, %s68, %s69
    %p73 = pneg %p67
    %p74 = scmp.eq.s32.totalorder %s11, 1
    %p75 = por %p73, %p74
    %p76 = scmp.ne.s32.totalorder %s68, %s71
    %p77 = scmp.eq.s32.totalorder %s11, 0
    %p78 = por %p76, %p77
    %p79 = scmp.ne.s32.totalorder %s68, %s71
    %p80 = scmp.eq.s32.totalorder %s16, 1
    %p81 = por %p79, %p80
    %p82 = scmp.ne.s32.totalorder %s71, %s72
    %p83 = scmp.eq.s32.totalorder %s16, 0
    %p84 = por %p82, %p83
    %p85 = scmp.ne.s32.totalorder %s71, %s72
    %p86 = scmp.eq.s32.totalorder %s17, 1
    %p87 = por %p85, %p86
    %p89 = scmp.ne.s32.totalorder %s72, %s88
    %p90 = scmp.eq.s32.totalorder %s17, 0
    %p91 = por %p89, %p90
    %s92 = ssub.s32 %s11, %s18
    %p93 = scmp.eq.s32.totalorder %s92, 0
    %s95 = sadd.s32 %s94, 1
    %s96 = scalar_select %p93, %s94, %s95
    %p99 = pneg %p93
    %p100 = scmp.eq.s32.totalorder %s11, 1
    %p101 = por %p99, %p100
    %p102 = scmp.ne.s32.totalorder %s94, %s97
    %p103 = scmp.eq.s32.totalorder %s11, 0
    %p104 = por %p102, %p103
    %p105 = scmp.ne.s32.totalorder %s94, %s97
    %p106 = scmp.eq.s32.totalorder %s16, 1
    %p107 = por %p105, %p106
    %p108 = scmp.ne.s32.totalorder %s97, %s98
    %p109 = scmp.eq.s32.totalorder %s16, 0
    %p110 = por %p108, %p109
    %p111 = scmp.ne.s32.totalorder %s97, %s98
    %p112 = scmp.eq.s32.totalorder %s17, 1
    %p113 = por %p111, %p112
    %p115 = scmp.ne.s32.totalorder %s98, %s114
    %p116 = scmp.eq.s32.totalorder %s17, 0
    %p117 = por %p115, %p116
    %s118 = ssub.s32 %s11, %s18
    %p119 = scmp.eq.s32.totalorder %s118, 0
    %s121 = sadd.s32 %s120, 1
    %s122 = scalar_select %p119, %s120, %s121
    %p125 = pneg %p119
    %p126 = scmp.eq.s32.totalorder %s11, 1
    %p127 = por %p125, %p126
    %p128 = scmp.ne.s32.totalorder %s120, %s123
    %p129 = scmp.eq.s32.totalorder %s11, 0
    %p130 = por %p128, %p129
    %p131 = scmp.ne.s32.totalorder %s120, %s123
    %p132 = scmp.eq.s32.totalorder %s16, 1
    %p133 = por %p131, %p132
    %p134 = scmp.ne.s32.totalorder %s123, %s124
    %p135 = scmp.eq.s32.totalorder %s16, 0
    %p136 = por %p134, %p135
    %p137 = scmp.ne.s32.totalorder %s123, %s124
    %p138 = scmp.eq.s32.totalorder %s17, 1
    %p139 = por %p137, %p138
    %p141 = scmp.ne.s32.totalorder %s124, %s140
    %p142 = scmp.eq.s32.totalorder %s17, 0
    %p143 = por %p141, %p142
    %p144 = scmp.le.s32.totalorder 1, %s11
    %p145 = scmp.lt.s32.totalorder %s11, 3
    %p146 = pnand %p144, %p145
    %p147 = pneg %p146
    // Predicated region
    $region9: #{residual_block_forward.4} parent=5 // pred_check
      _
    $region10: #{residual_block_forward.4} parent=5 // pred_check_branch
      %149 = sbr.rel (%p146) target = $region12
    $region11: #{residual_block_forward.4} parent=5 // pred_region
      %s150 = ssub.s32 %s11, 1
      // Predicated region
      $region13: #{residual_block_forward.4} parent=11 // pred_check
        %p151 = pneg %p58
      $region14: #{residual_block_forward.4} parent=11 // pred_check_branch
        %153 = sbr.rel (%p151) target = $region16
      $region15: #{residual_block_forward.4} parent=11 // pred_region
        _
      $region16: #{residual_block_forward.4} parent=11 // pred_fallthru
        _
    $region12: #{residual_block_forward.4} parent=5 // pred_fallthru
      _
    %p154 = scmp.lt.s32.totalorder %s11, 2
    // Predicated region
    $region17: #{residual_block_forward.4} parent=5 // pred_check
      %p155 = pneg %p154
    $region18: #{residual_block_forward.4} parent=5 // pred_check_branch
      %157 = sbr.rel (%p155) target = $region20
    $region19: #{residual_block_forward.4} parent=5 // pred_region
      // Predicated region
      $region21: #{residual_block_forward.4} parent=19 // pred_check
        %p158 = pneg %p31
      $region22: #{residual_block_forward.4} parent=19 // pred_check_branch
        %160 = sbr.rel (%p158) target = $region24
      $region23: #{residual_block_forward.4} parent=19 // pred_region
        %p161 = scmp.lt.s32.totalorder %s11, 1
        %s162 = scalar_select %p161, %s11, 1
        %s163 = smul.addr %s162, 32
        %s164 = smul.addr %s163, 4
        %s165 = scalar_lea.vmem %s0, %s164
      $region24: #{residual_block_forward.4} parent=19 // pred_fallthru
        _
    $region20: #{residual_block_forward.4} parent=5 // pred_fallthru
      _
    %p166 = scmp.le.s32.totalorder 1, %s11
    %p167 = scmp.lt.s32.totalorder %s11, 3
    %p168 = pnand %p166, %p167
    %p169 = pneg %p168
    // Predicated region
    $region25: #{residual_block_forward.4} parent=5 // pred_check
      _
    $region26: #{residual_block_forward.4} parent=5 // pred_check_branch
      %171 = sbr.rel (%p168) target = $region28
    $region27: #{residual_block_forward.4} parent=5 // pred_region
      %s172 = ssub.s32 %s11, 1
      %p173 = scmp.lt.s32.totalorder %s16, 1
      %s174 = scalar_select %p173, %s16, 1
      %s175 = smul.addr %s174, 32
      %s176 = smul.addr %s175, 4
      %s177 = scalar_lea.vmem %s0, %s176
      %p178 = pneg %p37
      %p179 = pneg %p34
      %p180 = pneg %p58
      %p181 = pneg %p55
      %p182 = pneg %p84
      %p183 = pneg %p81
      %p184 = scmp.lt.s32.totalorder %s16, 1
      %s185 = scalar_select %p184, %s16, 1
      %s186 = smul.addr %s185, 32
      %s187 = smul.addr %s186, 8
      %s188 = scalar_lea.vmem %s2, %s187
      %p189 = pneg %p110
      %p190 = pneg %p107
      %p191 = scmp.lt.s32.totalorder %s16, 1
      %s192 = scalar_select %p191, %s16, 1
      %s193 = scalar_lea.vmem %s3, %s192
      %p194 = pneg %p136
      %p195 = pneg %p133
      %p196 = scmp.lt.s32.totalorder %s16, 1
      %s197 = scalar_select %p196, %s16, 1
      %s198 = scalar_lea.vmem %s4, %s197
      %p199 = scmp.lt.s32.totalorder %s16, 1
      %s200 = scalar_select %p199, %s16, 1
      %s201 = smul.addr %s200, 32
      %s202 = smul.addr %s201, 4
      %s203 = scalar_lea.vmem %s0, %s202
      %p204 = scmp.lt.s32.totalorder %s16, 1
      %s205 = scalar_select %p204, %s16, 1
      %s206 = smul.addr %s205, 32
      %s207 = smul.addr %s206, 8
      %s208 = scalar_lea.vmem %s2, %s207
      %p209 = scmp.lt.s32.totalorder %s16, 1
      %s210 = scalar_select %p209, %s16, 1
      %s211 = scalar_lea.vmem %s3, %s210
      %p212 = scmp.lt.s32.totalorder %s16, 1
      %s213 = scalar_select %p212, %s16, 1
      %s214 = scalar_lea.vmem %s4, %s213
      %vm216 = vcmask 27648
      %217 = vst.msk [vmem:[#allocation2] sm:$0xf] %vm216, 0
      %218 = vst.msk [vmem:[#allocation2 + $0x4] sm:$0xf] %vm216, 0
      %vm219 = vcmask 24576
      %220 = vst.msk [vmem:[#allocation2 + $0x8] sm:$0x1] %vm219, 0
      %221 = vst.msk [vmem:[#allocation2 + $0xc] sm:$0xf] %vm216, 0
      %222 = vst.msk [vmem:[#allocation2 + $0x10] sm:$0xf] %vm216, 0
      %223 = vst.msk [vmem:[#allocation2 + $0x14] sm:$0x1] %vm219, 0
      %224 = vst.msk [vmem:[#allocation2 + $0x18] sm:$0xf] %vm216, 0
      %225 = vst.msk [vmem:[#allocation2 + $0x1c] sm:$0xf] %vm216, 0
      %226 = vst.msk [vmem:[#allocation2 + $0x20] sm:$0x1] %vm219, 0
      %227 = vst.msk [vmem:[#allocation2 + $0x24] sm:$0xf] %vm216, 0
      %228 = vst.msk [vmem:[#allocation2 + $0x28] sm:$0xf] %vm216, 0
      %229 = vst.msk [vmem:[#allocation2 + $0x2c] sm:$0x1] %vm219, 0
      %230 = vst.msk [vmem:[#allocation2 + $0x30] sm:$0xf] %vm216, 0
      %231 = vst.msk [vmem:[#allocation2 + $0x34] sm:$0xf] %vm216, 0
      %232 = vst.msk [vmem:[#allocation2 + $0x38] sm:$0x1] %vm219, 0
      %233 = vst.msk [vmem:[#allocation2 + $0x3c] sm:$0xf] %vm216, 0
      %234 = vst.msk [vmem:[#allocation2 + $0x40] sm:$0xf] %vm216, 0
      %235 = vst.msk [vmem:[#allocation2 + $0x44] sm:$0x1] %vm219, 0
      %236 = vst.msk [vmem:[#allocation2 + $0x48] sm:$0xf] %vm216, 0
      %237 = vst.msk [vmem:[#allocation2 + $0x4c] sm:$0xf] %vm216, 0
      %238 = vst.msk [vmem:[#allocation2 + $0x50] sm:$0x1] %vm219, 0
      %239 = vst.msk [vmem:[#allocation2 + $0x54] sm:$0xf] %vm216, 0
      %240 = vst.msk [vmem:[#allocation2 + $0x58] sm:$0xf] %vm216, 0
      %241 = vst.msk [vmem:[#allocation2 + $0x5c] sm:$0x1] %vm219, 0
      %242 = vst.msk [vmem:[#allocation2 + $0x60] sm:$0xf] %vm216, 0
      %243 = vst.msk [vmem:[#allocation2 + $0x64] sm:$0xf] %vm216, 0
      %244 = vst.msk [vmem:[#allocation2 + $0x68] sm:$0x1] %vm219, 0
      %245 = vst.msk [vmem:[#allocation2 + $0x6c] sm:$0xf] %vm216, 0
      %246 = vst.msk [vmem:[#allocation2 + $0x70] sm:$0xf] %vm216, 0
      %247 = vst.msk [vmem:[#allocation2 + $0x74] sm:$0x1] %vm219, 0
      %248 = vst.msk [vmem:[#allocation2 + $0x78] sm:$0xf] %vm216, 0
      %249 = vst.msk [vmem:[#allocation2 + $0x7c] sm:$0xf] %vm216, 0
      %250 = vst.msk [vmem:[#allocation2 + $0x80] sm:$0x1] %vm219, 0
      %251 = vst.msk [vmem:[#allocation2 + $0x84] sm:$0xf] %vm216, 0
      %252 = vst.msk [vmem:[#allocation2 + $0x88] sm:$0xf] %vm216, 0
      %253 = vst.msk [vmem:[#allocation2 + $0x8c] sm:$0x1] %vm219, 0
      %254 = vst.msk [vmem:[#allocation2 + $0x90] sm:$0xf] %vm216, 0
      %255 = vst.msk [vmem:[#allocation2 + $0x94] sm:$0xf] %vm216, 0
      %256 = vst.msk [vmem:[#allocation2 + $0x98] sm:$0x1] %vm219, 0
      %257 = vst.msk [vmem:[#allocation2 + $0x9c] sm:$0xf] %vm216, 0
      %258 = vst.msk [vmem:[#allocation2 + $0xa0] sm:$0xf] %vm216, 0
      %259 = vst.msk [vmem:[#allocation2 + $0xa4] sm:$0x1] %vm219, 0
      %260 = vst.msk [vmem:[#allocation2 + $0xa8] sm:$0xf] %vm216, 0
      %261 = vst.msk [vmem:[#allocation2 + $0xac] sm:$0xf] %vm216, 0
      %262 = vst.msk [vmem:[#allocation2 + $0xb0] sm:$0x1] %vm219, 0
      %263 = vst.msk [vmem:[#allocation2 + $0xb4] sm:$0xf] %vm216, 0
      %264 = vst.msk [vmem:[#allocation2 + $0xb8] sm:$0xf] %vm216, 0
      %265 = vst.msk [vmem:[#allocation2 + $0xbc] sm:$0x1] %vm219, 0
      %266 = vst.msk [vmem:[#allocation2 + $0xc0] sm:$0xf] %vm216, 0
      %267 = vst.msk [vmem:[#allocation2 + $0xc4] sm:$0xf] %vm216, 0
      %268 = vst.msk [vmem:[#allocation2 + $0xc8] sm:$0x1] %vm219, 0
      %269 = vst.msk [vmem:[#allocation2 + $0xcc] sm:$0xf] %vm216, 0
      %270 = vst.msk [vmem:[#allocation2 + $0xd0] sm:$0xf] %vm216, 0
      %271 = vst.msk [vmem:[#allocation2 + $0xd4] sm:$0x1] %vm219, 0
      %v272 = vld [vmem:[%s203] sm:$0xf]
      %v273 = vld [vmem:[%s203 + $0x4] sm:$0xf]
      %v274 = vld [vmem:[%s203 + $0x8] sm:$0xf]
      %v275 = vld [vmem:[%s203 + $0xc] sm:$0xf]
      %v276 = vld [vmem:[%s203 + $0x10] sm:$0xf]
      %v277 = vld [vmem:[%s203 + $0x14] sm:$0xf]
      %v278 = vld [vmem:[%s203 + $0x18] sm:$0xf]
      %v279 = vld [vmem:[%s203 + $0x1c] sm:$0xf]
      %v280 = vld [vmem:[%s203 + $0x20] sm:$0xf]
      %v281 = vld [vmem:[%s203 + $0x24] sm:$0xf]
      %v282 = vld [vmem:[%s203 + $0x28] sm:$0xf]
      %v283 = vld [vmem:[%s203 + $0x2c] sm:$0xf]
      %v284 = vld [vmem:[%s203 + $0x30] sm:$0xf]
      %v285 = vld [vmem:[%s203 + $0x34] sm:$0xf]
      %v286 = vld [vmem:[%s203 + $0x38] sm:$0xf]
      %v287 = vld [vmem:[%s203 + $0x3c] sm:$0xf]
      %v288 = vld [vmem:[%s203 + $0x40] sm:$0xf]
      %v289 = vld [vmem:[%s203 + $0x44] sm:$0xf]
      %v290 = vld [vmem:[%s203 + $0x48] sm:$0xf]
      %v291 = vld [vmem:[%s203 + $0x4c] sm:$0xf]
      %v292 = vld [vmem:[%s203 + $0x50] sm:$0xf]
      %v293 = vld [vmem:[%s203 + $0x54] sm:$0xf]
      %v294 = vld [vmem:[%s203 + $0x58] sm:$0xf]
      %v295 = vld [vmem:[%s203 + $0x5c] sm:$0xf]
      %v296 = vld [vmem:[%s203 + $0x60] sm:$0xf]
      %v297 = vld [vmem:[%s203 + $0x64] sm:$0xf]
      %v298 = vld [vmem:[%s203 + $0x68] sm:$0xf]
      %v299 = vld [vmem:[%s203 + $0x6c] sm:$0xf]
      %v300 = vld [vmem:[%s203 + $0x70] sm:$0xf]
      %v301 = vld [vmem:[%s203 + $0x74] sm:$0xf]
      %v302 = vld [vmem:[%s203 + $0x78] sm:$0xf]
      %v303 = vld [vmem:[%s203 + $0x7c] sm:$0xf]
      %vm304 = vsmask.f32 256
      %vm305 = vsmask.f32 4368
      %vm306 = vmor %vm304, %vm305
      %v308 = vshrl.u32 %v272, 16
      %v310 = vrot.slane %v308, 7
      %v311 = vshll.u32 %v272, 16
      %v313 = vor.u32 %v310, %v311
      %v314 = vrot.slane %v310, 4
      %v316 = vshrl.u32 %v273, 16
      %v318 = vrot.slane %v316, 7
      %v319 = vshll.u32 %v273, 16
      %v321 = vor.u32 %v318, %v319
      %v322 = vsel %vm306, %v314, %v321
      %v323 = vrot.slane %v318, 4
      %v325 = vshrl.u32 %v274, 16
      %v327 = vrot.slane %v325, 7
      %v328 = vshll.u32 %v274, 16
      %v330 = vor.u32 %v327, %v328
      %v331 = vrot.slane %v327, 4
      %v333 = vshrl.u32 %v275, 16
      %v335 = vrot.slane %v333, 7
      %v336 = vshll.u32 %v275, 16
      %v338 = vor.u32 %v335, %v336
      %v339 = vsel %vm306, %v331, %v338
      %v340 = vrot.slane %v335, 4
      %v342 = vshrl.u32 %v276, 16
      %v344 = vrot.slane %v342, 7
      %v345 = vshll.u32 %v276, 16
      %v347 = vor.u32 %v344, %v345
      %v348 = vrot.slane %v344, 4
      %v350 = vshrl.u32 %v277, 16
      %v352 = vrot.slane %v350, 7
      %v353 = vshll.u32 %v277, 16
      %v355 = vor.u32 %v352, %v353
      %v356 = vsel %vm306, %v348, %v355
      %v357 = vrot.slane %v352, 4
      %v359 = vshrl.u32 %v278, 16
      %v361 = vrot.slane %v359, 7
      %v362 = vshll.u32 %v278, 16
      %v364 = vor.u32 %v361, %v362
      %v365 = vrot.slane %v361, 4
      %v367 = vshrl.u32 %v279, 16
      %v369 = vrot.slane %v367, 7
      %v370 = vshll.u32 %v279, 16
      %v372 = vor.u32 %v369, %v370
      %v373 = vsel %vm306, %v365, %v372
      %v374 = vrot.slane %v369, 4
      %v376 = vshrl.u32 %v280, 16
      %v378 = vrot.slane %v376, 7
      %v379 = vshll.u32 %v280, 16
      %v381 = vor.u32 %v378, %v379
      %v382 = vrot.slane %v378, 4
      %v384 = vshrl.u32 %v281, 16
      %v386 = vrot.slane %v384, 7
      %v387 = vshll.u32 %v281, 16
      %v389 = vor.u32 %v386, %v387
      %v390 = vsel %vm306, %v382, %v389
      %v391 = vrot.slane %v386, 4
      %v393 = vshrl.u32 %v282, 16
      %v395 = vrot.slane %v393, 7
      %v396 = vshll.u32 %v282, 16
      %v398 = vor.u32 %v395, %v396
      %v399 = vrot.slane %v395, 4
      %v401 = vshrl.u32 %v283, 16
      %v403 = vrot.slane %v401, 7
      %v404 = vshll.u32 %v283, 16
      %v406 = vor.u32 %v403, %v404
      %v407 = vsel %vm306, %v399, %v406
      %v408 = vrot.slane %v403, 4
      %v410 = vshrl.u32 %v284, 16
      %v412 = vrot.slane %v410, 7
      %v413 = vshll.u32 %v284, 16
      %v415 = vor.u32 %v412, %v413
      %v416 = vrot.slane %v412, 4
      %v418 = vshrl.u32 %v285, 16
      %v420 = vrot.slane %v418, 7
      %v421 = vshll.u32 %v285, 16
      %v423 = vor.u32 %v420, %v421
      %v424 = vsel %vm306, %v416, %v423
      %v425 = vrot.slane %v420, 4
      %v427 = vshrl.u32 %v286, 16
      %v429 = vrot.slane %v427, 7
      %v430 = vshll.u32 %v286, 16
      %v432 = vor.u32 %v429, %v430
      %v433 = vrot.slane %v429, 4
      %v435 = vshrl.u32 %v287, 16
      %v437 = vrot.slane %v435, 7
      %v438 = vshll.u32 %v287, 16
      %v440 = vor.u32 %v437, %v438
      %v441 = vsel %vm306, %v433, %v440
      %v442 = vrot.slane %v437, 4
      %v444 = vshrl.u32 %v288, 16
      %v446 = vrot.slane %v444, 7
      %v447 = vshll.u32 %v288, 16
      %v449 = vor.u32 %v446, %v447
      %v450 = vrot.slane %v446, 4
      %v452 = vshrl.u32 %v289, 16
      %v454 = vrot.slane %v452, 7
      %v455 = vshll.u32 %v289, 16
      %v457 = vor.u32 %v454, %v455
      %v458 = vsel %vm306, %v450, %v457
      %v459 = vrot.slane %v454, 4
      %v461 = vshrl.u32 %v290, 16
      %v463 = vrot.slane %v461, 7
      %v464 = vshll.u32 %v290, 16
      %v466 = vor.u32 %v463, %v464
      %v467 = vrot.slane %v463, 4
      %v469 = vshrl.u32 %v291, 16
      %v471 = vrot.slane %v469, 7
      %v472 = vshll.u32 %v291, 16
      %v474 = vor.u32 %v471, %v472
      %v475 = vsel %vm306, %v467, %v474
      %v476 = vrot.slane %v471, 4
      %v478 = vshrl.u32 %v292, 16
      %v480 = vrot.slane %v478, 7
      %v481 = vshll.u32 %v292, 16
      %v483 = vor.u32 %v480, %v481
      %v484 = vrot.slane %v480, 4
      %v486 = vshrl.u32 %v293, 16
      %v488 = vrot.slane %v486, 7
      %v489 = vshll.u32 %v293, 16
      %v491 = vor.u32 %v488, %v489
      %v492 = vsel %vm306, %v484, %v491
      %v493 = vrot.slane %v488, 4
      %v495 = vshrl.u32 %v294, 16
      %v497 = vrot.slane %v495, 7
      %v498 = vshll.u32 %v294, 16
      %v500 = vor.u32 %v497, %v498
      %v501 = vrot.slane %v497, 4
      %v503 = vshrl.u32 %v295, 16
      %v505 = vrot.slane %v503, 7
      %v506 = vshll.u32 %v295, 16
      %v508 = vor.u32 %v505, %v506
      %v509 = vsel %vm306, %v501, %v508
      %v510 = vrot.slane %v505, 4
      %v512 = vshrl.u32 %v296, 16
      %v514 = vrot.slane %v512, 7
      %v515 = vshll.u32 %v296, 16
      %v517 = vor.u32 %v514, %v515
      %v518 = vrot.slane %v514, 4
      %v520 = vshrl.u32 %v297, 16
      %v522 = vrot.slane %v520, 7
      %v523 = vshll.u32 %v297, 16
      %v525 = vor.u32 %v522, %v523
      %v526 = vsel %vm306, %v518, %v525
      %v527 = vrot.slane %v522, 4
      %v529 = vshrl.u32 %v298, 16
      %v531 = vrot.slane %v529, 7
      %v532 = vshll.u32 %v298, 16
      %v534 = vor.u32 %v531, %v532
      %v535 = vrot.slane %v531, 4
      %v537 = vshrl.u32 %v299, 16
      %v539 = vrot.slane %v537, 7
      %v540 = vshll.u32 %v299, 16
      %v542 = vor.u32 %v539, %v540
      %v543 = vsel %vm306, %v535, %v542
      %v544 = vrot.slane %v539, 4
      %v546 = vshrl.u32 %v300, 16
      %v548 = vrot.slane %v546, 7
      %v549 = vshll.u32 %v300, 16
      %v551 = vor.u32 %v548, %v549
      %v552 = vrot.slane %v548, 4
      %v554 = vshrl.u32 %v301, 16
      %v556 = vrot.slane %v554, 7
      %v557 = vshll.u32 %v301, 16
      %v559 = vor.u32 %v556, %v557
      %v560 = vsel %vm306, %v552, %v559
      %v561 = vrot.slane %v556, 4
      %v563 = vshrl.u32 %v302, 16
      %v565 = vrot.slane %v563, 7
      %v566 = vshll.u32 %v302, 16
      %v568 = vor.u32 %v565, %v566
      %v569 = vrot.slane %v565, 4
      %v571 = vshrl.u32 %v303, 16
      %v573 = vrot.slane %v571, 7
      %v574 = vshll.u32 %v303, 16
      %v576 = vor.u32 %v573, %v574
      %v577 = vsel %vm306, %v569, %v576
      %v578 = vrot.slane %v573, 4
      %s627 = scalar_lea.vmem [#allocation2], 12
      %vm628 = vcmask 27648
      %vm629 = vsmask.f32 7938
      %vm630 = vmand %vm628, %vm629
      %v631 = vld [vmem:[%s627] sm:$0xf]
      %v632 = vsel %vm630, %v313, %v631
      %633 = vst [vmem:[%s627] sm:$0xf] %v632
      %634 = vst.msk [vmem:[%s627 + $0x4] sm:$0xf] %vm216, %v322
      %vm635 = vcmask 24576
      %vm636 = vmand %vm635, %vm304
      %v637 = vld [vmem:[%s627 + $0x8] sm:$0x1]
      %v638 = vsel %vm636, %v323, %v637
      %639 = vst [vmem:[%s627 + $0x8] sm:$0x1] %v638
      %v640 = vld [vmem:[%s627 + $0xc] sm:$0xf]
      %v641 = vsel %vm630, %v330, %v640
      %642 = vst [vmem:[%s627 + $0xc] sm:$0xf] %v641
      %643 = vst.msk [vmem:[%s627 + $0x10] sm:$0xf] %vm216, %v339
      %v644 = vld [vmem:[%s627 + $0x14] sm:$0x1]
      %v645 = vsel %vm636, %v340, %v644
      %646 = vst [vmem:[%s627 + $0x14] sm:$0x1] %v645
      %v647 = vld [vmem:[%s627 + $0x18] sm:$0xf]
      %v648 = vsel %vm630, %v347, %v647
      %649 = vst [vmem:[%s627 + $0x18] sm:$0xf] %v648
      %650 = vst.msk [vmem:[%s627 + $0x1c] sm:$0xf] %vm216, %v356
      %v651 = vld [vmem:[%s627 + $0x20] sm:$0x1]
      %v652 = vsel %vm636, %v357, %v651
      %653 = vst [vmem:[%s627 + $0x20] sm:$0x1] %v652
      %v654 = vld [vmem:[%s627 + $0x24] sm:$0xf]
      %v655 = vsel %vm630, %v364, %v654
      %656 = vst [vmem:[%s627 + $0x24] sm:$0xf] %v655
      %657 = vst.msk [vmem:[%s627 + $0x28] sm:$0xf] %vm216, %v373
      %v658 = vld [vmem:[%s627 + $0x2c] sm:$0x1]
      %v659 = vsel %vm636, %v374, %v658
      %660 = vst [vmem:[%s627 + $0x2c] sm:$0x1] %v659
      %v661 = vld [vmem:[%s627 + $0x30] sm:$0xf]
      %v662 = vsel %vm630, %v381, %v661
      %663 = vst [vmem:[%s627 + $0x30] sm:$0xf] %v662
      %664 = vst.msk [vmem:[%s627 + $0x34] sm:$0xf] %vm216, %v390
      %v665 = vld [vmem:[%s627 + $0x38] sm:$0x1]
      %v666 = vsel %vm636, %v391, %v665
      %667 = vst [vmem:[%s627 + $0x38] sm:$0x1] %v666
      %v668 = vld [vmem:[%s627 + $0x3c] sm:$0xf]
      %v669 = vsel %vm630, %v398, %v668
      %670 = vst [vmem:[%s627 + $0x3c] sm:$0xf] %v669
      %671 = vst.msk [vmem:[%s627 + $0x40] sm:$0xf] %vm216, %v407
      %v672 = vld [vmem:[%s627 + $0x44] sm:$0x1]
      %v673 = vsel %vm636, %v408, %v672
      %674 = vst [vmem:[%s627 + $0x44] sm:$0x1] %v673
      %v675 = vld [vmem:[%s627 + $0x48] sm:$0xf]
      %v676 = vsel %vm630, %v415, %v675
      %677 = vst [vmem:[%s627 + $0x48] sm:$0xf] %v676
      %678 = vst.msk [vmem:[%s627 + $0x4c] sm:$0xf] %vm216, %v424
      %v679 = vld [vmem:[%s627 + $0x50] sm:$0x1]
      %v680 = vsel %vm636, %v425, %v679
      %681 = vst [vmem:[%s627 + $0x50] sm:$0x1] %v680
      %v682 = vld [vmem:[%s627 + $0x54] sm:$0xf]
      %v683 = vsel %vm630, %v432, %v682
      %684 = vst [vmem:[%s627 + $0x54] sm:$0xf] %v683
      %685 = vst.msk [vmem:[%s627 + $0x58] sm:$0xf] %vm216, %v441
      %v686 = vld [vmem:[%s627 + $0x5c] sm:$0x1]
      %v687 = vsel %vm636, %v442, %v686
      %688 = vst [vmem:[%s627 + $0x5c] sm:$0x1] %v687
      %v689 = vld [vmem:[%s627 + $0x60] sm:$0xf]
      %v690 = vsel %vm630, %v449, %v689
      %691 = vst [vmem:[%s627 + $0x60] sm:$0xf] %v690
      %692 = vst.msk [vmem:[%s627 + $0x64] sm:$0xf] %vm216, %v458
      %v693 = vld [vmem:[%s627 + $0x68] sm:$0x1]
      %v694 = vsel %vm636, %v459, %v693
      %695 = vst [vmem:[%s627 + $0x68] sm:$0x1] %v694
      %v696 = vld [vmem:[%s627 + $0x6c] sm:$0xf]
      %v697 = vsel %vm630, %v466, %v696
      %698 = vst [vmem:[%s627 + $0x6c] sm:$0xf] %v697
      %699 = vst.msk [vmem:[%s627 + $0x70] sm:$0xf] %vm216, %v475
      %v700 = vld [vmem:[%s627 + $0x74] sm:$0x1]
      %v701 = vsel %vm636, %v476, %v700
      %702 = vst [vmem:[%s627 + $0x74] sm:$0x1] %v701
      %v703 = vld [vmem:[%s627 + $0x78] sm:$0xf]
      %v704 = vsel %vm630, %v483, %v703
      %705 = vst [vmem:[%s627 + $0x78] sm:$0xf] %v704
      %706 = vst.msk [vmem:[%s627 + $0x7c] sm:$0xf] %vm216, %v492
      %v707 = vld [vmem:[%s627 + $0x80] sm:$0x1]
      %v708 = vsel %vm636, %v493, %v707
      %709 = vst [vmem:[%s627 + $0x80] sm:$0x1] %v708
      %v710 = vld [vmem:[%s627 + $0x84] sm:$0xf]
      %v711 = vsel %vm630, %v500, %v710
      %712 = vst [vmem:[%s627 + $0x84] sm:$0xf] %v711
      %713 = vst.msk [vmem:[%s627 + $0x88] sm:$0xf] %vm216, %v509
      %v714 = vld [vmem:[%s627 + $0x8c] sm:$0x1]
      %v715 = vsel %vm636, %v510, %v714
      %716 = vst [vmem:[%s627 + $0x8c] sm:$0x1] %v715
      %v717 = vld [vmem:[%s627 + $0x90] sm:$0xf]
      %v718 = vsel %vm630, %v517, %v717
      %719 = vst [vmem:[%s627 + $0x90] sm:$0xf] %v718
      %720 = vst.msk [vmem:[%s627 + $0x94] sm:$0xf] %vm216, %v526
      %v721 = vld [vmem:[%s627 + $0x98] sm:$0x1]
      %v722 = vsel %vm636, %v527, %v721
      %723 = vst [vmem:[%s627 + $0x98] sm:$0x1] %v722
      %v724 = vld [vmem:[%s627 + $0x9c] sm:$0xf]
      %v725 = vsel %vm630, %v534, %v724
      %726 = vst [vmem:[%s627 + $0x9c] sm:$0xf] %v725
      %727 = vst.msk [vmem:[%s627 + $0xa0] sm:$0xf] %vm216, %v543
      %v728 = vld [vmem:[%s627 + $0xa4] sm:$0x1]
      %v729 = vsel %vm636, %v544, %v728
      %730 = vst [vmem:[%s627 + $0xa4] sm:$0x1] %v729
      %v731 = vld [vmem:[%s627 + $0xa8] sm:$0xf]
      %v732 = vsel %vm630, %v551, %v731
      %733 = vst [vmem:[%s627 + $0xa8] sm:$0xf] %v732
      %734 = vst.msk [vmem:[%s627 + $0xac] sm:$0xf] %vm216, %v560
      %v735 = vld [vmem:[%s627 + $0xb0] sm:$0x1]
      %v736 = vsel %vm636, %v561, %v735
      %737 = vst [vmem:[%s627 + $0xb0] sm:$0x1] %v736
      %v738 = vld [vmem:[%s627 + $0xb4] sm:$0xf]
      %v739 = vsel %vm630, %v568, %v738
      %740 = vst [vmem:[%s627 + $0xb4] sm:$0xf] %v739
      %741 = vst.msk [vmem:[%s627 + $0xb8] sm:$0xf] %vm216, %v577
      %v742 = vld [vmem:[%s627 + $0xbc] sm:$0x1]
      %v743 = vsel %vm636, %v578, %v742
      %744 = vst [vmem:[%s627 + $0xbc] sm:$0x1] %v743
      %v745 = vld [vmem:[#allocation2] sm:$0xf]
      %v746 = vld [vmem:[#allocation2 + $0x4] sm:$0xf]
      %v747 = vld [vmem:[#allocation2 + $0xc] sm:$0xf]
      %v748 = vld [vmem:[#allocation2 + $0x10] sm:$0xf]
      %v749 = vld [vmem:[#allocation2 + $0x18] sm:$0xf]
      %v750 = vld [vmem:[#allocation2 + $0x1c] sm:$0xf]
      %v751 = vld [vmem:[#allocation2 + $0x24] sm:$0xf]
      %v752 = vld [vmem:[#allocation2 + $0x28] sm:$0xf]
      %v753 = vld [vmem:[#allocation2 + $0x30] sm:$0xf]
      %v754 = vld [vmem:[#allocation2 + $0x34] sm:$0xf]
      %v755 = vld [vmem:[#allocation2 + $0x3c] sm:$0xf]
      %v756 = vld [vmem:[#allocation2 + $0x40] sm:$0xf]
      %v757 = vld [vmem:[#allocation2 + $0x48] sm:$0xf]
      %v758 = vld [vmem:[#allocation2 + $0x4c] sm:$0xf]
      %v759 = vld [vmem:[#allocation2 + $0x54] sm:$0xf]
      %v760 = vld [vmem:[#allocation2 + $0x58] sm:$0xf]
      %v761 = vld [vmem:[#allocation2 + $0x60] sm:$0xf]
      %v762 = vld [vmem:[#allocation2 + $0x64] sm:$0xf]
      %v763 = vld [vmem:[#allocation2 + $0x6c] sm:$0xf]
      %v764 = vld [vmem:[#allocation2 + $0x70] sm:$0xf]
      %v765 = vld [vmem:[#allocation2 + $0x78] sm:$0xf]
      %v766 = vld [vmem:[#allocation2 + $0x7c] sm:$0xf]
      %v767 = vld [vmem:[#allocation2 + $0x84] sm:$0xf]
      %v768 = vld [vmem:[#allocation2 + $0x88] sm:$0xf]
      %v769 = vld [vmem:[#allocation2 + $0x90] sm:$0xf]
      %v770 = vld [vmem:[#allocation2 + $0x94] sm:$0xf]
      %v771 = vld [vmem:[#allocation2 + $0x9c] sm:$0xf]
      %v772 = vld [vmem:[#allocation2 + $0xa0] sm:$0xf]
      %v773 = vld [vmem:[#allocation2 + $0xa8] sm:$0xf]
      %v774 = vld [vmem:[#allocation2 + $0xac] sm:$0xf]
      %v775 = vld [vmem:[#allocation2 + $0xb4] sm:$0xf]
      %v776 = vld [vmem:[#allocation2 + $0xb8] sm:$0xf]
      %v777 = vld [vmem:[%s1] sm:$0x3]
      %v778 = vld [vmem:[#allocation2 + $0x8] sm:$0x1]
      %v779 = vld [vmem:[#allocation2 + $0x14] sm:$0x1]
      %v780 = vld [vmem:[#allocation2 + $0x20] sm:$0x1]
      %v781 = vld [vmem:[#allocation2 + $0x2c] sm:$0x1]
      %v782 = vld [vmem:[#allocation2 + $0x38] sm:$0x1]
      %v783 = vld [vmem:[#allocation2 + $0x44] sm:$0x1]
      %v784 = vld [vmem:[#allocation2 + $0x50] sm:$0x1]
      %v785 = vld [vmem:[#allocation2 + $0x5c] sm:$0x1]
      %v786 = vld [vmem:[#allocation2 + $0x68] sm:$0x1]
      %v787 = vld [vmem:[#allocation2 + $0x74] sm:$0x1]
      %v788 = vld [vmem:[#allocation2 + $0x80] sm:$0x1]
      %v789 = vld [vmem:[#allocation2 + $0x8c] sm:$0x1]
      %v790 = vld [vmem:[#allocation2 + $0x98] sm:$0x1]
      %v791 = vld [vmem:[#allocation2 + $0xa4] sm:$0x1]
      %v792 = vld [vmem:[#allocation2 + $0xb0] sm:$0x1]
      %v793 = vld [vmem:[#allocation2 + $0xbc] sm:$0x1]
      %vm794 = vsmask.f32 3328
      %vm795 = vsmask.f32 7440
      %vm796 = vmor %vm794, %vm795
      %v798 = vshrl.u32 %v745, 16
      %v800 = vrot.slane %v798, 4
      %v801 = vshll.u32 %v745, 16
      %v803 = vrot.slane %v801, 5
      %v804 = vor.u32 %v800, %v803
      %v805 = vrot.slane %v804, 4
      %v807 = vshll.u32 %v746, 16
      %v809 = vrot.slane %v807, 5
      %v810 = vsel %vm796, %v805, %v809
      %v811 = vshrl.u32 %v746, 16
      %v813 = vrot.slane %v811, 4
      %v814 = vor.u32 %v813, %v809
      %v815 = vrot.slane %v814, 4
      %v817 = vshll.u32 %v778, 16
      %v819 = vrot.slane %v817, 5
      %v820 = vsel %vm796, %v815, %v819
      %v822 = vshrl.u32 %v747, 16
      %v824 = vrot.slane %v822, 4
      %v825 = vshll.u32 %v747, 16
      %v827 = vrot.slane %v825, 5
      %v828 = vor.u32 %v824, %v827
      %v829 = vrot.slane %v828, 4
      %v831 = vshll.u32 %v748, 16
      %v833 = vrot.slane %v831, 5
      %v834 = vsel %vm796, %v829, %v833
      %v835 = vshrl.u32 %v748, 16
      %v837 = vrot.slane %v835, 4
      %v838 = vor.u32 %v837, %v833
      %v839 = vrot.slane %v838, 4
      %v841 = vshll.u32 %v779, 16
      %v843 = vrot.slane %v841, 5
      %v844 = vsel %vm796, %v839, %v843
      %v846 = vshrl.u32 %v749, 16
      %v848 = vrot.slane %v846, 4
      %v849 = vshll.u32 %v749, 16
      %v851 = vrot.slane %v849, 5
      %v852 = vor.u32 %v848, %v851
      %v853 = vrot.slane %v852, 4
      %v855 = vshll.u32 %v750, 16
      %v857 = vrot.slane %v855, 5
      %v858 = vsel %vm796, %v853, %v857
      %v859 = vshrl.u32 %v750, 16
      %v861 = vrot.slane %v859, 4
      %v862 = vor.u32 %v861, %v857
      %v863 = vrot.slane %v862, 4
      %v865 = vshll.u32 %v780, 16
      %v867 = vrot.slane %v865, 5
      %v868 = vsel %vm796, %v863, %v867
      %v870 = vshrl.u32 %v751, 16
      %v872 = vrot.slane %v870, 4
      %v873 = vshll.u32 %v751, 16
      %v875 = vrot.slane %v873, 5
      %v876 = vor.u32 %v872, %v875
      %v877 = vrot.slane %v876, 4
      %v879 = vshll.u32 %v752, 16
      %v881 = vrot.slane %v879, 5
      %v882 = vsel %vm796, %v877, %v881
      %v883 = vshrl.u32 %v752, 16
      %v885 = vrot.slane %v883, 4
      %v886 = vor.u32 %v885, %v881
      %v887 = vrot.slane %v886, 4
      %v889 = vshll.u32 %v781, 16
      %v891 = vrot.slane %v889, 5
      %v892 = vsel %vm796, %v887, %v891
      %v894 = vshrl.u32 %v753, 16
      %v896 = vrot.slane %v894, 4
      %v897 = vshll.u32 %v753, 16
      %v899 = vrot.slane %v897, 5
      %v900 = vor.u32 %v896, %v899
      %v901 = vrot.slane %v900, 4
      %v903 = vshll.u32 %v754, 16
      %v905 = vrot.slane %v903, 5
      %v906 = vsel %vm796, %v901, %v905
      %v907 = vshrl.u32 %v754, 16
      %v909 = vrot.slane %v907, 4
      %v910 = vor.u32 %v909, %v905
      %v911 = vrot.slane %v910, 4
      %v913 = vshll.u32 %v782, 16
      %v915 = vrot.slane %v913, 5
      %v916 = vsel %vm796, %v911, %v915
      %v918 = vshrl.u32 %v755, 16
      %v920 = vrot.slane %v918, 4
      %v921 = vshll.u32 %v755, 16
      %v923 = vrot.slane %v921, 5
      %v924 = vor.u32 %v920, %v923
      %v925 = vrot.slane %v924, 4
      %v927 = vshll.u32 %v756, 16
      %v929 = vrot.slane %v927, 5
      %v930 = vsel %vm796, %v925, %v929
      %v931 = vshrl.u32 %v756, 16
      %v933 = vrot.slane %v931, 4
      %v934 = vor.u32 %v933, %v929
      %v935 = vrot.slane %v934, 4
      %v937 = vshll.u32 %v783, 16
      %v939 = vrot.slane %v937, 5
      %v940 = vsel %vm796, %v935, %v939
      %v942 = vshrl.u32 %v757, 16
      %v944 = vrot.slane %v942, 4
      %v945 = vshll.u32 %v757, 16
      %v947 = vrot.slane %v945, 5
      %v948 = vor.u32 %v944, %v947
      %v949 = vrot.slane %v948, 4
      %v951 = vshll.u32 %v758, 16
      %v953 = vrot.slane %v951, 5
      %v954 = vsel %vm796, %v949, %v953
      %v955 = vshrl.u32 %v758, 16
      %v957 = vrot.slane %v955, 4
      %v958 = vor.u32 %v957, %v953
      %v959 = vrot.slane %v958, 4
      %v961 = vshll.u32 %v784, 16
      %v963 = vrot.slane %v961, 5
      %v964 = vsel %vm796, %v959, %v963
      %v966 = vshrl.u32 %v759, 16
      %v968 = vrot.slane %v966, 4
      %v969 = vshll.u32 %v759, 16
      %v971 = vrot.slane %v969, 5
      %v972 = vor.u32 %v968, %v971
      %v973 = vrot.slane %v972, 4
      %v975 = vshll.u32 %v760, 16
      %v977 = vrot.slane %v975, 5
      %v978 = vsel %vm796, %v973, %v977
      %v979 = vshrl.u32 %v760, 16
      %v981 = vrot.slane %v979, 4
      %v982 = vor.u32 %v981, %v977
      %v983 = vrot.slane %v982, 4
      %v985 = vshll.u32 %v785, 16
      %v987 = vrot.slane %v985, 5
      %v988 = vsel %vm796, %v983, %v987
      %v990 = vshrl.u32 %v761, 16
      %v992 = vrot.slane %v990, 4
      %v993 = vshll.u32 %v761, 16
      %v995 = vrot.slane %v993, 5
      %v996 = vor.u32 %v992, %v995
      %v997 = vrot.slane %v996, 4
      %v999 = vshll.u32 %v762, 16
      %v1001 = vrot.slane %v999, 5
      %v1002 = vsel %vm796, %v997, %v1001
      %v1003 = vshrl.u32 %v762, 16
      %v1005 = vrot.slane %v1003, 4
      %v1006 = vor.u32 %v1005, %v1001
      %v1007 = vrot.slane %v1006, 4
      %v1009 = vshll.u32 %v786, 16
      %v1011 = vrot.slane %v1009, 5
      %v1012 = vsel %vm796, %v1007, %v1011
      %v1014 = vshrl.u32 %v763, 16
      %v1016 = vrot.slane %v1014, 4
      %v1017 = vshll.u32 %v763, 16
      %v1019 = vrot.slane %v1017, 5
      %v1020 = vor.u32 %v1016, %v1019
      %v1021 = vrot.slane %v1020, 4
      %v1023 = vshll.u32 %v764, 16
      %v1025 = vrot.slane %v1023, 5
      %v1026 = vsel %vm796, %v1021, %v1025
      %v1027 = vshrl.u32 %v764, 16
      %v1029 = vrot.slane %v1027, 4
      %v1030 = vor.u32 %v1029, %v1025
      %v1031 = vrot.slane %v1030, 4
      %v1033 = vshll.u32 %v787, 16
      %v1035 = vrot.slane %v1033, 5
      %v1036 = vsel %vm796, %v1031, %v1035
      %v1038 = vshrl.u32 %v765, 16
      %v1040 = vrot.slane %v1038, 4
      %v1041 = vshll.u32 %v765, 16
      %v1043 = vrot.slane %v1041, 5
      %v1044 = vor.u32 %v1040, %v1043
      %v1045 = vrot.slane %v1044, 4
      %v1047 = vshll.u32 %v766, 16
      %v1049 = vrot.slane %v1047, 5
      %v1050 = vsel %vm796, %v1045, %v1049
      %v1051 = vshrl.u32 %v766, 16
      %v1053 = vrot.slane %v1051, 4
      %v1054 = vor.u32 %v1053, %v1049
      %v1055 = vrot.slane %v1054, 4
      %v1057 = vshll.u32 %v788, 16
      %v1059 = vrot.slane %v1057, 5
      %v1060 = vsel %vm796, %v1055, %v1059
      %v1062 = vshrl.u32 %v767, 16
      %v1064 = vrot.slane %v1062, 4
      %v1065 = vshll.u32 %v767, 16
      %v1067 = vrot.slane %v1065, 5
      %v1068 = vor.u32 %v1064, %v1067
      %v1069 = vrot.slane %v1068, 4
      %v1071 = vshll.u32 %v768, 16
      %v1073 = vrot.slane %v1071, 5
      %v1074 = vsel %vm796, %v1069, %v1073
      %v1075 = vshrl.u32 %v768, 16
      %v1077 = vrot.slane %v1075, 4
      %v1078 = vor.u32 %v1077, %v1073
      %v1079 = vrot.slane %v1078, 4
      %v1081 = vshll.u32 %v789, 16
      %v1083 = vrot.slane %v1081, 5
      %v1084 = vsel %vm796, %v1079, %v1083
      %v1086 = vshrl.u32 %v769, 16
      %v1088 = vrot.slane %v1086, 4
      %v1089 = vshll.u32 %v769, 16
      %v1091 = vrot.slane %v1089, 5
      %v1092 = vor.u32 %v1088, %v1091
      %v1093 = vrot.slane %v1092, 4
      %v1095 = vshll.u32 %v770, 16
      %v1097 = vrot.slane %v1095, 5
      %v1098 = vsel %vm796, %v1093, %v1097
      %v1099 = vshrl.u32 %v770, 16
      %v1101 = vrot.slane %v1099, 4
      %v1102 = vor.u32 %v1101, %v1097
      %v1103 = vrot.slane %v1102, 4
      %v1105 = vshll.u32 %v790, 16
      %v1107 = vrot.slane %v1105, 5
      %v1108 = vsel %vm796, %v1103, %v1107
      %v1110 = vshrl.u32 %v771, 16
      %v1112 = vrot.slane %v1110, 4
      %v1113 = vshll.u32 %v771, 16
      %v1115 = vrot.slane %v1113, 5
      %v1116 = vor.u32 %v1112, %v1115
      %v1117 = vrot.slane %v1116, 4
      %v1119 = vshll.u32 %v772, 16
      %v1121 = vrot.slane %v1119, 5
      %v1122 = vsel %vm796, %v1117, %v1121
      %v1123 = vshrl.u32 %v772, 16
      %v1125 = vrot.slane %v1123, 4
      %v1126 = vor.u32 %v1125, %v1121
      %v1127 = vrot.slane %v1126, 4
      %v1129 = vshll.u32 %v791, 16
      %v1131 = vrot.slane %v1129, 5
      %v1132 = vsel %vm796, %v1127, %v1131
      %v1134 = vshrl.u32 %v773, 16
      %v1136 = vrot.slane %v1134, 4
      %v1137 = vshll.u32 %v773, 16
      %v1139 = vrot.slane %v1137, 5
      %v1140 = vor.u32 %v1136, %v1139
      %v1141 = vrot.slane %v1140, 4
      %v1143 = vshll.u32 %v774, 16
      %v1145 = vrot.slane %v1143, 5
      %v1146 = vsel %vm796, %v1141, %v1145
      %v1147 = vshrl.u32 %v774, 16
      %v1149 = vrot.slane %v1147, 4
      %v1150 = vor.u32 %v1149, %v1145
      %v1151 = vrot.slane %v1150, 4
      %v1153 = vshll.u32 %v792, 16
      %v1155 = vrot.slane %v1153, 5
      %v1156 = vsel %vm796, %v1151, %v1155
      %v1158 = vshrl.u32 %v775, 16
      %v1160 = vrot.slane %v1158, 4
      %v1161 = vshll.u32 %v775, 16
      %v1163 = vrot.slane %v1161, 5
      %v1164 = vor.u32 %v1160, %v1163
      %v1165 = vrot.slane %v1164, 4
      %v1167 = vshll.u32 %v776, 16
      %v1169 = vrot.slane %v1167, 5
      %v1170 = vsel %vm796, %v1165, %v1169
      %v1171 = vshrl.u32 %v776, 16
      %v1173 = vrot.slane %v1171, 4
      %v1174 = vor.u32 %v1173, %v1169
      %v1175 = vrot.slane %v1174, 4
      %v1177 = vshll.u32 %v793, 16
      %v1179 = vrot.slane %v1177, 5
      %v1180 = vsel %vm796, %v1175, %v1179
      %s1181 = scalar_lea.vmem %s1, 2
      %v1182 = vld [vmem:[%s1181] sm:$0x3]
      %v1183 = vunpack.c.l.b16 %v810
      %v1184 = vunpack.c.l.b16 %v820
      %v1185 = vunpack.c.l.b16 %v834
      %v1186 = vunpack.c.l.b16 %v844
      %v1187 = vunpack.c.l.b16 %v858
      %v1188 = vunpack.c.l.b16 %v868
      %v1189 = vunpack.c.l.b16 %v882
      %v1190 = vunpack.c.l.b16 %v892
      %v1191 = vunpack.c.l.b16 %v906
      %v1192 = vunpack.c.l.b16 %v916
      %v1193 = vunpack.c.l.b16 %v930
      %v1194 = vunpack.c.l.b16 %v940
      %v1195 = vunpack.c.l.b16 %v954
      %v1196 = vunpack.c.l.b16 %v964
      %v1197 = vunpack.c.l.b16 %v978
      %v1198 = vunpack.c.l.b16 %v988
      %v1199 = vunpack.c.l.b16 %v1002
      %v1200 = vunpack.c.l.b16 %v1012
      %v1201 = vunpack.c.l.b16 %v1026
      %v1202 = vunpack.c.l.b16 %v1036
      %v1203 = vunpack.c.l.b16 %v1050
      %v1204 = vunpack.c.l.b16 %v1060
      %v1205 = vunpack.c.l.b16 %v1074
      %v1206 = vunpack.c.l.b16 %v1084
      %v1207 = vunpack.c.l.b16 %v1098
      %v1208 = vunpack.c.l.b16 %v1108
      %v1209 = vunpack.c.l.b16 %v1122
      %v1210 = vunpack.c.l.b16 %v1132
      %v1211 = vunpack.c.l.b16 %v1146
      %v1212 = vunpack.c.l.b16 %v1156
      %v1213 = vunpack.c.l.b16 %v1170
      %v1214 = vunpack.c.l.b16 %v1180
      %v1215 = vpack.c.b16 %v1184, %v1183
      %v1216 = vpack.c.b16 %v1186, %v1185
      %v1217 = vpack.c.b16 %v1188, %v1187
      %v1218 = vpack.c.b16 %v1190, %v1189
      %v1219 = vpack.c.b16 %v1192, %v1191
      %v1220 = vpack.c.b16 %v1194, %v1193
      %v1221 = vpack.c.b16 %v1196, %v1195
      %v1222 = vpack.c.b16 %v1198, %v1197
      %v1223 = vpack.c.b16 %v1200, %v1199
      %v1224 = vpack.c.b16 %v1202, %v1201
      %v1225 = vpack.c.b16 %v1204, %v1203
      %v1226 = vpack.c.b16 %v1206, %v1205
      %v1227 = vpack.c.b16 %v1208, %v1207
      %v1228 = vpack.c.b16 %v1210, %v1209
      %v1229 = vpack.c.b16 %v1212, %v1211
      %v1230 = vpack.c.b16 %v1214, %v1213
      %vm1231 = vcmask 31744
      %v1233 = vsel %vm1231, %v1215, 0
      %v1236 = vsel %vm1231, %v1216, 0
      %v1239 = vsel %vm1231, %v1217, 0
      %v1242 = vsel %vm1231, %v1218, 0
      %v1245 = vsel %vm1231, %v1219, 0
      %v1248 = vsel %vm1231, %v1220, 0
      %v1251 = vsel %vm1231, %v1221, 0
      %v1254 = vsel %vm1231, %v1222, 0
      %v1257 = vsel %vm1231, %v1223, 0
      %v1260 = vsel %vm1231, %v1224, 0
      %v1263 = vsel %vm1231, %v1225, 0
      %v1266 = vsel %vm1231, %v1226, 0
      %v1269 = vsel %vm1231, %v1227, 0
      %v1272 = vsel %vm1231, %v1228, 0
      %v1275 = vsel %vm1231, %v1229, 0
      %v1278 = vsel %vm1231, %v1230, 0
      %vm1280 = vcmask 1041408
      %v1282 = vsel %vm1280, %v1182, 0
      %1284 = vmatpush.bf16.msra.mxu0 0
      %1285 = vmatpush.bf16.msra.mxu0 0
      %1286 = vmatpush.bf16.msra.mxu0 0
      %1287 = vmatpush.bf16.msra.mxu0 0
      %1288 = vmatpush.bf16.msra.mxu0 0
      %1289 = vmatpush.bf16.msra.mxu0 0
      %1290 = vmatpush.bf16.msra.mxu0 0
      %1291 = vmatpush.bf16.msra.mxu0 %v1282
      %1292 = vmatmul.bf16.gmra.mxu0 %v1233
      %v1293 = vpop.f32.mrf.mxu0
      %v1294 = vadd.f32 0.0, %v1293
      %v1295 = vpop.f32.mrf.mxu0
      %v1296 = vadd.f32 0.0, %v1295
      %1297 = vmatmul.bf16.gmra.mxu0 %v1236
      %v1298 = vpop.f32.mrf.mxu0
      %v1299 = vadd.f32 0.0, %v1298
      %v1300 = vpop.f32.mrf.mxu0
      %v1301 = vadd.f32 0.0, %v1300
      %1302 = vmatmul.bf16.gmra.mxu0 %v1239
      %v1303 = vpop.f32.mrf.mxu0
      %v1304 = vadd.f32 0.0, %v1303
      %v1305 = vpop.f32.mrf.mxu0
      %v1306 = vadd.f32 0.0, %v1305
      %1307 = vmatmul.bf16.gmra.mxu0 %v1242
      %v1308 = vpop.f32.mrf.mxu0
      %v1309 = vadd.f32 0.0, %v1308
      %v1310 = vpop.f32.mrf.mxu0
      %v1311 = vadd.f32 0.0, %v1310
      %1312 = vmatmul.bf16.gmra.mxu0 %v1245
      %v1313 = vpop.f32.mrf.mxu0
      %v1314 = vadd.f32 0.0, %v1313
      %v1315 = vpop.f32.mrf.mxu0
      %v1316 = vadd.f32 0.0, %v1315
      %1317 = vmatmul.bf16.gmra.mxu0 %v1248
      %v1318 = vpop.f32.mrf.mxu0
      %v1319 = vadd.f32 0.0, %v1318
      %v1320 = vpop.f32.mrf.mxu0
      %v1321 = vadd.f32 0.0, %v1320
      %1322 = vmatmul.bf16.gmra.mxu0 %v1251
      %v1323 = vpop.f32.mrf.mxu0
      %v1324 = vadd.f32 0.0, %v1323
      %v1325 = vpop.f32.mrf.mxu0
      %v1326 = vadd.f32 0.0, %v1325
      %1327 = vmatmul.bf16.gmra.mxu0 %v1254
      %v1328 = vpop.f32.mrf.mxu0
      %v1329 = vadd.f32 0.0, %v1328
      %v1330 = vpop.f32.mrf.mxu0
      %v1331 = vadd.f32 0.0, %v1330
      %1332 = vmatmul.bf16.gmra.mxu0 %v1257
      %v1333 = vpop.f32.mrf.mxu0
      %v1334 = vadd.f32 0.0, %v1333
      %v1335 = vpop.f32.mrf.mxu0
      %v1336 = vadd.f32 0.0, %v1335
      %1337 = vmatmul.bf16.gmra.mxu0 %v1260
      %v1338 = vpop.f32.mrf.mxu0
      %v1339 = vadd.f32 0.0, %v1338
      %v1340 = vpop.f32.mrf.mxu0
      %v1341 = vadd.f32 0.0, %v1340
      %1342 = vmatmul.bf16.gmra.mxu0 %v1263
      %v1343 = vpop.f32.mrf.mxu0
      %v1344 = vadd.f32 0.0, %v1343
      %v1345 = vpop.f32.mrf.mxu0
      %v1346 = vadd.f32 0.0, %v1345
      %1347 = vmatmul.bf16.gmra.mxu0 %v1266
      %v1348 = vpop.f32.mrf.mxu0
      %v1349 = vadd.f32 0.0, %v1348
      %v1350 = vpop.f32.mrf.mxu0
      %v1351 = vadd.f32 0.0, %v1350
      %1352 = vmatmul.bf16.gmra.mxu0 %v1269
      %v1353 = vpop.f32.mrf.mxu0
      %v1354 = vadd.f32 0.0, %v1353
      %v1355 = vpop.f32.mrf.mxu0
      %v1356 = vadd.f32 0.0, %v1355
      %1357 = vmatmul.bf16.gmra.mxu0 %v1272
      %v1358 = vpop.f32.mrf.mxu0
      %v1359 = vadd.f32 0.0, %v1358
      %v1360 = vpop.f32.mrf.mxu0
      %v1361 = vadd.f32 0.0, %v1360
      %1362 = vmatmul.bf16.gmra.mxu0 %v1275
      %v1363 = vpop.f32.mrf.mxu0
      %v1364 = vadd.f32 0.0, %v1363
      %v1365 = vpop.f32.mrf.mxu0
      %v1366 = vadd.f32 0.0, %v1365
      %1367 = vmatmul.bf16.gmra.mxu0 %v1278
      %v1368 = vpop.f32.mrf.mxu0
      %v1369 = vadd.f32 0.0, %v1368
      %v1370 = vpop.f32.mrf.mxu0
      %v1371 = vadd.f32 0.0, %v1370
      %1372 = vdwg.mxu0
      %v1405 = vunpack.c.l.b16 %v745
      %v1406 = vunpack.c.l.b16 %v746
      %v1407 = vunpack.c.l.b16 %v747
      %v1408 = vunpack.c.l.b16 %v748
      %v1409 = vunpack.c.l.b16 %v749
      %v1410 = vunpack.c.l.b16 %v750
      %v1411 = vunpack.c.l.b16 %v751
      %v1412 = vunpack.c.l.b16 %v752
      %v1413 = vunpack.c.l.b16 %v753
      %v1414 = vunpack.c.l.b16 %v754
      %v1415 = vunpack.c.l.b16 %v755
      %v1416 = vunpack.c.l.b16 %v756
      %v1417 = vunpack.c.l.b16 %v757
      %v1418 = vunpack.c.l.b16 %v758
      %v1419 = vunpack.c.l.b16 %v759
      %v1420 = vunpack.c.l.b16 %v760
      %v1421 = vunpack.c.l.b16 %v761
      %v1422 = vunpack.c.l.b16 %v762
      %v1423 = vunpack.c.l.b16 %v763
      %v1424 = vunpack.c.l.b16 %v764
      %v1425 = vunpack.c.l.b16 %v765
      %v1426 = vunpack.c.l.b16 %v766
      %v1427 = vunpack.c.l.b16 %v767
      %v1428 = vunpack.c.l.b16 %v768
      %v1429 = vunpack.c.l.b16 %v769
      %v1430 = vunpack.c.l.b16 %v770
      %v1431 = vunpack.c.l.b16 %v771
      %v1432 = vunpack.c.l.b16 %v772
      %v1433 = vunpack.c.l.b16 %v773
      %v1434 = vunpack.c.l.b16 %v774
      %v1435 = vunpack.c.l.b16 %v775
      %v1436 = vunpack.c.l.b16 %v776
      %v1437 = vpack.c.b16 %v1406, %v1405
      %v1438 = vpack.c.b16 %v1408, %v1407
      %v1439 = vpack.c.b16 %v1410, %v1409
      %v1440 = vpack.c.b16 %v1412, %v1411
      %v1441 = vpack.c.b16 %v1414, %v1413
      %v1442 = vpack.c.b16 %v1416, %v1415
      %v1443 = vpack.c.b16 %v1418, %v1417
      %v1444 = vpack.c.b16 %v1420, %v1419
      %v1445 = vpack.c.b16 %v1422, %v1421
      %v1446 = vpack.c.b16 %v1424, %v1423
      %v1447 = vpack.c.b16 %v1426, %v1425
      %v1448 = vpack.c.b16 %v1428, %v1427
      %v1449 = vpack.c.b16 %v1430, %v1429
      %v1450 = vpack.c.b16 %v1432, %v1431
      %v1451 = vpack.c.b16 %v1434, %v1433
      %v1452 = vpack.c.b16 %v1436, %v1435
      %v1454 = vsel %vm1231, %v1437, 0
      %v1457 = vsel %vm1231, %v1438, 0
      %v1460 = vsel %vm1231, %v1439, 0
      %v1463 = vsel %vm1231, %v1440, 0
      %v1466 = vsel %vm1231, %v1441, 0
      %v1469 = vsel %vm1231, %v1442, 0
      %v1472 = vsel %vm1231, %v1443, 0
      %v1475 = vsel %vm1231, %v1444, 0
      %v1478 = vsel %vm1231, %v1445, 0
      %v1481 = vsel %vm1231, %v1446, 0
      %v1484 = vsel %vm1231, %v1447, 0
      %v1487 = vsel %vm1231, %v1448, 0
      %v1490 = vsel %vm1231, %v1449, 0
      %v1493 = vsel %vm1231, %v1450, 0
      %v1496 = vsel %vm1231, %v1451, 0
      %v1499 = vsel %vm1231, %v1452, 0
      %v1502 = vsel %vm1280, %v777, 0
      %1504 = vmatpush.bf16.msra.mxu0 0
      %1505 = vmatpush.bf16.msra.mxu0 0
      %1506 = vmatpush.bf16.msra.mxu0 0
      %1507 = vmatpush.bf16.msra.mxu0 0
      %1508 = vmatpush.bf16.msra.mxu0 0
      %1509 = vmatpush.bf16.msra.mxu0 0
      %1510 = vmatpush.bf16.msra.mxu0 0
      %1511 = vmatpush.bf16.msra.mxu0 %v1502
      %1512 = vmatmul.bf16.gmra.mxu0 %v1454
      %v1513 = vpop.f32.mrf.mxu0
      %v1514 = vadd.f32 %v1294, %v1513
      %v1515 = vpop.f32.mrf.mxu0
      %v1516 = vadd.f32 %v1296, %v1515
      %1517 = vmatmul.bf16.gmra.mxu0 %v1457
      %v1518 = vpop.f32.mrf.mxu0
      %v1519 = vadd.f32 %v1299, %v1518
      %v1520 = vpop.f32.mrf.mxu0
      %v1521 = vadd.f32 %v1301, %v1520
      %1522 = vmatmul.bf16.gmra.mxu0 %v1460
      %v1523 = vpop.f32.mrf.mxu0
      %v1524 = vadd.f32 %v1304, %v1523
      %v1525 = vpop.f32.mrf.mxu0
      %v1526 = vadd.f32 %v1306, %v1525
      %1527 = vmatmul.bf16.gmra.mxu0 %v1463
      %v1528 = vpop.f32.mrf.mxu0
      %v1529 = vadd.f32 %v1309, %v1528
      %v1530 = vpop.f32.mrf.mxu0
      %v1531 = vadd.f32 %v1311, %v1530
      %1532 = vmatmul.bf16.gmra.mxu0 %v1466
      %v1533 = vpop.f32.mrf.mxu0
      %v1534 = vadd.f32 %v1314, %v1533
      %v1535 = vpop.f32.mrf.mxu0
      %v1536 = vadd.f32 %v1316, %v1535
      %1537 = vmatmul.bf16.gmra.mxu0 %v1469
      %v1538 = vpop.f32.mrf.mxu0
      %v1539 = vadd.f32 %v1319, %v1538
      %v1540 = vpop.f32.mrf.mxu0
      %v1541 = vadd.f32 %v1321, %v1540
      %1542 = vmatmul.bf16.gmra.mxu0 %v1472
      %v1543 = vpop.f32.mrf.mxu0
      %v1544 = vadd.f32 %v1324, %v1543
      %v1545 = vpop.f32.mrf.mxu0
      %v1546 = vadd.f32 %v1326, %v1545
      %1547 = vmatmul.bf16.gmra.mxu0 %v1475
      %v1548 = vpop.f32.mrf.mxu0
      %v1549 = vadd.f32 %v1329, %v1548
      %v1550 = vpop.f32.mrf.mxu0
      %v1551 = vadd.f32 %v1331, %v1550
      %1552 = vmatmul.bf16.gmra.mxu0 %v1478
      %v1553 = vpop.f32.mrf.mxu0
      %v1554 = vadd.f32 %v1334, %v1553
      %v1555 = vpop.f32.mrf.mxu0
      %v1556 = vadd.f32 %v1336, %v1555
      %1557 = vmatmul.bf16.gmra.mxu0 %v1481
      %v1558 = vpop.f32.mrf.mxu0
      %v1559 = vadd.f32 %v1339, %v1558
      %v1560 = vpop.f32.mrf.mxu0
      %v1561 = vadd.f32 %v1341, %v1560
      %1562 = vmatmul.bf16.gmra.mxu0 %v1484
      %v1563 = vpop.f32.mrf.mxu0
      %v1564 = vadd.f32 %v1344, %v1563
      %v1565 = vpop.f32.mrf.mxu0
      %v1566 = vadd.f32 %v1346, %v1565
      %1567 = vmatmul.bf16.gmra.mxu0 %v1487
      %v1568 = vpop.f32.mrf.mxu0
      %v1569 = vadd.f32 %v1349, %v1568
      %v1570 = vpop.f32.mrf.mxu0
      %v1571 = vadd.f32 %v1351, %v1570
      %1572 = vmatmul.bf16.gmra.mxu0 %v1490
      %v1573 = vpop.f32.mrf.mxu0
      %v1574 = vadd.f32 %v1354, %v1573
      %v1575 = vpop.f32.mrf.mxu0
      %v1576 = vadd.f32 %v1356, %v1575
      %1577 = vmatmul.bf16.gmra.mxu0 %v1493
      %v1578 = vpop.f32.mrf.mxu0
      %v1579 = vadd.f32 %v1359, %v1578
      %v1580 = vpop.f32.mrf.mxu0
      %v1581 = vadd.f32 %v1361, %v1580
      %1582 = vmatmul.bf16.gmra.mxu0 %v1496
      %v1583 = vpop.f32.mrf.mxu0
      %v1584 = vadd.f32 %v1364, %v1583
      %v1585 = vpop.f32.mrf.mxu0
      %v1586 = vadd.f32 %v1366, %v1585
      %1587 = vmatmul.bf16.gmra.mxu0 %v1499
      %v1588 = vpop.f32.mrf.mxu0
      %v1589 = vadd.f32 %v1369, %v1588
      %v1590 = vpop.f32.mrf.mxu0
      %v1591 = vadd.f32 %v1371, %v1590
      %1592 = vdwg.mxu0
      %v1593 = vld [vmem:[#allocation2] sm:$0xe]
      %v1594 = vld [vmem:[#allocation2 + $0xc] sm:$0xe]
      %v1595 = vld [vmem:[#allocation2 + $0x18] sm:$0xe]
      %v1596 = vld [vmem:[#allocation2 + $0x24] sm:$0xe]
      %v1597 = vld [vmem:[#allocation2 + $0x30] sm:$0xe]
      %v1598 = vld [vmem:[#allocation2 + $0x3c] sm:$0xe]
      %v1599 = vld [vmem:[#allocation2 + $0x48] sm:$0xe]
      %v1600 = vld [vmem:[#allocation2 + $0x54] sm:$0xe]
      %v1601 = vld [vmem:[#allocation2 + $0x60] sm:$0xe]
      %v1602 = vld [vmem:[#allocation2 + $0x6c] sm:$0xe]
      %v1603 = vld [vmem:[#allocation2 + $0x78] sm:$0xe]
      %v1604 = vld [vmem:[#allocation2 + $0x84] sm:$0xe]
      %v1605 = vld [vmem:[#allocation2 + $0x90] sm:$0xe]
      %v1606 = vld [vmem:[#allocation2 + $0x9c] sm:$0xe]
      %v1607 = vld [vmem:[#allocation2 + $0xa8] sm:$0xe]
      %v1608 = vld [vmem:[#allocation2 + $0xb4] sm:$0xe]
      %vm1641 = vcmask 1042432
      %vm1642 = vcmask 1046532
      %vm1643 = vmor %vm1641, %vm1642
      %v1644 = vrot.slane %v1593, 5
      %v1645 = vrot.slane %v1644, 4
      %v1646 = vrot.slane %v746, 5
      %v1647 = vsel %vm1643, %v1645, %v1646
      %v1648 = vrot.slane %v1646, 4
      %v1649 = vrot.slane %v778, 5
      %v1650 = vsel %vm1643, %v1648, %v1649
      %v1651 = vrot.slane %v1594, 5
      %v1652 = vrot.slane %v1651, 4
      %v1653 = vrot.slane %v748, 5
      %v1654 = vsel %vm1643, %v1652, %v1653
      %v1655 = vrot.slane %v1653, 4
      %v1656 = vrot.slane %v779, 5
      %v1657 = vsel %vm1643, %v1655, %v1656
      %v1658 = vrot.slane %v1595, 5
      %v1659 = vrot.slane %v1658, 4
      %v1660 = vrot.slane %v750, 5
      %v1661 = vsel %vm1643, %v1659, %v1660
      %v1662 = vrot.slane %v1660, 4
      %v1663 = vrot.slane %v780, 5
      %v1664 = vsel %vm1643, %v1662, %v1663
      %v1665 = vrot.slane %v1596, 5
      %v1666 = vrot.slane %v1665, 4
      %v1667 = vrot.slane %v752, 5
      %v1668 = vsel %vm1643, %v1666, %v1667
      %v1669 = vrot.slane %v1667, 4
      %v1670 = vrot.slane %v781, 5
      %v1671 = vsel %vm1643, %v1669, %v1670
      %v1672 = vrot.slane %v1597, 5
      %v1673 = vrot.slane %v1672, 4
      %v1674 = vrot.slane %v754, 5
      %v1675 = vsel %vm1643, %v1673, %v1674
      %v1676 = vrot.slane %v1674, 4
      %v1677 = vrot.slane %v782, 5
      %v1678 = vsel %vm1643, %v1676, %v1677
      %v1679 = vrot.slane %v1598, 5
      %v1680 = vrot.slane %v1679, 4
      %v1681 = vrot.slane %v756, 5
      %v1682 = vsel %vm1643, %v1680, %v1681
      %v1683 = vrot.slane %v1681, 4
      %v1684 = vrot.slane %v783, 5
      %v1685 = vsel %vm1643, %v1683, %v1684
      %v1686 = vrot.slane %v1599, 5
      %v1687 = vrot.slane %v1686, 4
      %v1688 = vrot.slane %v758, 5
      %v1689 = vsel %vm1643, %v1687, %v1688
      %v1690 = vrot.slane %v1688, 4
      %v1691 = vrot.slane %v784, 5
      %v1692 = vsel %vm1643, %v1690, %v1691
      %v1693 = vrot.slane %v1600, 5
      %v1694 = vrot.slane %v1693, 4
      %v1695 = vrot.slane %v760, 5
      %v1696 = vsel %vm1643, %v1694, %v1695
      %v1697 = vrot.slane %v1695, 4
      %v1698 = vrot.slane %v785, 5
      %v1699 = vsel %vm1643, %v1697, %v1698
      %v1700 = vrot.slane %v1601, 5
      %v1701 = vrot.slane %v1700, 4
      %v1702 = vrot.slane %v762, 5
      %v1703 = vsel %vm1643, %v1701, %v1702
      %v1704 = vrot.slane %v1702, 4
      %v1705 = vrot.slane %v786, 5
      %v1706 = vsel %vm1643, %v1704, %v1705
      %v1707 = vrot.slane %v1602, 5
      %v1708 = vrot.slane %v1707, 4
      %v1709 = vrot.slane %v764, 5
      %v1710 = vsel %vm1643, %v1708, %v1709
      %v1711 = vrot.slane %v1709, 4
      %v1712 = vrot.slane %v787, 5
      %v1713 = vsel %vm1643, %v1711, %v1712
      %v1714 = vrot.slane %v1603, 5
      %v1715 = vrot.slane %v1714, 4
      %v1716 = vrot.slane %v766, 5
      %v1717 = vsel %vm1643, %v1715, %v1716
      %v1718 = vrot.slane %v1716, 4
      %v1719 = vrot.slane %v788, 5
      %v1720 = vsel %vm1643, %v1718, %v1719
      %v1721 = vrot.slane %v1604, 5
      %v1722 = vrot.slane %v1721, 4
      %v1723 = vrot.slane %v768, 5
      %v1724 = vsel %vm1643, %v1722, %v1723
      %v1725 = vrot.slane %v1723, 4
      %v1726 = vrot.slane %v789, 5
      %v1727 = vsel %vm1643, %v1725, %v1726
      %v1728 = vrot.slane %v1605, 5
      %v1729 = vrot.slane %v1728, 4
      %v1730 = vrot.slane %v770, 5
      %v1731 = vsel %vm1643, %v1729, %v1730
      %v1732 = vrot.slane %v1730, 4
      %v1733 = vrot.slane %v790, 5
      %v1734 = vsel %vm1643, %v1732, %v1733
      %v1735 = vrot.slane %v1606, 5
      %v1736 = vrot.slane %v1735, 4
      %v1737 = vrot.slane %v772, 5
      %v1738 = vsel %vm1643, %v1736, %v1737
      %v1739 = vrot.slane %v1737, 4
      %v1740 = vrot.slane %v791, 5
      %v1741 = vsel %vm1643, %v1739, %v1740
      %v1742 = vrot.slane %v1607, 5
      %v1743 = vrot.slane %v1742, 4
      %v1744 = vrot.slane %v774, 5
      %v1745 = vsel %vm1643, %v1743, %v1744
      %v1746 = vrot.slane %v1744, 4
      %v1747 = vrot.slane %v792, 5
      %v1748 = vsel %vm1643, %v1746, %v1747
      %v1749 = vrot.slane %v1608, 5
      %v1750 = vrot.slane %v1749, 4
      %v1751 = vrot.slane %v776, 5
      %v1752 = vsel %vm1643, %v1750, %v1751
      %v1753 = vrot.slane %v1751, 4
      %v1754 = vrot.slane %v793, 5
      %v1755 = vsel %vm1643, %v1753, %v1754
      %s1756 = scalar_lea.vmem %s1, 4
      %v1757 = vld [vmem:[%s1756] sm:$0x3]
      %v1758 = vunpack.c.l.b16 %v1647
      %v1759 = vunpack.c.l.b16 %v1650
      %v1760 = vunpack.c.l.b16 %v1654
      %v1761 = vunpack.c.l.b16 %v1657
      %v1762 = vunpack.c.l.b16 %v1661
      %v1763 = vunpack.c.l.b16 %v1664
      %v1764 = vunpack.c.l.b16 %v1668
      %v1765 = vunpack.c.l.b16 %v1671
      %v1766 = vunpack.c.l.b16 %v1675
      %v1767 = vunpack.c.l.b16 %v1678
      %v1768 = vunpack.c.l.b16 %v1682
      %v1769 = vunpack.c.l.b16 %v1685
      %v1770 = vunpack.c.l.b16 %v1689
      %v1771 = vunpack.c.l.b16 %v1692
      %v1772 = vunpack.c.l.b16 %v1696
      %v1773 = vunpack.c.l.b16 %v1699
      %v1774 = vunpack.c.l.b16 %v1703
      %v1775 = vunpack.c.l.b16 %v1706
      %v1776 = vunpack.c.l.b16 %v1710
      %v1777 = vunpack.c.l.b16 %v1713
      %v1778 = vunpack.c.l.b16 %v1717
      %v1779 = vunpack.c.l.b16 %v1720
      %v1780 = vunpack.c.l.b16 %v1724
      %v1781 = vunpack.c.l.b16 %v1727
      %v1782 = vunpack.c.l.b16 %v1731
      %v1783 = vunpack.c.l.b16 %v1734
      %v1784 = vunpack.c.l.b16 %v1738
      %v1785 = vunpack.c.l.b16 %v1741
      %v1786 = vunpack.c.l.b16 %v1745
      %v1787 = vunpack.c.l.b16 %v1748
      %v1788 = vunpack.c.l.b16 %v1752
      %v1789 = vunpack.c.l.b16 %v1755
      %v1790 = vpack.c.b16 %v1759, %v1758
      %v1791 = vpack.c.b16 %v1761, %v1760
      %v1792 = vpack.c.b16 %v1763, %v1762
      %v1793 = vpack.c.b16 %v1765, %v1764
      %v1794 = vpack.c.b16 %v1767, %v1766
      %v1795 = vpack.c.b16 %v1769, %v1768
      %v1796 = vpack.c.b16 %v1771, %v1770
      %v1797 = vpack.c.b16 %v1773, %v1772
      %v1798 = vpack.c.b16 %v1775, %v1774
      %v1799 = vpack.c.b16 %v1777, %v1776
      %v1800 = vpack.c.b16 %v1779, %v1778
      %v1801 = vpack.c.b16 %v1781, %v1780
      %v1802 = vpack.c.b16 %v1783, %v1782
      %v1803 = vpack.c.b16 %v1785, %v1784
      %v1804 = vpack.c.b16 %v1787, %v1786
      %v1805 = vpack.c.b16 %v1789, %v1788
      %v1807 = vsel %vm1231, %v1790, 0
      %v1810 = vsel %vm1231, %v1791, 0
      %v1813 = vsel %vm1231, %v1792, 0
      %v1816 = vsel %vm1231, %v1793, 0
      %v1819 = vsel %vm1231, %v1794, 0
      %v1822 = vsel %vm1231, %v1795, 0
      %v1825 = vsel %vm1231, %v1796, 0
      %v1828 = vsel %vm1231, %v1797, 0
      %v1831 = vsel %vm1231, %v1798, 0
      %v1834 = vsel %vm1231, %v1799, 0
      %v1837 = vsel %vm1231, %v1800, 0
      %v1840 = vsel %vm1231, %v1801, 0
      %v1843 = vsel %vm1231, %v1802, 0
      %v1846 = vsel %vm1231, %v1803, 0
      %v1849 = vsel %vm1231, %v1804, 0
      %v1852 = vsel %vm1231, %v1805, 0
      %v1855 = vsel %vm1280, %v1757, 0
      %1857 = vmatpush.bf16.msra.mxu0 0
      %1858 = vmatpush.bf16.msra.mxu0 0
      %1859 = vmatpush.bf16.msra.mxu0 0
      %1860 = vmatpush.bf16.msra.mxu0 0
      %1861 = vmatpush.bf16.msra.mxu0 0
      %1862 = vmatpush.bf16.msra.mxu0 0
      %1863 = vmatpush.bf16.msra.mxu0 0
      %1864 = vmatpush.bf16.msra.mxu0 %v1855
      %1865 = vmatmul.bf16.gmra.mxu0 %v1807
      %v1866 = vpop.f32.mrf.mxu0
      %v1867 = vadd.f32 0.0, %v1866
      %v1868 = vpop.f32.mrf.mxu0
      %v1869 = vadd.f32 0.0, %v1868
      %1870 = vmatmul.bf16.gmra.mxu0 %v1810
      %v1871 = vpop.f32.mrf.mxu0
      %v1872 = vadd.f32 0.0, %v1871
      %v1873 = vpop.f32.mrf.mxu0
      %v1874 = vadd.f32 0.0, %v1873
      %1875 = vmatmul.bf16.gmra.mxu0 %v1813
      %v1876 = vpop.f32.mrf.mxu0
      %v1877 = vadd.f32 0.0, %v1876
      %v1878 = vpop.f32.mrf.mxu0
      %v1879 = vadd.f32 0.0, %v1878
      %1880 = vmatmul.bf16.gmra.mxu0 %v1816
      %v1881 = vpop.f32.mrf.mxu0
      %v1882 = vadd.f32 0.0, %v1881
      %v1883 = vpop.f32.mrf.mxu0
      %v1884 = vadd.f32 0.0, %v1883
      %1885 = vmatmul.bf16.gmra.mxu0 %v1819
      %v1886 = vpop.f32.mrf.mxu0
      %v1887 = vadd.f32 0.0, %v1886
      %v1888 = vpop.f32.mrf.mxu0
      %v1889 = vadd.f32 0.0, %v1888
      %1890 = vmatmul.bf16.gmra.mxu0 %v1822
      %v1891 = vpop.f32.mrf.mxu0
      %v1892 = vadd.f32 0.0, %v1891
      %v1893 = vpop.f32.mrf.mxu0
      %v1894 = vadd.f32 0.0, %v1893
      %1895 = vmatmul.bf16.gmra.mxu0 %v1825
      %v1896 = vpop.f32.mrf.mxu0
      %v1897 = vadd.f32 0.0, %v1896
      %v1898 = vpop.f32.mrf.mxu0
      %v1899 = vadd.f32 0.0, %v1898
      %1900 = vmatmul.bf16.gmra.mxu0 %v1828
      %v1901 = vpop.f32.mrf.mxu0
      %v1902 = vadd.f32 0.0, %v1901
      %v1903 = vpop.f32.mrf.mxu0
      %v1904 = vadd.f32 0.0, %v1903
      %1905 = vmatmul.bf16.gmra.mxu0 %v1831
      %v1906 = vpop.f32.mrf.mxu0
      %v1907 = vadd.f32 0.0, %v1906
      %v1908 = vpop.f32.mrf.mxu0
      %v1909 = vadd.f32 0.0, %v1908
      %1910 = vmatmul.bf16.gmra.mxu0 %v1834
      %v1911 = vpop.f32.mrf.mxu0
      %v1912 = vadd.f32 0.0, %v1911
      %v1913 = vpop.f32.mrf.mxu0
      %v1914 = vadd.f32 0.0, %v1913
      %1915 = vmatmul.bf16.gmra.mxu0 %v1837
      %v1916 = vpop.f32.mrf.mxu0
      %v1917 = vadd.f32 0.0, %v1916
      %v1918 = vpop.f32.mrf.mxu0
      %v1919 = vadd.f32 0.0, %v1918
      %1920 = vmatmul.bf16.gmra.mxu0 %v1840
      %v1921 = vpop.f32.mrf.mxu0
      %v1922 = vadd.f32 0.0, %v1921
      %v1923 = vpop.f32.mrf.mxu0
      %v1924 = vadd.f32 0.0, %v1923
      %1925 = vmatmul.bf16.gmra.mxu0 %v1843
      %v1926 = vpop.f32.mrf.mxu0
      %v1927 = vadd.f32 0.0, %v1926
      %v1928 = vpop.f32.mrf.mxu0
      %v1929 = vadd.f32 0.0, %v1928
      %1930 = vmatmul.bf16.gmra.mxu0 %v1846
      %v1931 = vpop.f32.mrf.mxu0
      %v1932 = vadd.f32 0.0, %v1931
      %v1933 = vpop.f32.mrf.mxu0
      %v1934 = vadd.f32 0.0, %v1933
      %1935 = vmatmul.bf16.gmra.mxu0 %v1849
      %v1936 = vpop.f32.mrf.mxu0
      %v1937 = vadd.f32 0.0, %v1936
      %v1938 = vpop.f32.mrf.mxu0
      %v1939 = vadd.f32 0.0, %v1938
      %1940 = vmatmul.bf16.gmra.mxu0 %v1852
      %v1941 = vpop.f32.mrf.mxu0
      %v1942 = vadd.f32 0.0, %v1941
      %v1943 = vpop.f32.mrf.mxu0
      %v1944 = vadd.f32 0.0, %v1943
      %1945 = vdwg.mxu0
      %v1946 = vadd.f32 %v1514, %v1867
      %v1947 = vadd.f32 %v1516, %v1869
      %v1948 = vadd.f32 %v1519, %v1872
      %v1949 = vadd.f32 %v1521, %v1874
      %v1950 = vadd.f32 %v1524, %v1877
      %v1951 = vadd.f32 %v1526, %v1879
      %v1952 = vadd.f32 %v1529, %v1882
      %v1953 = vadd.f32 %v1531, %v1884
      %v1954 = vadd.f32 %v1534, %v1887
      %v1955 = vadd.f32 %v1536, %v1889
      %v1956 = vadd.f32 %v1539, %v1892
      %v1957 = vadd.f32 %v1541, %v1894
      %v1958 = vadd.f32 %v1544, %v1897
      %v1959 = vadd.f32 %v1546, %v1899
      %v1960 = vadd.f32 %v1549, %v1902
      %v1961 = vadd.f32 %v1551, %v1904
      %v1962 = vadd.f32 %v1554, %v1907
      %v1963 = vadd.f32 %v1556, %v1909
      %v1964 = vadd.f32 %v1559, %v1912
      %v1965 = vadd.f32 %v1561, %v1914
      %v1966 = vadd.f32 %v1564, %v1917
      %v1967 = vadd.f32 %v1566, %v1919
      %v1968 = vadd.f32 %v1569, %v1922
      %v1969 = vadd.f32 %v1571, %v1924
      %v1970 = vadd.f32 %v1574, %v1927
      %v1971 = vadd.f32 %v1576, %v1929
      %v1972 = vadd.f32 %v1579, %v1932
      %v1973 = vadd.f32 %v1581, %v1934
      %v1974 = vadd.f32 %v1584, %v1937
      %v1975 = vadd.f32 %v1586, %v1939
      %v1976 = vadd.f32 %v1589, %v1942
      %v1977 = vadd.f32 %v1591, %v1944
      %v1978 = vld [vmem:[%s627] sm:$0xf]
      %v1979 = vld [vmem:[%s627 + $0x4] sm:$0xf]
      %v1980 = vld [vmem:[%s627 + $0xc] sm:$0xf]
      %v1981 = vld [vmem:[%s627 + $0x10] sm:$0xf]
      %v1982 = vld [vmem:[%s627 + $0x18] sm:$0xf]
      %v1983 = vld [vmem:[%s627 + $0x1c] sm:$0xf]
      %v1984 = vld [vmem:[%s627 + $0x24] sm:$0xf]
      %v1985 = vld [vmem:[%s627 + $0x28] sm:$0xf]
      %v1986 = vld [vmem:[%s627 + $0x30] sm:$0xf]
      %v1987 = vld [vmem:[%s627 + $0x34] sm:$0xf]
      %v1988 = vld [vmem:[%s627 + $0x3c] sm:$0xf]
      %v1989 = vld [vmem:[%s627 + $0x40] sm:$0xf]
      %v1990 = vld [vmem:[%s627 + $0x48] sm:$0xf]
      %v1991 = vld [vmem:[%s627 + $0x4c] sm:$0xf]
      %v1992 = vld [vmem:[%s627 + $0x54] sm:$0xf]
      %v1993 = vld [vmem:[%s627 + $0x58] sm:$0xf]
      %v1994 = vld [vmem:[%s627 + $0x60] sm:$0xf]
      %v1995 = vld [vmem:[%s627 + $0x64] sm:$0xf]
      %v1996 = vld [vmem:[%s627 + $0x6c] sm:$0xf]
      %v1997 = vld [vmem:[%s627 + $0x70] sm:$0xf]
      %v1998 = vld [vmem:[%s627 + $0x78] sm:$0xf]
      %v1999 = vld [vmem:[%s627 + $0x7c] sm:$0xf]
      %v2000 = vld [vmem:[%s627 + $0x84] sm:$0xf]
      %v2001 = vld [vmem:[%s627 + $0x88] sm:$0xf]
      %v2002 = vld [vmem:[%s627 + $0x90] sm:$0xf]
      %v2003 = vld [vmem:[%s627 + $0x94] sm:$0xf]
      %v2004 = vld [vmem:[%s627 + $0x9c] sm:$0xf]
      %v2005 = vld [vmem:[%s627 + $0xa0] sm:$0xf]
      %v2006 = vld [vmem:[%s627 + $0xa8] sm:$0xf]
      %v2007 = vld [vmem:[%s627 + $0xac] sm:$0xf]
      %v2008 = vld [vmem:[%s627 + $0xb4] sm:$0xf]
      %v2009 = vld [vmem:[%s627 + $0xb8] sm:$0xf]
      %s2010 = scalar_lea.vmem %s1, 6
      %v2011 = vld [vmem:[%s2010] sm:$0x3]
      %v2044 = vunpack.c.l.b16 %v1978
      %v2045 = vunpack.c.l.b16 %v1979
      %v2046 = vunpack.c.l.b16 %v1980
      %v2047 = vunpack.c.l.b16 %v1981
      %v2048 = vunpack.c.l.b16 %v1982
      %v2049 = vunpack.c.l.b16 %v1983
      %v2050 = vunpack.c.l.b16 %v1984
      %v2051 = vunpack.c.l.b16 %v1985
      %v2052 = vunpack.c.l.b16 %v1986
      %v2053 = vunpack.c.l.b16 %v1987
      %v2054 = vunpack.c.l.b16 %v1988
      %v2055 = vunpack.c.l.b16 %v1989
      %v2056 = vunpack.c.l.b16 %v1990
      %v2057 = vunpack.c.l.b16 %v1991
      %v2058 = vunpack.c.l.b16 %v1992
      %v2059 = vunpack.c.l.b16 %v1993
      %v2060 = vunpack.c.l.b16 %v1994
      %v2061 = vunpack.c.l.b16 %v1995
      %v2062 = vunpack.c.l.b16 %v1996
      %v2063 = vunpack.c.l.b16 %v1997
      %v2064 = vunpack.c.l.b16 %v1998
      %v2065 = vunpack.c.l.b16 %v1999
      %v2066 = vunpack.c.l.b16 %v2000
      %v2067 = vunpack.c.l.b16 %v2001
      %v2068 = vunpack.c.l.b16 %v2002
      %v2069 = vunpack.c.l.b16 %v2003
      %v2070 = vunpack.c.l.b16 %v2004
      %v2071 = vunpack.c.l.b16 %v2005
      %v2072 = vunpack.c.l.b16 %v2006
      %v2073 = vunpack.c.l.b16 %v2007
      %v2074 = vunpack.c.l.b16 %v2008
      %v2075 = vunpack.c.l.b16 %v2009
      %v2076 = vpack.c.b16 %v2045, %v2044
      %v2077 = vpack.c.b16 %v2047, %v2046
      %v2078 = vpack.c.b16 %v2049, %v2048
      %v2079 = vpack.c.b16 %v2051, %v2050
      %v2080 = vpack.c.b16 %v2053, %v2052
      %v2081 = vpack.c.b16 %v2055, %v2054
      %v2082 = vpack.c.b16 %v2057, %v2056
      %v2083 = vpack.c.b16 %v2059, %v2058
      %v2084 = vpack.c.b16 %v2061, %v2060
      %v2085 = vpack.c.b16 %v2063, %v2062
      %v2086 = vpack.c.b16 %v2065, %v2064
      %v2087 = vpack.c.b16 %v2067, %v2066
      %v2088 = vpack.c.b16 %v2069, %v2068
      %v2089 = vpack.c.b16 %v2071, %v2070
      %v2090 = vpack.c.b16 %v2073, %v2072
      %v2091 = vpack.c.b16 %v2075, %v2074
      %v2093 = vsel %vm1231, %v2076, 0
      %v2096 = vsel %vm1231, %v2077, 0
      %v2099 = vsel %vm1231, %v2078, 0
      %v2102 = vsel %vm1231, %v2079, 0
      %v2105 = vsel %vm1231, %v2080, 0
      %v2108 = vsel %vm1231, %v2081, 0
      %v2111 = vsel %vm1231, %v2082, 0
      %v2114 = vsel %vm1231, %v2083, 0
      %v2117 = vsel %vm1231, %v2084, 0
      %v2120 = vsel %vm1231, %v2085, 0
      %v2123 = vsel %vm1231, %v2086, 0
      %v2126 = vsel %vm1231, %v2087, 0
      %v2129 = vsel %vm1231, %v2088, 0
      %v2132 = vsel %vm1231, %v2089, 0
      %v2135 = vsel %vm1231, %v2090, 0
      %v2138 = vsel %vm1231, %v2091, 0
      %v2141 = vsel %vm1280, %v2011, 0
      %2143 = vmatpush.bf16.msra.mxu0 0
      %2144 = vmatpush.bf16.msra.mxu0 0
      %2145 = vmatpush.bf16.msra.mxu0 0
      %2146 = vmatpush.bf16.msra.mxu0 0
      %2147 = vmatpush.bf16.msra.mxu0 0
      %2148 = vmatpush.bf16.msra.mxu0 0
      %2149 = vmatpush.bf16.msra.mxu0 0
      %2150 = vmatpush.bf16.msra.mxu0 %v2141
      %2151 = vmatmul.bf16.gmra.mxu0 %v2093
      %v2152 = vpop.f32.mrf.mxu0
      %v2153 = vadd.f32 0.0, %v2152
      %v2154 = vpop.f32.mrf.mxu0
      %v2155 = vadd.f32 0.0, %v2154
      %2156 = vmatmul.bf16.gmra.mxu0 %v2096
      %v2157 = vpop.f32.mrf.mxu0
      %v2158 = vadd.f32 0.0, %v2157
      %v2159 = vpop.f32.mrf.mxu0
      %v2160 = vadd.f32 0.0, %v2159
      %2161 = vmatmul.bf16.gmra.mxu0 %v2099
      %v2162 = vpop.f32.mrf.mxu0
      %v2163 = vadd.f32 0.0, %v2162
      %v2164 = vpop.f32.mrf.mxu0
      %v2165 = vadd.f32 0.0, %v2164
      %2166 = vmatmul.bf16.gmra.mxu0 %v2102
      %v2167 = vpop.f32.mrf.mxu0
      %v2168 = vadd.f32 0.0, %v2167
      %v2169 = vpop.f32.mrf.mxu0
      %v2170 = vadd.f32 0.0, %v2169
      %2171 = vmatmul.bf16.gmra.mxu0 %v2105
      %v2172 = vpop.f32.mrf.mxu0
      %v2173 = vadd.f32 0.0, %v2172
      %v2174 = vpop.f32.mrf.mxu0
      %v2175 = vadd.f32 0.0, %v2174
      %2176 = vmatmul.bf16.gmra.mxu0 %v2108
      %v2177 = vpop.f32.mrf.mxu0
      %v2178 = vadd.f32 0.0, %v2177
      %v2179 = vpop.f32.mrf.mxu0
      %v2180 = vadd.f32 0.0, %v2179
      %2181 = vmatmul.bf16.gmra.mxu0 %v2111
      %v2182 = vpop.f32.mrf.mxu0
      %v2183 = vadd.f32 0.0, %v2182
      %v2184 = vpop.f32.mrf.mxu0
      %v2185 = vadd.f32 0.0, %v2184
      %2186 = vmatmul.bf16.gmra.mxu0 %v2114
      %v2187 = vpop.f32.mrf.mxu0
      %v2188 = vadd.f32 0.0, %v2187
      %v2189 = vpop.f32.mrf.mxu0
      %v2190 = vadd.f32 0.0, %v2189
      %2191 = vmatmul.bf16.gmra.mxu0 %v2117
      %v2192 = vpop.f32.mrf.mxu0
      %v2193 = vadd.f32 0.0, %v2192
      %v2194 = vpop.f32.mrf.mxu0
      %v2195 = vadd.f32 0.0, %v2194
      %2196 = vmatmul.bf16.gmra.mxu0 %v2120
      %v2197 = vpop.f32.mrf.mxu0
      %v2198 = vadd.f32 0.0, %v2197
      %v2199 = vpop.f32.mrf.mxu0
      %v2200 = vadd.f32 0.0, %v2199
      %2201 = vmatmul.bf16.gmra.mxu0 %v2123
      %v2202 = vpop.f32.mrf.mxu0
      %v2203 = vadd.f32 0.0, %v2202
      %v2204 = vpop.f32.mrf.mxu0
      %v2205 = vadd.f32 0.0, %v2204
      %2206 = vmatmul.bf16.gmra.mxu0 %v2126
      %v2207 = vpop.f32.mrf.mxu0
      %v2208 = vadd.f32 0.0, %v2207
      %v2209 = vpop.f32.mrf.mxu0
      %v2210 = vadd.f32 0.0, %v2209
      %2211 = vmatmul.bf16.gmra.mxu0 %v2129
      %v2212 = vpop.f32.mrf.mxu0
      %v2213 = vadd.f32 0.0, %v2212
      %v2214 = vpop.f32.mrf.mxu0
      %v2215 = vadd.f32 0.0, %v2214
      %2216 = vmatmul.bf16.gmra.mxu0 %v2132
      %v2217 = vpop.f32.mrf.mxu0
      %v2218 = vadd.f32 0.0, %v2217
      %v2219 = vpop.f32.mrf.mxu0
      %v2220 = vadd.f32 0.0, %v2219
      %2221 = vmatmul.bf16.gmra.mxu0 %v2135
      %v2222 = vpop.f32.mrf.mxu0
      %v2223 = vadd.f32 0.0, %v2222
      %v2224 = vpop.f32.mrf.mxu0
      %v2225 = vadd.f32 0.0, %v2224
      %2226 = vmatmul.bf16.gmra.mxu0 %v2138
      %v2227 = vpop.f32.mrf.mxu0
      %v2228 = vadd.f32 0.0, %v2227
      %v2229 = vpop.f32.mrf.mxu0
      %v2230 = vadd.f32 0.0, %v2229
      %2231 = vdwg.mxu0
      %v2232 = vadd.f32 %v1946, %v2153
      %v2233 = vadd.f32 %v1947, %v2155
      %v2234 = vadd.f32 %v1948, %v2158
      %v2235 = vadd.f32 %v1949, %v2160
      %v2236 = vadd.f32 %v1950, %v2163
      %v2237 = vadd.f32 %v1951, %v2165
      %v2238 = vadd.f32 %v1952, %v2168
      %v2239 = vadd.f32 %v1953, %v2170
      %v2240 = vadd.f32 %v1954, %v2173
      %v2241 = vadd.f32 %v1955, %v2175
      %v2242 = vadd.f32 %v1956, %v2178
      %v2243 = vadd.f32 %v1957, %v2180
      %v2244 = vadd.f32 %v1958, %v2183
      %v2245 = vadd.f32 %v1959, %v2185
      %v2246 = vadd.f32 %v1960, %v2188
      %v2247 = vadd.f32 %v1961, %v2190
      %v2248 = vadd.f32 %v1962, %v2193
      %v2249 = vadd.f32 %v1963, %v2195
      %v2250 = vadd.f32 %v1964, %v2198
      %v2251 = vadd.f32 %v1965, %v2200
      %v2252 = vadd.f32 %v1966, %v2203
      %v2253 = vadd.f32 %v1967, %v2205
      %v2254 = vadd.f32 %v1968, %v2208
      %v2255 = vadd.f32 %v1969, %v2210
      %v2256 = vadd.f32 %v1970, %v2213
      %v2257 = vadd.f32 %v1971, %v2215
      %v2258 = vadd.f32 %v1972, %v2218
      %v2259 = vadd.f32 %v1973, %v2220
      %v2260 = vadd.f32 %v1974, %v2223
      %v2261 = vadd.f32 %v1975, %v2225
      %v2262 = vadd.f32 %v1976, %v2228
      %v2263 = vadd.f32 %v1977, %v2230
      %v2264 = vld [vmem:[%s627] sm:$0xf]
      %v2265 = vld [vmem:[%s627 + $0x4] sm:$0xf]
      %v2266 = vld [vmem:[%s627 + $0x8] sm:$0x1]
      %v2267 = vld [vmem:[%s627 + $0xc] sm:$0xf]
      %v2268 = vld [vmem:[%s627 + $0x10] sm:$0xf]
      %v2269 = vld [vmem:[%s627 + $0x14] sm:$0x1]
      %v2270 = vld [vmem:[%s627 + $0x18] sm:$0xf]
      %v2271 = vld [vmem:[%s627 + $0x1c] sm:$0xf]
      %v2272 = vld [vmem:[%s627 + $0x20] sm:$0x1]
      %v2273 = vld [vmem:[%s627 + $0x24] sm:$0xf]
      %v2274 = vld [vmem:[%s627 + $0x28] sm:$0xf]
      %v2275 = vld [vmem:[%s627 + $0x2c] sm:$0x1]
      %v2276 = vld [vmem:[%s627 + $0x30] sm:$0xf]
      %v2277 = vld [vmem:[%s627 + $0x34] sm:$0xf]
      %v2278 = vld [vmem:[%s627 + $0x38] sm:$0x1]
      %v2279 = vld [vmem:[%s627 + $0x3c] sm:$0xf]
      %v2280 = vld [vmem:[%s627 + $0x40] sm:$0xf]
      %v2281 = vld [vmem:[%s627 + $0x44] sm:$0x1]
      %v2282 = vld [vmem:[%s627 + $0x48] sm:$0xf]
      %v2283 = vld [vmem:[%s627 + $0x4c] sm:$0xf]
      %v2284 = vld [vmem:[%s627 + $0x50] sm:$0x1]
      %v2285 = vld [vmem:[%s627 + $0x54] sm:$0xf]
      %v2286 = vld [vmem:[%s627 + $0x58] sm:$0xf]
      %v2287 = vld [vmem:[%s627 + $0x5c] sm:$0x1]
      %v2288 = vld [vmem:[%s627 + $0x60] sm:$0xf]
      %v2289 = vld [vmem:[%s627 + $0x64] sm:$0xf]
      %v2290 = vld [vmem:[%s627 + $0x68] sm:$0x1]
      %v2291 = vld [vmem:[%s627 + $0x6c] sm:$0xf]
      %v2292 = vld [vmem:[%s627 + $0x70] sm:$0xf]
      %v2293 = vld [vmem:[%s627 + $0x74] sm:$0x1]
      %v2294 = vld [vmem:[%s627 + $0x78] sm:$0xf]
      %v2295 = vld [vmem:[%s627 + $0x7c] sm:$0xf]
      %v2296 = vld [vmem:[%s627 + $0x80] sm:$0x1]
      %v2297 = vld [vmem:[%s627 + $0x84] sm:$0xf]
      %v2298 = vld [vmem:[%s627 + $0x88] sm:$0xf]
      %v2299 = vld [vmem:[%s627 + $0x8c] sm:$0x1]
      %v2300 = vld [vmem:[%s627 + $0x90] sm:$0xf]
      %v2301 = vld [vmem:[%s627 + $0x94] sm:$0xf]
      %v2302 = vld [vmem:[%s627 + $0x98] sm:$0x1]
      %v2303 = vld [vmem:[%s627 + $0x9c] sm:$0xf]
      %v2304 = vld [vmem:[%s627 + $0xa0] sm:$0xf]
      %v2305 = vld [vmem:[%s627 + $0xa4] sm:$0x1]
      %v2306 = vld [vmem:[%s627 + $0xa8] sm:$0xf]
      %v2307 = vld [vmem:[%s627 + $0xac] sm:$0xf]
      %v2308 = vld [vmem:[%s627 + $0xb0] sm:$0x1]
      %v2309 = vld [vmem:[%s627 + $0xb4] sm:$0xf]
      %v2310 = vld [vmem:[%s627 + $0xb8] sm:$0xf]
      %v2311 = vld [vmem:[%s627 + $0xbc] sm:$0x1]
      %v2313 = vshrl.u32 %v2264, 16
      %v2315 = vrot.slane %v2313, 4
      %v2316 = vshll.u32 %v2264, 16
      %v2318 = vrot.slane %v2316, 5
      %v2319 = vor.u32 %v2315, %v2318
      %v2320 = vrot.slane %v2319, 4
      %v2322 = vshll.u32 %v2265, 16
      %v2324 = vrot.slane %v2322, 5
      %v2325 = vsel %vm796, %v2320, %v2324
      %v2326 = vshrl.u32 %v2265, 16
      %v2328 = vrot.slane %v2326, 4
      %v2329 = vor.u32 %v2328, %v2324
      %v2330 = vrot.slane %v2329, 4
      %v2332 = vshll.u32 %v2266, 16
      %v2334 = vrot.slane %v2332, 5
      %v2335 = vsel %vm796, %v2330, %v2334
      %v2337 = vshrl.u32 %v2267, 16
      %v2339 = vrot.slane %v2337, 4
      %v2340 = vshll.u32 %v2267, 16
      %v2342 = vrot.slane %v2340, 5
      %v2343 = vor.u32 %v2339, %v2342
      %v2344 = vrot.slane %v2343, 4
      %v2346 = vshll.u32 %v2268, 16
      %v2348 = vrot.slane %v2346, 5
      %v2349 = vsel %vm796, %v2344, %v2348
      %v2350 = vshrl.u32 %v2268, 16
      %v2352 = vrot.slane %v2350, 4
      %v2353 = vor.u32 %v2352, %v2348
      %v2354 = vrot.slane %v2353, 4
      %v2356 = vshll.u32 %v2269, 16
      %v2358 = vrot.slane %v2356, 5
      %v2359 = vsel %vm796, %v2354, %v2358
      %v2361 = vshrl.u32 %v2270, 16
      %v2363 = vrot.slane %v2361, 4
      %v2364 = vshll.u32 %v2270, 16
      %v2366 = vrot.slane %v2364, 5
      %v2367 = vor.u32 %v2363, %v2366
      %v2368 = vrot.slane %v2367, 4
      %v2370 = vshll.u32 %v2271, 16
      %v2372 = vrot.slane %v2370, 5
      %v2373 = vsel %vm796, %v2368, %v2372
      %v2374 = vshrl.u32 %v2271, 16
      %v2376 = vrot.slane %v2374, 4
      %v2377 = vor.u32 %v2376, %v2372
      %v2378 = vrot.slane %v2377, 4
      %v2380 = vshll.u32 %v2272, 16
      %v2382 = vrot.slane %v2380, 5
      %v2383 = vsel %vm796, %v2378, %v2382
      %v2385 = vshrl.u32 %v2273, 16
      %v2387 = vrot.slane %v2385, 4
      %v2388 = vshll.u32 %v2273, 16
      %v2390 = vrot.slane %v2388, 5
      %v2391 = vor.u32 %v2387, %v2390
      %v2392 = vrot.slane %v2391, 4
      %v2394 = vshll.u32 %v2274, 16
      %v2396 = vrot.slane %v2394, 5
      %v2397 = vsel %vm796, %v2392, %v2396
      %v2398 = vshrl.u32 %v2274, 16
      %v2400 = vrot.slane %v2398, 4
      %v2401 = vor.u32 %v2400, %v2396
      %v2402 = vrot.slane %v2401, 4
      %v2404 = vshll.u32 %v2275, 16
      %v2406 = vrot.slane %v2404, 5
      %v2407 = vsel %vm796, %v2402, %v2406
      %v2409 = vshrl.u32 %v2276, 16
      %v2411 = vrot.slane %v2409, 4
      %v2412 = vshll.u32 %v2276, 16
      %v2414 = vrot.slane %v2412, 5
      %v2415 = vor.u32 %v2411, %v2414
      %v2416 = vrot.slane %v2415, 4
      %v2418 = vshll.u32 %v2277, 16
      %v2420 = vrot.slane %v2418, 5
      %v2421 = vsel %vm796, %v2416, %v2420
      %v2422 = vshrl.u32 %v2277, 16
      %v2424 = vrot.slane %v2422, 4
      %v2425 = vor.u32 %v2424, %v2420
      %v2426 = vrot.slane %v2425, 4
      %v2428 = vshll.u32 %v2278, 16
      %v2430 = vrot.slane %v2428, 5
      %v2431 = vsel %vm796, %v2426, %v2430
      %v2433 = vshrl.u32 %v2279, 16
      %v2435 = vrot.slane %v2433, 4
      %v2436 = vshll.u32 %v2279, 16
      %v2438 = vrot.slane %v2436, 5
      %v2439 = vor.u32 %v2435, %v2438
      %v2440 = vrot.slane %v2439, 4
      %v2442 = vshll.u32 %v2280, 16
      %v2444 = vrot.slane %v2442, 5
      %v2445 = vsel %vm796, %v2440, %v2444
      %v2446 = vshrl.u32 %v2280, 16
      %v2448 = vrot.slane %v2446, 4
      %v2449 = vor.u32 %v2448, %v2444
      %v2450 = vrot.slane %v2449, 4
      %v2452 = vshll.u32 %v2281, 16
      %v2454 = vrot.slane %v2452, 5
      %v2455 = vsel %vm796, %v2450, %v2454
      %v2457 = vshrl.u32 %v2282, 16
      %v2459 = vrot.slane %v2457, 4
      %v2460 = vshll.u32 %v2282, 16
      %v2462 = vrot.slane %v2460, 5
      %v2463 = vor.u32 %v2459, %v2462
      %v2464 = vrot.slane %v2463, 4
      %v2466 = vshll.u32 %v2283, 16
      %v2468 = vrot.slane %v2466, 5
      %v2469 = vsel %vm796, %v2464, %v2468
      %v2470 = vshrl.u32 %v2283, 16
      %v2472 = vrot.slane %v2470, 4
      %v2473 = vor.u32 %v2472, %v2468
      %v2474 = vrot.slane %v2473, 4
      %v2476 = vshll.u32 %v2284, 16
      %v2478 = vrot.slane %v2476, 5
      %v2479 = vsel %vm796, %v2474, %v2478
      %v2481 = vshrl.u32 %v2285, 16
      %v2483 = vrot.slane %v2481, 4
      %v2484 = vshll.u32 %v2285, 16
      %v2486 = vrot.slane %v2484, 5
      %v2487 = vor.u32 %v2483, %v2486
      %v2488 = vrot.slane %v2487, 4
      %v2490 = vshll.u32 %v2286, 16
      %v2492 = vrot.slane %v2490, 5
      %v2493 = vsel %vm796, %v2488, %v2492
      %v2494 = vshrl.u32 %v2286, 16
      %v2496 = vrot.slane %v2494, 4
      %v2497 = vor.u32 %v2496, %v2492
      %v2498 = vrot.slane %v2497, 4
      %v2500 = vshll.u32 %v2287, 16
      %v2502 = vrot.slane %v2500, 5
      %v2503 = vsel %vm796, %v2498, %v2502
      %v2505 = vshrl.u32 %v2288, 16
      %v2507 = vrot.slane %v2505, 4
      %v2508 = vshll.u32 %v2288, 16
      %v2510 = vrot.slane %v2508, 5
      %v2511 = vor.u32 %v2507, %v2510
      %v2512 = vrot.slane %v2511, 4
      %v2514 = vshll.u32 %v2289, 16
      %v2516 = vrot.slane %v2514, 5
      %v2517 = vsel %vm796, %v2512, %v2516
      %v2518 = vshrl.u32 %v2289, 16
      %v2520 = vrot.slane %v2518, 4
      %v2521 = vor.u32 %v2520, %v2516
      %v2522 = vrot.slane %v2521, 4
      %v2524 = vshll.u32 %v2290, 16
      %v2526 = vrot.slane %v2524, 5
      %v2527 = vsel %vm796, %v2522, %v2526
      %v2529 = vshrl.u32 %v2291, 16
      %v2531 = vrot.slane %v2529, 4
      %v2532 = vshll.u32 %v2291, 16
      %v2534 = vrot.slane %v2532, 5
      %v2535 = vor.u32 %v2531, %v2534
      %v2536 = vrot.slane %v2535, 4
      %v2538 = vshll.u32 %v2292, 16
      %v2540 = vrot.slane %v2538, 5
      %v2541 = vsel %vm796, %v2536, %v2540
      %v2542 = vshrl.u32 %v2292, 16
      %v2544 = vrot.slane %v2542, 4
      %v2545 = vor.u32 %v2544, %v2540
      %v2546 = vrot.slane %v2545, 4
      %v2548 = vshll.u32 %v2293, 16
      %v2550 = vrot.slane %v2548, 5
      %v2551 = vsel %vm796, %v2546, %v2550
      %v2553 = vshrl.u32 %v2294, 16
      %v2555 = vrot.slane %v2553, 4
      %v2556 = vshll.u32 %v2294, 16
      %v2558 = vrot.slane %v2556, 5
      %v2559 = vor.u32 %v2555, %v2558
      %v2560 = vrot.slane %v2559, 4
      %v2562 = vshll.u32 %v2295, 16
      %v2564 = vrot.slane %v2562, 5
      %v2565 = vsel %vm796, %v2560, %v2564
      %v2566 = vshrl.u32 %v2295, 16
      %v2568 = vrot.slane %v2566, 4
      %v2569 = vor.u32 %v2568, %v2564
      %v2570 = vrot.slane %v2569, 4
      %v2572 = vshll.u32 %v2296, 16
      %v2574 = vrot.slane %v2572, 5
      %v2575 = vsel %vm796, %v2570, %v2574
      %v2577 = vshrl.u32 %v2297, 16
      %v2579 = vrot.slane %v2577, 4
      %v2580 = vshll.u32 %v2297, 16
      %v2582 = vrot.slane %v2580, 5
      %v2583 = vor.u32 %v2579, %v2582
      %v2584 = vrot.slane %v2583, 4
      %v2586 = vshll.u32 %v2298, 16
      %v2588 = vrot.slane %v2586, 5
      %v2589 = vsel %vm796, %v2584, %v2588
      %v2590 = vshrl.u32 %v2298, 16
      %v2592 = vrot.slane %v2590, 4
      %v2593 = vor.u32 %v2592, %v2588
      %v2594 = vrot.slane %v2593, 4
      %v2596 = vshll.u32 %v2299, 16
      %v2598 = vrot.slane %v2596, 5
      %v2599 = vsel %vm796, %v2594, %v2598
      %v2601 = vshrl.u32 %v2300, 16
      %v2603 = vrot.slane %v2601, 4
      %v2604 = vshll.u32 %v2300, 16
      %v2606 = vrot.slane %v2604, 5
      %v2607 = vor.u32 %v2603, %v2606
      %v2608 = vrot.slane %v2607, 4
      %v2610 = vshll.u32 %v2301, 16
      %v2612 = vrot.slane %v2610, 5
      %v2613 = vsel %vm796, %v2608, %v2612
      %v2614 = vshrl.u32 %v2301, 16
      %v2616 = vrot.slane %v2614, 4
      %v2617 = vor.u32 %v2616, %v2612
      %v2618 = vrot.slane %v2617, 4
      %v2620 = vshll.u32 %v2302, 16
      %v2622 = vrot.slane %v2620, 5
      %v2623 = vsel %vm796, %v2618, %v2622
      %v2625 = vshrl.u32 %v2303, 16
      %v2627 = vrot.slane %v2625, 4
      %v2628 = vshll.u32 %v2303, 16
      %v2630 = vrot.slane %v2628, 5
      %v2631 = vor.u32 %v2627, %v2630
      %v2632 = vrot.slane %v2631, 4
      %v2634 = vshll.u32 %v2304, 16
      %v2636 = vrot.slane %v2634, 5
      %v2637 = vsel %vm796, %v2632, %v2636
      %v2638 = vshrl.u32 %v2304, 16
      %v2640 = vrot.slane %v2638, 4
      %v2641 = vor.u32 %v2640, %v2636
      %v2642 = vrot.slane %v2641, 4
      %v2644 = vshll.u32 %v2305, 16
      %v2646 = vrot.slane %v2644, 5
      %v2647 = vsel %vm796, %v2642, %v2646
      %v2649 = vshrl.u32 %v2306, 16
      %v2651 = vrot.slane %v2649, 4
      %v2652 = vshll.u32 %v2306, 16
      %v2654 = vrot.slane %v2652, 5
      %v2655 = vor.u32 %v2651, %v2654
      %v2656 = vrot.slane %v2655, 4
      %v2658 = vshll.u32 %v2307, 16
      %v2660 = vrot.slane %v2658, 5
      %v2661 = vsel %vm796, %v2656, %v2660
      %v2662 = vshrl.u32 %v2307, 16
      %v2664 = vrot.slane %v2662, 4
      %v2665 = vor.u32 %v2664, %v2660
      %v2666 = vrot.slane %v2665, 4
      %v2668 = vshll.u32 %v2308, 16
      %v2670 = vrot.slane %v2668, 5
      %v2671 = vsel %vm796, %v2666, %v2670
      %v2673 = vshrl.u32 %v2309, 16
      %v2675 = vrot.slane %v2673, 4
      %v2676 = vshll.u32 %v2309, 16
      %v2678 = vrot.slane %v2676, 5
      %v2679 = vor.u32 %v2675, %v2678
      %v2680 = vrot.slane %v2679, 4
      %v2682 = vshll.u32 %v2310, 16
      %v2684 = vrot.slane %v2682, 5
      %v2685 = vsel %vm796, %v2680, %v2684
      %v2686 = vshrl.u32 %v2310, 16
      %v2688 = vrot.slane %v2686, 4
      %v2689 = vor.u32 %v2688, %v2684
      %v2690 = vrot.slane %v2689, 4
      %v2692 = vshll.u32 %v2311, 16
      %v2694 = vrot.slane %v2692, 5
      %v2695 = vsel %vm796, %v2690, %v2694
      %s2696 = scalar_lea.vmem %s1, 8
      %v2697 = vld [vmem:[%s2696] sm:$0x3]
      %v2698 = vunpack.c.l.b16 %v2325
      %v2699 = vunpack.c.l.b16 %v2335
      %v2700 = vunpack.c.l.b16 %v2349
      %v2701 = vunpack.c.l.b16 %v2359
      %v2702 = vunpack.c.l.b16 %v2373
      %v2703 = vunpack.c.l.b16 %v2383
      %v2704 = vunpack.c.l.b16 %v2397
      %v2705 = vunpack.c.l.b16 %v2407
      %v2706 = vunpack.c.l.b16 %v2421
      %v2707 = vunpack.c.l.b16 %v2431
      %v2708 = vunpack.c.l.b16 %v2445
      %v2709 = vunpack.c.l.b16 %v2455
      %v2710 = vunpack.c.l.b16 %v2469
      %v2711 = vunpack.c.l.b16 %v2479
      %v2712 = vunpack.c.l.b16 %v2493
      %v2713 = vunpack.c.l.b16 %v2503
      %v2714 = vunpack.c.l.b16 %v2517
      %v2715 = vunpack.c.l.b16 %v2527
      %v2716 = vunpack.c.l.b16 %v2541
      %v2717 = vunpack.c.l.b16 %v2551
      %v2718 = vunpack.c.l.b16 %v2565
      %v2719 = vunpack.c.l.b16 %v2575
      %v2720 = vunpack.c.l.b16 %v2589
      %v2721 = vunpack.c.l.b16 %v2599
      %v2722 = vunpack.c.l.b16 %v2613
      %v2723 = vunpack.c.l.b16 %v2623
      %v2724 = vunpack.c.l.b16 %v2637
      %v2725 = vunpack.c.l.b16 %v2647
      %v2726 = vunpack.c.l.b16 %v2661
      %v2727 = vunpack.c.l.b16 %v2671
      %v2728 = vunpack.c.l.b16 %v2685
      %v2729 = vunpack.c.l.b16 %v2695
      %v2730 = vpack.c.b16 %v2699, %v2698
      %v2731 = vpack.c.b16 %v2701, %v2700
      %v2732 = vpack.c.b16 %v2703, %v2702
      %v2733 = vpack.c.b16 %v2705, %v2704
      %v2734 = vpack.c.b16 %v2707, %v2706
      %v2735 = vpack.c.b16 %v2709, %v2708
      %v2736 = vpack.c.b16 %v2711, %v2710
      %v2737 = vpack.c.b16 %v2713, %v2712
      %v2738 = vpack.c.b16 %v2715, %v2714
      %v2739 = vpack.c.b16 %v2717, %v2716
      %v2740 = vpack.c.b16 %v2719, %v2718
      %v2741 = vpack.c.b16 %v2721, %v2720
      %v2742 = vpack.c.b16 %v2723, %v2722
      %v2743 = vpack.c.b16 %v2725, %v2724
      %v2744 = vpack.c.b16 %v2727, %v2726
      %v2745 = vpack.c.b16 %v2729, %v2728
      %v2747 = vsel %vm1231, %v2730, 0
      %v2750 = vsel %vm1231, %v2731, 0
      %v2753 = vsel %vm1231, %v2732, 0
      %v2756 = vsel %vm1231, %v2733, 0
      %v2759 = vsel %vm1231, %v2734, 0
      %v2762 = vsel %vm1231, %v2735, 0
      %v2765 = vsel %vm1231, %v2736, 0
      %v2768 = vsel %vm1231, %v2737, 0
      %v2771 = vsel %vm1231, %v2738, 0
      %v2774 = vsel %vm1231, %v2739, 0
      %v2777 = vsel %vm1231, %v2740, 0
      %v2780 = vsel %vm1231, %v2741, 0
      %v2783 = vsel %vm1231, %v2742, 0
      %v2786 = vsel %vm1231, %v2743, 0
      %v2789 = vsel %vm1231, %v2744, 0
      %v2792 = vsel %vm1231, %v2745, 0
      %v2795 = vsel %vm1280, %v2697, 0
      %2797 = vmatpush.bf16.msra.mxu0 0
      %2798 = vmatpush.bf16.msra.mxu0 0
      %2799 = vmatpush.bf16.msra.mxu0 0
      %2800 = vmatpush.bf16.msra.mxu0 0
      %2801 = vmatpush.bf16.msra.mxu0 0
      %2802 = vmatpush.bf16.msra.mxu0 0
      %2803 = vmatpush.bf16.msra.mxu0 0
      %2804 = vmatpush.bf16.msra.mxu0 %v2795
      %2805 = vmatmul.bf16.gmra.mxu0 %v2747
      %v2806 = vpop.f32.mrf.mxu0
      %v2807 = vadd.f32 0.0, %v2806
      %v2808 = vpop.f32.mrf.mxu0
      %v2809 = vadd.f32 0.0, %v2808
      %2810 = vmatmul.bf16.gmra.mxu0 %v2750
      %v2811 = vpop.f32.mrf.mxu0
      %v2812 = vadd.f32 0.0, %v2811
      %v2813 = vpop.f32.mrf.mxu0
      %v2814 = vadd.f32 0.0, %v2813
      %2815 = vmatmul.bf16.gmra.mxu0 %v2753
      %v2816 = vpop.f32.mrf.mxu0
      %v2817 = vadd.f32 0.0, %v2816
      %v2818 = vpop.f32.mrf.mxu0
      %v2819 = vadd.f32 0.0, %v2818
      %2820 = vmatmul.bf16.gmra.mxu0 %v2756
      %v2821 = vpop.f32.mrf.mxu0
      %v2822 = vadd.f32 0.0, %v2821
      %v2823 = vpop.f32.mrf.mxu0
      %v2824 = vadd.f32 0.0, %v2823
      %2825 = vmatmul.bf16.gmra.mxu0 %v2759
      %v2826 = vpop.f32.mrf.mxu0
      %v2827 = vadd.f32 0.0, %v2826
      %v2828 = vpop.f32.mrf.mxu0
      %v2829 = vadd.f32 0.0, %v2828
      %2830 = vmatmul.bf16.gmra.mxu0 %v2762
      %v2831 = vpop.f32.mrf.mxu0
      %v2832 = vadd.f32 0.0, %v2831
      %v2833 = vpop.f32.mrf.mxu0
      %v2834 = vadd.f32 0.0, %v2833
      %2835 = vmatmul.bf16.gmra.mxu0 %v2765
      %v2836 = vpop.f32.mrf.mxu0
      %v2837 = vadd.f32 0.0, %v2836
      %v2838 = vpop.f32.mrf.mxu0
      %v2839 = vadd.f32 0.0, %v2838
      %2840 = vmatmul.bf16.gmra.mxu0 %v2768
      %v2841 = vpop.f32.mrf.mxu0
      %v2842 = vadd.f32 0.0, %v2841
      %v2843 = vpop.f32.mrf.mxu0
      %v2844 = vadd.f32 0.0, %v2843
      %2845 = vmatmul.bf16.gmra.mxu0 %v2771
      %v2846 = vpop.f32.mrf.mxu0
      %v2847 = vadd.f32 0.0, %v2846
      %v2848 = vpop.f32.mrf.mxu0
      %v2849 = vadd.f32 0.0, %v2848
      %2850 = vmatmul.bf16.gmra.mxu0 %v2774
      %v2851 = vpop.f32.mrf.mxu0
      %v2852 = vadd.f32 0.0, %v2851
      %v2853 = vpop.f32.mrf.mxu0
      %v2854 = vadd.f32 0.0, %v2853
      %2855 = vmatmul.bf16.gmra.mxu0 %v2777
      %v2856 = vpop.f32.mrf.mxu0
      %v2857 = vadd.f32 0.0, %v2856
      %v2858 = vpop.f32.mrf.mxu0
      %v2859 = vadd.f32 0.0, %v2858
      %2860 = vmatmul.bf16.gmra.mxu0 %v2780
      %v2861 = vpop.f32.mrf.mxu0
      %v2862 = vadd.f32 0.0, %v2861
      %v2863 = vpop.f32.mrf.mxu0
      %v2864 = vadd.f32 0.0, %v2863
      %2865 = vmatmul.bf16.gmra.mxu0 %v2783
      %v2866 = vpop.f32.mrf.mxu0
      %v2867 = vadd.f32 0.0, %v2866
      %v2868 = vpop.f32.mrf.mxu0
      %v2869 = vadd.f32 0.0, %v2868
      %2870 = vmatmul.bf16.gmra.mxu0 %v2786
      %v2871 = vpop.f32.mrf.mxu0
      %v2872 = vadd.f32 0.0, %v2871
      %v2873 = vpop.f32.mrf.mxu0
      %v2874 = vadd.f32 0.0, %v2873
      %2875 = vmatmul.bf16.gmra.mxu0 %v2789
      %v2876 = vpop.f32.mrf.mxu0
      %v2877 = vadd.f32 0.0, %v2876
      %v2878 = vpop.f32.mrf.mxu0
      %v2879 = vadd.f32 0.0, %v2878
      %2880 = vmatmul.bf16.gmra.mxu0 %v2792
      %v2881 = vpop.f32.mrf.mxu0
      %v2882 = vadd.f32 0.0, %v2881
      %v2883 = vpop.f32.mrf.mxu0
      %v2884 = vadd.f32 0.0, %v2883
      %2885 = vdwg.mxu0
      %v2886 = vadd.f32 %v2232, %v2807
      %v2887 = vadd.f32 %v2233, %v2809
      %v2888 = vadd.f32 %v2234, %v2812
      %v2889 = vadd.f32 %v2235, %v2814
      %v2890 = vadd.f32 %v2236, %v2817
      %v2891 = vadd.f32 %v2237, %v2819
      %v2892 = vadd.f32 %v2238, %v2822
      %v2893 = vadd.f32 %v2239, %v2824
      %v2894 = vadd.f32 %v2240, %v2827
      %v2895 = vadd.f32 %v2241, %v2829
      %v2896 = vadd.f32 %v2242, %v2832
      %v2897 = vadd.f32 %v2243, %v2834
      %v2898 = vadd.f32 %v2244, %v2837
      %v2899 = vadd.f32 %v2245, %v2839
      %v2900 = vadd.f32 %v2246, %v2842
      %v2901 = vadd.f32 %v2247, %v2844
      %v2902 = vadd.f32 %v2248, %v2847
      %v2903 = vadd.f32 %v2249, %v2849
      %v2904 = vadd.f32 %v2250, %v2852
      %v2905 = vadd.f32 %v2251, %v2854
      %v2906 = vadd.f32 %v2252, %v2857
      %v2907 = vadd.f32 %v2253, %v2859
      %v2908 = vadd.f32 %v2254, %v2862
      %v2909 = vadd.f32 %v2255, %v2864
      %v2910 = vadd.f32 %v2256, %v2867
      %v2911 = vadd.f32 %v2257, %v2869
      %v2912 = vadd.f32 %v2258, %v2872
      %v2913 = vadd.f32 %v2259, %v2874
      %v2914 = vadd.f32 %v2260, %v2877
      %v2915 = vadd.f32 %v2261, %v2879
      %v2916 = vadd.f32 %v2262, %v2882
      %v2917 = vadd.f32 %v2263, %v2884
      %v2918 = vld [vmem:[%s627] sm:$0xe]
      %v2919 = vld [vmem:[%s627 + $0xc] sm:$0xe]
      %v2920 = vld [vmem:[%s627 + $0x18] sm:$0xe]
      %v2921 = vld [vmem:[%s627 + $0x24] sm:$0xe]
      %v2922 = vld [vmem:[%s627 + $0x30] sm:$0xe]
      %v2923 = vld [vmem:[%s627 + $0x3c] sm:$0xe]
      %v2924 = vld [vmem:[%s627 + $0x48] sm:$0xe]
      %v2925 = vld [vmem:[%s627 + $0x54] sm:$0xe]
      %v2926 = vld [vmem:[%s627 + $0x60] sm:$0xe]
      %v2927 = vld [vmem:[%s627 + $0x6c] sm:$0xe]
      %v2928 = vld [vmem:[%s627 + $0x78] sm:$0xe]
      %v2929 = vld [vmem:[%s627 + $0x84] sm:$0xe]
      %v2930 = vld [vmem:[%s627 + $0x90] sm:$0xe]
      %v2931 = vld [vmem:[%s627 + $0x9c] sm:$0xe]
      %v2932 = vld [vmem:[%s627 + $0xa8] sm:$0xe]
      %v2933 = vld [vmem:[%s627 + $0xb4] sm:$0xe]
      %v2982 = vrot.slane %v2918, 5
      %v2983 = vrot.slane %v2982, 4
      %v2984 = vrot.slane %v2265, 5
      %v2985 = vsel %vm1643, %v2983, %v2984
      %v2986 = vrot.slane %v2984, 4
      %v2987 = vrot.slane %v2266, 5
      %v2988 = vsel %vm1643, %v2986, %v2987
      %v2989 = vrot.slane %v2919, 5
      %v2990 = vrot.slane %v2989, 4
      %v2991 = vrot.slane %v2268, 5
      %v2992 = vsel %vm1643, %v2990, %v2991
      %v2993 = vrot.slane %v2991, 4
      %v2994 = vrot.slane %v2269, 5
      %v2995 = vsel %vm1643, %v2993, %v2994
      %v2996 = vrot.slane %v2920, 5
      %v2997 = vrot.slane %v2996, 4
      %v2998 = vrot.slane %v2271, 5
      %v2999 = vsel %vm1643, %v2997, %v2998
      %v3000 = vrot.slane %v2998, 4
      %v3001 = vrot.slane %v2272, 5
      %v3002 = vsel %vm1643, %v3000, %v3001
      %v3003 = vrot.slane %v2921, 5
      %v3004 = vrot.slane %v3003, 4
      %v3005 = vrot.slane %v2274, 5
      %v3006 = vsel %vm1643, %v3004, %v3005
      %v3007 = vrot.slane %v3005, 4
      %v3008 = vrot.slane %v2275, 5
      %v3009 = vsel %vm1643, %v3007, %v3008
      %v3010 = vrot.slane %v2922, 5
      %v3011 = vrot.slane %v3010, 4
      %v3012 = vrot.slane %v2277, 5
      %v3013 = vsel %vm1643, %v3011, %v3012
      %v3014 = vrot.slane %v3012, 4
      %v3015 = vrot.slane %v2278, 5
      %v3016 = vsel %vm1643, %v3014, %v3015
      %v3017 = vrot.slane %v2923, 5
      %v3018 = vrot.slane %v3017, 4
      %v3019 = vrot.slane %v2280, 5
      %v3020 = vsel %vm1643, %v3018, %v3019
      %v3021 = vrot.slane %v3019, 4
      %v3022 = vrot.slane %v2281, 5
      %v3023 = vsel %vm1643, %v3021, %v3022
      %v3024 = vrot.slane %v2924, 5
      %v3025 = vrot.slane %v3024, 4
      %v3026 = vrot.slane %v2283, 5
      %v3027 = vsel %vm1643, %v3025, %v3026
      %v3028 = vrot.slane %v3026, 4
      %v3029 = vrot.slane %v2284, 5
      %v3030 = vsel %vm1643, %v3028, %v3029
      %v3031 = vrot.slane %v2925, 5
      %v3032 = vrot.slane %v3031, 4
      %v3033 = vrot.slane %v2286, 5
      %v3034 = vsel %vm1643, %v3032, %v3033
      %v3035 = vrot.slane %v3033, 4
      %v3036 = vrot.slane %v2287, 5
      %v3037 = vsel %vm1643, %v3035, %v3036
      %v3038 = vrot.slane %v2926, 5
      %v3039 = vrot.slane %v3038, 4
      %v3040 = vrot.slane %v2289, 5
      %v3041 = vsel %vm1643, %v3039, %v3040
      %v3042 = vrot.slane %v3040, 4
      %v3043 = vrot.slane %v2290, 5
      %v3044 = vsel %vm1643, %v3042, %v3043
      %v3045 = vrot.slane %v2927, 5
      %v3046 = vrot.slane %v3045, 4
      %v3047 = vrot.slane %v2292, 5
      %v3048 = vsel %vm1643, %v3046, %v3047
      %v3049 = vrot.slane %v3047, 4
      %v3050 = vrot.slane %v2293, 5
      %v3051 = vsel %vm1643, %v3049, %v3050
      %v3052 = vrot.slane %v2928, 5
      %v3053 = vrot.slane %v3052, 4
      %v3054 = vrot.slane %v2295, 5
      %v3055 = vsel %vm1643, %v3053, %v3054
      %v3056 = vrot.slane %v3054, 4
      %v3057 = vrot.slane %v2296, 5
      %v3058 = vsel %vm1643, %v3056, %v3057
      %v3059 = vrot.slane %v2929, 5
      %v3060 = vrot.slane %v3059, 4
      %v3061 = vrot.slane %v2298, 5
      %v3062 = vsel %vm1643, %v3060, %v3061
      %v3063 = vrot.slane %v3061, 4
      %v3064 = vrot.slane %v2299, 5
      %v3065 = vsel %vm1643, %v3063, %v3064
      %v3066 = vrot.slane %v2930, 5
      %v3067 = vrot.slane %v3066, 4
      %v3068 = vrot.slane %v2301, 5
      %v3069 = vsel %vm1643, %v3067, %v3068
      %v3070 = vrot.slane %v3068, 4
      %v3071 = vrot.slane %v2302, 5
      %v3072 = vsel %vm1643, %v3070, %v3071
      %v3073 = vrot.slane %v2931, 5
      %v3074 = vrot.slane %v3073, 4
      %v3075 = vrot.slane %v2304, 5
      %v3076 = vsel %vm1643, %v3074, %v3075
      %v3077 = vrot.slane %v3075, 4
      %v3078 = vrot.slane %v2305, 5
      %v3079 = vsel %vm1643, %v3077, %v3078
      %v3080 = vrot.slane %v2932, 5
      %v3081 = vrot.slane %v3080, 4
      %v3082 = vrot.slane %v2307, 5
      %v3083 = vsel %vm1643, %v3081, %v3082
      %v3084 = vrot.slane %v3082, 4
      %v3085 = vrot.slane %v2308, 5
      %v3086 = vsel %vm1643, %v3084, %v3085
      %v3087 = vrot.slane %v2933, 5
      %v3088 = vrot.slane %v3087, 4
      %v3089 = vrot.slane %v2310, 5
      %v3090 = vsel %vm1643, %v3088, %v3089
      %v3091 = vrot.slane %v3089, 4
      %v3092 = vrot.slane %v2311, 5
      %v3093 = vsel %vm1643, %v3091, %v3092
      %s3094 = scalar_lea.vmem %s1, 10
      %v3095 = vld [vmem:[%s3094] sm:$0x3]
      %v3096 = vunpack.c.l.b16 %v2985
      %v3097 = vunpack.c.l.b16 %v2988
      %v3098 = vunpack.c.l.b16 %v2992
      %v3099 = vunpack.c.l.b16 %v2995
      %v3100 = vunpack.c.l.b16 %v2999
      %v3101 = vunpack.c.l.b16 %v3002
      %v3102 = vunpack.c.l.b16 %v3006
      %v3103 = vunpack.c.l.b16 %v3009
      %v3104 = vunpack.c.l.b16 %v3013
      %v3105 = vunpack.c.l.b16 %v3016
      %v3106 = vunpack.c.l.b16 %v3020
      %v3107 = vunpack.c.l.b16 %v3023
      %v3108 = vunpack.c.l.b16 %v3027
      %v3109 = vunpack.c.l.b16 %v3030
      %v3110 = vunpack.c.l.b16 %v3034
      %v3111 = vunpack.c.l.b16 %v3037
      %v3112 = vunpack.c.l.b16 %v3041
      %v3113 = vunpack.c.l.b16 %v3044
      %v3114 = vunpack.c.l.b16 %v3048
      %v3115 = vunpack.c.l.b16 %v3051
      %v3116 = vunpack.c.l.b16 %v3055
      %v3117 = vunpack.c.l.b16 %v3058
      %v3118 = vunpack.c.l.b16 %v3062
      %v3119 = vunpack.c.l.b16 %v3065
      %v3120 = vunpack.c.l.b16 %v3069
      %v3121 = vunpack.c.l.b16 %v3072
      %v3122 = vunpack.c.l.b16 %v3076
      %v3123 = vunpack.c.l.b16 %v3079
      %v3124 = vunpack.c.l.b16 %v3083
      %v3125 = vunpack.c.l.b16 %v3086
      %v3126 = vunpack.c.l.b16 %v3090
      %v3127 = vunpack.c.l.b16 %v3093
      %v3128 = vpack.c.b16 %v3097, %v3096
      %v3129 = vpack.c.b16 %v3099, %v3098
      %v3130 = vpack.c.b16 %v3101, %v3100
      %v3131 = vpack.c.b16 %v3103, %v3102
      %v3132 = vpack.c.b16 %v3105, %v3104
      %v3133 = vpack.c.b16 %v3107, %v3106
      %v3134 = vpack.c.b16 %v3109, %v3108
      %v3135 = vpack.c.b16 %v3111, %v3110
      %v3136 = vpack.c.b16 %v3113, %v3112
      %v3137 = vpack.c.b16 %v3115, %v3114
      %v3138 = vpack.c.b16 %v3117, %v3116
      %v3139 = vpack.c.b16 %v3119, %v3118
      %v3140 = vpack.c.b16 %v3121, %v3120
      %v3141 = vpack.c.b16 %v3123, %v3122
      %v3142 = vpack.c.b16 %v3125, %v3124
      %v3143 = vpack.c.b16 %v3127, %v3126
      %v3145 = vsel %vm1231, %v3128, 0
      %v3148 = vsel %vm1231, %v3129, 0
      %v3151 = vsel %vm1231, %v3130, 0
      %v3154 = vsel %vm1231, %v3131, 0
      %v3157 = vsel %vm1231, %v3132, 0
      %v3160 = vsel %vm1231, %v3133, 0
      %v3163 = vsel %vm1231, %v3134, 0
      %v3166 = vsel %vm1231, %v3135, 0
      %v3169 = vsel %vm1231, %v3136, 0
      %v3172 = vsel %vm1231, %v3137, 0
      %v3175 = vsel %vm1231, %v3138, 0
      %v3178 = vsel %vm1231, %v3139, 0
      %v3181 = vsel %vm1231, %v3140, 0
      %v3184 = vsel %vm1231, %v3141, 0
      %v3187 = vsel %vm1231, %v3142, 0
      %v3190 = vsel %vm1231, %v3143, 0
      %v3193 = vsel %vm1280, %v3095, 0
      %3195 = vmatpush.bf16.msra.mxu0 0
      %3196 = vmatpush.bf16.msra.mxu0 0
      %3197 = vmatpush.bf16.msra.mxu0 0
      %3198 = vmatpush.bf16.msra.mxu0 0
      %3199 = vmatpush.bf16.msra.mxu0 0
      %3200 = vmatpush.bf16.msra.mxu0 0
      %3201 = vmatpush.bf16.msra.mxu0 0
      %3202 = vmatpush.bf16.msra.mxu0 %v3193
      %3203 = vmatmul.bf16.gmra.mxu0 %v3145
      %v3204 = vpop.f32.mrf.mxu0
      %v3205 = vadd.f32 0.0, %v3204
      %v3206 = vpop.f32.mrf.mxu0
      %v3207 = vadd.f32 0.0, %v3206
      %3208 = vmatmul.bf16.gmra.mxu0 %v3148
      %v3209 = vpop.f32.mrf.mxu0
      %v3210 = vadd.f32 0.0, %v3209
      %v3211 = vpop.f32.mrf.mxu0
      %v3212 = vadd.f32 0.0, %v3211
      %3213 = vmatmul.bf16.gmra.mxu0 %v3151
      %v3214 = vpop.f32.mrf.mxu0
      %v3215 = vadd.f32 0.0, %v3214
      %v3216 = vpop.f32.mrf.mxu0
      %v3217 = vadd.f32 0.0, %v3216
      %3218 = vmatmul.bf16.gmra.mxu0 %v3154
      %v3219 = vpop.f32.mrf.mxu0
      %v3220 = vadd.f32 0.0, %v3219
      %v3221 = vpop.f32.mrf.mxu0
      %v3222 = vadd.f32 0.0, %v3221
      %3223 = vmatmul.bf16.gmra.mxu0 %v3157
      %v3224 = vpop.f32.mrf.mxu0
      %v3225 = vadd.f32 0.0, %v3224
      %v3226 = vpop.f32.mrf.mxu0
      %v3227 = vadd.f32 0.0, %v3226
      %3228 = vmatmul.bf16.gmra.mxu0 %v3160
      %v3229 = vpop.f32.mrf.mxu0
      %v3230 = vadd.f32 0.0, %v3229
      %v3231 = vpop.f32.mrf.mxu0
      %v3232 = vadd.f32 0.0, %v3231
      %3233 = vmatmul.bf16.gmra.mxu0 %v3163
      %v3234 = vpop.f32.mrf.mxu0
      %v3235 = vadd.f32 0.0, %v3234
      %v3236 = vpop.f32.mrf.mxu0
      %v3237 = vadd.f32 0.0, %v3236
      %3238 = vmatmul.bf16.gmra.mxu0 %v3166
      %v3239 = vpop.f32.mrf.mxu0
      %v3240 = vadd.f32 0.0, %v3239
      %v3241 = vpop.f32.mrf.mxu0
      %v3242 = vadd.f32 0.0, %v3241
      %3243 = vmatmul.bf16.gmra.mxu0 %v3169
      %v3244 = vpop.f32.mrf.mxu0
      %v3245 = vadd.f32 0.0, %v3244
      %v3246 = vpop.f32.mrf.mxu0
      %v3247 = vadd.f32 0.0, %v3246
      %3248 = vmatmul.bf16.gmra.mxu0 %v3172
      %v3249 = vpop.f32.mrf.mxu0
      %v3250 = vadd.f32 0.0, %v3249
      %v3251 = vpop.f32.mrf.mxu0
      %v3252 = vadd.f32 0.0, %v3251
      %3253 = vmatmul.bf16.gmra.mxu0 %v3175
      %v3254 = vpop.f32.mrf.mxu0
      %v3255 = vadd.f32 0.0, %v3254
      %v3256 = vpop.f32.mrf.mxu0
      %v3257 = vadd.f32 0.0, %v3256
      %3258 = vmatmul.bf16.gmra.mxu0 %v3178
      %v3259 = vpop.f32.mrf.mxu0
      %v3260 = vadd.f32 0.0, %v3259
      %v3261 = vpop.f32.mrf.mxu0
      %v3262 = vadd.f32 0.0, %v3261
      %3263 = vmatmul.bf16.gmra.mxu0 %v3181
      %v3264 = vpop.f32.mrf.mxu0
      %v3265 = vadd.f32 0.0, %v3264
      %v3266 = vpop.f32.mrf.mxu0
      %v3267 = vadd.f32 0.0, %v3266
      %3268 = vmatmul.bf16.gmra.mxu0 %v3184
      %v3269 = vpop.f32.mrf.mxu0
      %v3270 = vadd.f32 0.0, %v3269
      %v3271 = vpop.f32.mrf.mxu0
      %v3272 = vadd.f32 0.0, %v3271
      %3273 = vmatmul.bf16.gmra.mxu0 %v3187
      %v3274 = vpop.f32.mrf.mxu0
      %v3275 = vadd.f32 0.0, %v3274
      %v3276 = vpop.f32.mrf.mxu0
      %v3277 = vadd.f32 0.0, %v3276
      %3278 = vmatmul.bf16.gmra.mxu0 %v3190
      %v3279 = vpop.f32.mrf.mxu0
      %v3280 = vadd.f32 0.0, %v3279
      %v3281 = vpop.f32.mrf.mxu0
      %v3282 = vadd.f32 0.0, %v3281
      %3283 = vdwg.mxu0
      %v3284 = vadd.f32 %v2886, %v3205
      %v3285 = vadd.f32 %v2887, %v3207
      %v3286 = vadd.f32 %v2888, %v3210
      %v3287 = vadd.f32 %v2889, %v3212
      %v3288 = vadd.f32 %v2890, %v3215
      %v3289 = vadd.f32 %v2891, %v3217
      %v3290 = vadd.f32 %v2892, %v3220
      %v3291 = vadd.f32 %v2893, %v3222
      %v3292 = vadd.f32 %v2894, %v3225
      %v3293 = vadd.f32 %v2895, %v3227
      %v3294 = vadd.f32 %v2896, %v3230
      %v3295 = vadd.f32 %v2897, %v3232
      %v3296 = vadd.f32 %v2898, %v3235
      %v3297 = vadd.f32 %v2899, %v3237
      %v3298 = vadd.f32 %v2900, %v3240
      %v3299 = vadd.f32 %v2901, %v3242
      %v3300 = vadd.f32 %v2902, %v3245
      %v3301 = vadd.f32 %v2903, %v3247
      %v3302 = vadd.f32 %v2904, %v3250
      %v3303 = vadd.f32 %v2905, %v3252
      %v3304 = vadd.f32 %v2906, %v3255
      %v3305 = vadd.f32 %v2907, %v3257
      %v3306 = vadd.f32 %v2908, %v3260
      %v3307 = vadd.f32 %v2909, %v3262
      %v3308 = vadd.f32 %v2910, %v3265
      %v3309 = vadd.f32 %v2911, %v3267
      %v3310 = vadd.f32 %v2912, %v3270
      %v3311 = vadd.f32 %v2913, %v3272
      %v3312 = vadd.f32 %v2914, %v3275
      %v3313 = vadd.f32 %v2915, %v3277
      %v3314 = vadd.f32 %v2916, %v3280
      %v3315 = vadd.f32 %v2917, %v3282
      %s3316 = scalar_lea.vmem [#allocation2], 24
      %v3317 = vld [vmem:[%s3316] sm:$0xf]
      %v3318 = vld [vmem:[%s3316 + $0x4] sm:$0xf]
      %v3319 = vld [vmem:[%s3316 + $0xc] sm:$0xf]
      %v3320 = vld [vmem:[%s3316 + $0x10] sm:$0xf]
      %v3321 = vld [vmem:[%s3316 + $0x18] sm:$0xf]
      %v3322 = vld [vmem:[%s3316 + $0x1c] sm:$0xf]
      %v3323 = vld [vmem:[%s3316 + $0x24] sm:$0xf]
      %v3324 = vld [vmem:[%s3316 + $0x28] sm:$0xf]
      %v3325 = vld [vmem:[%s3316 + $0x30] sm:$0xf]
      %v3326 = vld [vmem:[%s3316 + $0x34] sm:$0xf]
      %v3327 = vld [vmem:[%s3316 + $0x3c] sm:$0xf]
      %v3328 = vld [vmem:[%s3316 + $0x40] sm:$0xf]
      %v3329 = vld [vmem:[%s3316 + $0x48] sm:$0xf]
      %v3330 = vld [vmem:[%s3316 + $0x4c] sm:$0xf]
      %v3331 = vld [vmem:[%s3316 + $0x54] sm:$0xf]
      %v3332 = vld [vmem:[%s3316 + $0x58] sm:$0xf]
      %v3333 = vld [vmem:[%s3316 + $0x60] sm:$0xf]
      %v3334 = vld [vmem:[%s3316 + $0x64] sm:$0xf]
      %v3335 = vld [vmem:[%s3316 + $0x6c] sm:$0xf]
      %v3336 = vld [vmem:[%s3316 + $0x70] sm:$0xf]
      %v3337 = vld [vmem:[%s3316 + $0x78] sm:$0xf]
      %v3338 = vld [vmem:[%s3316 + $0x7c] sm:$0xf]
      %v3339 = vld [vmem:[%s3316 + $0x84] sm:$0xf]
      %v3340 = vld [vmem:[%s3316 + $0x88] sm:$0xf]
      %v3341 = vld [vmem:[%s3316 + $0x90] sm:$0xf]
      %v3342 = vld [vmem:[%s3316 + $0x94] sm:$0xf]
      %v3343 = vld [vmem:[%s3316 + $0x9c] sm:$0xf]
      %v3344 = vld [vmem:[%s3316 + $0xa0] sm:$0xf]
      %v3345 = vld [vmem:[%s3316 + $0xa8] sm:$0xf]
      %v3346 = vld [vmem:[%s3316 + $0xac] sm:$0xf]
      %v3347 = vld [vmem:[%s3316 + $0xb4] sm:$0xf]
      %v3348 = vld [vmem:[%s3316 + $0xb8] sm:$0xf]
      %s3349 = scalar_lea.vmem %s1, 12
      %v3350 = vld [vmem:[%s3349] sm:$0x3]
      %v3383 = vunpack.c.l.b16 %v3317
      %v3384 = vunpack.c.l.b16 %v3318
      %v3385 = vunpack.c.l.b16 %v3319
      %v3386 = vunpack.c.l.b16 %v3320
      %v3387 = vunpack.c.l.b16 %v3321
      %v3388 = vunpack.c.l.b16 %v3322
      %v3389 = vunpack.c.l.b16 %v3323
      %v3390 = vunpack.c.l.b16 %v3324
      %v3391 = vunpack.c.l.b16 %v3325
      %v3392 = vunpack.c.l.b16 %v3326
      %v3393 = vunpack.c.l.b16 %v3327
      %v3394 = vunpack.c.l.b16 %v3328
      %v3395 = vunpack.c.l.b16 %v3329
      %v3396 = vunpack.c.l.b16 %v3330
      %v3397 = vunpack.c.l.b16 %v3331
      %v3398 = vunpack.c.l.b16 %v3332
      %v3399 = vunpack.c.l.b16 %v3333
      %v3400 = vunpack.c.l.b16 %v3334
      %v3401 = vunpack.c.l.b16 %v3335
      %v3402 = vunpack.c.l.b16 %v3336
      %v3403 = vunpack.c.l.b16 %v3337
      %v3404 = vunpack.c.l.b16 %v3338
      %v3405 = vunpack.c.l.b16 %v3339
      %v3406 = vunpack.c.l.b16 %v3340
      %v3407 = vunpack.c.l.b16 %v3341
      %v3408 = vunpack.c.l.b16 %v3342
      %v3409 = vunpack.c.l.b16 %v3343
      %v3410 = vunpack.c.l.b16 %v3344
      %v3411 = vunpack.c.l.b16 %v3345
      %v3412 = vunpack.c.l.b16 %v3346
      %v3413 = vunpack.c.l.b16 %v3347
      %v3414 = vunpack.c.l.b16 %v3348
      %v3415 = vpack.c.b16 %v3384, %v3383
      %v3416 = vpack.c.b16 %v3386, %v3385
      %v3417 = vpack.c.b16 %v3388, %v3387
      %v3418 = vpack.c.b16 %v3390, %v3389
      %v3419 = vpack.c.b16 %v3392, %v3391
      %v3420 = vpack.c.b16 %v3394, %v3393
      %v3421 = vpack.c.b16 %v3396, %v3395
      %v3422 = vpack.c.b16 %v3398, %v3397
      %v3423 = vpack.c.b16 %v3400, %v3399
      %v3424 = vpack.c.b16 %v3402, %v3401
      %v3425 = vpack.c.b16 %v3404, %v3403
      %v3426 = vpack.c.b16 %v3406, %v3405
      %v3427 = vpack.c.b16 %v3408, %v3407
      %v3428 = vpack.c.b16 %v3410, %v3409
      %v3429 = vpack.c.b16 %v3412, %v3411
      %v3430 = vpack.c.b16 %v3414, %v3413
      %v3432 = vsel %vm1231, %v3415, 0
      %v3435 = vsel %vm1231, %v3416, 0
      %v3438 = vsel %vm1231, %v3417, 0
      %v3441 = vsel %vm1231, %v3418, 0
      %v3444 = vsel %vm1231, %v3419, 0
      %v3447 = vsel %vm1231, %v3420, 0
      %v3450 = vsel %vm1231, %v3421, 0
      %v3453 = vsel %vm1231, %v3422, 0
      %v3456 = vsel %vm1231, %v3423, 0
      %v3459 = vsel %vm1231, %v3424, 0
      %v3462 = vsel %vm1231, %v3425, 0
      %v3465 = vsel %vm1231, %v3426, 0
      %v3468 = vsel %vm1231, %v3427, 0
      %v3471 = vsel %vm1231, %v3428, 0
      %v3474 = vsel %vm1231, %v3429, 0
      %v3477 = vsel %vm1231, %v3430, 0
      %v3480 = vsel %vm1280, %v3350, 0
      %3482 = vmatpush.bf16.msra.mxu0 0
      %3483 = vmatpush.bf16.msra.mxu0 0
      %3484 = vmatpush.bf16.msra.mxu0 0
      %3485 = vmatpush.bf16.msra.mxu0 0
      %3486 = vmatpush.bf16.msra.mxu0 0
      %3487 = vmatpush.bf16.msra.mxu0 0
      %3488 = vmatpush.bf16.msra.mxu0 0
      %3489 = vmatpush.bf16.msra.mxu0 %v3480
      %3490 = vmatmul.bf16.gmra.mxu0 %v3432
      %v3491 = vpop.f32.mrf.mxu0
      %v3492 = vadd.f32 0.0, %v3491
      %v3493 = vpop.f32.mrf.mxu0
      %v3494 = vadd.f32 0.0, %v3493
      %3495 = vmatmul.bf16.gmra.mxu0 %v3435
      %v3496 = vpop.f32.mrf.mxu0
      %v3497 = vadd.f32 0.0, %v3496
      %v3498 = vpop.f32.mrf.mxu0
      %v3499 = vadd.f32 0.0, %v3498
      %3500 = vmatmul.bf16.gmra.mxu0 %v3438
      %v3501 = vpop.f32.mrf.mxu0
      %v3502 = vadd.f32 0.0, %v3501
      %v3503 = vpop.f32.mrf.mxu0
      %v3504 = vadd.f32 0.0, %v3503
      %3505 = vmatmul.bf16.gmra.mxu0 %v3441
      %v3506 = vpop.f32.mrf.mxu0
      %v3507 = vadd.f32 0.0, %v3506
      %v3508 = vpop.f32.mrf.mxu0
      %v3509 = vadd.f32 0.0, %v3508
      %3510 = vmatmul.bf16.gmra.mxu0 %v3444
      %v3511 = vpop.f32.mrf.mxu0
      %v3512 = vadd.f32 0.0, %v3511
      %v3513 = vpop.f32.mrf.mxu0
      %v3514 = vadd.f32 0.0, %v3513
      %3515 = vmatmul.bf16.gmra.mxu0 %v3447
      %v3516 = vpop.f32.mrf.mxu0
      %v3517 = vadd.f32 0.0, %v3516
      %v3518 = vpop.f32.mrf.mxu0
      %v3519 = vadd.f32 0.0, %v3518
      %3520 = vmatmul.bf16.gmra.mxu0 %v3450
      %v3521 = vpop.f32.mrf.mxu0
      %v3522 = vadd.f32 0.0, %v3521
      %v3523 = vpop.f32.mrf.mxu0
      %v3524 = vadd.f32 0.0, %v3523
      %3525 = vmatmul.bf16.gmra.mxu0 %v3453
      %v3526 = vpop.f32.mrf.mxu0
      %v3527 = vadd.f32 0.0, %v3526
      %v3528 = vpop.f32.mrf.mxu0
      %v3529 = vadd.f32 0.0, %v3528
      %3530 = vmatmul.bf16.gmra.mxu0 %v3456
      %v3531 = vpop.f32.mrf.mxu0
      %v3532 = vadd.f32 0.0, %v3531
      %v3533 = vpop.f32.mrf.mxu0
      %v3534 = vadd.f32 0.0, %v3533
      %3535 = vmatmul.bf16.gmra.mxu0 %v3459
      %v3536 = vpop.f32.mrf.mxu0
      %v3537 = vadd.f32 0.0, %v3536
      %v3538 = vpop.f32.mrf.mxu0
      %v3539 = vadd.f32 0.0, %v3538
      %3540 = vmatmul.bf16.gmra.mxu0 %v3462
      %v3541 = vpop.f32.mrf.mxu0
      %v3542 = vadd.f32 0.0, %v3541
      %v3543 = vpop.f32.mrf.mxu0
      %v3544 = vadd.f32 0.0, %v3543
      %3545 = vmatmul.bf16.gmra.mxu0 %v3465
      %v3546 = vpop.f32.mrf.mxu0
      %v3547 = vadd.f32 0.0, %v3546
      %v3548 = vpop.f32.mrf.mxu0
      %v3549 = vadd.f32 0.0, %v3548
      %3550 = vmatmul.bf16.gmra.mxu0 %v3468
      %v3551 = vpop.f32.mrf.mxu0
      %v3552 = vadd.f32 0.0, %v3551
      %v3553 = vpop.f32.mrf.mxu0
      %v3554 = vadd.f32 0.0, %v3553
      %3555 = vmatmul.bf16.gmra.mxu0 %v3471
      %v3556 = vpop.f32.mrf.mxu0
      %v3557 = vadd.f32 0.0, %v3556
      %v3558 = vpop.f32.mrf.mxu0
      %v3559 = vadd.f32 0.0, %v3558
      %3560 = vmatmul.bf16.gmra.mxu0 %v3474
      %v3561 = vpop.f32.mrf.mxu0
      %v3562 = vadd.f32 0.0, %v3561
      %v3563 = vpop.f32.mrf.mxu0
      %v3564 = vadd.f32 0.0, %v3563
      %3565 = vmatmul.bf16.gmra.mxu0 %v3477
      %v3566 = vpop.f32.mrf.mxu0
      %v3567 = vadd.f32 0.0, %v3566
      %v3568 = vpop.f32.mrf.mxu0
      %v3569 = vadd.f32 0.0, %v3568
      %3570 = vdwg.mxu0
      %v3571 = vadd.f32 %v3284, %v3492
      %v3572 = vadd.f32 %v3285, %v3494
      %v3573 = vadd.f32 %v3286, %v3497
      %v3574 = vadd.f32 %v3287, %v3499
      %v3575 = vadd.f32 %v3288, %v3502
      %v3576 = vadd.f32 %v3289, %v3504
      %v3577 = vadd.f32 %v3290, %v3507
      %v3578 = vadd.f32 %v3291, %v3509
      %v3579 = vadd.f32 %v3292, %v3512
      %v3580 = vadd.f32 %v3293, %v3514
      %v3581 = vadd.f32 %v3294, %v3517
      %v3582 = vadd.f32 %v3295, %v3519
      %v3583 = vadd.f32 %v3296, %v3522
      %v3584 = vadd.f32 %v3297, %v3524
      %v3585 = vadd.f32 %v3298, %v3527
      %v3586 = vadd.f32 %v3299, %v3529
      %v3587 = vadd.f32 %v3300, %v3532
      %v3588 = vadd.f32 %v3301, %v3534
      %v3589 = vadd.f32 %v3302, %v3537
      %v3590 = vadd.f32 %v3303, %v3539
      %v3591 = vadd.f32 %v3304, %v3542
      %v3592 = vadd.f32 %v3305, %v3544
      %v3593 = vadd.f32 %v3306, %v3547
      %v3594 = vadd.f32 %v3307, %v3549
      %v3595 = vadd.f32 %v3308, %v3552
      %v3596 = vadd.f32 %v3309, %v3554
      %v3597 = vadd.f32 %v3310, %v3557
      %v3598 = vadd.f32 %v3311, %v3559
      %v3599 = vadd.f32 %v3312, %v3562
      %v3600 = vadd.f32 %v3313, %v3564
      %v3601 = vadd.f32 %v3314, %v3567
      %v3602 = vadd.f32 %v3315, %v3569
      %v3603 = vld [vmem:[%s3316] sm:$0xf]
      %v3604 = vld [vmem:[%s3316 + $0x4] sm:$0xf]
      %v3605 = vld [vmem:[%s3316 + $0x8] sm:$0x1]
      %v3606 = vld [vmem:[%s3316 + $0xc] sm:$0xf]
      %v3607 = vld [vmem:[%s3316 + $0x10] sm:$0xf]
      %v3608 = vld [vmem:[%s3316 + $0x14] sm:$0x1]
      %v3609 = vld [vmem:[%s3316 + $0x18] sm:$0xf]
      %v3610 = vld [vmem:[%s3316 + $0x1c] sm:$0xf]
      %v3611 = vld [vmem:[%s3316 + $0x20] sm:$0x1]
      %v3612 = vld [vmem:[%s3316 + $0x24] sm:$0xf]
      %v3613 = vld [vmem:[%s3316 + $0x28] sm:$0xf]
      %v3614 = vld [vmem:[%s3316 + $0x2c] sm:$0x1]
      %v3615 = vld [vmem:[%s3316 + $0x30] sm:$0xf]
      %v3616 = vld [vmem:[%s3316 + $0x34] sm:$0xf]
      %v3617 = vld [vmem:[%s3316 + $0x38] sm:$0x1]
      %v3618 = vld [vmem:[%s3316 + $0x3c] sm:$0xf]
      %v3619 = vld [vmem:[%s3316 + $0x40] sm:$0xf]
      %v3620 = vld [vmem:[%s3316 + $0x44] sm:$0x1]
      %v3621 = vld [vmem:[%s3316 + $0x48] sm:$0xf]
      %v3622 = vld [vmem:[%s3316 + $0x4c] sm:$0xf]
      %v3623 = vld [vmem:[%s3316 + $0x50] sm:$0x1]
      %v3624 = vld [vmem:[%s3316 + $0x54] sm:$0xf]
      %v3625 = vld [vmem:[%s3316 + $0x58] sm:$0xf]
      %v3626 = vld [vmem:[%s3316 + $0x5c] sm:$0x1]
      %v3627 = vld [vmem:[%s3316 + $0x60] sm:$0xf]
      %v3628 = vld [vmem:[%s3316 + $0x64] sm:$0xf]
      %v3629 = vld [vmem:[%s3316 + $0x68] sm:$0x1]
      %v3630 = vld [vmem:[%s3316 + $0x6c] sm:$0xf]
      %v3631 = vld [vmem:[%s3316 + $0x70] sm:$0xf]
      %v3632 = vld [vmem:[%s3316 + $0x74] sm:$0x1]
      %v3633 = vld [vmem:[%s3316 + $0x78] sm:$0xf]
      %v3634 = vld [vmem:[%s3316 + $0x7c] sm:$0xf]
      %v3635 = vld [vmem:[%s3316 + $0x80] sm:$0x1]
      %v3636 = vld [vmem:[%s3316 + $0x84] sm:$0xf]
      %v3637 = vld [vmem:[%s3316 + $0x88] sm:$0xf]
      %v3638 = vld [vmem:[%s3316 + $0x8c] sm:$0x1]
      %v3639 = vld [vmem:[%s3316 + $0x90] sm:$0xf]
      %v3640 = vld [vmem:[%s3316 + $0x94] sm:$0xf]
      %v3641 = vld [vmem:[%s3316 + $0x98] sm:$0x1]
      %v3642 = vld [vmem:[%s3316 + $0x9c] sm:$0xf]
      %v3643 = vld [vmem:[%s3316 + $0xa0] sm:$0xf]
      %v3644 = vld [vmem:[%s3316 + $0xa4] sm:$0x1]
      %v3645 = vld [vmem:[%s3316 + $0xa8] sm:$0xf]
      %v3646 = vld [vmem:[%s3316 + $0xac] sm:$0xf]
      %v3647 = vld [vmem:[%s3316 + $0xb0] sm:$0x1]
      %v3648 = vld [vmem:[%s3316 + $0xb4] sm:$0xf]
      %v3649 = vld [vmem:[%s3316 + $0xb8] sm:$0xf]
      %v3650 = vld [vmem:[%s3316 + $0xbc] sm:$0x1]
      %v3652 = vshrl.u32 %v3603, 16
      %v3654 = vrot.slane %v3652, 4
      %v3655 = vshll.u32 %v3603, 16
      %v3657 = vrot.slane %v3655, 5
      %v3658 = vor.u32 %v3654, %v3657
      %v3659 = vrot.slane %v3658, 4
      %v3661 = vshll.u32 %v3604, 16
      %v3663 = vrot.slane %v3661, 5
      %v3664 = vsel %vm796, %v3659, %v3663
      %v3665 = vshrl.u32 %v3604, 16
      %v3667 = vrot.slane %v3665, 4
      %v3668 = vor.u32 %v3667, %v3663
      %v3669 = vrot.slane %v3668, 4
      %v3671 = vshll.u32 %v3605, 16
      %v3673 = vrot.slane %v3671, 5
      %v3674 = vsel %vm796, %v3669, %v3673
      %v3676 = vshrl.u32 %v3606, 16
      %v3678 = vrot.slane %v3676, 4
      %v3679 = vshll.u32 %v3606, 16
      %v3681 = vrot.slane %v3679, 5
      %v3682 = vor.u32 %v3678, %v3681
      %v3683 = vrot.slane %v3682, 4
      %v3685 = vshll.u32 %v3607, 16
      %v3687 = vrot.slane %v3685, 5
      %v3688 = vsel %vm796, %v3683, %v3687
      %v3689 = vshrl.u32 %v3607, 16
      %v3691 = vrot.slane %v3689, 4
      %v3692 = vor.u32 %v3691, %v3687
      %v3693 = vrot.slane %v3692, 4
      %v3695 = vshll.u32 %v3608, 16
      %v3697 = vrot.slane %v3695, 5
      %v3698 = vsel %vm796, %v3693, %v3697
      %v3700 = vshrl.u32 %v3609, 16
      %v3702 = vrot.slane %v3700, 4
      %v3703 = vshll.u32 %v3609, 16
      %v3705 = vrot.slane %v3703, 5
      %v3706 = vor.u32 %v3702, %v3705
      %v3707 = vrot.slane %v3706, 4
      %v3709 = vshll.u32 %v3610, 16
      %v3711 = vrot.slane %v3709, 5
      %v3712 = vsel %vm796, %v3707, %v3711
      %v3713 = vshrl.u32 %v3610, 16
      %v3715 = vrot.slane %v3713, 4
      %v3716 = vor.u32 %v3715, %v3711
      %v3717 = vrot.slane %v3716, 4
      %v3719 = vshll.u32 %v3611, 16
      %v3721 = vrot.slane %v3719, 5
      %v3722 = vsel %vm796, %v3717, %v3721
      %v3724 = vshrl.u32 %v3612, 16
      %v3726 = vrot.slane %v3724, 4
      %v3727 = vshll.u32 %v3612, 16
      %v3729 = vrot.slane %v3727, 5
      %v3730 = vor.u32 %v3726, %v3729
      %v3731 = vrot.slane %v3730, 4
      %v3733 = vshll.u32 %v3613, 16
      %v3735 = vrot.slane %v3733, 5
      %v3736 = vsel %vm796, %v3731, %v3735
      %v3737 = vshrl.u32 %v3613, 16
      %v3739 = vrot.slane %v3737, 4
      %v3740 = vor.u32 %v3739, %v3735
      %v3741 = vrot.slane %v3740, 4
      %v3743 = vshll.u32 %v3614, 16
      %v3745 = vrot.slane %v3743, 5
      %v3746 = vsel %vm796, %v3741, %v3745
      %v3748 = vshrl.u32 %v3615, 16
      %v3750 = vrot.slane %v3748, 4
      %v3751 = vshll.u32 %v3615, 16
      %v3753 = vrot.slane %v3751, 5
      %v3754 = vor.u32 %v3750, %v3753
      %v3755 = vrot.slane %v3754, 4
      %v3757 = vshll.u32 %v3616, 16
      %v3759 = vrot.slane %v3757, 5
      %v3760 = vsel %vm796, %v3755, %v3759
      %v3761 = vshrl.u32 %v3616, 16
      %v3763 = vrot.slane %v3761, 4
      %v3764 = vor.u32 %v3763, %v3759
      %v3765 = vrot.slane %v3764, 4
      %v3767 = vshll.u32 %v3617, 16
      %v3769 = vrot.slane %v3767, 5
      %v3770 = vsel %vm796, %v3765, %v3769
      %v3772 = vshrl.u32 %v3618, 16
      %v3774 = vrot.slane %v3772, 4
      %v3775 = vshll.u32 %v3618, 16
      %v3777 = vrot.slane %v3775, 5
      %v3778 = vor.u32 %v3774, %v3777
      %v3779 = vrot.slane %v3778, 4
      %v3781 = vshll.u32 %v3619, 16
      %v3783 = vrot.slane %v3781, 5
      %v3784 = vsel %vm796, %v3779, %v3783
      %v3785 = vshrl.u32 %v3619, 16
      %v3787 = vrot.slane %v3785, 4
      %v3788 = vor.u32 %v3787, %v3783
      %v3789 = vrot.slane %v3788, 4
      %v3791 = vshll.u32 %v3620, 16
      %v3793 = vrot.slane %v3791, 5
      %v3794 = vsel %vm796, %v3789, %v3793
      %v3796 = vshrl.u32 %v3621, 16
      %v3798 = vrot.slane %v3796, 4
      %v3799 = vshll.u32 %v3621, 16
      %v3801 = vrot.slane %v3799, 5
      %v3802 = vor.u32 %v3798, %v3801
      %v3803 = vrot.slane %v3802, 4
      %v3805 = vshll.u32 %v3622, 16
      %v3807 = vrot.slane %v3805, 5
      %v3808 = vsel %vm796, %v3803, %v3807
      %v3809 = vshrl.u32 %v3622, 16
      %v3811 = vrot.slane %v3809, 4
      %v3812 = vor.u32 %v3811, %v3807
      %v3813 = vrot.slane %v3812, 4
      %v3815 = vshll.u32 %v3623, 16
      %v3817 = vrot.slane %v3815, 5
      %v3818 = vsel %vm796, %v3813, %v3817
      %v3820 = vshrl.u32 %v3624, 16
      %v3822 = vrot.slane %v3820, 4
      %v3823 = vshll.u32 %v3624, 16
      %v3825 = vrot.slane %v3823, 5
      %v3826 = vor.u32 %v3822, %v3825
      %v3827 = vrot.slane %v3826, 4
      %v3829 = vshll.u32 %v3625, 16
      %v3831 = vrot.slane %v3829, 5
      %v3832 = vsel %vm796, %v3827, %v3831
      %v3833 = vshrl.u32 %v3625, 16
      %v3835 = vrot.slane %v3833, 4
      %v3836 = vor.u32 %v3835, %v3831
      %v3837 = vrot.slane %v3836, 4
      %v3839 = vshll.u32 %v3626, 16
      %v3841 = vrot.slane %v3839, 5
      %v3842 = vsel %vm796, %v3837, %v3841
      %v3844 = vshrl.u32 %v3627, 16
      %v3846 = vrot.slane %v3844, 4
      %v3847 = vshll.u32 %v3627, 16
      %v3849 = vrot.slane %v3847, 5
      %v3850 = vor.u32 %v3846, %v3849
      %v3851 = vrot.slane %v3850, 4
      %v3853 = vshll.u32 %v3628, 16
      %v3855 = vrot.slane %v3853, 5
      %v3856 = vsel %vm796, %v3851, %v3855
      %v3857 = vshrl.u32 %v3628, 16
      %v3859 = vrot.slane %v3857, 4
      %v3860 = vor.u32 %v3859, %v3855
      %v3861 = vrot.slane %v3860, 4
      %v3863 = vshll.u32 %v3629, 16
      %v3865 = vrot.slane %v3863, 5
      %v3866 = vsel %vm796, %v3861, %v3865
      %v3868 = vshrl.u32 %v3630, 16
      %v3870 = vrot.slane %v3868, 4
      %v3871 = vshll.u32 %v3630, 16
      %v3873 = vrot.slane %v3871, 5
      %v3874 = vor.u32 %v3870, %v3873
      %v3875 = vrot.slane %v3874, 4
      %v3877 = vshll.u32 %v3631, 16
      %v3879 = vrot.slane %v3877, 5
      %v3880 = vsel %vm796, %v3875, %v3879
      %v3881 = vshrl.u32 %v3631, 16
      %v3883 = vrot.slane %v3881, 4
      %v3884 = vor.u32 %v3883, %v3879
      %v3885 = vrot.slane %v3884, 4
      %v3887 = vshll.u32 %v3632, 16
      %v3889 = vrot.slane %v3887, 5
      %v3890 = vsel %vm796, %v3885, %v3889
      %v3892 = vshrl.u32 %v3633, 16
      %v3894 = vrot.slane %v3892, 4
      %v3895 = vshll.u32 %v3633, 16
      %v3897 = vrot.slane %v3895, 5
      %v3898 = vor.u32 %v3894, %v3897
      %v3899 = vrot.slane %v3898, 4
      %v3901 = vshll.u32 %v3634, 16
      %v3903 = vrot.slane %v3901, 5
      %v3904 = vsel %vm796, %v3899, %v3903
      %v3905 = vshrl.u32 %v3634, 16
      %v3907 = vrot.slane %v3905, 4
      %v3908 = vor.u32 %v3907, %v3903
      %v3909 = vrot.slane %v3908, 4
      %v3911 = vshll.u32 %v3635, 16
      %v3913 = vrot.slane %v3911, 5
      %v3914 = vsel %vm796, %v3909, %v3913
      %v3916 = vshrl.u32 %v3636, 16
      %v3918 = vrot.slane %v3916, 4
      %v3919 = vshll.u32 %v3636, 16
      %v3921 = vrot.slane %v3919, 5
      %v3922 = vor.u32 %v3918, %v3921
      %v3923 = vrot.slane %v3922, 4
      %v3925 = vshll.u32 %v3637, 16
      %v3927 = vrot.slane %v3925, 5
      %v3928 = vsel %vm796, %v3923, %v3927
      %v3929 = vshrl.u32 %v3637, 16
      %v3931 = vrot.slane %v3929, 4
      %v3932 = vor.u32 %v3931, %v3927
      %v3933 = vrot.slane %v3932, 4
      %v3935 = vshll.u32 %v3638, 16
      %v3937 = vrot.slane %v3935, 5
      %v3938 = vsel %vm796, %v3933, %v3937
      %v3940 = vshrl.u32 %v3639, 16
      %v3942 = vrot.slane %v3940, 4
      %v3943 = vshll.u32 %v3639, 16
      %v3945 = vrot.slane %v3943, 5
      %v3946 = vor.u32 %v3942, %v3945
      %v3947 = vrot.slane %v3946, 4
      %v3949 = vshll.u32 %v3640, 16
      %v3951 = vrot.slane %v3949, 5
      %v3952 = vsel %vm796, %v3947, %v3951
      %v3953 = vshrl.u32 %v3640, 16
      %v3955 = vrot.slane %v3953, 4
      %v3956 = vor.u32 %v3955, %v3951
      %v3957 = vrot.slane %v3956, 4
      %v3959 = vshll.u32 %v3641, 16
      %v3961 = vrot.slane %v3959, 5
      %v3962 = vsel %vm796, %v3957, %v3961
      %v3964 = vshrl.u32 %v3642, 16
      %v3966 = vrot.slane %v3964, 4
      %v3967 = vshll.u32 %v3642, 16
      %v3969 = vrot.slane %v3967, 5
      %v3970 = vor.u32 %v3966, %v3969
      %v3971 = vrot.slane %v3970, 4
      %v3973 = vshll.u32 %v3643, 16
      %v3975 = vrot.slane %v3973, 5
      %v3976 = vsel %vm796, %v3971, %v3975
      %v3977 = vshrl.u32 %v3643, 16
      %v3979 = vrot.slane %v3977, 4
      %v3980 = vor.u32 %v3979, %v3975
      %v3981 = vrot.slane %v3980, 4
      %v3983 = vshll.u32 %v3644, 16
      %v3985 = vrot.slane %v3983, 5
      %v3986 = vsel %vm796, %v3981, %v3985
      %v3988 = vshrl.u32 %v3645, 16
      %v3990 = vrot.slane %v3988, 4
      %v3991 = vshll.u32 %v3645, 16
      %v3993 = vrot.slane %v3991, 5
      %v3994 = vor.u32 %v3990, %v3993
      %v3995 = vrot.slane %v3994, 4
      %v3997 = vshll.u32 %v3646, 16
      %v3999 = vrot.slane %v3997, 5
      %v4000 = vsel %vm796, %v3995, %v3999
      %v4001 = vshrl.u32 %v3646, 16
      %v4003 = vrot.slane %v4001, 4
      %v4004 = vor.u32 %v4003, %v3999
      %v4005 = vrot.slane %v4004, 4
      %v4007 = vshll.u32 %v3647, 16
      %v4009 = vrot.slane %v4007, 5
      %v4010 = vsel %vm796, %v4005, %v4009
      %v4012 = vshrl.u32 %v3648, 16
      %v4014 = vrot.slane %v4012, 4
      %v4015 = vshll.u32 %v3648, 16
      %v4017 = vrot.slane %v4015, 5
      %v4018 = vor.u32 %v4014, %v4017
      %v4019 = vrot.slane %v4018, 4
      %v4021 = vshll.u32 %v3649, 16
      %v4023 = vrot.slane %v4021, 5
      %v4024 = vsel %vm796, %v4019, %v4023
      %v4025 = vshrl.u32 %v3649, 16
      %v4027 = vrot.slane %v4025, 4
      %v4028 = vor.u32 %v4027, %v4023
      %v4029 = vrot.slane %v4028, 4
      %v4031 = vshll.u32 %v3650, 16
      %v4033 = vrot.slane %v4031, 5
      %v4034 = vsel %vm796, %v4029, %v4033
      %s4035 = scalar_lea.vmem %s1, 14
      %v4036 = vld [vmem:[%s4035] sm:$0x3]
      %v4037 = vunpack.c.l.b16 %v3664
      %v4038 = vunpack.c.l.b16 %v3674
      %v4039 = vunpack.c.l.b16 %v3688
      %v4040 = vunpack.c.l.b16 %v3698
      %v4041 = vunpack.c.l.b16 %v3712
      %v4042 = vunpack.c.l.b16 %v3722
      %v4043 = vunpack.c.l.b16 %v3736
      %v4044 = vunpack.c.l.b16 %v3746
      %v4045 = vunpack.c.l.b16 %v3760
      %v4046 = vunpack.c.l.b16 %v3770
      %v4047 = vunpack.c.l.b16 %v3784
      %v4048 = vunpack.c.l.b16 %v3794
      %v4049 = vunpack.c.l.b16 %v3808
      %v4050 = vunpack.c.l.b16 %v3818
      %v4051 = vunpack.c.l.b16 %v3832
      %v4052 = vunpack.c.l.b16 %v3842
      %v4053 = vunpack.c.l.b16 %v3856
      %v4054 = vunpack.c.l.b16 %v3866
      %v4055 = vunpack.c.l.b16 %v3880
      %v4056 = vunpack.c.l.b16 %v3890
      %v4057 = vunpack.c.l.b16 %v3904
      %v4058 = vunpack.c.l.b16 %v3914
      %v4059 = vunpack.c.l.b16 %v3928
      %v4060 = vunpack.c.l.b16 %v3938
      %v4061 = vunpack.c.l.b16 %v3952
      %v4062 = vunpack.c.l.b16 %v3962
      %v4063 = vunpack.c.l.b16 %v3976
      %v4064 = vunpack.c.l.b16 %v3986
      %v4065 = vunpack.c.l.b16 %v4000
      %v4066 = vunpack.c.l.b16 %v4010
      %v4067 = vunpack.c.l.b16 %v4024
      %v4068 = vunpack.c.l.b16 %v4034
      %v4069 = vpack.c.b16 %v4038, %v4037
      %v4070 = vpack.c.b16 %v4040, %v4039
      %v4071 = vpack.c.b16 %v4042, %v4041
      %v4072 = vpack.c.b16 %v4044, %v4043
      %v4073 = vpack.c.b16 %v4046, %v4045
      %v4074 = vpack.c.b16 %v4048, %v4047
      %v4075 = vpack.c.b16 %v4050, %v4049
      %v4076 = vpack.c.b16 %v4052, %v4051
      %v4077 = vpack.c.b16 %v4054, %v4053
      %v4078 = vpack.c.b16 %v4056, %v4055
      %v4079 = vpack.c.b16 %v4058, %v4057
      %v4080 = vpack.c.b16 %v4060, %v4059
      %v4081 = vpack.c.b16 %v4062, %v4061
      %v4082 = vpack.c.b16 %v4064, %v4063
      %v4083 = vpack.c.b16 %v4066, %v4065
      %v4084 = vpack.c.b16 %v4068, %v4067
      %v4086 = vsel %vm1231, %v4069, 0
      %v4089 = vsel %vm1231, %v4070, 0
      %v4092 = vsel %vm1231, %v4071, 0
      %v4095 = vsel %vm1231, %v4072, 0
      %v4098 = vsel %vm1231, %v4073, 0
      %v4101 = vsel %vm1231, %v4074, 0
      %v4104 = vsel %vm1231, %v4075, 0
      %v4107 = vsel %vm1231, %v4076, 0
      %v4110 = vsel %vm1231, %v4077, 0
      %v4113 = vsel %vm1231, %v4078, 0
      %v4116 = vsel %vm1231, %v4079, 0
      %v4119 = vsel %vm1231, %v4080, 0
      %v4122 = vsel %vm1231, %v4081, 0
      %v4125 = vsel %vm1231, %v4082, 0
      %v4128 = vsel %vm1231, %v4083, 0
      %v4131 = vsel %vm1231, %v4084, 0
      %v4134 = vsel %vm1280, %v4036, 0
      %4136 = vmatpush.bf16.msra.mxu0 0
      %4137 = vmatpush.bf16.msra.mxu0 0
      %4138 = vmatpush.bf16.msra.mxu0 0
      %4139 = vmatpush.bf16.msra.mxu0 0
      %4140 = vmatpush.bf16.msra.mxu0 0
      %4141 = vmatpush.bf16.msra.mxu0 0
      %4142 = vmatpush.bf16.msra.mxu0 0
      %4143 = vmatpush.bf16.msra.mxu0 %v4134
      %4144 = vmatmul.bf16.gmra.mxu0 %v4086
      %v4145 = vpop.f32.mrf.mxu0
      %v4146 = vadd.f32 0.0, %v4145
      %v4147 = vpop.f32.mrf.mxu0
      %v4148 = vadd.f32 0.0, %v4147
      %4149 = vmatmul.bf16.gmra.mxu0 %v4089
      %v4150 = vpop.f32.mrf.mxu0
      %v4151 = vadd.f32 0.0, %v4150
      %v4152 = vpop.f32.mrf.mxu0
      %v4153 = vadd.f32 0.0, %v4152
      %4154 = vmatmul.bf16.gmra.mxu0 %v4092
      %v4155 = vpop.f32.mrf.mxu0
      %v4156 = vadd.f32 0.0, %v4155
      %v4157 = vpop.f32.mrf.mxu0
      %v4158 = vadd.f32 0.0, %v4157
      %4159 = vmatmul.bf16.gmra.mxu0 %v4095
      %v4160 = vpop.f32.mrf.mxu0
      %v4161 = vadd.f32 0.0, %v4160
      %v4162 = vpop.f32.mrf.mxu0
      %v4163 = vadd.f32 0.0, %v4162
      %4164 = vmatmul.bf16.gmra.mxu0 %v4098
      %v4165 = vpop.f32.mrf.mxu0
      %v4166 = vadd.f32 0.0, %v4165
      %v4167 = vpop.f32.mrf.mxu0
      %v4168 = vadd.f32 0.0, %v4167
      %4169 = vmatmul.bf16.gmra.mxu0 %v4101
      %v4170 = vpop.f32.mrf.mxu0
      %v4171 = vadd.f32 0.0, %v4170
      %v4172 = vpop.f32.mrf.mxu0
      %v4173 = vadd.f32 0.0, %v4172
      %4174 = vmatmul.bf16.gmra.mxu0 %v4104
      %v4175 = vpop.f32.mrf.mxu0
      %v4176 = vadd.f32 0.0, %v4175
      %v4177 = vpop.f32.mrf.mxu0
      %v4178 = vadd.f32 0.0, %v4177
      %4179 = vmatmul.bf16.gmra.mxu0 %v4107
      %v4180 = vpop.f32.mrf.mxu0
      %v4181 = vadd.f32 0.0, %v4180
      %v4182 = vpop.f32.mrf.mxu0
      %v4183 = vadd.f32 0.0, %v4182
      %4184 = vmatmul.bf16.gmra.mxu0 %v4110
      %v4185 = vpop.f32.mrf.mxu0
      %v4186 = vadd.f32 0.0, %v4185
      %v4187 = vpop.f32.mrf.mxu0
      %v4188 = vadd.f32 0.0, %v4187
      %4189 = vmatmul.bf16.gmra.mxu0 %v4113
      %v4190 = vpop.f32.mrf.mxu0
      %v4191 = vadd.f32 0.0, %v4190
      %v4192 = vpop.f32.mrf.mxu0
      %v4193 = vadd.f32 0.0, %v4192
      %4194 = vmatmul.bf16.gmra.mxu0 %v4116
      %v4195 = vpop.f32.mrf.mxu0
      %v4196 = vadd.f32 0.0, %v4195
      %v4197 = vpop.f32.mrf.mxu0
      %v4198 = vadd.f32 0.0, %v4197
      %4199 = vmatmul.bf16.gmra.mxu0 %v4119
      %v4200 = vpop.f32.mrf.mxu0
      %v4201 = vadd.f32 0.0, %v4200
      %v4202 = vpop.f32.mrf.mxu0
      %v4203 = vadd.f32 0.0, %v4202
      %4204 = vmatmul.bf16.gmra.mxu0 %v4122
      %v4205 = vpop.f32.mrf.mxu0
      %v4206 = vadd.f32 0.0, %v4205
      %v4207 = vpop.f32.mrf.mxu0
      %v4208 = vadd.f32 0.0, %v4207
      %4209 = vmatmul.bf16.gmra.mxu0 %v4125
      %v4210 = vpop.f32.mrf.mxu0
      %v4211 = vadd.f32 0.0, %v4210
      %v4212 = vpop.f32.mrf.mxu0
      %v4213 = vadd.f32 0.0, %v4212
      %4214 = vmatmul.bf16.gmra.mxu0 %v4128
      %v4215 = vpop.f32.mrf.mxu0
      %v4216 = vadd.f32 0.0, %v4215
      %v4217 = vpop.f32.mrf.mxu0
      %v4218 = vadd.f32 0.0, %v4217
      %4219 = vmatmul.bf16.gmra.mxu0 %v4131
      %v4220 = vpop.f32.mrf.mxu0
      %v4221 = vadd.f32 0.0, %v4220
      %v4222 = vpop.f32.mrf.mxu0
      %v4223 = vadd.f32 0.0, %v4222
      %4224 = vdwg.mxu0
      %v4225 = vadd.f32 %v3571, %v4146
      %v4226 = vadd.f32 %v3572, %v4148
      %v4227 = vadd.f32 %v3573, %v4151
      %v4228 = vadd.f32 %v3574, %v4153
      %v4229 = vadd.f32 %v3575, %v4156
      %v4230 = vadd.f32 %v3576, %v4158
      %v4231 = vadd.f32 %v3577, %v4161
      %v4232 = vadd.f32 %v3578, %v4163
      %v4233 = vadd.f32 %v3579, %v4166
      %v4234 = vadd.f32 %v3580, %v4168
      %v4235 = vadd.f32 %v3581, %v4171
      %v4236 = vadd.f32 %v3582, %v4173
      %v4237 = vadd.f32 %v3583, %v4176
      %v4238 = vadd.f32 %v3584, %v4178
      %v4239 = vadd.f32 %v3585, %v4181
      %v4240 = vadd.f32 %v3586, %v4183
      %v4241 = vadd.f32 %v3587, %v4186
      %v4242 = vadd.f32 %v3588, %v4188
      %v4243 = vadd.f32 %v3589, %v4191
      %v4244 = vadd.f32 %v3590, %v4193
      %v4245 = vadd.f32 %v3591, %v4196
      %v4246 = vadd.f32 %v3592, %v4198
      %v4247 = vadd.f32 %v3593, %v4201
      %v4248 = vadd.f32 %v3594, %v4203
      %v4249 = vadd.f32 %v3595, %v4206
      %v4250 = vadd.f32 %v3596, %v4208
      %v4251 = vadd.f32 %v3597, %v4211
      %v4252 = vadd.f32 %v3598, %v4213
      %v4253 = vadd.f32 %v3599, %v4216
      %v4254 = vadd.f32 %v3600, %v4218
      %v4255 = vadd.f32 %v3601, %v4221
      %v4256 = vadd.f32 %v3602, %v4223
      %v4257 = vld [vmem:[%s3316] sm:$0xe]
      %v4258 = vld [vmem:[%s3316 + $0xc] sm:$0xe]
      %v4259 = vld [vmem:[%s3316 + $0x18] sm:$0xe]
      %v4260 = vld [vmem:[%s3316 + $0x24] sm:$0xe]
      %v4261 = vld [vmem:[%s3316 + $0x30] sm:$0xe]
      %v4262 = vld [vmem:[%s3316 + $0x3c] sm:$0xe]
      %v4263 = vld [vmem:[%s3316 + $0x48] sm:$0xe]
      %v4264 = vld [vmem:[%s3316 + $0x54] sm:$0xe]
      %v4265 = vld [vmem:[%s3316 + $0x60] sm:$0xe]
      %v4266 = vld [vmem:[%s3316 + $0x6c] sm:$0xe]
      %v4267 = vld [vmem:[%s3316 + $0x78] sm:$0xe]
      %v4268 = vld [vmem:[%s3316 + $0x84] sm:$0xe]
      %v4269 = vld [vmem:[%s3316 + $0x90] sm:$0xe]
      %v4270 = vld [vmem:[%s3316 + $0x9c] sm:$0xe]
      %v4271 = vld [vmem:[%s3316 + $0xa8] sm:$0xe]
      %v4272 = vld [vmem:[%s3316 + $0xb4] sm:$0xe]
      %v4321 = vrot.slane %v4257, 5
      %v4322 = vrot.slane %v4321, 4
      %v4323 = vrot.slane %v3604, 5
      %v4324 = vsel %vm1643, %v4322, %v4323
      %v4325 = vrot.slane %v4323, 4
      %v4326 = vrot.slane %v3605, 5
      %v4327 = vsel %vm1643, %v4325, %v4326
      %v4328 = vrot.slane %v4258, 5
      %v4329 = vrot.slane %v4328, 4
      %v4330 = vrot.slane %v3607, 5
      %v4331 = vsel %vm1643, %v4329, %v4330
      %v4332 = vrot.slane %v4330, 4
      %v4333 = vrot.slane %v3608, 5
      %v4334 = vsel %vm1643, %v4332, %v4333
      %v4335 = vrot.slane %v4259, 5
      %v4336 = vrot.slane %v4335, 4
      %v4337 = vrot.slane %v3610, 5
      %v4338 = vsel %vm1643, %v4336, %v4337
      %v4339 = vrot.slane %v4337, 4
      %v4340 = vrot.slane %v3611, 5
      %v4341 = vsel %vm1643, %v4339, %v4340
      %v4342 = vrot.slane %v4260, 5
      %v4343 = vrot.slane %v4342, 4
      %v4344 = vrot.slane %v3613, 5
      %v4345 = vsel %vm1643, %v4343, %v4344
      %v4346 = vrot.slane %v4344, 4
      %v4347 = vrot.slane %v3614, 5
      %v4348 = vsel %vm1643, %v4346, %v4347
      %v4349 = vrot.slane %v4261, 5
      %v4350 = vrot.slane %v4349, 4
      %v4351 = vrot.slane %v3616, 5
      %v4352 = vsel %vm1643, %v4350, %v4351
      %v4353 = vrot.slane %v4351, 4
      %v4354 = vrot.slane %v3617, 5
      %v4355 = vsel %vm1643, %v4353, %v4354
      %v4356 = vrot.slane %v4262, 5
      %v4357 = vrot.slane %v4356, 4
      %v4358 = vrot.slane %v3619, 5
      %v4359 = vsel %vm1643, %v4357, %v4358
      %v4360 = vrot.slane %v4358, 4
      %v4361 = vrot.slane %v3620, 5
      %v4362 = vsel %vm1643, %v4360, %v4361
      %v4363 = vrot.slane %v4263, 5
      %v4364 = vrot.slane %v4363, 4
      %v4365 = vrot.slane %v3622, 5
      %v4366 = vsel %vm1643, %v4364, %v4365
      %v4367 = vrot.slane %v4365, 4
      %v4368 = vrot.slane %v3623, 5
      %v4369 = vsel %vm1643, %v4367, %v4368
      %v4370 = vrot.slane %v4264, 5
      %v4371 = vrot.slane %v4370, 4
      %v4372 = vrot.slane %v3625, 5
      %v4373 = vsel %vm1643, %v4371, %v4372
      %v4374 = vrot.slane %v4372, 4
      %v4375 = vrot.slane %v3626, 5
      %v4376 = vsel %vm1643, %v4374, %v4375
      %v4377 = vrot.slane %v4265, 5
      %v4378 = vrot.slane %v4377, 4
      %v4379 = vrot.slane %v3628, 5
      %v4380 = vsel %vm1643, %v4378, %v4379
      %v4381 = vrot.slane %v4379, 4
      %v4382 = vrot.slane %v3629, 5
      %v4383 = vsel %vm1643, %v4381, %v4382
      %v4384 = vrot.slane %v4266, 5
      %v4385 = vrot.slane %v4384, 4
      %v4386 = vrot.slane %v3631, 5
      %v4387 = vsel %vm1643, %v4385, %v4386
      %v4388 = vrot.slane %v4386, 4
      %v4389 = vrot.slane %v3632, 5
      %v4390 = vsel %vm1643, %v4388, %v4389
      %v4391 = vrot.slane %v4267, 5
      %v4392 = vrot.slane %v4391, 4
      %v4393 = vrot.slane %v3634, 5
      %v4394 = vsel %vm1643, %v4392, %v4393
      %v4395 = vrot.slane %v4393, 4
      %v4396 = vrot.slane %v3635, 5
      %v4397 = vsel %vm1643, %v4395, %v4396
      %v4398 = vrot.slane %v4268, 5
      %v4399 = vrot.slane %v4398, 4
      %v4400 = vrot.slane %v3637, 5
      %v4401 = vsel %vm1643, %v4399, %v4400
      %v4402 = vrot.slane %v4400, 4
      %v4403 = vrot.slane %v3638, 5
      %v4404 = vsel %vm1643, %v4402, %v4403
      %v4405 = vrot.slane %v4269, 5
      %v4406 = vrot.slane %v4405, 4
      %v4407 = vrot.slane %v3640, 5
      %v4408 = vsel %vm1643, %v4406, %v4407
      %v4409 = vrot.slane %v4407, 4
      %v4410 = vrot.slane %v3641, 5
      %v4411 = vsel %vm1643, %v4409, %v4410
      %v4412 = vrot.slane %v4270, 5
      %v4413 = vrot.slane %v4412, 4
      %v4414 = vrot.slane %v3643, 5
      %v4415 = vsel %vm1643, %v4413, %v4414
      %v4416 = vrot.slane %v4414, 4
      %v4417 = vrot.slane %v3644, 5
      %v4418 = vsel %vm1643, %v4416, %v4417
      %v4419 = vrot.slane %v4271, 5
      %v4420 = vrot.slane %v4419, 4
      %v4421 = vrot.slane %v3646, 5
      %v4422 = vsel %vm1643, %v4420, %v4421
      %v4423 = vrot.slane %v4421, 4
      %v4424 = vrot.slane %v3647, 5
      %v4425 = vsel %vm1643, %v4423, %v4424
      %v4426 = vrot.slane %v4272, 5
      %v4427 = vrot.slane %v4426, 4
      %v4428 = vrot.slane %v3649, 5
      %v4429 = vsel %vm1643, %v4427, %v4428
      %v4430 = vrot.slane %v4428, 4
      %v4431 = vrot.slane %v3650, 5
      %v4432 = vsel %vm1643, %v4430, %v4431
      %s4433 = scalar_lea.vmem %s1, 16
      %v4434 = vld [vmem:[%s4433] sm:$0x3]
      %v4435 = vunpack.c.l.b16 %v4324
      %v4436 = vunpack.c.l.b16 %v4327
      %v4437 = vunpack.c.l.b16 %v4331
      %v4438 = vunpack.c.l.b16 %v4334
      %v4439 = vunpack.c.l.b16 %v4338
      %v4440 = vunpack.c.l.b16 %v4341
      %v4441 = vunpack.c.l.b16 %v4345
      %v4442 = vunpack.c.l.b16 %v4348
      %v4443 = vunpack.c.l.b16 %v4352
      %v4444 = vunpack.c.l.b16 %v4355
      %v4445 = vunpack.c.l.b16 %v4359
      %v4446 = vunpack.c.l.b16 %v4362
      %v4447 = vunpack.c.l.b16 %v4366
      %v4448 = vunpack.c.l.b16 %v4369
      %v4449 = vunpack.c.l.b16 %v4373
      %v4450 = vunpack.c.l.b16 %v4376
      %v4451 = vunpack.c.l.b16 %v4380
      %v4452 = vunpack.c.l.b16 %v4383
      %v4453 = vunpack.c.l.b16 %v4387
      %v4454 = vunpack.c.l.b16 %v4390
      %v4455 = vunpack.c.l.b16 %v4394
      %v4456 = vunpack.c.l.b16 %v4397
      %v4457 = vunpack.c.l.b16 %v4401
      %v4458 = vunpack.c.l.b16 %v4404
      %v4459 = vunpack.c.l.b16 %v4408
      %v4460 = vunpack.c.l.b16 %v4411
      %v4461 = vunpack.c.l.b16 %v4415
      %v4462 = vunpack.c.l.b16 %v4418
      %v4463 = vunpack.c.l.b16 %v4422
      %v4464 = vunpack.c.l.b16 %v4425
      %v4465 = vunpack.c.l.b16 %v4429
      %v4466 = vunpack.c.l.b16 %v4432
      %v4467 = vpack.c.b16 %v4436, %v4435
      %v4468 = vpack.c.b16 %v4438, %v4437
      %v4469 = vpack.c.b16 %v4440, %v4439
      %v4470 = vpack.c.b16 %v4442, %v4441
      %v4471 = vpack.c.b16 %v4444, %v4443
      %v4472 = vpack.c.b16 %v4446, %v4445
      %v4473 = vpack.c.b16 %v4448, %v4447
      %v4474 = vpack.c.b16 %v4450, %v4449
      %v4475 = vpack.c.b16 %v4452, %v4451
      %v4476 = vpack.c.b16 %v4454, %v4453
      %v4477 = vpack.c.b16 %v4456, %v4455
      %v4478 = vpack.c.b16 %v4458, %v4457
      %v4479 = vpack.c.b16 %v4460, %v4459
      %v4480 = vpack.c.b16 %v4462, %v4461
      %v4481 = vpack.c.b16 %v4464, %v4463
      %v4482 = vpack.c.b16 %v4466, %v4465
      %v4484 = vsel %vm1231, %v4467, 0
      %v4487 = vsel %vm1231, %v4468, 0
      %v4490 = vsel %vm1231, %v4469, 0
      %v4493 = vsel %vm1231, %v4470, 0
      %v4496 = vsel %vm1231, %v4471, 0
      %v4499 = vsel %vm1231, %v4472, 0
      %v4502 = vsel %vm1231, %v4473, 0
      %v4505 = vsel %vm1231, %v4474, 0
      %v4508 = vsel %vm1231, %v4475, 0
      %v4511 = vsel %vm1231, %v4476, 0
      %v4514 = vsel %vm1231, %v4477, 0
      %v4517 = vsel %vm1231, %v4478, 0
      %v4520 = vsel %vm1231, %v4479, 0
      %v4523 = vsel %vm1231, %v4480, 0
      %v4526 = vsel %vm1231, %v4481, 0
      %v4529 = vsel %vm1231, %v4482, 0
      %v4532 = vsel %vm1280, %v4434, 0
      %4534 = vmatpush.bf16.msra.mxu0 0
      %4535 = vmatpush.bf16.msra.mxu0 0
      %4536 = vmatpush.bf16.msra.mxu0 0
      %4537 = vmatpush.bf16.msra.mxu0 0
      %4538 = vmatpush.bf16.msra.mxu0 0
      %4539 = vmatpush.bf16.msra.mxu0 0
      %4540 = vmatpush.bf16.msra.mxu0 0
      %4541 = vmatpush.bf16.msra.mxu0 %v4532
      %4542 = vmatmul.bf16.gmra.mxu0 %v4484
      %v4543 = vpop.f32.mrf.mxu0
      %v4544 = vadd.f32 0.0, %v4543
      %v4545 = vpop.f32.mrf.mxu0
      %v4546 = vadd.f32 0.0, %v4545
      %4547 = vmatmul.bf16.gmra.mxu0 %v4487
      %v4548 = vpop.f32.mrf.mxu0
      %v4549 = vadd.f32 0.0, %v4548
      %v4550 = vpop.f32.mrf.mxu0
      %v4551 = vadd.f32 0.0, %v4550
      %4552 = vmatmul.bf16.gmra.mxu0 %v4490
      %v4553 = vpop.f32.mrf.mxu0
      %v4554 = vadd.f32 0.0, %v4553
      %v4555 = vpop.f32.mrf.mxu0
      %v4556 = vadd.f32 0.0, %v4555
      %4557 = vmatmul.bf16.gmra.mxu0 %v4493
      %v4558 = vpop.f32.mrf.mxu0
      %v4559 = vadd.f32 0.0, %v4558
      %v4560 = vpop.f32.mrf.mxu0
      %v4561 = vadd.f32 0.0, %v4560
      %4562 = vmatmul.bf16.gmra.mxu0 %v4496
      %v4563 = vpop.f32.mrf.mxu0
      %v4564 = vadd.f32 0.0, %v4563
      %v4565 = vpop.f32.mrf.mxu0
      %v4566 = vadd.f32 0.0, %v4565
      %4567 = vmatmul.bf16.gmra.mxu0 %v4499
      %v4568 = vpop.f32.mrf.mxu0
      %v4569 = vadd.f32 0.0, %v4568
      %v4570 = vpop.f32.mrf.mxu0
      %v4571 = vadd.f32 0.0, %v4570
      %4572 = vmatmul.bf16.gmra.mxu0 %v4502
      %v4573 = vpop.f32.mrf.mxu0
      %v4574 = vadd.f32 0.0, %v4573
      %v4575 = vpop.f32.mrf.mxu0
      %v4576 = vadd.f32 0.0, %v4575
      %4577 = vmatmul.bf16.gmra.mxu0 %v4505
      %v4578 = vpop.f32.mrf.mxu0
      %v4579 = vadd.f32 0.0, %v4578
      %v4580 = vpop.f32.mrf.mxu0
      %v4581 = vadd.f32 0.0, %v4580
      %4582 = vmatmul.bf16.gmra.mxu0 %v4508
      %v4583 = vpop.f32.mrf.mxu0
      %v4584 = vadd.f32 0.0, %v4583
      %v4585 = vpop.f32.mrf.mxu0
      %v4586 = vadd.f32 0.0, %v4585
      %4587 = vmatmul.bf16.gmra.mxu0 %v4511
      %v4588 = vpop.f32.mrf.mxu0
      %v4589 = vadd.f32 0.0, %v4588
      %v4590 = vpop.f32.mrf.mxu0
      %v4591 = vadd.f32 0.0, %v4590
      %4592 = vmatmul.bf16.gmra.mxu0 %v4514
      %v4593 = vpop.f32.mrf.mxu0
      %v4594 = vadd.f32 0.0, %v4593
      %v4595 = vpop.f32.mrf.mxu0
      %v4596 = vadd.f32 0.0, %v4595
      %4597 = vmatmul.bf16.gmra.mxu0 %v4517
      %v4598 = vpop.f32.mrf.mxu0
      %v4599 = vadd.f32 0.0, %v4598
      %v4600 = vpop.f32.mrf.mxu0
      %v4601 = vadd.f32 0.0, %v4600
      %4602 = vmatmul.bf16.gmra.mxu0 %v4520
      %v4603 = vpop.f32.mrf.mxu0
      %v4604 = vadd.f32 0.0, %v4603
      %v4605 = vpop.f32.mrf.mxu0
      %v4606 = vadd.f32 0.0, %v4605
      %4607 = vmatmul.bf16.gmra.mxu0 %v4523
      %v4608 = vpop.f32.mrf.mxu0
      %v4609 = vadd.f32 0.0, %v4608
      %v4610 = vpop.f32.mrf.mxu0
      %v4611 = vadd.f32 0.0, %v4610
      %4612 = vmatmul.bf16.gmra.mxu0 %v4526
      %v4613 = vpop.f32.mrf.mxu0
      %v4614 = vadd.f32 0.0, %v4613
      %v4615 = vpop.f32.mrf.mxu0
      %v4616 = vadd.f32 0.0, %v4615
      %4617 = vmatmul.bf16.gmra.mxu0 %v4529
      %v4618 = vpop.f32.mrf.mxu0
      %v4619 = vadd.f32 0.0, %v4618
      %v4620 = vpop.f32.mrf.mxu0
      %v4621 = vadd.f32 0.0, %v4620
      %4622 = vdwg.mxu0
      %v4623 = vadd.f32 %v4225, %v4544
      %v4624 = vadd.f32 %v4226, %v4546
      %v4625 = vadd.f32 %v4227, %v4549
      %v4626 = vadd.f32 %v4228, %v4551
      %v4627 = vadd.f32 %v4229, %v4554
      %v4628 = vadd.f32 %v4230, %v4556
      %v4629 = vadd.f32 %v4231, %v4559
      %v4630 = vadd.f32 %v4232, %v4561
      %v4631 = vadd.f32 %v4233, %v4564
      %v4632 = vadd.f32 %v4234, %v4566
      %v4633 = vadd.f32 %v4235, %v4569
      %v4634 = vadd.f32 %v4236, %v4571
      %v4635 = vadd.f32 %v4237, %v4574
      %v4636 = vadd.f32 %v4238, %v4576
      %v4637 = vadd.f32 %v4239, %v4579
      %v4638 = vadd.f32 %v4240, %v4581
      %v4639 = vadd.f32 %v4241, %v4584
      %v4640 = vadd.f32 %v4242, %v4586
      %v4641 = vadd.f32 %v4243, %v4589
      %v4642 = vadd.f32 %v4244, %v4591
      %v4643 = vadd.f32 %v4245, %v4594
      %v4644 = vadd.f32 %v4246, %v4596
      %v4645 = vadd.f32 %v4247, %v4599
      %v4646 = vadd.f32 %v4248, %v4601
      %v4647 = vadd.f32 %v4249, %v4604
      %v4648 = vadd.f32 %v4250, %v4606
      %v4649 = vadd.f32 %v4251, %v4609
      %v4650 = vadd.f32 %v4252, %v4611
      %v4651 = vadd.f32 %v4253, %v4614
      %v4652 = vadd.f32 %v4254, %v4616
      %v4653 = vadd.f32 %v4255, %v4619
      %v4654 = vadd.f32 %v4256, %v4621
      %4655 = vst [vmem:[%s208] sm:$0xff] %v4623
      %4656 = vst [vmem:[%s208 + $0x8] sm:$0xff] %v4624
      %4657 = vst [vmem:[%s208 + $0x10] sm:$0xff] %v4625
      %4658 = vst [vmem:[%s208 + $0x18] sm:$0xff] %v4626
      %4659 = vst [vmem:[%s208 + $0x20] sm:$0xff] %v4627
      %4660 = vst [vmem:[%s208 + $0x28] sm:$0xff] %v4628
      %4661 = vst [vmem:[%s208 + $0x30] sm:$0xff] %v4629
      %4662 = vst [vmem:[%s208 + $0x38] sm:$0xff] %v4630
      %4663 = vst [vmem:[%s208 + $0x40] sm:$0xff] %v4631
      %4664 = vst [vmem:[%s208 + $0x48] sm:$0xff] %v4632
      %4665 = vst [vmem:[%s208 + $0x50] sm:$0xff] %v4633
      %4666 = vst [vmem:[%s208 + $0x58] sm:$0xff] %v4634
      %4667 = vst [vmem:[%s208 + $0x60] sm:$0xff] %v4635
      %4668 = vst [vmem:[%s208 + $0x68] sm:$0xff] %v4636
      %4669 = vst [vmem:[%s208 + $0x70] sm:$0xff] %v4637
      %4670 = vst [vmem:[%s208 + $0x78] sm:$0xff] %v4638
      %4671 = vst [vmem:[%s208 + $0x80] sm:$0xff] %v4639
      %4672 = vst [vmem:[%s208 + $0x88] sm:$0xff] %v4640
      %4673 = vst [vmem:[%s208 + $0x90] sm:$0xff] %v4641
      %4674 = vst [vmem:[%s208 + $0x98] sm:$0xff] %v4642
      %4675 = vst [vmem:[%s208 + $0xa0] sm:$0xff] %v4643
      %4676 = vst [vmem:[%s208 + $0xa8] sm:$0xff] %v4644
      %4677 = vst [vmem:[%s208 + $0xb0] sm:$0xff] %v4645
      %4678 = vst [vmem:[%s208 + $0xb8] sm:$0xff] %v4646
      %4679 = vst [vmem:[%s208 + $0xc0] sm:$0xff] %v4647
      %4680 = vst [vmem:[%s208 + $0xc8] sm:$0xff] %v4648
      %4681 = vst [vmem:[%s208 + $0xd0] sm:$0xff] %v4649
      %4682 = vst [vmem:[%s208 + $0xd8] sm:$0xff] %v4650
      %4683 = vst [vmem:[%s208 + $0xe0] sm:$0xff] %v4651
      %4684 = vst [vmem:[%s208 + $0xe8] sm:$0xff] %v4652
      %4685 = vst [vmem:[%s208 + $0xf0] sm:$0xff] %v4653
      %4686 = vst [vmem:[%s208 + $0xf8] sm:$0xff] %v4654
      %v4687 = vadd.f32 %v4623, %v4624
      %v4688 = vadd.f32 %v4687, %v4625
      %v4689 = vadd.f32 %v4688, %v4626
      %v4690 = vadd.f32 %v4689, %v4627
      %v4691 = vadd.f32 %v4690, %v4628
      %v4692 = vadd.f32 %v4691, %v4629
      %v4693 = vadd.f32 %v4692, %v4630
      %v4694 = vadd.f32 %v4693, %v4631
      %v4695 = vadd.f32 %v4694, %v4632
      %v4696 = vadd.f32 %v4695, %v4633
      %v4697 = vadd.f32 %v4696, %v4634
      %v4698 = vadd.f32 %v4697, %v4635
      %v4699 = vadd.f32 %v4698, %v4636
      %v4700 = vadd.f32 %v4699, %v4637
      %v4701 = vadd.f32 %v4700, %v4638
      %v4702 = vadd.f32 %v4701, %v4639
      %v4703 = vadd.f32 %v4702, %v4640
      %v4704 = vadd.f32 %v4703, %v4641
      %v4705 = vadd.f32 %v4704, %v4642
      %v4706 = vadd.f32 %v4705, %v4643
      %v4707 = vadd.f32 %v4706, %v4644
      %v4708 = vadd.f32 %v4707, %v4645
      %v4709 = vadd.f32 %v4708, %v4646
      %v4710 = vadd.f32 %v4709, %v4647
      %v4711 = vadd.f32 %v4710, %v4648
      %v4712 = vadd.f32 %v4711, %v4649
      %v4713 = vadd.f32 %v4712, %v4650
      %v4714 = vadd.f32 %v4713, %v4651
      %v4715 = vadd.f32 %v4714, %v4652
      %v4716 = vadd.f32 %v4715, %v4653
      %v4717 = vadd.f32 %v4716, %v4654
      %v4718 = vrot.slane %v4717, 4
      %v4719 = vadd.f32 %v4717, %v4718
      %v4720 = vrot.slane %v4719, 2
      %v4721 = vadd.f32 %v4719, %v4720
      %v4722 = vrot.slane %v4721, 1
      %v4723 = vadd.f32 %v4721, %v4722
      %4724 = vst [vmem:[%s211] sm:$0x1] %v4723
      %v4725 = vmul.f32 %v4623, %v4623
      %v4726 = vmul.f32 %v4624, %v4624
      %v4727 = vmul.f32 %v4625, %v4625
      %v4728 = vmul.f32 %v4626, %v4626
      %v4729 = vmul.f32 %v4627, %v4627
      %v4730 = vmul.f32 %v4628, %v4628
      %v4731 = vmul.f32 %v4629, %v4629
      %v4732 = vmul.f32 %v4630, %v4630
      %v4733 = vmul.f32 %v4631, %v4631
      %v4734 = vmul.f32 %v4632, %v4632
      %v4735 = vmul.f32 %v4633, %v4633
      %v4736 = vmul.f32 %v4634, %v4634
      %v4737 = vmul.f32 %v4635, %v4635
      %v4738 = vmul.f32 %v4636, %v4636
      %v4739 = vmul.f32 %v4637, %v4637
      %v4740 = vmul.f32 %v4638, %v4638
      %v4741 = vmul.f32 %v4639, %v4639
      %v4742 = vmul.f32 %v4640, %v4640
      %v4743 = vmul.f32 %v4641, %v4641
      %v4744 = vmul.f32 %v4642, %v4642
      %v4745 = vmul.f32 %v4643, %v4643
      %v4746 = vmul.f32 %v4644, %v4644
      %v4747 = vmul.f32 %v4645, %v4645
      %v4748 = vmul.f32 %v4646, %v4646
      %v4749 = vmul.f32 %v4647, %v4647
      %v4750 = vmul.f32 %v4648, %v4648
      %v4751 = vmul.f32 %v4649, %v4649
      %v4752 = vmul.f32 %v4650, %v4650
      %v4753 = vmul.f32 %v4651, %v4651
      %v4754 = vmul.f32 %v4652, %v4652
      %v4755 = vmul.f32 %v4653, %v4653
      %v4756 = vmul.f32 %v4654, %v4654
      %v4757 = vadd.f32 %v4725, %v4726
      %v4758 = vadd.f32 %v4757, %v4727
      %v4759 = vadd.f32 %v4758, %v4728
      %v4760 = vadd.f32 %v4759, %v4729
      %v4761 = vadd.f32 %v4760, %v4730
      %v4762 = vadd.f32 %v4761, %v4731
      %v4763 = vadd.f32 %v4762, %v4732
      %v4764 = vadd.f32 %v4763, %v4733
      %v4765 = vadd.f32 %v4764, %v4734
      %v4766 = vadd.f32 %v4765, %v4735
      %v4767 = vadd.f32 %v4766, %v4736
      %v4768 = vadd.f32 %v4767, %v4737
      %v4769 = vadd.f32 %v4768, %v4738
      %v4770 = vadd.f32 %v4769, %v4739
      %v4771 = vadd.f32 %v4770, %v4740
      %v4772 = vadd.f32 %v4771, %v4741
      %v4773 = vadd.f32 %v4772, %v4742
      %v4774 = vadd.f32 %v4773, %v4743
      %v4775 = vadd.f32 %v4774, %v4744
      %v4776 = vadd.f32 %v4775, %v4745
      %v4777 = vadd.f32 %v4776, %v4746
      %v4778 = vadd.f32 %v4777, %v4747
      %v4779 = vadd.f32 %v4778, %v4748
      %v4780 = vadd.f32 %v4779, %v4749
      %v4781 = vadd.f32 %v4780, %v4750
      %v4782 = vadd.f32 %v4781, %v4751
      %v4783 = vadd.f32 %v4782, %v4752
      %v4784 = vadd.f32 %v4783, %v4753
      %v4785 = vadd.f32 %v4784, %v4754
      %v4786 = vadd.f32 %v4785, %v4755
      %v4787 = vadd.f32 %v4786, %v4756
      %v4788 = vrot.slane %v4787, 4
      %v4789 = vadd.f32 %v4787, %v4788
      %v4790 = vrot.slane %v4789, 2
      %v4791 = vadd.f32 %v4789, %v4790
      %v4792 = vrot.slane %v4791, 1
      %v4793 = vadd.f32 %v4791, %v4792
      %4794 = vst [vmem:[%s214] sm:$0x1] %v4793
      %p4795 = scmp.lt.s32.totalorder %s16, 1
      %s4796 = scalar_select %p4795, %s16, 1
      %s4797 = smul.addr %s4796, 32
      %s4798 = smul.addr %s4797, 8
      %s4799 = scalar_lea.vmem %s2, %s4798
      %p4800 = scmp.lt.s32.totalorder %s16, 1
      %s4801 = scalar_select %p4800, %s16, 1
      %s4802 = scalar_lea.vmem %s3, %s4801
      %p4803 = scmp.lt.s32.totalorder %s16, 1
      %s4804 = scalar_select %p4803, %s16, 1
      %s4805 = scalar_lea.vmem %s4, %s4804
      // Predicated region
      $region29: #{residual_block_forward.4} parent=27 // pred_check
        %p4806 = pneg %p81
      $region30: #{residual_block_forward.4} parent=27 // pred_check_branch
        %4808 = sbr.rel (%p4806) target = $region32
      $region31: #{residual_block_forward.4} parent=27 // pred_region
        _
      $region32: #{residual_block_forward.4} parent=27 // pred_fallthru
        _
      // Predicated region
      $region33: #{residual_block_forward.4} parent=27 // pred_check
        %p4809 = pneg %p107
      $region34: #{residual_block_forward.4} parent=27 // pred_check_branch
        %4811 = sbr.rel (%p4809) target = $region36
      $region35: #{residual_block_forward.4} parent=27 // pred_region
        _
      $region36: #{residual_block_forward.4} parent=27 // pred_fallthru
        _
      // Predicated region
      $region37: #{residual_block_forward.4} parent=27 // pred_check
        %p4812 = pneg %p133
      $region38: #{residual_block_forward.4} parent=27 // pred_check_branch
        %4814 = sbr.rel (%p4812) target = $region40
      $region39: #{residual_block_forward.4} parent=27 // pred_region
        _
      $region40: #{residual_block_forward.4} parent=27 // pred_fallthru
        _
    $region28: #{residual_block_forward.4} parent=5 // pred_fallthru
      _
    %p4815 = scmp.le.s32.totalorder 2, %s11
    // Predicated region
    $region41: #{residual_block_forward.4} parent=5 // pred_check
      %p4816 = pneg %p4815
    $region42: #{residual_block_forward.4} parent=5 // pred_check_branch
      %4818 = sbr.rel (%p4816) target = $region44
    $region43: #{residual_block_forward.4} parent=5 // pred_region
      %s4819 = ssub.s32 %s11, 2
      // Predicated region
      $region45: #{residual_block_forward.4} parent=43 // pred_check
        %p4820 = pneg %p87
      $region46: #{residual_block_forward.4} parent=43 // pred_check_branch
        %4822 = sbr.rel (%p4820) target = $region48
      $region47: #{residual_block_forward.4} parent=43 // pred_region
        %p4823 = scmp.lt.s32.totalorder %s17, 1
        %s4824 = scalar_select %p4823, %s17, 1
        %s4825 = smul.addr %s4824, 32
        %s4826 = smul.addr %s4825, 8
        %s4827 = scalar_lea.vmem %s2, %s4826
      $region48: #{residual_block_forward.4} parent=43 // pred_fallthru
        _
      // Predicated region
      $region49: #{residual_block_forward.4} parent=43 // pred_check
        %p4828 = pneg %p113
      $region50: #{residual_block_forward.4} parent=43 // pred_check_branch
        %4830 = sbr.rel (%p4828) target = $region52
      $region51: #{residual_block_forward.4} parent=43 // pred_region
        %p4831 = scmp.lt.s32.totalorder %s17, 1
        %s4832 = scalar_select %p4831, %s17, 1
        %s4833 = scalar_lea.vmem %s3, %s4832
      $region52: #{residual_block_forward.4} parent=43 // pred_fallthru
        _
      // Predicated region
      $region53: #{residual_block_forward.4} parent=43 // pred_check
        %p4834 = pneg %p139
      $region54: #{residual_block_forward.4} parent=43 // pred_check_branch
        %4836 = sbr.rel (%p4834) target = $region56
      $region55: #{residual_block_forward.4} parent=43 // pred_region
        %p4837 = scmp.lt.s32.totalorder %s17, 1
        %s4838 = scalar_select %p4837, %s17, 1
        %s4839 = scalar_lea.vmem %s4, %s4838
      $region56: #{residual_block_forward.4} parent=43 // pred_fallthru
        _
    $region44: #{residual_block_forward.4} parent=5 // pred_fallthru
      _
  $region6: #{residual_block_forward.4} parent=0 // loop_footer
    %s15 = sadd.s32 1, %s11
  $region7: #{residual_block_forward.4} parent=0 // loop_footer_branch
    %10 = sbr.rel target = $region3
  $region8: #{residual_block_forward.4} parent=0 // loop_exit
    _

</llo_original>
